<compile_context>
chip_gen: v6e
topology: v6e:2x2x1
jax: 0.10.0
libtpu: 0.0.40
codegen_flags: <defaults>
</compile_context>

<pallas_src>
import functools

import jax
import jax.numpy as jnp
from jax.experimental import pallas as pl
from jax.experimental.pallas import tpu as pltpu

# ---- architecture constants (from the module's __init__) -------------------
N_EMG_CH    = 5                              # n_emg_channels (graph nodes)
N_EMG_FEAT  = 128                            # n_emg_graph_features
HID_FACTOR  = 8                              # hidden_dim_factor
FEATURE_DIM = N_EMG_FEAT * HID_FACTOR // 2   # 512 == decoder feature_dim
N_EEG_CH    = 32                             # n_eeg_channels
N_EEG_T     = 10                             # n_eeg_samples / n_eeg_timesteps
EEG_FLAT    = N_EEG_CH * N_EEG_T             # 320
EEG_PAD     = 384                            # 3 * 128: lane-dense output width
LN_EPS      = 1e-5
_SUBLANE    = 16                             # bf16 input => batch tile % 16 == 0


def _round_up(x, m):
    return (x + m - 1) // m * m


def _device_kind():
    try:
        return jax.devices()[0].device_kind.lower()
    except Exception:
        return ""


_KIND  = _device_kind()
_IS_V7 = "v7" in _KIND
# bf16 VALU exists on v6e/v7x; v5e (and older) keep the attention math in f32.
ATTN_DTYPE = jnp.bfloat16 if ("v6" in _KIND or _IS_V7) else jnp.float32
# v7x has 64 MiB physical VMEM -> keep TB <= 256; v5e/v6e (128 MiB) use 512.
_DEFAULT_TB = 256 if _IS_V7 else 512


# ---- Pallas kernel: full forward for a tile of TB batch samples -------------
def _emg2eeg_kernel(x_ref,                       # (5, TB, 128) bf16, node-major
                    w_h_ref, b_h_ref,            # (128, 512) bf16, (1, 512) f32
                    w_qkv_ref, b_qkv_ref,        # (128, 1536) bf16, (1,1536) attn-dtype
                    w_o_ref,                     # (512, 512) bf16
                    w1_ref, b1_ref,              # (512, 512) bf16, (1, 512) f32
                    w2_ref, b2_ref,              # (512, 384) bf16, (1, 384) f32
                    out_ref):                    # (TB, 384) f32
    N = N_EMG_CH
    TB = x_ref.shape[1]
    D = FEATURE_DIM

    # (5, TB, 128) -> (5*TB, 128); TB % 16 == 0 keeps this layout-preserving.
    x = x_ref[...].reshape(N * TB, N_EMG_FEAT)

    # --- node embedding (f32, needed for the residual + LayerNorm) -----------
    h_all = jnp.dot(x, w_h_ref[...], preferred_element_type=jnp.float32)
    h_all = h_all + b_h_ref[...]                               # (5*TB, 512) f32

    # --- fused [q|k|v] projection with the 128->512 embedding folded in ------
    # (wrapper packs W_emb @ [Wq*1/sqrt(D) | Wk | Wv]); bf16 output on v6e/v7x.
    qkv = jnp.dot(x, w_qkv_ref[...], preferred_element_type=ATTN_DTYPE)
    qkv = qkv + b_qkv_ref[...]                                 # (5*TB, 1536)

    # sublane/lane-aligned per-node views (no copies, no concatenation)
    h = [h_all[n * TB:(n + 1) * TB, :] for n in range(N)]
    q = [qkv[n * TB:(n + 1) * TB, 0 * D:1 * D] for n in range(N)]
    k = [qkv[n * TB:(n + 1) * TB, 1 * D:2 * D] for n in range(N)]
    v = [qkv[n * TB:(n + 1) * TB, 2 * D:3 * D] for n in range(N)]

    feat = None
    for i in range(N):
        # --- scores for query node i, lane-packed -> one (TB, 5) softmax -----
        # products in ATTN_DTYPE (bf16 VPU on v6e/v7x), lane-sum accumulated f32
        s_i = jnp.concatenate(
            [jnp.sum((q[i] * k[j]).astype(jnp.float32), axis=-1, keepdims=True)
             for j in range(N)],
            axis=-1)                                           # (TB, 5) f32
        m = jnp.max(s_i, axis=-1, keepdims=True)               # XLU
        e = jnp.exp(s_i - m)                                   # one EUP pass
        inv = pl.reciprocal(jnp.sum(e, axis=-1, keepdims=True), approx=True)
        p = (e * inv).astype(ATTN_DTYPE)                       # (TB, 5)

        # --- p @ v combine (bf16 VPU on v6e/v7x) ------------------------------
        zi = p[:, 0:1] * v[0]
        for j in range(1, N):
            zi = zi + p[:, j:j + 1] * v[j]                     # (TB, 512)

        # --- attention out-projection + residual, per node (no z concat) -----
        post = h[i] + jnp.dot(zi.astype(jnp.bfloat16), w_o_ref[...],
                              preferred_element_type=jnp.float32)

        # --- LayerNorm (affine folded into w1/b1 by the wrapper) -------------
        mu = jnp.mean(post, axis=-1, keepdims=True)
        d = post - mu
        var = jnp.mean(d * d, axis=-1, keepdims=True)
        nrm = d * jax.lax.rsqrt(var + LN_EPS)                  # (TB, 512) f32

        # --- spatial pooling over the 5 graph nodes (1/5 folded into w1) -----
        feat = nrm if feat is None else feat + nrm

    # --- EEGDecoderV2 (transformer_decode_first=False): MLP head --------------
    f1 = jnp.dot(feat.astype(jnp.bfloat16), w1_ref[...],
                 preferred_element_type=jnp.float32) + b1_ref[...]
    # TODO(synk): torch nn.GELU defaults to the exact erf form; tanh approx used.
    f1 = jax.nn.gelu(f1, approximate=True)
    eeg = jnp.dot(f1.astype(jnp.bfloat16), w2_ref[...],
                  preferred_element_type=jnp.float32) + b2_ref[...]

    out_ref[...] = eeg.astype(out_ref.dtype)                   # (TB, 384)


# ---- wrapper -----------------------------------------------------------------
@functools.partial(jax.jit, static_argnames=("tb",))
def emg_to_eeg_forward(emg_graph, params, *, tb=None):
    """emg_graph: (B, 5, 128) float32 -> (B, 32, 10) float32."""
    (w_emb, b_emb, w_q, w_k, w_v, w_o, ln_g, ln_b, w1, b1, w2, b2) = params
    B = emg_graph.shape[0]
    if tb is None:
        tb = _DEFAULT_TB

    # batch tile: multiple of 16 (bf16 sublane tiling); on v7x force >=2 grid
    # steps (when B > 16) so the "parallel" grid axis shards over both TCs.
    if _IS_V7:
        TB = min(tb, max(_SUBLANE, _round_up(-(-B // 2), _SUBLANE)))
    else:
        TB = min(tb, _round_up(B, _SUBLANE))
    Bp = _round_up(B, TB)

    # ---- pack kernel-side parameters (all folds done here, once) -------------
    scale = 1.0 / jnp.sqrt(jnp.float32(FEATURE_DIM))
    w_qkv_cat = jnp.concatenate([w_q * scale, w_k, w_v], axis=1)    # (512, 1536)
    w_qkv_fused = jnp.dot(w_emb, w_qkv_cat).astype(jnp.bfloat16)    # (128, 1536)
    b_qkv_fused = jnp.dot(b_emb, w_qkv_cat).astype(ATTN_DTYPE)      # (1, 1536)

    # LN affine + 1/5 pooling folded into the first decoder layer (exact fold)
    w1_fused = ((jnp.transpose(ln_g) * w1) * (1.0 / N_EMG_CH)).astype(jnp.bfloat16)
    b1_fused = b1 + jnp.dot(ln_b, w1)                               # (1, 512) f32

    w2_p = jnp.pad(w2, ((0, 0), (0, EEG_PAD - EEG_FLAT))).astype(jnp.bfloat16)
    b2_p = jnp.pad(b2, ((0, 0), (0, EEG_PAD - EEG_FLAT)))

    # ---- node-major, batch-padded, bf16 input: (5, Bp, 128) -------------------
    x = emg_graph.astype(jnp.bfloat16)
    if Bp != B:
        x = jnp.pad(x, ((0, Bp - B), (0, 0), (0, 0)))
    x = jnp.transpose(x, (1, 0, 2))                                 # (5, Bp, 128)

    kernel_args = (
        x,
        w_emb.astype(jnp.bfloat16), b_emb,
        w_qkv_fused, b_qkv_fused,
        w_o.astype(jnp.bfloat16),
        w1_fused, b1_fused,
        w2_p, b2_p,
    )

    full = lambda shape: pl.BlockSpec(shape, lambda i: (0,) * len(shape))
    in_specs = [
        pl.BlockSpec((N_EMG_CH, TB, N_EMG_FEAT), lambda i: (0, i, 0)),    # x
        full((N_EMG_FEAT, FEATURE_DIM)), full((1, FEATURE_DIM)),          # w_h, b_h
        full((N_EMG_FEAT, 3 * FEATURE_DIM)), full((1, 3 * FEATURE_DIM)),  # w_qkv, b_qkv
        full((FEATURE_DIM, FEATURE_DIM)),                                 # w_o
        full((FEATURE_DIM, FEATURE_DIM)), full((1, FEATURE_DIM)),         # w1, b1
        full((FEATURE_DIM, EEG_PAD)), full((1, EEG_PAD)),                 # w2, b2
    ]
    out_spec = pl.BlockSpec((TB, EEG_PAD), lambda i: (i, 0))

    flat = pl.pallas_call(
        _emg2eeg_kernel,
        out_shape=jax.ShapeDtypeStruct((Bp, EEG_PAD), jnp.float32),
        grid_spec=pltpu.PrefetchScalarGridSpec(
            num_scalar_prefetch=0,
            grid=(Bp // TB,),
            in_specs=in_specs,
            out_specs=out_spec,
        ),
        compiler_params=pltpu.CompilerParams(
            dimension_semantics=("parallel",),   # shards steps across v7x's 2 TCs
            vmem_limit_bytes=48 << 20,           # fits v7x's 64 MiB with headroom
        ),
    )(*kernel_args)

    # drop batch/lane padding, PyTorch-style (B, n_eeg_channels, n_eeg_samples)
    return flat[:B, :EEG_FLAT].reshape(B, N_EEG_CH, N_EEG_T)


# ---- deterministic parameter construction -------------------------------------
def init_params(key):
    ks = jax.random.split(key, 8)

    def lin(k, fan_in, fan_out):
        return (jax.random.normal(k, (fan_in, fan_out), jnp.float32)
                * (1.0 / jnp.sqrt(jnp.float32(fan_in))))

    w_emb = lin(ks[0], N_EMG_FEAT, FEATURE_DIM)
    b_emb = jnp.zeros((1, FEATURE_DIM), jnp.float32)
    w_q = lin(ks[1], FEATURE_DIM, FEATURE_DIM)
    w_k = lin(ks[2], FEATURE_DIM, FEATURE_DIM)
    w_v = lin(ks[3], FEATURE_DIM, FEATURE_DIM)
    w_o = lin(ks[4], FEATURE_DIM, FEATURE_DIM)
    ln_g = jnp.ones((1, FEATURE_DIM), jnp.float32)
    ln_b = jnp.zeros((1, FEATURE_DIM), jnp.float32)
    w1 = lin(ks[5], FEATURE_DIM, FEATURE_DIM)
    b1 = jnp.zeros((1, FEATURE_DIM), jnp.float32)
    w2 = lin(ks[6], FEATURE_DIM, EEG_FLAT)
    b2 = jnp.zeros((1, EEG_FLAT), jnp.float32)
    return (w_emb, b_emb, w_q, w_k, w_v, w_o, ln_g, ln_b, w1, b1, w2, b2)


# ---- pure-JAX f32 reference (for sanity checking the kernel) -------------------
def reference_forward(emg_graph, params):
    (w_emb, b_emb, w_q, w_k, w_v, w_o, ln_g, ln_b, w1, b1, w2, b2) = params
    x = emg_graph.astype(jnp.float32)
    h = jnp.einsum("bnf,fd->bnd", x, w_emb) + b_emb
    q = jnp.einsum("bnd,de->bne", h, w_q)
    k = jnp.einsum("bnd,de->bne", h, w_k)
    v = jnp.einsum("bnd,de->bne", h, w_v)
    s = jnp.einsum("bnd,bmd->bnm", q, k) / jnp.sqrt(jnp.float32(FEATURE_DIM))
    p = jax.nn.softmax(s, axis=-1)
    h = h + jnp.einsum("bnm,bmd->bnd", p, v) @ w_o
    mu = h.mean(-1, keepdims=True)
    var = ((h - mu) ** 2).mean(-1, keepdims=True)
    h = (h - mu) * jax.lax.rsqrt(var + LN_EPS) * ln_g + ln_b
    feat = h.mean(axis=1)                                     # (B, 512)
    f1 = jax.nn.gelu(feat @ w1 + b1, approximate=True)
    eeg = f1 @ w2 + b2
    return eeg.reshape(-1, N_EEG_CH, N_EEG_T)


if __name__ == "__main__":
    key = jax.random.PRNGKey(0)
    k_x, k_p = jax.random.split(key)

    B = 2
    emg_graph = jax.random.normal(k_x, (B, N_EMG_CH, N_EMG_FEAT), jnp.float32)
    params = init_params(k_p)

    out = jax.block_until_ready(emg_to_eeg_forward(emg_graph, params))
    assert out.shape == (B, N_EEG_CH, N_EEG_T), out.shape
    assert bool(jnp.all(jnp.isfinite(out)))

    ref = jax.block_until_ready(reference_forward(emg_graph, params))
    # tolerance covers bf16 MXU operands / fused-weight rounding / (v6e, v7x)
    # bf16 attention products vs. the f32 reference
    max_err = float(jnp.max(jnp.abs(out - ref)))
    assert bool(jnp.allclose(out, ref, rtol=6e-2, atol=6e-2)), max_err

    # TODO(synk): original EMGFeaturizer / EEGDecoderV2 sources were not
    # provided; architecture reconstructed from constructor args.
    print("KERNEL_OK")
</pallas_src>

<mosaic_0001>
module attributes {stable_mosaic.version = 11 : i64} {
  func.func @_emg2eeg_kernel(%arg0: i32, %arg1: memref<5x16x128xbf16, #tpu.memory_space<vmem>>, %arg2: memref<128x512xbf16, #tpu.memory_space<vmem>>, %arg3: memref<1x512xf32, #tpu.memory_space<vmem>>, %arg4: memref<128x1536xbf16, #tpu.memory_space<vmem>>, %arg5: memref<1x1536xf32, #tpu.memory_space<vmem>>, %arg6: memref<512x512xbf16, #tpu.memory_space<vmem>>, %arg7: memref<512x512xbf16, #tpu.memory_space<vmem>>, %arg8: memref<1x512xf32, #tpu.memory_space<vmem>>, %arg9: memref<512x384xbf16, #tpu.memory_space<vmem>>, %arg10: memref<1x384xf32, #tpu.memory_space<vmem>>, %arg11: memref<16x384xf32, #tpu.memory_space<vmem>>) attributes {dimension_semantics = [#tpu.dimension_semantics<parallel>], iteration_bounds = array<i64: 1>, scalar_prefetch = 0 : i64, scratch_operands = 0 : i64, tpu.core_type = #tpu.core_type<tc>, window_params = [{transform_indices = @transform_0, window_bounds = array<i64: 5, 16, 128>}, {pipeline_mode = #tpu.pipeline_mode<synchronous>, transform_indices = @transform_1, window_bounds = array<i64: 128, 512>}, {pipeline_mode = #tpu.pipeline_mode<synchronous>, transform_indices = @transform_2, window_bounds = array<i64: 1, 512>}, {pipeline_mode = #tpu.pipeline_mode<synchronous>, transform_indices = @transform_3, window_bounds = array<i64: 128, 1536>}, {pipeline_mode = #tpu.pipeline_mode<synchronous>, transform_indices = @transform_4, window_bounds = array<i64: 1, 1536>}, {pipeline_mode = #tpu.pipeline_mode<synchronous>, transform_indices = @transform_5, window_bounds = array<i64: 512, 512>}, {pipeline_mode = #tpu.pipeline_mode<synchronous>, transform_indices = @transform_6, window_bounds = array<i64: 512, 512>}, {pipeline_mode = #tpu.pipeline_mode<synchronous>, transform_indices = @transform_7, window_bounds = array<i64: 1, 512>}, {pipeline_mode = #tpu.pipeline_mode<synchronous>, transform_indices = @transform_8, window_bounds = array<i64: 512, 384>}, {pipeline_mode = #tpu.pipeline_mode<synchronous>, transform_indices = @transform_9, window_bounds = array<i64: 1, 384>}, {transform_indices = @transform_10, window_bounds = array<i64: 16, 384>}]} {
    %c0 = arith.constant 0 : index
    %c0_0 = arith.constant 0 : index
    %c0_1 = arith.constant 0 : index
    %0 = vector.load %arg1[%c0, %c0_0, %c0_1] : memref<5x16x128xbf16, #tpu.memory_space<vmem>>, vector<5x16x128xbf16>
    %1 = vector.shape_cast %0 : vector<5x16x128xbf16> to vector<80x128xbf16>
    %c0_2 = arith.constant 0 : index
    %c0_3 = arith.constant 0 : index
    %2 = vector.load %arg2[%c0_2, %c0_3] : memref<128x512xbf16, #tpu.memory_space<vmem>>, vector<128x512xbf16>
    %cst = arith.constant dense<0.000000e+00> : vector<80x512xf32>
    %3 = tpu.matmul %1, %2, %cst {dimension_numbers = #tpu.dot_dimension_numbers<[1], [0], [0], [1], [0, 0, 1, 1], [], []>} : vector<80x128xbf16>, vector<128x512xbf16>, vector<80x512xf32> -> vector<80x512xf32>
    %c0_4 = arith.constant 0 : index
    %c0_5 = arith.constant 0 : index
    %4 = vector.load %arg3[%c0_4, %c0_5] : memref<1x512xf32, #tpu.memory_space<vmem>>, vector<1x512xf32>
    %5 = vector.broadcast %4 : vector<1x512xf32> to vector<80x512xf32>
    %6 = arith.addf %3, %5 : vector<80x512xf32>
    %c0_6 = arith.constant 0 : index
    %c0_7 = arith.constant 0 : index
    %7 = vector.load %arg4[%c0_6, %c0_7] : memref<128x1536xbf16, #tpu.memory_space<vmem>>, vector<128x1536xbf16>
    %cst_8 = arith.constant dense<0.000000e+00> : vector<80x1536xf32>
    %8 = tpu.matmul %1, %7, %cst_8 {dimension_numbers = #tpu.dot_dimension_numbers<[1], [0], [0], [1], [0, 0, 1, 1], [], []>} : vector<80x128xbf16>, vector<128x1536xbf16>, vector<80x1536xf32> -> vector<80x1536xf32>
    %c0_9 = arith.constant 0 : index
    %c0_10 = arith.constant 0 : index
    %9 = vector.load %arg5[%c0_9, %c0_10] : memref<1x1536xf32, #tpu.memory_space<vmem>>, vector<1x1536xf32>
    %10 = vector.broadcast %9 : vector<1x1536xf32> to vector<80x1536xf32>
    %11 = arith.addf %8, %10 : vector<80x1536xf32>
    %12 = vector.extract_strided_slice %6 {offsets = [0, 0], sizes = [16, 512], strides = [1, 1]} : vector<80x512xf32> to vector<16x512xf32>
    %13 = vector.extract_strided_slice %6 {offsets = [16, 0], sizes = [16, 512], strides = [1, 1]} : vector<80x512xf32> to vector<16x512xf32>
    %14 = vector.extract_strided_slice %6 {offsets = [32, 0], sizes = [16, 512], strides = [1, 1]} : vector<80x512xf32> to vector<16x512xf32>
    %15 = vector.extract_strided_slice %6 {offsets = [48, 0], sizes = [16, 512], strides = [1, 1]} : vector<80x512xf32> to vector<16x512xf32>
    %16 = vector.extract_strided_slice %6 {offsets = [64, 0], sizes = [16, 512], strides = [1, 1]} : vector<80x512xf32> to vector<16x512xf32>
    %17 = vector.extract_strided_slice %11 {offsets = [0, 0], sizes = [16, 512], strides = [1, 1]} : vector<80x1536xf32> to vector<16x512xf32>
    %18 = vector.extract_strided_slice %11 {offsets = [16, 0], sizes = [16, 512], strides = [1, 1]} : vector<80x1536xf32> to vector<16x512xf32>
    %19 = vector.extract_strided_slice %11 {offsets = [32, 0], sizes = [16, 512], strides = [1, 1]} : vector<80x1536xf32> to vector<16x512xf32>
    %20 = vector.extract_strided_slice %11 {offsets = [48, 0], sizes = [16, 512], strides = [1, 1]} : vector<80x1536xf32> to vector<16x512xf32>
    %21 = vector.extract_strided_slice %11 {offsets = [64, 0], sizes = [16, 512], strides = [1, 1]} : vector<80x1536xf32> to vector<16x512xf32>
    %22 = vector.extract_strided_slice %11 {offsets = [0, 512], sizes = [16, 512], strides = [1, 1]} : vector<80x1536xf32> to vector<16x512xf32>
    %23 = vector.extract_strided_slice %11 {offsets = [16, 512], sizes = [16, 512], strides = [1, 1]} : vector<80x1536xf32> to vector<16x512xf32>
    %24 = vector.extract_strided_slice %11 {offsets = [32, 512], sizes = [16, 512], strides = [1, 1]} : vector<80x1536xf32> to vector<16x512xf32>
    %25 = vector.extract_strided_slice %11 {offsets = [48, 512], sizes = [16, 512], strides = [1, 1]} : vector<80x1536xf32> to vector<16x512xf32>
    %26 = vector.extract_strided_slice %11 {offsets = [64, 512], sizes = [16, 512], strides = [1, 1]} : vector<80x1536xf32> to vector<16x512xf32>
    %27 = vector.extract_strided_slice %11 {offsets = [0, 1024], sizes = [16, 512], strides = [1, 1]} : vector<80x1536xf32> to vector<16x512xf32>
    %28 = vector.extract_strided_slice %11 {offsets = [16, 1024], sizes = [16, 512], strides = [1, 1]} : vector<80x1536xf32> to vector<16x512xf32>
    %29 = vector.extract_strided_slice %11 {offsets = [32, 1024], sizes = [16, 512], strides = [1, 1]} : vector<80x1536xf32> to vector<16x512xf32>
    %30 = vector.extract_strided_slice %11 {offsets = [48, 1024], sizes = [16, 512], strides = [1, 1]} : vector<80x1536xf32> to vector<16x512xf32>
    %31 = vector.extract_strided_slice %11 {offsets = [64, 1024], sizes = [16, 512], strides = [1, 1]} : vector<80x1536xf32> to vector<16x512xf32>
    %32 = arith.mulf %17, %22 : vector<16x512xf32>
    %cst_11 = arith.constant dense<0.000000e+00> : vector<16xf32>
    %33 = vector.multi_reduction <add>, %32, %cst_11 [1] : vector<16x512xf32> to vector<16xf32>
    %34 = vector.shape_cast %33 : vector<16xf32> to vector<16x1xf32>
    %35 = arith.mulf %17, %23 : vector<16x512xf32>
    %cst_12 = arith.constant dense<0.000000e+00> : vector<16xf32>
    %36 = vector.multi_reduction <add>, %35, %cst_12 [1] : vector<16x512xf32> to vector<16xf32>
    %37 = vector.shape_cast %36 : vector<16xf32> to vector<16x1xf32>
    %38 = arith.mulf %17, %24 : vector<16x512xf32>
    %cst_13 = arith.constant dense<0.000000e+00> : vector<16xf32>
    %39 = vector.multi_reduction <add>, %38, %cst_13 [1] : vector<16x512xf32> to vector<16xf32>
    %40 = vector.shape_cast %39 : vector<16xf32> to vector<16x1xf32>
    %41 = arith.mulf %17, %25 : vector<16x512xf32>
    %cst_14 = arith.constant dense<0.000000e+00> : vector<16xf32>
    %42 = vector.multi_reduction <add>, %41, %cst_14 [1] : vector<16x512xf32> to vector<16xf32>
    %43 = vector.shape_cast %42 : vector<16xf32> to vector<16x1xf32>
    %44 = arith.mulf %17, %26 : vector<16x512xf32>
    %cst_15 = arith.constant dense<0.000000e+00> : vector<16xf32>
    %45 = vector.multi_reduction <add>, %44, %cst_15 [1] : vector<16x512xf32> to vector<16xf32>
    %46 = vector.shape_cast %45 : vector<16xf32> to vector<16x1xf32>
    %47 = tpu.concatenate %34, %37, %40, %43, %46 in 1 : vector<16x1xf32>, vector<16x1xf32>, vector<16x1xf32>, vector<16x1xf32>, vector<16x1xf32> -> vector<16x5xf32>
    %cst_16 = arith.constant dense<0xFF800000> : vector<16xf32>
    %48 = vector.multi_reduction <maximumf>, %47, %cst_16 [1] : vector<16x5xf32> to vector<16xf32>
    %49 = vector.shape_cast %48 : vector<16xf32> to vector<16x1xf32>
    %50 = vector.broadcast %49 : vector<16x1xf32> to vector<16x5xf32>
    %51 = arith.subf %47, %50 : vector<16x5xf32>
    %52 = math.exp %51 : vector<16x5xf32>
    %cst_17 = arith.constant dense<0.000000e+00> : vector<16xf32>
    %53 = vector.multi_reduction <add>, %52, %cst_17 [1] : vector<16x5xf32> to vector<16xf32>
    %54 = vector.shape_cast %53 : vector<16xf32> to vector<16x1xf32>
    %55 = tpu.reciprocal %54 {approx = true} : vector<16x1xf32> -> vector<16x1xf32>
    %56 = vector.broadcast %55 : vector<16x1xf32> to vector<16x5xf32>
    %57 = arith.mulf %52, %56 : vector<16x5xf32>
    %58 = vector.extract_strided_slice %57 {offsets = [0, 0], sizes = [16, 1], strides = [1, 1]} : vector<16x5xf32> to vector<16x1xf32>
    %59 = vector.broadcast %58 : vector<16x1xf32> to vector<16x512xf32>
    %60 = arith.mulf %59, %27 : vector<16x512xf32>
    %61 = vector.extract_strided_slice %57 {offsets = [0, 1], sizes = [16, 1], strides = [1, 1]} : vector<16x5xf32> to vector<16x1xf32>
    %62 = vector.broadcast %61 : vector<16x1xf32> to vector<16x512xf32>
    %63 = arith.mulf %62, %28 : vector<16x512xf32>
    %64 = arith.addf %60, %63 : vector<16x512xf32>
    %65 = vector.extract_strided_slice %57 {offsets = [0, 2], sizes = [16, 1], strides = [1, 1]} : vector<16x5xf32> to vector<16x1xf32>
    %66 = vector.broadcast %65 : vector<16x1xf32> to vector<16x512xf32>
    %67 = arith.mulf %66, %29 : vector<16x512xf32>
    %68 = arith.addf %64, %67 : vector<16x512xf32>
    %69 = vector.extract_strided_slice %57 {offsets = [0, 3], sizes = [16, 1], strides = [1, 1]} : vector<16x5xf32> to vector<16x1xf32>
    %70 = vector.broadcast %69 : vector<16x1xf32> to vector<16x512xf32>
    %71 = arith.mulf %70, %30 : vector<16x512xf32>
    %72 = arith.addf %68, %71 : vector<16x512xf32>
    %73 = vector.extract_strided_slice %57 {offsets = [0, 4], sizes = [16, 1], strides = [1, 1]} : vector<16x5xf32> to vector<16x1xf32>
    %74 = vector.broadcast %73 : vector<16x1xf32> to vector<16x512xf32>
    %75 = arith.mulf %74, %31 : vector<16x512xf32>
    %76 = arith.addf %72, %75 : vector<16x512xf32>
    %77 = arith.truncf %76 : vector<16x512xf32> to vector<16x512xbf16>
    %c0_18 = arith.constant 0 : index
    %c0_19 = arith.constant 0 : index
    %78 = vector.load %arg6[%c0_18, %c0_19] : memref<512x512xbf16, #tpu.memory_space<vmem>>, vector<512x512xbf16>
    %cst_20 = arith.constant dense<0.000000e+00> : vector<16x512xf32>
    %79 = tpu.matmul %77, %78, %cst_20 {dimension_numbers = #tpu.dot_dimension_numbers<[1], [0], [0], [1], [0, 0, 1, 1], [], []>} : vector<16x512xbf16>, vector<512x512xbf16>, vector<16x512xf32> -> vector<16x512xf32>
    %80 = arith.addf %12, %79 : vector<16x512xf32>
    %cst_21 = arith.constant dense<0.000000e+00> : vector<16xf32>
    %81 = vector.multi_reduction <add>, %80, %cst_21 [1] : vector<16x512xf32> to vector<16xf32>
    %82 = vector.shape_cast %81 : vector<16xf32> to vector<16x1xf32>
    %cst_22 = arith.constant 5.120000e+02 : f32
    %83 = vector.broadcast %cst_22 : f32 to vector<16x1xf32>
    %84 = arith.divf %82, %83 : vector<16x1xf32>
    %85 = vector.broadcast %84 : vector<16x1xf32> to vector<16x512xf32>
    %86 = arith.subf %80, %85 : vector<16x512xf32>
    %87 = arith.mulf %86, %86 : vector<16x512xf32>
    %cst_23 = arith.constant dense<0.000000e+00> : vector<16xf32>
    %88 = vector.multi_reduction <add>, %87, %cst_23 [1] : vector<16x512xf32> to vector<16xf32>
    %89 = vector.shape_cast %88 : vector<16xf32> to vector<16x1xf32>
    %cst_24 = arith.constant 5.120000e+02 : f32
    %90 = vector.broadcast %cst_24 : f32 to vector<16x1xf32>
    %91 = arith.divf %89, %90 : vector<16x1xf32>
    %cst_25 = arith.constant 9.99999974E-6 : f32
    %92 = vector.broadcast %cst_25 : f32 to vector<16x1xf32>
    %93 = arith.addf %91, %92 : vector<16x1xf32>
    %94 = math.rsqrt %93 : vector<16x1xf32>
    %95 = vector.broadcast %94 : vector<16x1xf32> to vector<16x512xf32>
    %96 = arith.mulf %86, %95 : vector<16x512xf32>
    %97 = arith.mulf %18, %22 : vector<16x512xf32>
    %cst_26 = arith.constant dense<0.000000e+00> : vector<16xf32>
    %98 = vector.multi_reduction <add>, %97, %cst_26 [1] : vector<16x512xf32> to vector<16xf32>
    %99 = vector.shape_cast %98 : vector<16xf32> to vector<16x1xf32>
    %100 = arith.mulf %18, %23 : vector<16x512xf32>
    %cst_27 = arith.constant dense<0.000000e+00> : vector<16xf32>
    %101 = vector.multi_reduction <add>, %100, %cst_27 [1] : vector<16x512xf32> to vector<16xf32>
    %102 = vector.shape_cast %101 : vector<16xf32> to vector<16x1xf32>
    %103 = arith.mulf %18, %24 : vector<16x512xf32>
    %cst_28 = arith.constant dense<0.000000e+00> : vector<16xf32>
    %104 = vector.multi_reduction <add>, %103, %cst_28 [1] : vector<16x512xf32> to vector<16xf32>
    %105 = vector.shape_cast %104 : vector<16xf32> to vector<16x1xf32>
    %106 = arith.mulf %18, %25 : vector<16x512xf32>
    %cst_29 = arith.constant dense<0.000000e+00> : vector<16xf32>
    %107 = vector.multi_reduction <add>, %106, %cst_29 [1] : vector<16x512xf32> to vector<16xf32>
    %108 = vector.shape_cast %107 : vector<16xf32> to vector<16x1xf32>
    %109 = arith.mulf %18, %26 : vector<16x512xf32>
    %cst_30 = arith.constant dense<0.000000e+00> : vector<16xf32>
    %110 = vector.multi_reduction <add>, %109, %cst_30 [1] : vector<16x512xf32> to vector<16xf32>
    %111 = vector.shape_cast %110 : vector<16xf32> to vector<16x1xf32>
    %112 = tpu.concatenate %99, %102, %105, %108, %111 in 1 : vector<16x1xf32>, vector<16x1xf32>, vector<16x1xf32>, vector<16x1xf32>, vector<16x1xf32> -> vector<16x5xf32>
    %cst_31 = arith.constant dense<0xFF800000> : vector<16xf32>
    %113 = vector.multi_reduction <maximumf>, %112, %cst_31 [1] : vector<16x5xf32> to vector<16xf32>
    %114 = vector.shape_cast %113 : vector<16xf32> to vector<16x1xf32>
    %115 = vector.broadcast %114 : vector<16x1xf32> to vector<16x5xf32>
    %116 = arith.subf %112, %115 : vector<16x5xf32>
    %117 = math.exp %116 : vector<16x5xf32>
    %cst_32 = arith.constant dense<0.000000e+00> : vector<16xf32>
    %118 = vector.multi_reduction <add>, %117, %cst_32 [1] : vector<16x5xf32> to vector<16xf32>
    %119 = vector.shape_cast %118 : vector<16xf32> to vector<16x1xf32>
    %120 = tpu.reciprocal %119 {approx = true} : vector<16x1xf32> -> vector<16x1xf32>
    %121 = vector.broadcast %120 : vector<16x1xf32> to vector<16x5xf32>
    %122 = arith.mulf %117, %121 : vector<16x5xf32>
    %123 = vector.extract_strided_slice %122 {offsets = [0, 0], sizes = [16, 1], strides = [1, 1]} : vector<16x5xf32> to vector<16x1xf32>
    %124 = vector.broadcast %123 : vector<16x1xf32> to vector<16x512xf32>
    %125 = arith.mulf %124, %27 : vector<16x512xf32>
    %126 = vector.extract_strided_slice %122 {offsets = [0, 1], sizes = [16, 1], strides = [1, 1]} : vector<16x5xf32> to vector<16x1xf32>
    %127 = vector.broadcast %126 : vector<16x1xf32> to vector<16x512xf32>
    %128 = arith.mulf %127, %28 : vector<16x512xf32>
    %129 = arith.addf %125, %128 : vector<16x512xf32>
    %130 = vector.extract_strided_slice %122 {offsets = [0, 2], sizes = [16, 1], strides = [1, 1]} : vector<16x5xf32> to vector<16x1xf32>
    %131 = vector.broadcast %130 : vector<16x1xf32> to vector<16x512xf32>
    %132 = arith.mulf %131, %29 : vector<16x512xf32>
    %133 = arith.addf %129, %132 : vector<16x512xf32>
    %134 = vector.extract_strided_slice %122 {offsets = [0, 3], sizes = [16, 1], strides = [1, 1]} : vector<16x5xf32> to vector<16x1xf32>
    %135 = vector.broadcast %134 : vector<16x1xf32> to vector<16x512xf32>
    %136 = arith.mulf %135, %30 : vector<16x512xf32>
    %137 = arith.addf %133, %136 : vector<16x512xf32>
    %138 = vector.extract_strided_slice %122 {offsets = [0, 4], sizes = [16, 1], strides = [1, 1]} : vector<16x5xf32> to vector<16x1xf32>
    %139 = vector.broadcast %138 : vector<16x1xf32> to vector<16x512xf32>
    %140 = arith.mulf %139, %31 : vector<16x512xf32>
    %141 = arith.addf %137, %140 : vector<16x512xf32>
    %142 = arith.truncf %141 : vector<16x512xf32> to vector<16x512xbf16>
    %c0_33 = arith.constant 0 : index
    %c0_34 = arith.constant 0 : index
    %143 = vector.load %arg6[%c0_33, %c0_34] : memref<512x512xbf16, #tpu.memory_space<vmem>>, vector<512x512xbf16>
    %cst_35 = arith.constant dense<0.000000e+00> : vector<16x512xf32>
    %144 = tpu.matmul %142, %143, %cst_35 {dimension_numbers = #tpu.dot_dimension_numbers<[1], [0], [0], [1], [0, 0, 1, 1], [], []>} : vector<16x512xbf16>, vector<512x512xbf16>, vector<16x512xf32> -> vector<16x512xf32>
    %145 = arith.addf %13, %144 : vector<16x512xf32>
    %cst_36 = arith.constant dense<0.000000e+00> : vector<16xf32>
    %146 = vector.multi_reduction <add>, %145, %cst_36 [1] : vector<16x512xf32> to vector<16xf32>
    %147 = vector.shape_cast %146 : vector<16xf32> to vector<16x1xf32>
    %cst_37 = arith.constant 5.120000e+02 : f32
    %148 = vector.broadcast %cst_37 : f32 to vector<16x1xf32>
    %149 = arith.divf %147, %148 : vector<16x1xf32>
    %150 = vector.broadcast %149 : vector<16x1xf32> to vector<16x512xf32>
    %151 = arith.subf %145, %150 : vector<16x512xf32>
    %152 = arith.mulf %151, %151 : vector<16x512xf32>
    %cst_38 = arith.constant dense<0.000000e+00> : vector<16xf32>
    %153 = vector.multi_reduction <add>, %152, %cst_38 [1] : vector<16x512xf32> to vector<16xf32>
    %154 = vector.shape_cast %153 : vector<16xf32> to vector<16x1xf32>
    %cst_39 = arith.constant 5.120000e+02 : f32
    %155 = vector.broadcast %cst_39 : f32 to vector<16x1xf32>
    %156 = arith.divf %154, %155 : vector<16x1xf32>
    %cst_40 = arith.constant 9.99999974E-6 : f32
    %157 = vector.broadcast %cst_40 : f32 to vector<16x1xf32>
    %158 = arith.addf %156, %157 : vector<16x1xf32>
    %159 = math.rsqrt %158 : vector<16x1xf32>
    %160 = vector.broadcast %159 : vector<16x1xf32> to vector<16x512xf32>
    %161 = arith.mulf %151, %160 : vector<16x512xf32>
    %162 = arith.addf %96, %161 : vector<16x512xf32>
    %163 = arith.mulf %19, %22 : vector<16x512xf32>
    %cst_41 = arith.constant dense<0.000000e+00> : vector<16xf32>
    %164 = vector.multi_reduction <add>, %163, %cst_41 [1] : vector<16x512xf32> to vector<16xf32>
    %165 = vector.shape_cast %164 : vector<16xf32> to vector<16x1xf32>
    %166 = arith.mulf %19, %23 : vector<16x512xf32>
    %cst_42 = arith.constant dense<0.000000e+00> : vector<16xf32>
    %167 = vector.multi_reduction <add>, %166, %cst_42 [1] : vector<16x512xf32> to vector<16xf32>
    %168 = vector.shape_cast %167 : vector<16xf32> to vector<16x1xf32>
    %169 = arith.mulf %19, %24 : vector<16x512xf32>
    %cst_43 = arith.constant dense<0.000000e+00> : vector<16xf32>
    %170 = vector.multi_reduction <add>, %169, %cst_43 [1] : vector<16x512xf32> to vector<16xf32>
    %171 = vector.shape_cast %170 : vector<16xf32> to vector<16x1xf32>
    %172 = arith.mulf %19, %25 : vector<16x512xf32>
    %cst_44 = arith.constant dense<0.000000e+00> : vector<16xf32>
    %173 = vector.multi_reduction <add>, %172, %cst_44 [1] : vector<16x512xf32> to vector<16xf32>
    %174 = vector.shape_cast %173 : vector<16xf32> to vector<16x1xf32>
    %175 = arith.mulf %19, %26 : vector<16x512xf32>
    %cst_45 = arith.constant dense<0.000000e+00> : vector<16xf32>
    %176 = vector.multi_reduction <add>, %175, %cst_45 [1] : vector<16x512xf32> to vector<16xf32>
    %177 = vector.shape_cast %176 : vector<16xf32> to vector<16x1xf32>
    %178 = tpu.concatenate %165, %168, %171, %174, %177 in 1 : vector<16x1xf32>, vector<16x1xf32>, vector<16x1xf32>, vector<16x1xf32>, vector<16x1xf32> -> vector<16x5xf32>
    %cst_46 = arith.constant dense<0xFF800000> : vector<16xf32>
    %179 = vector.multi_reduction <maximumf>, %178, %cst_46 [1] : vector<16x5xf32> to vector<16xf32>
    %180 = vector.shape_cast %179 : vector<16xf32> to vector<16x1xf32>
    %181 = vector.broadcast %180 : vector<16x1xf32> to vector<16x5xf32>
    %182 = arith.subf %178, %181 : vector<16x5xf32>
    %183 = math.exp %182 : vector<16x5xf32>
    %cst_47 = arith.constant dense<0.000000e+00> : vector<16xf32>
    %184 = vector.multi_reduction <add>, %183, %cst_47 [1] : vector<16x5xf32> to vector<16xf32>
    %185 = vector.shape_cast %184 : vector<16xf32> to vector<16x1xf32>
    %186 = tpu.reciprocal %185 {approx = true} : vector<16x1xf32> -> vector<16x1xf32>
    %187 = vector.broadcast %186 : vector<16x1xf32> to vector<16x5xf32>
    %188 = arith.mulf %183, %187 : vector<16x5xf32>
    %189 = vector.extract_strided_slice %188 {offsets = [0, 0], sizes = [16, 1], strides = [1, 1]} : vector<16x5xf32> to vector<16x1xf32>
    %190 = vector.broadcast %189 : vector<16x1xf32> to vector<16x512xf32>
    %191 = arith.mulf %190, %27 : vector<16x512xf32>
    %192 = vector.extract_strided_slice %188 {offsets = [0, 1], sizes = [16, 1], strides = [1, 1]} : vector<16x5xf32> to vector<16x1xf32>
    %193 = vector.broadcast %192 : vector<16x1xf32> to vector<16x512xf32>
    %194 = arith.mulf %193, %28 : vector<16x512xf32>
    %195 = arith.addf %191, %194 : vector<16x512xf32>
    %196 = vector.extract_strided_slice %188 {offsets = [0, 2], sizes = [16, 1], strides = [1, 1]} : vector<16x5xf32> to vector<16x1xf32>
    %197 = vector.broadcast %196 : vector<16x1xf32> to vector<16x512xf32>
    %198 = arith.mulf %197, %29 : vector<16x512xf32>
    %199 = arith.addf %195, %198 : vector<16x512xf32>
    %200 = vector.extract_strided_slice %188 {offsets = [0, 3], sizes = [16, 1], strides = [1, 1]} : vector<16x5xf32> to vector<16x1xf32>
    %201 = vector.broadcast %200 : vector<16x1xf32> to vector<16x512xf32>
    %202 = arith.mulf %201, %30 : vector<16x512xf32>
    %203 = arith.addf %199, %202 : vector<16x512xf32>
    %204 = vector.extract_strided_slice %188 {offsets = [0, 4], sizes = [16, 1], strides = [1, 1]} : vector<16x5xf32> to vector<16x1xf32>
    %205 = vector.broadcast %204 : vector<16x1xf32> to vector<16x512xf32>
    %206 = arith.mulf %205, %31 : vector<16x512xf32>
    %207 = arith.addf %203, %206 : vector<16x512xf32>
    %208 = arith.truncf %207 : vector<16x512xf32> to vector<16x512xbf16>
    %c0_48 = arith.constant 0 : index
    %c0_49 = arith.constant 0 : index
    %209 = vector.load %arg6[%c0_48, %c0_49] : memref<512x512xbf16, #tpu.memory_space<vmem>>, vector<512x512xbf16>
    %cst_50 = arith.constant dense<0.000000e+00> : vector<16x512xf32>
    %210 = tpu.matmul %208, %209, %cst_50 {dimension_numbers = #tpu.dot_dimension_numbers<[1], [0], [0], [1], [0, 0, 1, 1], [], []>} : vector<16x512xbf16>, vector<512x512xbf16>, vector<16x512xf32> -> vector<16x512xf32>
    %211 = arith.addf %14, %210 : vector<16x512xf32>
    %cst_51 = arith.constant dense<0.000000e+00> : vector<16xf32>
    %212 = vector.multi_reduction <add>, %211, %cst_51 [1] : vector<16x512xf32> to vector<16xf32>
    %213 = vector.shape_cast %212 : vector<16xf32> to vector<16x1xf32>
    %cst_52 = arith.constant 5.120000e+02 : f32
    %214 = vector.broadcast %cst_52 : f32 to vector<16x1xf32>
    %215 = arith.divf %213, %214 : vector<16x1xf32>
    %216 = vector.broadcast %215 : vector<16x1xf32> to vector<16x512xf32>
    %217 = arith.subf %211, %216 : vector<16x512xf32>
    %218 = arith.mulf %217, %217 : vector<16x512xf32>
    %cst_53 = arith.constant dense<0.000000e+00> : vector<16xf32>
    %219 = vector.multi_reduction <add>, %218, %cst_53 [1] : vector<16x512xf32> to vector<16xf32>
    %220 = vector.shape_cast %219 : vector<16xf32> to vector<16x1xf32>
    %cst_54 = arith.constant 5.120000e+02 : f32
    %221 = vector.broadcast %cst_54 : f32 to vector<16x1xf32>
    %222 = arith.divf %220, %221 : vector<16x1xf32>
    %cst_55 = arith.constant 9.99999974E-6 : f32
    %223 = vector.broadcast %cst_55 : f32 to vector<16x1xf32>
    %224 = arith.addf %222, %223 : vector<16x1xf32>
    %225 = math.rsqrt %224 : vector<16x1xf32>
    %226 = vector.broadcast %225 : vector<16x1xf32> to vector<16x512xf32>
    %227 = arith.mulf %217, %226 : vector<16x512xf32>
    %228 = arith.addf %162, %227 : vector<16x512xf32>
    %229 = arith.mulf %20, %22 : vector<16x512xf32>
    %cst_56 = arith.constant dense<0.000000e+00> : vector<16xf32>
    %230 = vector.multi_reduction <add>, %229, %cst_56 [1] : vector<16x512xf32> to vector<16xf32>
    %231 = vector.shape_cast %230 : vector<16xf32> to vector<16x1xf32>
    %232 = arith.mulf %20, %23 : vector<16x512xf32>
    %cst_57 = arith.constant dense<0.000000e+00> : vector<16xf32>
    %233 = vector.multi_reduction <add>, %232, %cst_57 [1] : vector<16x512xf32> to vector<16xf32>
    %234 = vector.shape_cast %233 : vector<16xf32> to vector<16x1xf32>
    %235 = arith.mulf %20, %24 : vector<16x512xf32>
    %cst_58 = arith.constant dense<0.000000e+00> : vector<16xf32>
    %236 = vector.multi_reduction <add>, %235, %cst_58 [1] : vector<16x512xf32> to vector<16xf32>
    %237 = vector.shape_cast %236 : vector<16xf32> to vector<16x1xf32>
    %238 = arith.mulf %20, %25 : vector<16x512xf32>
    %cst_59 = arith.constant dense<0.000000e+00> : vector<16xf32>
    %239 = vector.multi_reduction <add>, %238, %cst_59 [1] : vector<16x512xf32> to vector<16xf32>
    %240 = vector.shape_cast %239 : vector<16xf32> to vector<16x1xf32>
    %241 = arith.mulf %20, %26 : vector<16x512xf32>
    %cst_60 = arith.constant dense<0.000000e+00> : vector<16xf32>
    %242 = vector.multi_reduction <add>, %241, %cst_60 [1] : vector<16x512xf32> to vector<16xf32>
    %243 = vector.shape_cast %242 : vector<16xf32> to vector<16x1xf32>
    %244 = tpu.concatenate %231, %234, %237, %240, %243 in 1 : vector<16x1xf32>, vector<16x1xf32>, vector<16x1xf32>, vector<16x1xf32>, vector<16x1xf32> -> vector<16x5xf32>
    %cst_61 = arith.constant dense<0xFF800000> : vector<16xf32>
    %245 = vector.multi_reduction <maximumf>, %244, %cst_61 [1] : vector<16x5xf32> to vector<16xf32>
    %246 = vector.shape_cast %245 : vector<16xf32> to vector<16x1xf32>
    %247 = vector.broadcast %246 : vector<16x1xf32> to vector<16x5xf32>
    %248 = arith.subf %244, %247 : vector<16x5xf32>
    %249 = math.exp %248 : vector<16x5xf32>
    %cst_62 = arith.constant dense<0.000000e+00> : vector<16xf32>
    %250 = vector.multi_reduction <add>, %249, %cst_62 [1] : vector<16x5xf32> to vector<16xf32>
    %251 = vector.shape_cast %250 : vector<16xf32> to vector<16x1xf32>
    %252 = tpu.reciprocal %251 {approx = true} : vector<16x1xf32> -> vector<16x1xf32>
    %253 = vector.broadcast %252 : vector<16x1xf32> to vector<16x5xf32>
    %254 = arith.mulf %249, %253 : vector<16x5xf32>
    %255 = vector.extract_strided_slice %254 {offsets = [0, 0], sizes = [16, 1], strides = [1, 1]} : vector<16x5xf32> to vector<16x1xf32>
    %256 = vector.broadcast %255 : vector<16x1xf32> to vector<16x512xf32>
    %257 = arith.mulf %256, %27 : vector<16x512xf32>
    %258 = vector.extract_strided_slice %254 {offsets = [0, 1], sizes = [16, 1], strides = [1, 1]} : vector<16x5xf32> to vector<16x1xf32>
    %259 = vector.broadcast %258 : vector<16x1xf32> to vector<16x512xf32>
    %260 = arith.mulf %259, %28 : vector<16x512xf32>
    %261 = arith.addf %257, %260 : vector<16x512xf32>
    %262 = vector.extract_strided_slice %254 {offsets = [0, 2], sizes = [16, 1], strides = [1, 1]} : vector<16x5xf32> to vector<16x1xf32>
    %263 = vector.broadcast %262 : vector<16x1xf32> to vector<16x512xf32>
    %264 = arith.mulf %263, %29 : vector<16x512xf32>
    %265 = arith.addf %261, %264 : vector<16x512xf32>
    %266 = vector.extract_strided_slice %254 {offsets = [0, 3], sizes = [16, 1], strides = [1, 1]} : vector<16x5xf32> to vector<16x1xf32>
    %267 = vector.broadcast %266 : vector<16x1xf32> to vector<16x512xf32>
    %268 = arith.mulf %267, %30 : vector<16x512xf32>
    %269 = arith.addf %265, %268 : vector<16x512xf32>
    %270 = vector.extract_strided_slice %254 {offsets = [0, 4], sizes = [16, 1], strides = [1, 1]} : vector<16x5xf32> to vector<16x1xf32>
    %271 = vector.broadcast %270 : vector<16x1xf32> to vector<16x512xf32>
    %272 = arith.mulf %271, %31 : vector<16x512xf32>
    %273 = arith.addf %269, %272 : vector<16x512xf32>
    %274 = arith.truncf %273 : vector<16x512xf32> to vector<16x512xbf16>
    %c0_63 = arith.constant 0 : index
    %c0_64 = arith.constant 0 : index
    %275 = vector.load %arg6[%c0_63, %c0_64] : memref<512x512xbf16, #tpu.memory_space<vmem>>, vector<512x512xbf16>
    %cst_65 = arith.constant dense<0.000000e+00> : vector<16x512xf32>
    %276 = tpu.matmul %274, %275, %cst_65 {dimension_numbers = #tpu.dot_dimension_numbers<[1], [0], [0], [1], [0, 0, 1, 1], [], []>} : vector<16x512xbf16>, vector<512x512xbf16>, vector<16x512xf32> -> vector<16x512xf32>
    %277 = arith.addf %15, %276 : vector<16x512xf32>
    %cst_66 = arith.constant dense<0.000000e+00> : vector<16xf32>
    %278 = vector.multi_reduction <add>, %277, %cst_66 [1] : vector<16x512xf32> to vector<16xf32>
    %279 = vector.shape_cast %278 : vector<16xf32> to vector<16x1xf32>
    %cst_67 = arith.constant 5.120000e+02 : f32
    %280 = vector.broadcast %cst_67 : f32 to vector<16x1xf32>
    %281 = arith.divf %279, %280 : vector<16x1xf32>
    %282 = vector.broadcast %281 : vector<16x1xf32> to vector<16x512xf32>
    %283 = arith.subf %277, %282 : vector<16x512xf32>
    %284 = arith.mulf %283, %283 : vector<16x512xf32>
    %cst_68 = arith.constant dense<0.000000e+00> : vector<16xf32>
    %285 = vector.multi_reduction <add>, %284, %cst_68 [1] : vector<16x512xf32> to vector<16xf32>
    %286 = vector.shape_cast %285 : vector<16xf32> to vector<16x1xf32>
    %cst_69 = arith.constant 5.120000e+02 : f32
    %287 = vector.broadcast %cst_69 : f32 to vector<16x1xf32>
    %288 = arith.divf %286, %287 : vector<16x1xf32>
    %cst_70 = arith.constant 9.99999974E-6 : f32
    %289 = vector.broadcast %cst_70 : f32 to vector<16x1xf32>
    %290 = arith.addf %288, %289 : vector<16x1xf32>
    %291 = math.rsqrt %290 : vector<16x1xf32>
    %292 = vector.broadcast %291 : vector<16x1xf32> to vector<16x512xf32>
    %293 = arith.mulf %283, %292 : vector<16x512xf32>
    %294 = arith.addf %228, %293 : vector<16x512xf32>
    %295 = arith.mulf %21, %22 : vector<16x512xf32>
    %cst_71 = arith.constant dense<0.000000e+00> : vector<16xf32>
    %296 = vector.multi_reduction <add>, %295, %cst_71 [1] : vector<16x512xf32> to vector<16xf32>
    %297 = vector.shape_cast %296 : vector<16xf32> to vector<16x1xf32>
    %298 = arith.mulf %21, %23 : vector<16x512xf32>
    %cst_72 = arith.constant dense<0.000000e+00> : vector<16xf32>
    %299 = vector.multi_reduction <add>, %298, %cst_72 [1] : vector<16x512xf32> to vector<16xf32>
    %300 = vector.shape_cast %299 : vector<16xf32> to vector<16x1xf32>
    %301 = arith.mulf %21, %24 : vector<16x512xf32>
    %cst_73 = arith.constant dense<0.000000e+00> : vector<16xf32>
    %302 = vector.multi_reduction <add>, %301, %cst_73 [1] : vector<16x512xf32> to vector<16xf32>
    %303 = vector.shape_cast %302 : vector<16xf32> to vector<16x1xf32>
    %304 = arith.mulf %21, %25 : vector<16x512xf32>
    %cst_74 = arith.constant dense<0.000000e+00> : vector<16xf32>
    %305 = vector.multi_reduction <add>, %304, %cst_74 [1] : vector<16x512xf32> to vector<16xf32>
    %306 = vector.shape_cast %305 : vector<16xf32> to vector<16x1xf32>
    %307 = arith.mulf %21, %26 : vector<16x512xf32>
    %cst_75 = arith.constant dense<0.000000e+00> : vector<16xf32>
    %308 = vector.multi_reduction <add>, %307, %cst_75 [1] : vector<16x512xf32> to vector<16xf32>
    %309 = vector.shape_cast %308 : vector<16xf32> to vector<16x1xf32>
    %310 = tpu.concatenate %297, %300, %303, %306, %309 in 1 : vector<16x1xf32>, vector<16x1xf32>, vector<16x1xf32>, vector<16x1xf32>, vector<16x1xf32> -> vector<16x5xf32>
    %cst_76 = arith.constant dense<0xFF800000> : vector<16xf32>
    %311 = vector.multi_reduction <maximumf>, %310, %cst_76 [1] : vector<16x5xf32> to vector<16xf32>
    %312 = vector.shape_cast %311 : vector<16xf32> to vector<16x1xf32>
    %313 = vector.broadcast %312 : vector<16x1xf32> to vector<16x5xf32>
    %314 = arith.subf %310, %313 : vector<16x5xf32>
    %315 = math.exp %314 : vector<16x5xf32>
    %cst_77 = arith.constant dense<0.000000e+00> : vector<16xf32>
    %316 = vector.multi_reduction <add>, %315, %cst_77 [1] : vector<16x5xf32> to vector<16xf32>
    %317 = vector.shape_cast %316 : vector<16xf32> to vector<16x1xf32>
    %318 = tpu.reciprocal %317 {approx = true} : vector<16x1xf32> -> vector<16x1xf32>
    %319 = vector.broadcast %318 : vector<16x1xf32> to vector<16x5xf32>
    %320 = arith.mulf %315, %319 : vector<16x5xf32>
    %321 = vector.extract_strided_slice %320 {offsets = [0, 0], sizes = [16, 1], strides = [1, 1]} : vector<16x5xf32> to vector<16x1xf32>
    %322 = vector.broadcast %321 : vector<16x1xf32> to vector<16x512xf32>
    %323 = arith.mulf %322, %27 : vector<16x512xf32>
    %324 = vector.extract_strided_slice %320 {offsets = [0, 1], sizes = [16, 1], strides = [1, 1]} : vector<16x5xf32> to vector<16x1xf32>
    %325 = vector.broadcast %324 : vector<16x1xf32> to vector<16x512xf32>
    %326 = arith.mulf %325, %28 : vector<16x512xf32>
    %327 = arith.addf %323, %326 : vector<16x512xf32>
    %328 = vector.extract_strided_slice %320 {offsets = [0, 2], sizes = [16, 1], strides = [1, 1]} : vector<16x5xf32> to vector<16x1xf32>
    %329 = vector.broadcast %328 : vector<16x1xf32> to vector<16x512xf32>
    %330 = arith.mulf %329, %29 : vector<16x512xf32>
    %331 = arith.addf %327, %330 : vector<16x512xf32>
    %332 = vector.extract_strided_slice %320 {offsets = [0, 3], sizes = [16, 1], strides = [1, 1]} : vector<16x5xf32> to vector<16x1xf32>
    %333 = vector.broadcast %332 : vector<16x1xf32> to vector<16x512xf32>
    %334 = arith.mulf %333, %30 : vector<16x512xf32>
    %335 = arith.addf %331, %334 : vector<16x512xf32>
    %336 = vector.extract_strided_slice %320 {offsets = [0, 4], sizes = [16, 1], strides = [1, 1]} : vector<16x5xf32> to vector<16x1xf32>
    %337 = vector.broadcast %336 : vector<16x1xf32> to vector<16x512xf32>
    %338 = arith.mulf %337, %31 : vector<16x512xf32>
    %339 = arith.addf %335, %338 : vector<16x512xf32>
    %340 = arith.truncf %339 : vector<16x512xf32> to vector<16x512xbf16>
    %c0_78 = arith.constant 0 : index
    %c0_79 = arith.constant 0 : index
    %341 = vector.load %arg6[%c0_78, %c0_79] : memref<512x512xbf16, #tpu.memory_space<vmem>>, vector<512x512xbf16>
    %cst_80 = arith.constant dense<0.000000e+00> : vector<16x512xf32>
    %342 = tpu.matmul %340, %341, %cst_80 {dimension_numbers = #tpu.dot_dimension_numbers<[1], [0], [0], [1], [0, 0, 1, 1], [], []>} : vector<16x512xbf16>, vector<512x512xbf16>, vector<16x512xf32> -> vector<16x512xf32>
    %343 = arith.addf %16, %342 : vector<16x512xf32>
    %cst_81 = arith.constant dense<0.000000e+00> : vector<16xf32>
    %344 = vector.multi_reduction <add>, %343, %cst_81 [1] : vector<16x512xf32> to vector<16xf32>
    %345 = vector.shape_cast %344 : vector<16xf32> to vector<16x1xf32>
    %cst_82 = arith.constant 5.120000e+02 : f32
    %346 = vector.broadcast %cst_82 : f32 to vector<16x1xf32>
    %347 = arith.divf %345, %346 : vector<16x1xf32>
    %348 = vector.broadcast %347 : vector<16x1xf32> to vector<16x512xf32>
    %349 = arith.subf %343, %348 : vector<16x512xf32>
    %350 = arith.mulf %349, %349 : vector<16x512xf32>
    %cst_83 = arith.constant dense<0.000000e+00> : vector<16xf32>
    %351 = vector.multi_reduction <add>, %350, %cst_83 [1] : vector<16x512xf32> to vector<16xf32>
    %352 = vector.shape_cast %351 : vector<16xf32> to vector<16x1xf32>
    %cst_84 = arith.constant 5.120000e+02 : f32
    %353 = vector.broadcast %cst_84 : f32 to vector<16x1xf32>
    %354 = arith.divf %352, %353 : vector<16x1xf32>
    %cst_85 = arith.constant 9.99999974E-6 : f32
    %355 = vector.broadcast %cst_85 : f32 to vector<16x1xf32>
    %356 = arith.addf %354, %355 : vector<16x1xf32>
    %357 = math.rsqrt %356 : vector<16x1xf32>
    %358 = vector.broadcast %357 : vector<16x1xf32> to vector<16x512xf32>
    %359 = arith.mulf %349, %358 : vector<16x512xf32>
    %360 = arith.addf %294, %359 : vector<16x512xf32>
    %361 = arith.truncf %360 : vector<16x512xf32> to vector<16x512xbf16>
    %c0_86 = arith.constant 0 : index
    %c0_87 = arith.constant 0 : index
    %362 = vector.load %arg7[%c0_86, %c0_87] : memref<512x512xbf16, #tpu.memory_space<vmem>>, vector<512x512xbf16>
    %cst_88 = arith.constant dense<0.000000e+00> : vector<16x512xf32>
    %363 = tpu.matmul %361, %362, %cst_88 {dimension_numbers = #tpu.dot_dimension_numbers<[1], [0], [0], [1], [0, 0, 1, 1], [], []>} : vector<16x512xbf16>, vector<512x512xbf16>, vector<16x512xf32> -> vector<16x512xf32>
    %c0_89 = arith.constant 0 : index
    %c0_90 = arith.constant 0 : index
    %364 = vector.load %arg8[%c0_89, %c0_90] : memref<1x512xf32, #tpu.memory_space<vmem>>, vector<1x512xf32>
    %365 = vector.broadcast %364 : vector<1x512xf32> to vector<16x512xf32>
    %366 = arith.addf %363, %365 : vector<16x512xf32>
    %367 = arith.mulf %366, %366 : vector<16x512xf32>
    %368 = arith.mulf %366, %367 : vector<16x512xf32>
    %cst_91 = arith.constant 4.471500e-02 : f32
    %369 = vector.broadcast %cst_91 : f32 to vector<16x512xf32>
    %370 = arith.mulf %369, %368 : vector<16x512xf32>
    %371 = arith.addf %366, %370 : vector<16x512xf32>
    %cst_92 = arith.constant 0.797884583 : f32
    %372 = vector.broadcast %cst_92 : f32 to vector<16x512xf32>
    %373 = arith.mulf %372, %371 : vector<16x512xf32>
    %374 = math.tanh %373 : vector<16x512xf32>
    %cst_93 = arith.constant 1.000000e+00 : f32
    %375 = vector.broadcast %cst_93 : f32 to vector<16x512xf32>
    %376 = arith.addf %375, %374 : vector<16x512xf32>
    %cst_94 = arith.constant 5.000000e-01 : f32
    %377 = vector.broadcast %cst_94 : f32 to vector<16x512xf32>
    %378 = arith.mulf %377, %376 : vector<16x512xf32>
    %379 = arith.mulf %366, %378 : vector<16x512xf32>
    %380 = arith.truncf %379 : vector<16x512xf32> to vector<16x512xbf16>
    %c0_95 = arith.constant 0 : index
    %c0_96 = arith.constant 0 : index
    %381 = vector.load %arg9[%c0_95, %c0_96] : memref<512x384xbf16, #tpu.memory_space<vmem>>, vector<512x384xbf16>
    %cst_97 = arith.constant dense<0.000000e+00> : vector<16x384xf32>
    %382 = tpu.matmul %380, %381, %cst_97 {dimension_numbers = #tpu.dot_dimension_numbers<[1], [0], [0], [1], [0, 0, 1, 1], [], []>} : vector<16x512xbf16>, vector<512x384xbf16>, vector<16x384xf32> -> vector<16x384xf32>
    %c0_98 = arith.constant 0 : index
    %c0_99 = arith.constant 0 : index
    %383 = vector.load %arg10[%c0_98, %c0_99] : memref<1x384xf32, #tpu.memory_space<vmem>>, vector<1x384xf32>
    %384 = vector.broadcast %383 : vector<1x384xf32> to vector<16x384xf32>
    %385 = arith.addf %382, %384 : vector<16x384xf32>
    %c0_100 = arith.constant 0 : index
    %c0_101 = arith.constant 0 : index
    %386 = vector.load %arg11[%c0_100, %c0_101] : memref<16x384xf32, #tpu.memory_space<vmem>>, vector<16x384xf32>
    tpu.vector_store %arg11[%c0_100, %c0_101], %385 {strides = array<i32>} : memref<16x384xf32, #tpu.memory_space<vmem>>, vector<16x384xf32>,
    return
  }
  func.func @transform_0(%arg0: i32) -> (i32, i32, i32) {
    %c0_i32 = arith.constant 0 : i32
    %c0_i32_0 = arith.constant 0 : i32
    %c0_i32_1 = arith.constant 0 : i32
    return %c0_i32, %arg0, %c0_i32_0 : i32, i32, i32
  }
  func.func @transform_1(%arg0: i32) -> (i32, i32) {
    %c0_i32 = arith.constant 0 : i32
    %c0_i32_0 = arith.constant 0 : i32
    %c0_i32_1 = arith.constant 0 : i32
    return %c0_i32, %c0_i32_0 : i32, i32
  }
  func.func @transform_2(%arg0: i32) -> (i32, i32) {
    %c0_i32 = arith.constant 0 : i32
    %c0_i32_0 = arith.constant 0 : i32
    %c0_i32_1 = arith.constant 0 : i32
    return %c0_i32, %c0_i32_0 : i32, i32
  }
  func.func @transform_3(%arg0: i32) -> (i32, i32) {
    %c0_i32 = arith.constant 0 : i32
    %c0_i32_0 = arith.constant 0 : i32
    %c0_i32_1 = arith.constant 0 : i32
    return %c0_i32, %c0_i32_0 : i32, i32
  }
  func.func @transform_4(%arg0: i32) -> (i32, i32) {
    %c0_i32 = arith.constant 0 : i32
    %c0_i32_0 = arith.constant 0 : i32
    %c0_i32_1 = arith.constant 0 : i32
    return %c0_i32, %c0_i32_0 : i32, i32
  }
  func.func @transform_5(%arg0: i32) -> (i32, i32) {
    %c0_i32 = arith.constant 0 : i32
    %c0_i32_0 = arith.constant 0 : i32
    %c0_i32_1 = arith.constant 0 : i32
    return %c0_i32, %c0_i32_0 : i32, i32
  }
  func.func @transform_6(%arg0: i32) -> (i32, i32) {
    %c0_i32 = arith.constant 0 : i32
    %c0_i32_0 = arith.constant 0 : i32
    %c0_i32_1 = arith.constant 0 : i32
    return %c0_i32, %c0_i32_0 : i32, i32
  }
  func.func @transform_7(%arg0: i32) -> (i32, i32) {
    %c0_i32 = arith.constant 0 : i32
    %c0_i32_0 = arith.constant 0 : i32
    %c0_i32_1 = arith.constant 0 : i32
    return %c0_i32, %c0_i32_0 : i32, i32
  }
  func.func @transform_8(%arg0: i32) -> (i32, i32) {
    %c0_i32 = arith.constant 0 : i32
    %c0_i32_0 = arith.constant 0 : i32
    %c0_i32_1 = arith.constant 0 : i32
    return %c0_i32, %c0_i32_0 : i32, i32
  }
  func.func @transform_9(%arg0: i32) -> (i32, i32) {
    %c0_i32 = arith.constant 0 : i32
    %c0_i32_0 = arith.constant 0 : i32
    %c0_i32_1 = arith.constant 0 : i32
    return %c0_i32, %c0_i32_0 : i32, i32
  }
  func.func @transform_10(%arg0: i32) -> (i32, i32) {
    %c0_i32 = arith.constant 0 : i32
    %c0_i32_0 = arith.constant 0 : i32
    return %arg0, %c0_i32 : i32, i32
  }
}

</mosaic_0001>

<llo_original>
// kernel: emg_to_eeg_forward.1
$region0: #{emg_to_eeg_forward.1}
  #allocation0 [shape = 'u32[]', space=smem, size = 0x4, offset = 0x4, fixed_abs, tag = 'smem constant byte address 0x4 - core index']
  #allocation1 [shape = 'u32[144,128]{1,0:T(1,128)}', space=vmem, size = 0x12000, scoped, tag = 'internal scratch']
  %s0 = inlined_call_operand.vmem [shape: bf16[5,16,128], index: 0, kind: input, shape index: {}]
  %s1 = inlined_call_operand.vmem [shape: bf16[128,512], index: 1, kind: input, shape index: {}]
  %s2 = inlined_call_operand.vmem [shape: f32[1,512], index: 2, kind: input, shape index: {}]
  %s3 = inlined_call_operand.vmem [shape: bf16[128,1536], index: 3, kind: input, shape index: {}]
  %s4 = inlined_call_operand.vmem [shape: f32[1,1536], index: 4, kind: input, shape index: {}]
  %s5 = inlined_call_operand.vmem [shape: bf16[512,512], index: 5, kind: input, shape index: {}]
  %s6 = inlined_call_operand.vmem [shape: bf16[512,512], index: 6, kind: input, shape index: {}]
  %s7 = inlined_call_operand.vmem [shape: f32[1,512], index: 7, kind: input, shape index: {}]
  %s8 = inlined_call_operand.vmem [shape: bf16[512,384], index: 8, kind: input, shape index: {}]
  %s9 = inlined_call_operand.vmem [shape: f32[1,384], index: 9, kind: input, shape index: {}]
  %s10 = inlined_call_operand.vmem [shape: f32[16,384], index: 10, kind: output, shape index: {}]
  %s11 = sld [smem:[#allocation0]]
  $region50: #{emg_to_eeg_forward.1} parent=0
    _
  %s13 = ssub.s32 1, %s11
  %s14 = scalar_select 0, %s13, %s11
  // Predicated region
  $region2: #{emg_to_eeg_forward.1} parent=0 // pred_check
    _
  $region3: #{emg_to_eeg_forward.1} parent=0 // pred_check_branch
    %16 = sbr.rel (0) target = $region5
  $region4: #{emg_to_eeg_forward.1} parent=0 // pred_region
    _
  $region5: #{emg_to_eeg_forward.1} parent=0 // pred_fallthru
    _
  // Predicated region
  $region6: #{emg_to_eeg_forward.1} parent=0 // pred_check
    _
  $region7: #{emg_to_eeg_forward.1} parent=0 // pred_check_branch
    %18 = sbr.rel (0) target = $region9
  $region8: #{emg_to_eeg_forward.1} parent=0 // pred_region
    _
  $region9: #{emg_to_eeg_forward.1} parent=0 // pred_fallthru
    _
  // Predicated region
  $region10: #{emg_to_eeg_forward.1} parent=0 // pred_check
    _
  $region11: #{emg_to_eeg_forward.1} parent=0 // pred_check_branch
    %20 = sbr.rel (0) target = $region13
  $region12: #{emg_to_eeg_forward.1} parent=0 // pred_region
    _
  $region13: #{emg_to_eeg_forward.1} parent=0 // pred_fallthru
    _
  // Predicated region
  $region14: #{emg_to_eeg_forward.1} parent=0 // pred_check
    _
  $region15: #{emg_to_eeg_forward.1} parent=0 // pred_check_branch
    %22 = sbr.rel (0) target = $region17
  $region16: #{emg_to_eeg_forward.1} parent=0 // pred_region
    _
  $region17: #{emg_to_eeg_forward.1} parent=0 // pred_fallthru
    _
  // Predicated region
  $region18: #{emg_to_eeg_forward.1} parent=0 // pred_check
    _
  $region19: #{emg_to_eeg_forward.1} parent=0 // pred_check_branch
    %24 = sbr.rel (0) target = $region21
  $region20: #{emg_to_eeg_forward.1} parent=0 // pred_region
    _
  $region21: #{emg_to_eeg_forward.1} parent=0 // pred_fallthru
    _
  // Predicated region
  $region22: #{emg_to_eeg_forward.1} parent=0 // pred_check
    _
  $region23: #{emg_to_eeg_forward.1} parent=0 // pred_check_branch
    %26 = sbr.rel (0) target = $region25
  $region24: #{emg_to_eeg_forward.1} parent=0 // pred_region
    _
  $region25: #{emg_to_eeg_forward.1} parent=0 // pred_fallthru
    _
  // Predicated region
  $region26: #{emg_to_eeg_forward.1} parent=0 // pred_check
    _
  $region27: #{emg_to_eeg_forward.1} parent=0 // pred_check_branch
    %28 = sbr.rel (0) target = $region29
  $region28: #{emg_to_eeg_forward.1} parent=0 // pred_region
    _
  $region29: #{emg_to_eeg_forward.1} parent=0 // pred_fallthru
    _
  // Predicated region
  $region30: #{emg_to_eeg_forward.1} parent=0 // pred_check
    _
  $region31: #{emg_to_eeg_forward.1} parent=0 // pred_check_branch
    %30 = sbr.rel (0) target = $region33
  $region32: #{emg_to_eeg_forward.1} parent=0 // pred_region
    _
  $region33: #{emg_to_eeg_forward.1} parent=0 // pred_fallthru
    _
  // Predicated region
  $region34: #{emg_to_eeg_forward.1} parent=0 // pred_check
    _
  $region35: #{emg_to_eeg_forward.1} parent=0 // pred_check_branch
    %32 = sbr.rel (0) target = $region37
  $region36: #{emg_to_eeg_forward.1} parent=0 // pred_region
    _
  $region37: #{emg_to_eeg_forward.1} parent=0 // pred_fallthru
    _
  // Predicated region
  $region38: #{emg_to_eeg_forward.1} parent=0 // pred_check
    _
  $region39: #{emg_to_eeg_forward.1} parent=0 // pred_check_branch
    %34 = sbr.rel (0) target = $region41
  $region40: #{emg_to_eeg_forward.1} parent=0 // pred_region
    _
  $region41: #{emg_to_eeg_forward.1} parent=0 // pred_fallthru
    _
  %v36 = vld [vmem:[%s0] sm:$0xf]
  %v37 = vld [vmem:[%s0 + $0x4] sm:$0xf]
  %v38 = vld [vmem:[%s0 + $0x8] sm:$0xf]
  %v39 = vld [vmem:[%s0 + $0xc] sm:$0xf]
  %v40 = vld [vmem:[%s0 + $0x10] sm:$0xf]
  %v41 = vld [vmem:[%s0 + $0x14] sm:$0xf]
  %v42 = vld [vmem:[%s0 + $0x18] sm:$0xf]
  %v43 = vld [vmem:[%s0 + $0x1c] sm:$0xf]
  %v44 = vld [vmem:[%s0 + $0x20] sm:$0xf]
  %v45 = vld [vmem:[%s0 + $0x24] sm:$0xf]
  %v46 = vld [vmem:[%s1] sm:$0xff]
  %v47 = vld [vmem:[%s1 + $0x8] sm:$0xff]
  %v48 = vld [vmem:[%s1 + $0x10] sm:$0xff]
  %v49 = vld [vmem:[%s1 + $0x18] sm:$0xff]
  %v50 = vld [vmem:[%s1 + $0x20] sm:$0xff]
  %v51 = vld [vmem:[%s1 + $0x28] sm:$0xff]
  %v52 = vld [vmem:[%s1 + $0x30] sm:$0xff]
  %v53 = vld [vmem:[%s1 + $0x38] sm:$0xff]
  %v54 = vld [vmem:[%s1 + $0x40] sm:$0xff]
  %v55 = vld [vmem:[%s1 + $0x48] sm:$0xff]
  %v56 = vld [vmem:[%s1 + $0x50] sm:$0xff]
  %v57 = vld [vmem:[%s1 + $0x58] sm:$0xff]
  %v58 = vld [vmem:[%s1 + $0x60] sm:$0xff]
  %v59 = vld [vmem:[%s1 + $0x68] sm:$0xff]
  %v60 = vld [vmem:[%s1 + $0x70] sm:$0xff]
  %v61 = vld [vmem:[%s1 + $0x78] sm:$0xff]
  %v62 = vld [vmem:[%s1 + $0x80] sm:$0xff]
  %v63 = vld [vmem:[%s1 + $0x88] sm:$0xff]
  %v64 = vld [vmem:[%s1 + $0x90] sm:$0xff]
  %v65 = vld [vmem:[%s1 + $0x98] sm:$0xff]
  %v66 = vld [vmem:[%s1 + $0xa0] sm:$0xff]
  %v67 = vld [vmem:[%s1 + $0xa8] sm:$0xff]
  %v68 = vld [vmem:[%s1 + $0xb0] sm:$0xff]
  %v69 = vld [vmem:[%s1 + $0xb8] sm:$0xff]
  %v70 = vld [vmem:[%s1 + $0xc0] sm:$0xff]
  %v71 = vld [vmem:[%s1 + $0xc8] sm:$0xff]
  %v72 = vld [vmem:[%s1 + $0xd0] sm:$0xff]
  %v73 = vld [vmem:[%s1 + $0xd8] sm:$0xff]
  %v74 = vld [vmem:[%s1 + $0xe0] sm:$0xff]
  %v75 = vld [vmem:[%s1 + $0xe8] sm:$0xff]
  %v76 = vld [vmem:[%s1 + $0xf0] sm:$0xff]
  %v77 = vld [vmem:[%s1 + $0xf8] sm:$0xff]
  %v78 = vld [vmem:[%s2] sm:$0xf]
  %v80 = vlaneseq
  %v81 = vshrl.u32 %v80, 7
  %v82 = vsub.s32 0, %v81
  %v83 = vrot.slane %v78, %v82
  %v84 = vlaneseq
  %v85 = vshrl.u32 %v84, 7
  %v86 = vsub.s32 1, %v85
  %v87 = vrot.slane %v78, %v86
  %v88 = vlaneseq
  %v89 = vshrl.u32 %v88, 7
  %v90 = vsub.s32 2, %v89
  %v91 = vrot.slane %v78, %v90
  %v92 = vlaneseq
  %v93 = vshrl.u32 %v92, 7
  %v94 = vsub.s32 3, %v93
  %v95 = vrot.slane %v78, %v94
  %v110 = vunpack.c.l.b16 %v36
  %v111 = vunpack.c.l.b16 %v37
  %v112 = vunpack.c.l.b16 %v38
  %v113 = vunpack.c.l.b16 %v39
  %v114 = vunpack.c.l.b16 %v40
  %v115 = vunpack.c.l.b16 %v41
  %v116 = vunpack.c.l.b16 %v42
  %v117 = vunpack.c.l.b16 %v43
  %v118 = vunpack.c.l.b16 %v44
  %v119 = vunpack.c.l.b16 %v45
  %v120 = vpack.c.b16 %v111, %v110
  %v121 = vpack.c.b16 %v113, %v112
  %v122 = vpack.c.b16 %v115, %v114
  %v123 = vpack.c.b16 %v117, %v116
  %v124 = vpack.c.b16 %v119, %v118
  %v162 = vunpack.c.l.b16 %v46
  %v163 = vunpack.c.h.b16 %v46
  %v164 = vunpack.c.l.b16 %v47
  %v165 = vunpack.c.h.b16 %v47
  %v166 = vunpack.c.l.b16 %v48
  %v167 = vunpack.c.h.b16 %v48
  %v168 = vunpack.c.l.b16 %v49
  %v169 = vunpack.c.h.b16 %v49
  %v170 = vunpack.c.l.b16 %v50
  %v171 = vunpack.c.h.b16 %v50
  %v172 = vunpack.c.l.b16 %v51
  %v173 = vunpack.c.h.b16 %v51
  %v174 = vunpack.c.l.b16 %v52
  %v175 = vunpack.c.h.b16 %v52
  %v176 = vunpack.c.l.b16 %v53
  %v177 = vunpack.c.h.b16 %v53
  %v178 = vunpack.c.l.b16 %v54
  %v179 = vunpack.c.h.b16 %v54
  %v180 = vunpack.c.l.b16 %v55
  %v181 = vunpack.c.h.b16 %v55
  %v182 = vunpack.c.l.b16 %v56
  %v183 = vunpack.c.h.b16 %v56
  %v184 = vunpack.c.l.b16 %v57
  %v185 = vunpack.c.h.b16 %v57
  %v186 = vunpack.c.l.b16 %v58
  %v187 = vunpack.c.h.b16 %v58
  %v188 = vunpack.c.l.b16 %v59
  %v189 = vunpack.c.h.b16 %v59
  %v190 = vunpack.c.l.b16 %v60
  %v191 = vunpack.c.h.b16 %v60
  %v192 = vunpack.c.l.b16 %v61
  %v193 = vunpack.c.h.b16 %v61
  %v194 = vunpack.c.l.b16 %v62
  %v195 = vunpack.c.h.b16 %v62
  %v196 = vunpack.c.l.b16 %v63
  %v197 = vunpack.c.h.b16 %v63
  %v198 = vunpack.c.l.b16 %v64
  %v199 = vunpack.c.h.b16 %v64
  %v200 = vunpack.c.l.b16 %v65
  %v201 = vunpack.c.h.b16 %v65
  %v202 = vunpack.c.l.b16 %v66
  %v203 = vunpack.c.h.b16 %v66
  %v204 = vunpack.c.l.b16 %v67
  %v205 = vunpack.c.h.b16 %v67
  %v206 = vunpack.c.l.b16 %v68
  %v207 = vunpack.c.h.b16 %v68
  %v208 = vunpack.c.l.b16 %v69
  %v209 = vunpack.c.h.b16 %v69
  %v210 = vunpack.c.l.b16 %v70
  %v211 = vunpack.c.h.b16 %v70
  %v212 = vunpack.c.l.b16 %v71
  %v213 = vunpack.c.h.b16 %v71
  %v214 = vunpack.c.l.b16 %v72
  %v215 = vunpack.c.h.b16 %v72
  %v216 = vunpack.c.l.b16 %v73
  %v217 = vunpack.c.h.b16 %v73
  %v218 = vunpack.c.l.b16 %v74
  %v219 = vunpack.c.h.b16 %v74
  %v220 = vunpack.c.l.b16 %v75
  %v221 = vunpack.c.h.b16 %v75
  %v222 = vunpack.c.l.b16 %v76
  %v223 = vunpack.c.h.b16 %v76
  %v224 = vunpack.c.l.b16 %v77
  %v225 = vunpack.c.h.b16 %v77
  %v226 = vpack.c.b16 %v166, %v162
  %v227 = vpack.c.b16 %v167, %v163
  %v228 = vpack.c.b16 %v168, %v164
  %v229 = vpack.c.b16 %v169, %v165
  %v230 = vpack.c.b16 %v174, %v170
  %v231 = vpack.c.b16 %v175, %v171
  %v232 = vpack.c.b16 %v176, %v172
  %v233 = vpack.c.b16 %v177, %v173
  %v234 = vpack.c.b16 %v182, %v178
  %v235 = vpack.c.b16 %v183, %v179
  %v236 = vpack.c.b16 %v184, %v180
  %v237 = vpack.c.b16 %v185, %v181
  %v238 = vpack.c.b16 %v190, %v186
  %v239 = vpack.c.b16 %v191, %v187
  %v240 = vpack.c.b16 %v192, %v188
  %v241 = vpack.c.b16 %v193, %v189
  %v242 = vpack.c.b16 %v198, %v194
  %v243 = vpack.c.b16 %v199, %v195
  %v244 = vpack.c.b16 %v200, %v196
  %v245 = vpack.c.b16 %v201, %v197
  %v246 = vpack.c.b16 %v206, %v202
  %v247 = vpack.c.b16 %v207, %v203
  %v248 = vpack.c.b16 %v208, %v204
  %v249 = vpack.c.b16 %v209, %v205
  %v250 = vpack.c.b16 %v214, %v210
  %v251 = vpack.c.b16 %v215, %v211
  %v252 = vpack.c.b16 %v216, %v212
  %v253 = vpack.c.b16 %v217, %v213
  %v254 = vpack.c.b16 %v222, %v218
  %v255 = vpack.c.b16 %v223, %v219
  %v256 = vpack.c.b16 %v224, %v220
  %v257 = vpack.c.b16 %v225, %v221
  %290 = vmatprep.subr.bf16.mxu0 %v255
  %291 = vmatpush1.bf16.msra.mxu0 %v254
  %292 = vmatprep.subr.bf16.mxu0 %v251
  %293 = vmatpush1.bf16.msra.mxu0 %v250
  %294 = vmatprep.subr.bf16.mxu0 %v247
  %295 = vmatpush1.bf16.msra.mxu0 %v246
  %296 = vmatprep.subr.bf16.mxu0 %v243
  %297 = vmatpush1.bf16.msra.mxu0 %v242
  %298 = vmatprep.subr.bf16.mxu0 %v239
  %299 = vmatpush1.bf16.msra.mxu0 %v238
  %300 = vmatprep.subr.bf16.mxu0 %v235
  %301 = vmatpush1.bf16.msra.mxu0 %v234
  %302 = vmatprep.subr.bf16.mxu0 %v231
  %303 = vmatpush1.bf16.msra.mxu0 %v230
  %304 = vmatprep.subr.bf16.mxu0 %v227
  %305 = vmatpush1.bf16.msra.mxu0 %v226
  %306 = vmatprep.subr.bf16.mxu0 0
  %307 = vmatpush2.bf16.msra.mxu0 0
  %308 = vmatprep.subr.bf16.mxu0 0
  %309 = vmatpush2.bf16.msra.mxu0 0
  %310 = vmatprep.subr.bf16.mxu0 0
  %311 = vmatpush2.bf16.msra.mxu0 0
  %312 = vmatprep.subr.bf16.mxu0 0
  %313 = vmatpush2.bf16.msra.mxu0 0
  %314 = vmatprep.subr.bf16.mxu0 0
  %315 = vmatpush2.bf16.msra.mxu0 0
  %316 = vmatprep.subr.bf16.mxu0 0
  %317 = vmatpush2.bf16.msra.mxu0 0
  %318 = vmatprep.subr.bf16.mxu0 0
  %319 = vmatpush2.bf16.msra.mxu0 0
  %320 = vmatprep.subr.bf16.mxu0 0
  %321 = vmatpush2.bf16.msra.mxu0 0
  %322 = vmatprep.mubr.bf16.mxu0 0
  %323 = vmatmul.mubr.bf16.gmra.mxu0 %v120
  %v324 = vpop.f32.mrf.mxu0
  %v325 = vadd.f32 %v83, %v324
  %v326 = vpop.f32.mrf.mxu0
  %v327 = vadd.f32 %v87, %v326
  %v328 = vpop.f32.mrf.mxu0
  %v329 = vadd.f32 %v83, %v328
  %v330 = vpop.f32.mrf.mxu0
  %v331 = vadd.f32 %v87, %v330
  %332 = vmatprep.mubr.bf16.mxu0 0
  %333 = vmatmul.mubr.bf16.gmra.mxu0 %v121
  %v334 = vpop.f32.mrf.mxu0
  %v335 = vadd.f32 %v83, %v334
  %v336 = vpop.f32.mrf.mxu0
  %v337 = vadd.f32 %v87, %v336
  %v338 = vpop.f32.mrf.mxu0
  %v339 = vadd.f32 %v83, %v338
  %v340 = vpop.f32.mrf.mxu0
  %v341 = vadd.f32 %v87, %v340
  %342 = vmatprep.mubr.bf16.mxu0 0
  %343 = vmatmul.mubr.bf16.gmra.mxu0 %v122
  %v344 = vpop.f32.mrf.mxu0
  %v345 = vadd.f32 %v83, %v344
  %v346 = vpop.f32.mrf.mxu0
  %v347 = vadd.f32 %v87, %v346
  %v348 = vpop.f32.mrf.mxu0
  %v349 = vadd.f32 %v83, %v348
  %v350 = vpop.f32.mrf.mxu0
  %v351 = vadd.f32 %v87, %v350
  %352 = vmatprep.mubr.bf16.mxu0 0
  %353 = vmatmul.mubr.bf16.gmra.mxu0 %v123
  %v354 = vpop.f32.mrf.mxu0
  %v355 = vadd.f32 %v83, %v354
  %v356 = vpop.f32.mrf.mxu0
  %v357 = vadd.f32 %v87, %v356
  %v358 = vpop.f32.mrf.mxu0
  %v359 = vadd.f32 %v83, %v358
  %v360 = vpop.f32.mrf.mxu0
  %v361 = vadd.f32 %v87, %v360
  %362 = vmatprep.mubr.bf16.mxu0 0
  %363 = vmatmul.mubr.bf16.gmra.mxu0 %v124
  %v364 = vpop.f32.mrf.mxu0
  %v365 = vadd.f32 %v83, %v364
  %v366 = vpop.f32.mrf.mxu0
  %v367 = vadd.f32 %v87, %v366
  %v368 = vpop.f32.mrf.mxu0
  %v369 = vadd.f32 %v83, %v368
  %v370 = vpop.f32.mrf.mxu0
  %v371 = vadd.f32 %v87, %v370
  %372 = vdwg.mxu0
  %373 = vmatprep.subr.bf16.mxu0 %v257
  %374 = vmatpush1.bf16.msra.mxu0 %v256
  %375 = vmatprep.subr.bf16.mxu0 %v253
  %376 = vmatpush1.bf16.msra.mxu0 %v252
  %377 = vmatprep.subr.bf16.mxu0 %v249
  %378 = vmatpush1.bf16.msra.mxu0 %v248
  %379 = vmatprep.subr.bf16.mxu0 %v245
  %380 = vmatpush1.bf16.msra.mxu0 %v244
  %381 = vmatprep.subr.bf16.mxu0 %v241
  %382 = vmatpush1.bf16.msra.mxu0 %v240
  %383 = vmatprep.subr.bf16.mxu0 %v237
  %384 = vmatpush1.bf16.msra.mxu0 %v236
  %385 = vmatprep.subr.bf16.mxu0 %v233
  %386 = vmatpush1.bf16.msra.mxu0 %v232
  %387 = vmatprep.subr.bf16.mxu0 %v229
  %388 = vmatpush1.bf16.msra.mxu0 %v228
  %389 = vmatprep.subr.bf16.mxu0 0
  %390 = vmatpush2.bf16.msra.mxu0 0
  %391 = vmatprep.subr.bf16.mxu0 0
  %392 = vmatpush2.bf16.msra.mxu0 0
  %393 = vmatprep.subr.bf16.mxu0 0
  %394 = vmatpush2.bf16.msra.mxu0 0
  %395 = vmatprep.subr.bf16.mxu0 0
  %396 = vmatpush2.bf16.msra.mxu0 0
  %397 = vmatprep.subr.bf16.mxu0 0
  %398 = vmatpush2.bf16.msra.mxu0 0
  %399 = vmatprep.subr.bf16.mxu0 0
  %400 = vmatpush2.bf16.msra.mxu0 0
  %401 = vmatprep.subr.bf16.mxu0 0
  %402 = vmatpush2.bf16.msra.mxu0 0
  %403 = vmatprep.subr.bf16.mxu0 0
  %404 = vmatpush2.bf16.msra.mxu0 0
  %405 = vmatprep.mubr.bf16.mxu0 0
  %406 = vmatmul.mubr.bf16.gmra.mxu0 %v120
  %v407 = vpop.f32.mrf.mxu0
  %v408 = vadd.f32 %v91, %v407
  %v409 = vpop.f32.mrf.mxu0
  %v410 = vadd.f32 %v95, %v409
  %v411 = vpop.f32.mrf.mxu0
  %v412 = vadd.f32 %v91, %v411
  %v413 = vpop.f32.mrf.mxu0
  %v414 = vadd.f32 %v95, %v413
  %415 = vmatprep.mubr.bf16.mxu0 0
  %416 = vmatmul.mubr.bf16.gmra.mxu0 %v121
  %v417 = vpop.f32.mrf.mxu0
  %v418 = vadd.f32 %v91, %v417
  %v419 = vpop.f32.mrf.mxu0
  %v420 = vadd.f32 %v95, %v419
  %v421 = vpop.f32.mrf.mxu0
  %v422 = vadd.f32 %v91, %v421
  %v423 = vpop.f32.mrf.mxu0
  %v424 = vadd.f32 %v95, %v423
  %425 = vmatprep.mubr.bf16.mxu0 0
  %426 = vmatmul.mubr.bf16.gmra.mxu0 %v122
  %v427 = vpop.f32.mrf.mxu0
  %v428 = vadd.f32 %v91, %v427
  %v429 = vpop.f32.mrf.mxu0
  %v430 = vadd.f32 %v95, %v429
  %v431 = vpop.f32.mrf.mxu0
  %v432 = vadd.f32 %v91, %v431
  %v433 = vpop.f32.mrf.mxu0
  %v434 = vadd.f32 %v95, %v433
  %435 = vmatprep.mubr.bf16.mxu0 0
  %436 = vmatmul.mubr.bf16.gmra.mxu0 %v123
  %v437 = vpop.f32.mrf.mxu0
  %v438 = vadd.f32 %v91, %v437
  %v439 = vpop.f32.mrf.mxu0
  %v440 = vadd.f32 %v95, %v439
  %v441 = vpop.f32.mrf.mxu0
  %v442 = vadd.f32 %v91, %v441
  %v443 = vpop.f32.mrf.mxu0
  %v444 = vadd.f32 %v95, %v443
  %445 = vmatprep.mubr.bf16.mxu0 0
  %446 = vmatmul.mubr.bf16.gmra.mxu0 %v124
  %v447 = vpop.f32.mrf.mxu0
  %v448 = vadd.f32 %v91, %v447
  %v449 = vpop.f32.mrf.mxu0
  %v450 = vadd.f32 %v95, %v449
  %v451 = vpop.f32.mrf.mxu0
  %v452 = vadd.f32 %v91, %v451
  %v453 = vpop.f32.mrf.mxu0
  %v454 = vadd.f32 %v95, %v453
  %455 = vdwg.mxu0
  %v456 = vld [vmem:[%s3] sm:$0xff]
  %v457 = vld [vmem:[%s3 + $0x8] sm:$0xff]
  %v458 = vld [vmem:[%s3 + $0x10] sm:$0xff]
  %v459 = vld [vmem:[%s3 + $0x18] sm:$0xff]
  %v460 = vld [vmem:[%s3 + $0x20] sm:$0xff]
  %v461 = vld [vmem:[%s3 + $0x28] sm:$0xff]
  %v462 = vld [vmem:[%s3 + $0x30] sm:$0xff]
  %v463 = vld [vmem:[%s3 + $0x38] sm:$0xff]
  %v464 = vld [vmem:[%s3 + $0x40] sm:$0xff]
  %v465 = vld [vmem:[%s3 + $0x48] sm:$0xff]
  %v466 = vld [vmem:[%s3 + $0x50] sm:$0xff]
  %v467 = vld [vmem:[%s3 + $0x58] sm:$0xff]
  %v468 = vld [vmem:[%s3 + $0x60] sm:$0xff]
  %v469 = vld [vmem:[%s3 + $0x68] sm:$0xff]
  %v470 = vld [vmem:[%s3 + $0x70] sm:$0xff]
  %v471 = vld [vmem:[%s3 + $0x78] sm:$0xff]
  %v472 = vld [vmem:[%s3 + $0x80] sm:$0xff]
  %v473 = vld [vmem:[%s3 + $0x88] sm:$0xff]
  %v474 = vld [vmem:[%s3 + $0x90] sm:$0xff]
  %v475 = vld [vmem:[%s3 + $0x98] sm:$0xff]
  %v476 = vld [vmem:[%s3 + $0xa0] sm:$0xff]
  %v477 = vld [vmem:[%s3 + $0xa8] sm:$0xff]
  %v478 = vld [vmem:[%s3 + $0xb0] sm:$0xff]
  %v479 = vld [vmem:[%s3 + $0xb8] sm:$0xff]
  %v480 = vld [vmem:[%s3 + $0xc0] sm:$0xff]
  %v481 = vld [vmem:[%s3 + $0xc8] sm:$0xff]
  %v482 = vld [vmem:[%s3 + $0xd0] sm:$0xff]
  %v483 = vld [vmem:[%s3 + $0xd8] sm:$0xff]
  %v484 = vld [vmem:[%s3 + $0xe0] sm:$0xff]
  %v485 = vld [vmem:[%s3 + $0xe8] sm:$0xff]
  %v486 = vld [vmem:[%s3 + $0xf0] sm:$0xff]
  %v487 = vld [vmem:[%s3 + $0xf8] sm:$0xff]
  %v488 = vld [vmem:[%s3 + $0x100] sm:$0xff]
  %v489 = vld [vmem:[%s3 + $0x108] sm:$0xff]
  %v490 = vld [vmem:[%s3 + $0x110] sm:$0xff]
  %v491 = vld [vmem:[%s3 + $0x118] sm:$0xff]
  %v492 = vld [vmem:[%s3 + $0x120] sm:$0xff]
  %v493 = vld [vmem:[%s3 + $0x128] sm:$0xff]
  %v494 = vld [vmem:[%s3 + $0x130] sm:$0xff]
  %v495 = vld [vmem:[%s3 + $0x138] sm:$0xff]
  %v496 = vld [vmem:[%s3 + $0x140] sm:$0xff]
  %v497 = vld [vmem:[%s3 + $0x148] sm:$0xff]
  %v498 = vld [vmem:[%s3 + $0x150] sm:$0xff]
  %v499 = vld [vmem:[%s3 + $0x158] sm:$0xff]
  %v500 = vld [vmem:[%s3 + $0x160] sm:$0xff]
  %v501 = vld [vmem:[%s3 + $0x168] sm:$0xff]
  %v502 = vld [vmem:[%s3 + $0x170] sm:$0xff]
  %v503 = vld [vmem:[%s3 + $0x178] sm:$0xff]
  %v504 = vld [vmem:[%s3 + $0x180] sm:$0xff]
  %v505 = vld [vmem:[%s3 + $0x188] sm:$0xff]
  %v506 = vld [vmem:[%s3 + $0x190] sm:$0xff]
  %v507 = vld [vmem:[%s3 + $0x198] sm:$0xff]
  %v508 = vld [vmem:[%s3 + $0x1a0] sm:$0xff]
  %v509 = vld [vmem:[%s3 + $0x1a8] sm:$0xff]
  %v510 = vld [vmem:[%s3 + $0x1b0] sm:$0xff]
  %v511 = vld [vmem:[%s3 + $0x1b8] sm:$0xff]
  %v512 = vld [vmem:[%s3 + $0x1c0] sm:$0xff]
  %v513 = vld [vmem:[%s3 + $0x1c8] sm:$0xff]
  %v514 = vld [vmem:[%s3 + $0x1d0] sm:$0xff]
  %v515 = vld [vmem:[%s3 + $0x1d8] sm:$0xff]
  %v516 = vld [vmem:[%s3 + $0x1e0] sm:$0xff]
  %v517 = vld [vmem:[%s3 + $0x1e8] sm:$0xff]
  %v518 = vld [vmem:[%s3 + $0x1f0] sm:$0xff]
  %v519 = vld [vmem:[%s3 + $0x1f8] sm:$0xff]
  %v520 = vld [vmem:[%s3 + $0x200] sm:$0xff]
  %v521 = vld [vmem:[%s3 + $0x208] sm:$0xff]
  %v522 = vld [vmem:[%s3 + $0x210] sm:$0xff]
  %v523 = vld [vmem:[%s3 + $0x218] sm:$0xff]
  %v524 = vld [vmem:[%s3 + $0x220] sm:$0xff]
  %v525 = vld [vmem:[%s3 + $0x228] sm:$0xff]
  %v526 = vld [vmem:[%s3 + $0x230] sm:$0xff]
  %v527 = vld [vmem:[%s3 + $0x238] sm:$0xff]
  %v528 = vld [vmem:[%s3 + $0x240] sm:$0xff]
  %v529 = vld [vmem:[%s3 + $0x248] sm:$0xff]
  %v530 = vld [vmem:[%s3 + $0x250] sm:$0xff]
  %v531 = vld [vmem:[%s3 + $0x258] sm:$0xff]
  %v532 = vld [vmem:[%s3 + $0x260] sm:$0xff]
  %v533 = vld [vmem:[%s3 + $0x268] sm:$0xff]
  %v534 = vld [vmem:[%s3 + $0x270] sm:$0xff]
  %v535 = vld [vmem:[%s3 + $0x278] sm:$0xff]
  %v536 = vld [vmem:[%s3 + $0x280] sm:$0xff]
  %v537 = vld [vmem:[%s3 + $0x288] sm:$0xff]
  %v538 = vld [vmem:[%s3 + $0x290] sm:$0xff]
  %v539 = vld [vmem:[%s3 + $0x298] sm:$0xff]
  %v540 = vld [vmem:[%s3 + $0x2a0] sm:$0xff]
  %v541 = vld [vmem:[%s3 + $0x2a8] sm:$0xff]
  %v542 = vld [vmem:[%s3 + $0x2b0] sm:$0xff]
  %v543 = vld [vmem:[%s3 + $0x2b8] sm:$0xff]
  %v544 = vld [vmem:[%s3 + $0x2c0] sm:$0xff]
  %v545 = vld [vmem:[%s3 + $0x2c8] sm:$0xff]
  %v546 = vld [vmem:[%s3 + $0x2d0] sm:$0xff]
  %v547 = vld [vmem:[%s3 + $0x2d8] sm:$0xff]
  %v548 = vld [vmem:[%s3 + $0x2e0] sm:$0xff]
  %v549 = vld [vmem:[%s3 + $0x2e8] sm:$0xff]
  %v550 = vld [vmem:[%s3 + $0x2f0] sm:$0xff]
  %v551 = vld [vmem:[%s3 + $0x2f8] sm:$0xff]
  %v552 = vld [vmem:[%s4] sm:$0xff]
  %v553 = vld [vmem:[%s4 + $0x8] sm:$0xf]
  %v556 = vlaneseq
  %v557 = vshrl.u32 %v556, 7
  %v558 = vsub.s32 0, %v557
  %v559 = vrot.slane %v552, %v558
  %v560 = vlaneseq
  %v561 = vshrl.u32 %v560, 7
  %v562 = vsub.s32 1, %v561
  %v563 = vrot.slane %v552, %v562
  %v564 = vlaneseq
  %v565 = vshrl.u32 %v564, 7
  %v566 = vsub.s32 2, %v565
  %v567 = vrot.slane %v552, %v566
  %v568 = vlaneseq
  %v569 = vshrl.u32 %v568, 7
  %v570 = vsub.s32 3, %v569
  %v571 = vrot.slane %v552, %v570
  %v572 = vlaneseq
  %v573 = vshrl.u32 %v572, 7
  %v574 = vsub.s32 4, %v573
  %v575 = vrot.slane %v552, %v574
  %v576 = vlaneseq
  %v577 = vshrl.u32 %v576, 7
  %v578 = vsub.s32 5, %v577
  %v579 = vrot.slane %v552, %v578
  %v580 = vlaneseq
  %v581 = vshrl.u32 %v580, 7
  %v582 = vsub.s32 6, %v581
  %v583 = vrot.slane %v552, %v582
  %v584 = vlaneseq
  %v585 = vshrl.u32 %v584, 7
  %v586 = vsub.s32 7, %v585
  %v587 = vrot.slane %v552, %v586
  %v588 = vlaneseq
  %v589 = vshrl.u32 %v588, 7
  %v590 = vsub.s32 0, %v589
  %v591 = vrot.slane %v553, %v590
  %v592 = vlaneseq
  %v593 = vshrl.u32 %v592, 7
  %v594 = vsub.s32 1, %v593
  %v595 = vrot.slane %v553, %v594
  %v596 = vlaneseq
  %v597 = vshrl.u32 %v596, 7
  %v598 = vsub.s32 2, %v597
  %v599 = vrot.slane %v553, %v598
  %v600 = vlaneseq
  %v601 = vshrl.u32 %v600, 7
  %v602 = vsub.s32 3, %v601
  %v603 = vrot.slane %v553, %v602
  %v712 = vunpack.c.l.b16 %v456
  %v713 = vunpack.c.h.b16 %v456
  %v714 = vunpack.c.l.b16 %v457
  %v715 = vunpack.c.h.b16 %v457
  %v716 = vunpack.c.l.b16 %v458
  %v717 = vunpack.c.h.b16 %v458
  %v718 = vunpack.c.l.b16 %v459
  %v719 = vunpack.c.h.b16 %v459
  %v720 = vunpack.c.l.b16 %v460
  %v721 = vunpack.c.h.b16 %v460
  %v722 = vunpack.c.l.b16 %v461
  %v723 = vunpack.c.h.b16 %v461
  %v724 = vunpack.c.l.b16 %v462
  %v725 = vunpack.c.h.b16 %v462
  %v726 = vunpack.c.l.b16 %v463
  %v727 = vunpack.c.h.b16 %v463
  %v728 = vunpack.c.l.b16 %v464
  %v729 = vunpack.c.h.b16 %v464
  %v730 = vunpack.c.l.b16 %v465
  %v731 = vunpack.c.h.b16 %v465
  %v732 = vunpack.c.l.b16 %v466
  %v733 = vunpack.c.h.b16 %v466
  %v734 = vunpack.c.l.b16 %v467
  %v735 = vunpack.c.h.b16 %v467
  %v736 = vunpack.c.l.b16 %v468
  %v737 = vunpack.c.h.b16 %v468
  %v738 = vunpack.c.l.b16 %v469
  %v739 = vunpack.c.h.b16 %v469
  %v740 = vunpack.c.l.b16 %v470
  %v741 = vunpack.c.h.b16 %v470
  %v742 = vunpack.c.l.b16 %v471
  %v743 = vunpack.c.h.b16 %v471
  %v744 = vunpack.c.l.b16 %v472
  %v745 = vunpack.c.h.b16 %v472
  %v746 = vunpack.c.l.b16 %v473
  %v747 = vunpack.c.h.b16 %v473
  %v748 = vunpack.c.l.b16 %v474
  %v749 = vunpack.c.h.b16 %v474
  %v750 = vunpack.c.l.b16 %v475
  %v751 = vunpack.c.h.b16 %v475
  %v752 = vunpack.c.l.b16 %v476
  %v753 = vunpack.c.h.b16 %v476
  %v754 = vunpack.c.l.b16 %v477
  %v755 = vunpack.c.h.b16 %v477
  %v756 = vunpack.c.l.b16 %v478
  %v757 = vunpack.c.h.b16 %v478
  %v758 = vunpack.c.l.b16 %v479
  %v759 = vunpack.c.h.b16 %v479
  %v760 = vunpack.c.l.b16 %v480
  %v761 = vunpack.c.h.b16 %v480
  %v762 = vunpack.c.l.b16 %v481
  %v763 = vunpack.c.h.b16 %v481
  %v764 = vunpack.c.l.b16 %v482
  %v765 = vunpack.c.h.b16 %v482
  %v766 = vunpack.c.l.b16 %v483
  %v767 = vunpack.c.h.b16 %v483
  %v768 = vunpack.c.l.b16 %v484
  %v769 = vunpack.c.h.b16 %v484
  %v770 = vunpack.c.l.b16 %v485
  %v771 = vunpack.c.h.b16 %v485
  %v772 = vunpack.c.l.b16 %v486
  %v773 = vunpack.c.h.b16 %v486
  %v774 = vunpack.c.l.b16 %v487
  %v775 = vunpack.c.h.b16 %v487
  %v776 = vunpack.c.l.b16 %v488
  %v777 = vunpack.c.h.b16 %v488
  %v778 = vunpack.c.l.b16 %v489
  %v779 = vunpack.c.h.b16 %v489
  %v780 = vunpack.c.l.b16 %v490
  %v781 = vunpack.c.h.b16 %v490
  %v782 = vunpack.c.l.b16 %v491
  %v783 = vunpack.c.h.b16 %v491
  %v784 = vunpack.c.l.b16 %v492
  %v785 = vunpack.c.h.b16 %v492
  %v786 = vunpack.c.l.b16 %v493
  %v787 = vunpack.c.h.b16 %v493
  %v788 = vunpack.c.l.b16 %v494
  %v789 = vunpack.c.h.b16 %v494
  %v790 = vunpack.c.l.b16 %v495
  %v791 = vunpack.c.h.b16 %v495
  %v792 = vunpack.c.l.b16 %v496
  %v793 = vunpack.c.h.b16 %v496
  %v794 = vunpack.c.l.b16 %v497
  %v795 = vunpack.c.h.b16 %v497
  %v796 = vunpack.c.l.b16 %v498
  %v797 = vunpack.c.h.b16 %v498
  %v798 = vunpack.c.l.b16 %v499
  %v799 = vunpack.c.h.b16 %v499
  %v800 = vunpack.c.l.b16 %v500
  %v801 = vunpack.c.h.b16 %v500
  %v802 = vunpack.c.l.b16 %v501
  %v803 = vunpack.c.h.b16 %v501
  %v804 = vunpack.c.l.b16 %v502
  %v805 = vunpack.c.h.b16 %v502
  %v806 = vunpack.c.l.b16 %v503
  %v807 = vunpack.c.h.b16 %v503
  %v808 = vunpack.c.l.b16 %v504
  %v809 = vunpack.c.h.b16 %v504
  %v810 = vunpack.c.l.b16 %v505
  %v811 = vunpack.c.h.b16 %v505
  %v812 = vunpack.c.l.b16 %v506
  %v813 = vunpack.c.h.b16 %v506
  %v814 = vunpack.c.l.b16 %v507
  %v815 = vunpack.c.h.b16 %v507
  %v816 = vunpack.c.l.b16 %v508
  %v817 = vunpack.c.h.b16 %v508
  %v818 = vunpack.c.l.b16 %v509
  %v819 = vunpack.c.h.b16 %v509
  %v820 = vunpack.c.l.b16 %v510
  %v821 = vunpack.c.h.b16 %v510
  %v822 = vunpack.c.l.b16 %v511
  %v823 = vunpack.c.h.b16 %v511
  %v824 = vunpack.c.l.b16 %v512
  %v825 = vunpack.c.h.b16 %v512
  %v826 = vunpack.c.l.b16 %v513
  %v827 = vunpack.c.h.b16 %v513
  %v828 = vunpack.c.l.b16 %v514
  %v829 = vunpack.c.h.b16 %v514
  %v830 = vunpack.c.l.b16 %v515
  %v831 = vunpack.c.h.b16 %v515
  %v832 = vunpack.c.l.b16 %v516
  %v833 = vunpack.c.h.b16 %v516
  %v834 = vunpack.c.l.b16 %v517
  %v835 = vunpack.c.h.b16 %v517
  %v836 = vunpack.c.l.b16 %v518
  %v837 = vunpack.c.h.b16 %v518
  %v838 = vunpack.c.l.b16 %v519
  %v839 = vunpack.c.h.b16 %v519
  %v840 = vunpack.c.l.b16 %v520
  %v841 = vunpack.c.h.b16 %v520
  %v842 = vunpack.c.l.b16 %v521
  %v843 = vunpack.c.h.b16 %v521
  %v844 = vunpack.c.l.b16 %v522
  %v845 = vunpack.c.h.b16 %v522
  %v846 = vunpack.c.l.b16 %v523
  %v847 = vunpack.c.h.b16 %v523
  %v848 = vunpack.c.l.b16 %v524
  %v849 = vunpack.c.h.b16 %v524
  %v850 = vunpack.c.l.b16 %v525
  %v851 = vunpack.c.h.b16 %v525
  %v852 = vunpack.c.l.b16 %v526
  %v853 = vunpack.c.h.b16 %v526
  %v854 = vunpack.c.l.b16 %v527
  %v855 = vunpack.c.h.b16 %v527
  %v856 = vunpack.c.l.b16 %v528
  %v857 = vunpack.c.h.b16 %v528
  %v858 = vunpack.c.l.b16 %v529
  %v859 = vunpack.c.h.b16 %v529
  %v860 = vunpack.c.l.b16 %v530
  %v861 = vunpack.c.h.b16 %v530
  %v862 = vunpack.c.l.b16 %v531
  %v863 = vunpack.c.h.b16 %v531
  %v864 = vunpack.c.l.b16 %v532
  %v865 = vunpack.c.h.b16 %v532
  %v866 = vunpack.c.l.b16 %v533
  %v867 = vunpack.c.h.b16 %v533
  %v868 = vunpack.c.l.b16 %v534
  %v869 = vunpack.c.h.b16 %v534
  %v870 = vunpack.c.l.b16 %v535
  %v871 = vunpack.c.h.b16 %v535
  %v872 = vunpack.c.l.b16 %v536
  %v873 = vunpack.c.h.b16 %v536
  %v874 = vunpack.c.l.b16 %v537
  %v875 = vunpack.c.h.b16 %v537
  %v876 = vunpack.c.l.b16 %v538
  %v877 = vunpack.c.h.b16 %v538
  %v878 = vunpack.c.l.b16 %v539
  %v879 = vunpack.c.h.b16 %v539
  %v880 = vunpack.c.l.b16 %v540
  %v881 = vunpack.c.h.b16 %v540
  %v882 = vunpack.c.l.b16 %v541
  %v883 = vunpack.c.h.b16 %v541
  %v884 = vunpack.c.l.b16 %v542
  %v885 = vunpack.c.h.b16 %v542
  %v886 = vunpack.c.l.b16 %v543
  %v887 = vunpack.c.h.b16 %v543
  %v888 = vunpack.c.l.b16 %v544
  %v889 = vunpack.c.h.b16 %v544
  %v890 = vunpack.c.l.b16 %v545
  %v891 = vunpack.c.h.b16 %v545
  %v892 = vunpack.c.l.b16 %v546
  %v893 = vunpack.c.h.b16 %v546
  %v894 = vunpack.c.l.b16 %v547
  %v895 = vunpack.c.h.b16 %v547
  %v896 = vunpack.c.l.b16 %v548
  %v897 = vunpack.c.h.b16 %v548
  %v898 = vunpack.c.l.b16 %v549
  %v899 = vunpack.c.h.b16 %v549
  %v900 = vunpack.c.l.b16 %v550
  %v901 = vunpack.c.h.b16 %v550
  %v902 = vunpack.c.l.b16 %v551
  %v903 = vunpack.c.h.b16 %v551
  %v904 = vpack.c.b16 %v724, %v712
  %v905 = vpack.c.b16 %v725, %v713
  %v906 = vpack.c.b16 %v726, %v714
  %v907 = vpack.c.b16 %v727, %v715
  %v908 = vpack.c.b16 %v728, %v716
  %v909 = vpack.c.b16 %v729, %v717
  %v910 = vpack.c.b16 %v730, %v718
  %v911 = vpack.c.b16 %v731, %v719
  %v912 = vpack.c.b16 %v732, %v720
  %v913 = vpack.c.b16 %v733, %v721
  %v914 = vpack.c.b16 %v734, %v722
  %v915 = vpack.c.b16 %v735, %v723
  %v916 = vpack.c.b16 %v748, %v736
  %v917 = vpack.c.b16 %v749, %v737
  %v918 = vpack.c.b16 %v750, %v738
  %v919 = vpack.c.b16 %v751, %v739
  %v920 = vpack.c.b16 %v752, %v740
  %v921 = vpack.c.b16 %v753, %v741
  %v922 = vpack.c.b16 %v754, %v742
  %v923 = vpack.c.b16 %v755, %v743
  %v924 = vpack.c.b16 %v756, %v744
  %v925 = vpack.c.b16 %v757, %v745
  %v926 = vpack.c.b16 %v758, %v746
  %v927 = vpack.c.b16 %v759, %v747
  %v928 = vpack.c.b16 %v772, %v760
  %v929 = vpack.c.b16 %v773, %v761
  %v930 = vpack.c.b16 %v774, %v762
  %v931 = vpack.c.b16 %v775, %v763
  %v932 = vpack.c.b16 %v776, %v764
  %v933 = vpack.c.b16 %v777, %v765
  %v934 = vpack.c.b16 %v778, %v766
  %v935 = vpack.c.b16 %v779, %v767
  %v936 = vpack.c.b16 %v780, %v768
  %v937 = vpack.c.b16 %v781, %v769
  %v938 = vpack.c.b16 %v782, %v770
  %v939 = vpack.c.b16 %v783, %v771
  %v940 = vpack.c.b16 %v796, %v784
  %v941 = vpack.c.b16 %v797, %v785
  %v942 = vpack.c.b16 %v798, %v786
  %v943 = vpack.c.b16 %v799, %v787
  %v944 = vpack.c.b16 %v800, %v788
  %v945 = vpack.c.b16 %v801, %v789
  %v946 = vpack.c.b16 %v802, %v790
  %v947 = vpack.c.b16 %v803, %v791
  %v948 = vpack.c.b16 %v804, %v792
  %v949 = vpack.c.b16 %v805, %v793
  %v950 = vpack.c.b16 %v806, %v794
  %v951 = vpack.c.b16 %v807, %v795
  %v952 = vpack.c.b16 %v820, %v808
  %v953 = vpack.c.b16 %v821, %v809
  %v954 = vpack.c.b16 %v822, %v810
  %v955 = vpack.c.b16 %v823, %v811
  %v956 = vpack.c.b16 %v824, %v812
  %v957 = vpack.c.b16 %v825, %v813
  %v958 = vpack.c.b16 %v826, %v814
  %v959 = vpack.c.b16 %v827, %v815
  %v960 = vpack.c.b16 %v828, %v816
  %v961 = vpack.c.b16 %v829, %v817
  %v962 = vpack.c.b16 %v830, %v818
  %v963 = vpack.c.b16 %v831, %v819
  %v964 = vpack.c.b16 %v844, %v832
  %v965 = vpack.c.b16 %v845, %v833
  %v966 = vpack.c.b16 %v846, %v834
  %v967 = vpack.c.b16 %v847, %v835
  %v968 = vpack.c.b16 %v848, %v836
  %v969 = vpack.c.b16 %v849, %v837
  %v970 = vpack.c.b16 %v850, %v838
  %v971 = vpack.c.b16 %v851, %v839
  %v972 = vpack.c.b16 %v852, %v840
  %v973 = vpack.c.b16 %v853, %v841
  %v974 = vpack.c.b16 %v854, %v842
  %v975 = vpack.c.b16 %v855, %v843
  %v976 = vpack.c.b16 %v868, %v856
  %v977 = vpack.c.b16 %v869, %v857
  %v978 = vpack.c.b16 %v870, %v858
  %v979 = vpack.c.b16 %v871, %v859
  %v980 = vpack.c.b16 %v872, %v860
  %v981 = vpack.c.b16 %v873, %v861
  %v982 = vpack.c.b16 %v874, %v862
  %v983 = vpack.c.b16 %v875, %v863
  %v984 = vpack.c.b16 %v876, %v864
  %v985 = vpack.c.b16 %v877, %v865
  %v986 = vpack.c.b16 %v878, %v866
  %v987 = vpack.c.b16 %v879, %v867
  %v988 = vpack.c.b16 %v892, %v880
  %v989 = vpack.c.b16 %v893, %v881
  %v990 = vpack.c.b16 %v894, %v882
  %v991 = vpack.c.b16 %v895, %v883
  %v992 = vpack.c.b16 %v896, %v884
  %v993 = vpack.c.b16 %v897, %v885
  %v994 = vpack.c.b16 %v898, %v886
  %v995 = vpack.c.b16 %v899, %v887
  %v996 = vpack.c.b16 %v900, %v888
  %v997 = vpack.c.b16 %v901, %v889
  %v998 = vpack.c.b16 %v902, %v890
  %v999 = vpack.c.b16 %v903, %v891
  %1096 = vmatprep.subr.bf16.mxu0 %v989
  %1097 = vmatpush1.bf16.msra.mxu0 %v988
  %1098 = vmatprep.subr.bf16.mxu0 %v977
  %1099 = vmatpush1.bf16.msra.mxu0 %v976
  %1100 = vmatprep.subr.bf16.mxu0 %v965
  %1101 = vmatpush1.bf16.msra.mxu0 %v964
  %1102 = vmatprep.subr.bf16.mxu0 %v953
  %1103 = vmatpush1.bf16.msra.mxu0 %v952
  %1104 = vmatprep.subr.bf16.mxu0 %v941
  %1105 = vmatpush1.bf16.msra.mxu0 %v940
  %1106 = vmatprep.subr.bf16.mxu0 %v929
  %1107 = vmatpush1.bf16.msra.mxu0 %v928
  %1108 = vmatprep.subr.bf16.mxu0 %v917
  %1109 = vmatpush1.bf16.msra.mxu0 %v916
  %1110 = vmatprep.subr.bf16.mxu0 %v905
  %1111 = vmatpush1.bf16.msra.mxu0 %v904
  %1112 = vmatprep.subr.bf16.mxu0 0
  %1113 = vmatpush2.bf16.msra.mxu0 0
  %1114 = vmatprep.subr.bf16.mxu0 0
  %1115 = vmatpush2.bf16.msra.mxu0 0
  %1116 = vmatprep.subr.bf16.mxu0 0
  %1117 = vmatpush2.bf16.msra.mxu0 0
  %1118 = vmatprep.subr.bf16.mxu0 0
  %1119 = vmatpush2.bf16.msra.mxu0 0
  %1120 = vmatprep.subr.bf16.mxu0 0
  %1121 = vmatpush2.bf16.msra.mxu0 0
  %1122 = vmatprep.subr.bf16.mxu0 0
  %1123 = vmatpush2.bf16.msra.mxu0 0
  %1124 = vmatprep.subr.bf16.mxu0 0
  %1125 = vmatpush2.bf16.msra.mxu0 0
  %1126 = vmatprep.subr.bf16.mxu0 0
  %1127 = vmatpush2.bf16.msra.mxu0 0
  %1128 = vmatprep.mubr.bf16.mxu0 0
  %1129 = vmatmul.mubr.bf16.gmra.mxu0 %v120
  %v1130 = vpop.f32.mrf.mxu0
  %v1131 = vadd.f32 %v559, %v1130
  %v1132 = vpop.f32.mrf.mxu0
  %v1133 = vadd.f32 %v563, %v1132
  %v1134 = vpop.f32.mrf.mxu0
  %v1135 = vadd.f32 %v559, %v1134
  %v1136 = vpop.f32.mrf.mxu0
  %v1137 = vadd.f32 %v563, %v1136
  %1138 = vmatprep.mubr.bf16.mxu0 0
  %1139 = vmatmul.mubr.bf16.gmra.mxu0 %v121
  %v1140 = vpop.f32.mrf.mxu0
  %v1141 = vadd.f32 %v559, %v1140
  %v1142 = vpop.f32.mrf.mxu0
  %v1143 = vadd.f32 %v563, %v1142
  %v1144 = vpop.f32.mrf.mxu0
  %v1145 = vadd.f32 %v559, %v1144
  %v1146 = vpop.f32.mrf.mxu0
  %v1147 = vadd.f32 %v563, %v1146
  %1148 = vmatprep.mubr.bf16.mxu0 0
  %1149 = vmatmul.mubr.bf16.gmra.mxu0 %v122
  %v1150 = vpop.f32.mrf.mxu0
  %v1151 = vadd.f32 %v559, %v1150
  %v1152 = vpop.f32.mrf.mxu0
  %v1153 = vadd.f32 %v563, %v1152
  %v1154 = vpop.f32.mrf.mxu0
  %v1155 = vadd.f32 %v559, %v1154
  %v1156 = vpop.f32.mrf.mxu0
  %v1157 = vadd.f32 %v563, %v1156
  %1158 = vmatprep.mubr.bf16.mxu0 0
  %1159 = vmatmul.mubr.bf16.gmra.mxu0 %v123
  %v1160 = vpop.f32.mrf.mxu0
  %v1161 = vadd.f32 %v559, %v1160
  %v1162 = vpop.f32.mrf.mxu0
  %v1163 = vadd.f32 %v563, %v1162
  %v1164 = vpop.f32.mrf.mxu0
  %v1165 = vadd.f32 %v559, %v1164
  %v1166 = vpop.f32.mrf.mxu0
  %v1167 = vadd.f32 %v563, %v1166
  %1168 = vmatprep.mubr.bf16.mxu0 0
  %1169 = vmatmul.mubr.bf16.gmra.mxu0 %v124
  %v1170 = vpop.f32.mrf.mxu0
  %v1171 = vadd.f32 %v559, %v1170
  %v1172 = vpop.f32.mrf.mxu0
  %v1173 = vadd.f32 %v563, %v1172
  %v1174 = vpop.f32.mrf.mxu0
  %v1175 = vadd.f32 %v559, %v1174
  %v1176 = vpop.f32.mrf.mxu0
  %v1177 = vadd.f32 %v563, %v1176
  %1178 = vdwg.mxu0
  %1179 = vmatprep.subr.bf16.mxu0 %v991
  %1180 = vmatpush1.bf16.msra.mxu0 %v990
  %1181 = vmatprep.subr.bf16.mxu0 %v979
  %1182 = vmatpush1.bf16.msra.mxu0 %v978
  %1183 = vmatprep.subr.bf16.mxu0 %v967
  %1184 = vmatpush1.bf16.msra.mxu0 %v966
  %1185 = vmatprep.subr.bf16.mxu0 %v955
  %1186 = vmatpush1.bf16.msra.mxu0 %v954
  %1187 = vmatprep.subr.bf16.mxu0 %v943
  %1188 = vmatpush1.bf16.msra.mxu0 %v942
  %1189 = vmatprep.subr.bf16.mxu0 %v931
  %1190 = vmatpush1.bf16.msra.mxu0 %v930
  %1191 = vmatprep.subr.bf16.mxu0 %v919
  %1192 = vmatpush1.bf16.msra.mxu0 %v918
  %1193 = vmatprep.subr.bf16.mxu0 %v907
  %1194 = vmatpush1.bf16.msra.mxu0 %v906
  %1195 = vmatprep.subr.bf16.mxu0 0
  %1196 = vmatpush2.bf16.msra.mxu0 0
  %1197 = vmatprep.subr.bf16.mxu0 0
  %1198 = vmatpush2.bf16.msra.mxu0 0
  %1199 = vmatprep.subr.bf16.mxu0 0
  %1200 = vmatpush2.bf16.msra.mxu0 0
  %1201 = vmatprep.subr.bf16.mxu0 0
  %1202 = vmatpush2.bf16.msra.mxu0 0
  %1203 = vmatprep.subr.bf16.mxu0 0
  %1204 = vmatpush2.bf16.msra.mxu0 0
  %1205 = vmatprep.subr.bf16.mxu0 0
  %1206 = vmatpush2.bf16.msra.mxu0 0
  %1207 = vmatprep.subr.bf16.mxu0 0
  %1208 = vmatpush2.bf16.msra.mxu0 0
  %1209 = vmatprep.subr.bf16.mxu0 0
  %1210 = vmatpush2.bf16.msra.mxu0 0
  %1211 = vmatprep.mubr.bf16.mxu0 0
  %1212 = vmatmul.mubr.bf16.gmra.mxu0 %v120
  %v1213 = vpop.f32.mrf.mxu0
  %v1214 = vadd.f32 %v567, %v1213
  %v1215 = vpop.f32.mrf.mxu0
  %v1216 = vadd.f32 %v571, %v1215
  %v1217 = vpop.f32.mrf.mxu0
  %v1218 = vadd.f32 %v567, %v1217
  %v1219 = vpop.f32.mrf.mxu0
  %v1220 = vadd.f32 %v571, %v1219
  %1221 = vmatprep.mubr.bf16.mxu0 0
  %1222 = vmatmul.mubr.bf16.gmra.mxu0 %v121
  %v1223 = vpop.f32.mrf.mxu0
  %v1224 = vadd.f32 %v567, %v1223
  %v1225 = vpop.f32.mrf.mxu0
  %v1226 = vadd.f32 %v571, %v1225
  %v1227 = vpop.f32.mrf.mxu0
  %v1228 = vadd.f32 %v567, %v1227
  %v1229 = vpop.f32.mrf.mxu0
  %v1230 = vadd.f32 %v571, %v1229
  %1231 = vmatprep.mubr.bf16.mxu0 0
  %1232 = vmatmul.mubr.bf16.gmra.mxu0 %v122
  %v1233 = vpop.f32.mrf.mxu0
  %v1234 = vadd.f32 %v567, %v1233
  %v1235 = vpop.f32.mrf.mxu0
  %v1236 = vadd.f32 %v571, %v1235
  %v1237 = vpop.f32.mrf.mxu0
  %v1238 = vadd.f32 %v567, %v1237
  %v1239 = vpop.f32.mrf.mxu0
  %v1240 = vadd.f32 %v571, %v1239
  %1241 = vmatprep.mubr.bf16.mxu0 0
  %1242 = vmatmul.mubr.bf16.gmra.mxu0 %v123
  %v1243 = vpop.f32.mrf.mxu0
  %v1244 = vadd.f32 %v567, %v1243
  %v1245 = vpop.f32.mrf.mxu0
  %v1246 = vadd.f32 %v571, %v1245
  %v1247 = vpop.f32.mrf.mxu0
  %v1248 = vadd.f32 %v567, %v1247
  %v1249 = vpop.f32.mrf.mxu0
  %v1250 = vadd.f32 %v571, %v1249
  %1251 = vmatprep.mubr.bf16.mxu0 0
  %1252 = vmatmul.mubr.bf16.gmra.mxu0 %v124
  %v1253 = vpop.f32.mrf.mxu0
  %v1254 = vadd.f32 %v567, %v1253
  %v1255 = vpop.f32.mrf.mxu0
  %v1256 = vadd.f32 %v571, %v1255
  %v1257 = vpop.f32.mrf.mxu0
  %v1258 = vadd.f32 %v567, %v1257
  %v1259 = vpop.f32.mrf.mxu0
  %v1260 = vadd.f32 %v571, %v1259
  %1261 = vdwg.mxu0
  %1262 = vmatprep.subr.bf16.mxu0 %v993
  %1263 = vmatpush1.bf16.msra.mxu0 %v992
  %1264 = vmatprep.subr.bf16.mxu0 %v981
  %1265 = vmatpush1.bf16.msra.mxu0 %v980
  %1266 = vmatprep.subr.bf16.mxu0 %v969
  %1267 = vmatpush1.bf16.msra.mxu0 %v968
  %1268 = vmatprep.subr.bf16.mxu0 %v957
  %1269 = vmatpush1.bf16.msra.mxu0 %v956
  %1270 = vmatprep.subr.bf16.mxu0 %v945
  %1271 = vmatpush1.bf16.msra.mxu0 %v944
  %1272 = vmatprep.subr.bf16.mxu0 %v933
  %1273 = vmatpush1.bf16.msra.mxu0 %v932
  %1274 = vmatprep.subr.bf16.mxu0 %v921
  %1275 = vmatpush1.bf16.msra.mxu0 %v920
  %1276 = vmatprep.subr.bf16.mxu0 %v909
  %1277 = vmatpush1.bf16.msra.mxu0 %v908
  %1278 = vmatprep.subr.bf16.mxu0 0
  %1279 = vmatpush2.bf16.msra.mxu0 0
  %1280 = vmatprep.subr.bf16.mxu0 0
  %1281 = vmatpush2.bf16.msra.mxu0 0
  %1282 = vmatprep.subr.bf16.mxu0 0
  %1283 = vmatpush2.bf16.msra.mxu0 0
  %1284 = vmatprep.subr.bf16.mxu0 0
  %1285 = vmatpush2.bf16.msra.mxu0 0
  %1286 = vmatprep.subr.bf16.mxu0 0
  %1287 = vmatpush2.bf16.msra.mxu0 0
  %1288 = vmatprep.subr.bf16.mxu0 0
  %1289 = vmatpush2.bf16.msra.mxu0 0
  %1290 = vmatprep.subr.bf16.mxu0 0
  %1291 = vmatpush2.bf16.msra.mxu0 0
  %1292 = vmatprep.subr.bf16.mxu0 0
  %1293 = vmatpush2.bf16.msra.mxu0 0
  %1294 = vmatprep.mubr.bf16.mxu0 0
  %1295 = vmatmul.mubr.bf16.gmra.mxu0 %v120
  %v1296 = vpop.f32.mrf.mxu0
  %v1297 = vadd.f32 %v575, %v1296
  %v1298 = vpop.f32.mrf.mxu0
  %v1299 = vadd.f32 %v579, %v1298
  %v1300 = vpop.f32.mrf.mxu0
  %v1301 = vadd.f32 %v575, %v1300
  %v1302 = vpop.f32.mrf.mxu0
  %v1303 = vadd.f32 %v579, %v1302
  %1304 = vmatprep.mubr.bf16.mxu0 0
  %1305 = vmatmul.mubr.bf16.gmra.mxu0 %v121
  %v1306 = vpop.f32.mrf.mxu0
  %v1307 = vadd.f32 %v575, %v1306
  %v1308 = vpop.f32.mrf.mxu0
  %v1309 = vadd.f32 %v579, %v1308
  %v1310 = vpop.f32.mrf.mxu0
  %v1311 = vadd.f32 %v575, %v1310
  %v1312 = vpop.f32.mrf.mxu0
  %v1313 = vadd.f32 %v579, %v1312
  %1314 = vmatprep.mubr.bf16.mxu0 0
  %1315 = vmatmul.mubr.bf16.gmra.mxu0 %v122
  %v1316 = vpop.f32.mrf.mxu0
  %v1317 = vadd.f32 %v575, %v1316
  %v1318 = vpop.f32.mrf.mxu0
  %v1319 = vadd.f32 %v579, %v1318
  %v1320 = vpop.f32.mrf.mxu0
  %v1321 = vadd.f32 %v575, %v1320
  %v1322 = vpop.f32.mrf.mxu0
  %v1323 = vadd.f32 %v579, %v1322
  %1324 = vmatprep.mubr.bf16.mxu0 0
  %1325 = vmatmul.mubr.bf16.gmra.mxu0 %v123
  %v1326 = vpop.f32.mrf.mxu0
  %v1327 = vadd.f32 %v575, %v1326
  %v1328 = vpop.f32.mrf.mxu0
  %v1329 = vadd.f32 %v579, %v1328
  %v1330 = vpop.f32.mrf.mxu0
  %v1331 = vadd.f32 %v575, %v1330
  %v1332 = vpop.f32.mrf.mxu0
  %v1333 = vadd.f32 %v579, %v1332
  %1334 = vmatprep.mubr.bf16.mxu0 0
  %1335 = vmatmul.mubr.bf16.gmra.mxu0 %v124
  %v1336 = vpop.f32.mrf.mxu0
  %v1337 = vadd.f32 %v575, %v1336
  %v1338 = vpop.f32.mrf.mxu0
  %v1339 = vadd.f32 %v579, %v1338
  %v1340 = vpop.f32.mrf.mxu0
  %v1341 = vadd.f32 %v575, %v1340
  %v1342 = vpop.f32.mrf.mxu0
  %v1343 = vadd.f32 %v579, %v1342
  %1344 = vdwg.mxu0
  %1345 = vmatprep.subr.bf16.mxu0 %v995
  %1346 = vmatpush1.bf16.msra.mxu0 %v994
  %1347 = vmatprep.subr.bf16.mxu0 %v983
  %1348 = vmatpush1.bf16.msra.mxu0 %v982
  %1349 = vmatprep.subr.bf16.mxu0 %v971
  %1350 = vmatpush1.bf16.msra.mxu0 %v970
  %1351 = vmatprep.subr.bf16.mxu0 %v959
  %1352 = vmatpush1.bf16.msra.mxu0 %v958
  %1353 = vmatprep.subr.bf16.mxu0 %v947
  %1354 = vmatpush1.bf16.msra.mxu0 %v946
  %1355 = vmatprep.subr.bf16.mxu0 %v935
  %1356 = vmatpush1.bf16.msra.mxu0 %v934
  %1357 = vmatprep.subr.bf16.mxu0 %v923
  %1358 = vmatpush1.bf16.msra.mxu0 %v922
  %1359 = vmatprep.subr.bf16.mxu0 %v911
  %1360 = vmatpush1.bf16.msra.mxu0 %v910
  %1361 = vmatprep.subr.bf16.mxu0 0
  %1362 = vmatpush2.bf16.msra.mxu0 0
  %1363 = vmatprep.subr.bf16.mxu0 0
  %1364 = vmatpush2.bf16.msra.mxu0 0
  %1365 = vmatprep.subr.bf16.mxu0 0
  %1366 = vmatpush2.bf16.msra.mxu0 0
  %1367 = vmatprep.subr.bf16.mxu0 0
  %1368 = vmatpush2.bf16.msra.mxu0 0
  %1369 = vmatprep.subr.bf16.mxu0 0
  %1370 = vmatpush2.bf16.msra.mxu0 0
  %1371 = vmatprep.subr.bf16.mxu0 0
  %1372 = vmatpush2.bf16.msra.mxu0 0
  %1373 = vmatprep.subr.bf16.mxu0 0
  %1374 = vmatpush2.bf16.msra.mxu0 0
  %1375 = vmatprep.subr.bf16.mxu0 0
  %1376 = vmatpush2.bf16.msra.mxu0 0
  %1377 = vmatprep.mubr.bf16.mxu0 0
  %1378 = vmatmul.mubr.bf16.gmra.mxu0 %v120
  %v1379 = vpop.f32.mrf.mxu0
  %v1380 = vadd.f32 %v583, %v1379
  %v1381 = vpop.f32.mrf.mxu0
  %v1382 = vadd.f32 %v587, %v1381
  %v1383 = vpop.f32.mrf.mxu0
  %v1384 = vadd.f32 %v583, %v1383
  %v1385 = vpop.f32.mrf.mxu0
  %v1386 = vadd.f32 %v587, %v1385
  %1387 = vmatprep.mubr.bf16.mxu0 0
  %1388 = vmatmul.mubr.bf16.gmra.mxu0 %v121
  %v1389 = vpop.f32.mrf.mxu0
  %v1390 = vadd.f32 %v583, %v1389
  %v1391 = vpop.f32.mrf.mxu0
  %v1392 = vadd.f32 %v587, %v1391
  %v1393 = vpop.f32.mrf.mxu0
  %v1394 = vadd.f32 %v583, %v1393
  %v1395 = vpop.f32.mrf.mxu0
  %v1396 = vadd.f32 %v587, %v1395
  %1397 = vmatprep.mubr.bf16.mxu0 0
  %1398 = vmatmul.mubr.bf16.gmra.mxu0 %v122
  %v1399 = vpop.f32.mrf.mxu0
  %v1400 = vadd.f32 %v583, %v1399
  %v1401 = vpop.f32.mrf.mxu0
  %v1402 = vadd.f32 %v587, %v1401
  %v1403 = vpop.f32.mrf.mxu0
  %v1404 = vadd.f32 %v583, %v1403
  %v1405 = vpop.f32.mrf.mxu0
  %v1406 = vadd.f32 %v587, %v1405
  %1407 = vmatprep.mubr.bf16.mxu0 0
  %1408 = vmatmul.mubr.bf16.gmra.mxu0 %v123
  %v1409 = vpop.f32.mrf.mxu0
  %v1410 = vadd.f32 %v583, %v1409
  %v1411 = vpop.f32.mrf.mxu0
  %v1412 = vadd.f32 %v587, %v1411
  %v1413 = vpop.f32.mrf.mxu0
  %v1414 = vadd.f32 %v583, %v1413
  %v1415 = vpop.f32.mrf.mxu0
  %v1416 = vadd.f32 %v587, %v1415
  %1417 = vmatprep.mubr.bf16.mxu0 0
  %1418 = vmatmul.mubr.bf16.gmra.mxu0 %v124
  %v1419 = vpop.f32.mrf.mxu0
  %v1420 = vadd.f32 %v583, %v1419
  %v1421 = vpop.f32.mrf.mxu0
  %v1422 = vadd.f32 %v587, %v1421
  %v1423 = vpop.f32.mrf.mxu0
  %v1424 = vadd.f32 %v583, %v1423
  %v1425 = vpop.f32.mrf.mxu0
  %v1426 = vadd.f32 %v587, %v1425
  %1427 = vdwg.mxu0
  %1428 = vmatprep.subr.bf16.mxu0 %v997
  %1429 = vmatpush1.bf16.msra.mxu0 %v996
  %1430 = vmatprep.subr.bf16.mxu0 %v985
  %1431 = vmatpush1.bf16.msra.mxu0 %v984
  %1432 = vmatprep.subr.bf16.mxu0 %v973
  %1433 = vmatpush1.bf16.msra.mxu0 %v972
  %1434 = vmatprep.subr.bf16.mxu0 %v961
  %1435 = vmatpush1.bf16.msra.mxu0 %v960
  %1436 = vmatprep.subr.bf16.mxu0 %v949
  %1437 = vmatpush1.bf16.msra.mxu0 %v948
  %1438 = vmatprep.subr.bf16.mxu0 %v937
  %1439 = vmatpush1.bf16.msra.mxu0 %v936
  %1440 = vmatprep.subr.bf16.mxu0 %v925
  %1441 = vmatpush1.bf16.msra.mxu0 %v924
  %1442 = vmatprep.subr.bf16.mxu0 %v913
  %1443 = vmatpush1.bf16.msra.mxu0 %v912
  %1444 = vmatprep.subr.bf16.mxu0 0
  %1445 = vmatpush2.bf16.msra.mxu0 0
  %1446 = vmatprep.subr.bf16.mxu0 0
  %1447 = vmatpush2.bf16.msra.mxu0 0
  %1448 = vmatprep.subr.bf16.mxu0 0
  %1449 = vmatpush2.bf16.msra.mxu0 0
  %1450 = vmatprep.subr.bf16.mxu0 0
  %1451 = vmatpush2.bf16.msra.mxu0 0
  %1452 = vmatprep.subr.bf16.mxu0 0
  %1453 = vmatpush2.bf16.msra.mxu0 0
  %1454 = vmatprep.subr.bf16.mxu0 0
  %1455 = vmatpush2.bf16.msra.mxu0 0
  %1456 = vmatprep.subr.bf16.mxu0 0
  %1457 = vmatpush2.bf16.msra.mxu0 0
  %1458 = vmatprep.subr.bf16.mxu0 0
  %1459 = vmatpush2.bf16.msra.mxu0 0
  %1460 = vmatprep.mubr.bf16.mxu0 0
  %1461 = vmatmul.mubr.bf16.gmra.mxu0 %v120
  %v1462 = vpop.f32.mrf.mxu0
  %v1463 = vadd.f32 %v591, %v1462
  %v1464 = vpop.f32.mrf.mxu0
  %v1465 = vadd.f32 %v595, %v1464
  %v1466 = vpop.f32.mrf.mxu0
  %v1467 = vadd.f32 %v591, %v1466
  %v1468 = vpop.f32.mrf.mxu0
  %v1469 = vadd.f32 %v595, %v1468
  %1470 = vmatprep.mubr.bf16.mxu0 0
  %1471 = vmatmul.mubr.bf16.gmra.mxu0 %v121
  %v1472 = vpop.f32.mrf.mxu0
  %v1473 = vadd.f32 %v591, %v1472
  %v1474 = vpop.f32.mrf.mxu0
  %v1475 = vadd.f32 %v595, %v1474
  %v1476 = vpop.f32.mrf.mxu0
  %v1477 = vadd.f32 %v591, %v1476
  %v1478 = vpop.f32.mrf.mxu0
  %v1479 = vadd.f32 %v595, %v1478
  %1480 = vmatprep.mubr.bf16.mxu0 0
  %1481 = vmatmul.mubr.bf16.gmra.mxu0 %v122
  %v1482 = vpop.f32.mrf.mxu0
  %v1483 = vadd.f32 %v591, %v1482
  %v1484 = vpop.f32.mrf.mxu0
  %v1485 = vadd.f32 %v595, %v1484
  %v1486 = vpop.f32.mrf.mxu0
  %v1487 = vadd.f32 %v591, %v1486
  %v1488 = vpop.f32.mrf.mxu0
  %v1489 = vadd.f32 %v595, %v1488
  %1490 = vmatprep.mubr.bf16.mxu0 0
  %1491 = vmatmul.mubr.bf16.gmra.mxu0 %v123
  %v1492 = vpop.f32.mrf.mxu0
  %v1493 = vadd.f32 %v591, %v1492
  %v1494 = vpop.f32.mrf.mxu0
  %v1495 = vadd.f32 %v595, %v1494
  %v1496 = vpop.f32.mrf.mxu0
  %v1497 = vadd.f32 %v591, %v1496
  %v1498 = vpop.f32.mrf.mxu0
  %v1499 = vadd.f32 %v595, %v1498
  %1500 = vmatprep.mubr.bf16.mxu0 0
  %1501 = vmatmul.mubr.bf16.gmra.mxu0 %v124
  %v1502 = vpop.f32.mrf.mxu0
  %v1503 = vadd.f32 %v591, %v1502
  %v1504 = vpop.f32.mrf.mxu0
  %v1505 = vadd.f32 %v595, %v1504
  %v1506 = vpop.f32.mrf.mxu0
  %v1507 = vadd.f32 %v591, %v1506
  %v1508 = vpop.f32.mrf.mxu0
  %v1509 = vadd.f32 %v595, %v1508
  %1510 = vdwg.mxu0
  %1511 = vmatprep.subr.bf16.mxu0 %v999
  %1512 = vmatpush1.bf16.msra.mxu0 %v998
  %1513 = vmatprep.subr.bf16.mxu0 %v987
  %1514 = vmatpush1.bf16.msra.mxu0 %v986
  %1515 = vmatprep.subr.bf16.mxu0 %v975
  %1516 = vmatpush1.bf16.msra.mxu0 %v974
  %1517 = vmatprep.subr.bf16.mxu0 %v963
  %1518 = vmatpush1.bf16.msra.mxu0 %v962
  %1519 = vmatprep.subr.bf16.mxu0 %v951
  %1520 = vmatpush1.bf16.msra.mxu0 %v950
  %1521 = vmatprep.subr.bf16.mxu0 %v939
  %1522 = vmatpush1.bf16.msra.mxu0 %v938
  %1523 = vmatprep.subr.bf16.mxu0 %v927
  %1524 = vmatpush1.bf16.msra.mxu0 %v926
  %1525 = vmatprep.subr.bf16.mxu0 %v915
  %1526 = vmatpush1.bf16.msra.mxu0 %v914
  %1527 = vmatprep.subr.bf16.mxu0 0
  %1528 = vmatpush2.bf16.msra.mxu0 0
  %1529 = vmatprep.subr.bf16.mxu0 0
  %1530 = vmatpush2.bf16.msra.mxu0 0
  %1531 = vmatprep.subr.bf16.mxu0 0
  %1532 = vmatpush2.bf16.msra.mxu0 0
  %1533 = vmatprep.subr.bf16.mxu0 0
  %1534 = vmatpush2.bf16.msra.mxu0 0
  %1535 = vmatprep.subr.bf16.mxu0 0
  %1536 = vmatpush2.bf16.msra.mxu0 0
  %1537 = vmatprep.subr.bf16.mxu0 0
  %1538 = vmatpush2.bf16.msra.mxu0 0
  %1539 = vmatprep.subr.bf16.mxu0 0
  %1540 = vmatpush2.bf16.msra.mxu0 0
  %1541 = vmatprep.subr.bf16.mxu0 0
  %1542 = vmatpush2.bf16.msra.mxu0 0
  %1543 = vmatprep.mubr.bf16.mxu0 0
  %1544 = vmatmul.mubr.bf16.gmra.mxu0 %v120
  %v1545 = vpop.f32.mrf.mxu0
  %v1546 = vadd.f32 %v599, %v1545
  %v1547 = vpop.f32.mrf.mxu0
  %v1548 = vadd.f32 %v603, %v1547
  %v1549 = vpop.f32.mrf.mxu0
  %v1550 = vadd.f32 %v599, %v1549
  %v1551 = vpop.f32.mrf.mxu0
  %v1552 = vadd.f32 %v603, %v1551
  %1553 = vmatprep.mubr.bf16.mxu0 0
  %1554 = vmatmul.mubr.bf16.gmra.mxu0 %v121
  %v1555 = vpop.f32.mrf.mxu0
  %v1556 = vadd.f32 %v599, %v1555
  %v1557 = vpop.f32.mrf.mxu0
  %v1558 = vadd.f32 %v603, %v1557
  %v1559 = vpop.f32.mrf.mxu0
  %v1560 = vadd.f32 %v599, %v1559
  %v1561 = vpop.f32.mrf.mxu0
  %v1562 = vadd.f32 %v603, %v1561
  %1563 = vmatprep.mubr.bf16.mxu0 0
  %1564 = vmatmul.mubr.bf16.gmra.mxu0 %v122
  %v1565 = vpop.f32.mrf.mxu0
  %v1566 = vadd.f32 %v599, %v1565
  %v1567 = vpop.f32.mrf.mxu0
  %v1568 = vadd.f32 %v603, %v1567
  %v1569 = vpop.f32.mrf.mxu0
  %v1570 = vadd.f32 %v599, %v1569
  %v1571 = vpop.f32.mrf.mxu0
  %v1572 = vadd.f32 %v603, %v1571
  %1573 = vmatprep.mubr.bf16.mxu0 0
  %1574 = vmatmul.mubr.bf16.gmra.mxu0 %v123
  %v1575 = vpop.f32.mrf.mxu0
  %v1576 = vadd.f32 %v599, %v1575
  %v1577 = vpop.f32.mrf.mxu0
  %v1578 = vadd.f32 %v603, %v1577
  %v1579 = vpop.f32.mrf.mxu0
  %v1580 = vadd.f32 %v599, %v1579
  %v1581 = vpop.f32.mrf.mxu0
  %v1582 = vadd.f32 %v603, %v1581
  %1583 = vmatprep.mubr.bf16.mxu0 0
  %1584 = vmatmul.mubr.bf16.gmra.mxu0 %v124
  %v1585 = vpop.f32.mrf.mxu0
  %v1586 = vadd.f32 %v599, %v1585
  %v1587 = vpop.f32.mrf.mxu0
  %v1588 = vadd.f32 %v603, %v1587
  %v1589 = vpop.f32.mrf.mxu0
  %v1590 = vadd.f32 %v599, %v1589
  %v1591 = vpop.f32.mrf.mxu0
  %v1592 = vadd.f32 %v603, %v1591
  %1593 = vdwg.mxu0
  %v1594 = vmul.f32 %v1131, %v1297
  %v1595 = vmul.f32 %v1133, %v1299
  %v1596 = vmul.f32 %v1214, %v1380
  %v1597 = vmul.f32 %v1216, %v1382
  %v1598 = vmul.f32 %v1135, %v1301
  %v1599 = vmul.f32 %v1137, %v1303
  %v1600 = vmul.f32 %v1218, %v1384
  %v1601 = vmul.f32 %v1220, %v1386
  %v1602 = vadd.f32 %v1594, %v1595
  %v1603 = vadd.f32 %v1602, %v1596
  %v1604 = vadd.f32 %v1603, %v1597
  %1605 = vadd.xlane.f32.xlu0 %v1604
  %v1606 = vpop.xlane.xlu0 %1605
  %v1607 = vadd.f32 %v1598, %v1599
  %v1608 = vadd.f32 %v1607, %v1600
  %v1609 = vadd.f32 %v1608, %v1601
  %1610 = vadd.xlane.f32.xlu0 %v1609
  %v1611 = vpop.xlane.xlu0 %1610
  %v1612 = vmul.f32 %v1131, %v1307
  %v1613 = vmul.f32 %v1133, %v1309
  %v1614 = vmul.f32 %v1214, %v1390
  %v1615 = vmul.f32 %v1216, %v1392
  %v1616 = vmul.f32 %v1135, %v1311
  %v1617 = vmul.f32 %v1137, %v1313
  %v1618 = vmul.f32 %v1218, %v1394
  %v1619 = vmul.f32 %v1220, %v1396
  %v1620 = vadd.f32 %v1612, %v1613
  %v1621 = vadd.f32 %v1620, %v1614
  %v1622 = vadd.f32 %v1621, %v1615
  %1623 = vadd.xlane.f32.xlu0 %v1622
  %v1624 = vpop.xlane.xlu0 %1623
  %v1625 = vadd.f32 %v1616, %v1617
  %v1626 = vadd.f32 %v1625, %v1618
  %v1627 = vadd.f32 %v1626, %v1619
  %1628 = vadd.xlane.f32.xlu0 %v1627
  %v1629 = vpop.xlane.xlu0 %1628
  %v1630 = vmul.f32 %v1131, %v1317
  %v1631 = vmul.f32 %v1133, %v1319
  %v1632 = vmul.f32 %v1214, %v1400
  %v1633 = vmul.f32 %v1216, %v1402
  %v1634 = vmul.f32 %v1135, %v1321
  %v1635 = vmul.f32 %v1137, %v1323
  %v1636 = vmul.f32 %v1218, %v1404
  %v1637 = vmul.f32 %v1220, %v1406
  %v1638 = vadd.f32 %v1630, %v1631
  %v1639 = vadd.f32 %v1638, %v1632
  %v1640 = vadd.f32 %v1639, %v1633
  %1641 = vadd.xlane.f32.xlu0 %v1640
  %v1642 = vpop.xlane.xlu0 %1641
  %v1643 = vadd.f32 %v1634, %v1635
  %v1644 = vadd.f32 %v1643, %v1636
  %v1645 = vadd.f32 %v1644, %v1637
  %1646 = vadd.xlane.f32.xlu0 %v1645
  %v1647 = vpop.xlane.xlu0 %1646
  %v1648 = vmul.f32 %v1131, %v1327
  %v1649 = vmul.f32 %v1133, %v1329
  %v1650 = vmul.f32 %v1214, %v1410
  %v1651 = vmul.f32 %v1216, %v1412
  %v1652 = vmul.f32 %v1135, %v1331
  %v1653 = vmul.f32 %v1137, %v1333
  %v1654 = vmul.f32 %v1218, %v1414
  %v1655 = vmul.f32 %v1220, %v1416
  %v1656 = vadd.f32 %v1648, %v1649
  %v1657 = vadd.f32 %v1656, %v1650
  %v1658 = vadd.f32 %v1657, %v1651
  %1659 = vadd.xlane.f32.xlu0 %v1658
  %v1660 = vpop.xlane.xlu0 %1659
  %v1661 = vadd.f32 %v1652, %v1653
  %v1662 = vadd.f32 %v1661, %v1654
  %v1663 = vadd.f32 %v1662, %v1655
  %1664 = vadd.xlane.f32.xlu0 %v1663
  %v1665 = vpop.xlane.xlu0 %1664
  %v1666 = vmul.f32 %v1131, %v1337
  %v1667 = vmul.f32 %v1133, %v1339
  %v1668 = vmul.f32 %v1214, %v1420
  %v1669 = vmul.f32 %v1216, %v1422
  %v1670 = vmul.f32 %v1135, %v1341
  %v1671 = vmul.f32 %v1137, %v1343
  %v1672 = vmul.f32 %v1218, %v1424
  %v1673 = vmul.f32 %v1220, %v1426
  %v1674 = vadd.f32 %v1666, %v1667
  %v1675 = vadd.f32 %v1674, %v1668
  %v1676 = vadd.f32 %v1675, %v1669
  %1677 = vadd.xlane.f32.xlu0 %v1676
  %v1678 = vpop.xlane.xlu0 %1677
  %v1679 = vadd.f32 %v1670, %v1671
  %v1680 = vadd.f32 %v1679, %v1672
  %v1681 = vadd.f32 %v1680, %v1673
  %1682 = vadd.xlane.f32.xlu0 %v1681
  %v1683 = vpop.xlane.xlu0 %1682
  %vm1684 = vcmask 7168
  %v1685 = vsel %vm1684, %v1606, %v1624
  %v1686 = vsel %vm1684, %v1611, %v1629
  %vm1687 = vcmask 15360
  %v1688 = vsel %vm1687, %v1685, %v1642
  %v1689 = vsel %vm1687, %v1686, %v1647
  %vm1690 = vcmask 23552
  %v1691 = vsel %vm1690, %v1688, %v1660
  %v1692 = vsel %vm1690, %v1689, %v1665
  %vm1693 = vcmask 31744
  %v1694 = vsel %vm1693, %v1691, %v1678
  %v1695 = vsel %vm1693, %v1692, %v1683
  %vm1696 = vcmask 39936
  %v1697 = vsel %vm1696, %v1694, -inf
  %1698 = vmax.xlane.f32.xlu0 %v1697
  %v1699 = vpop.xlane.xlu0 %1698
  %v1700 = vsel %vm1696, %v1695, -inf
  %1701 = vmax.xlane.f32.xlu0 %v1700
  %v1702 = vpop.xlane.xlu0 %1701
  %v1703 = vsub.f32 %v1694, %v1699
  %v1704 = vsub.f32 %v1695, %v1702
  %v1705 = vmul.f32 %v1703, 1.442695
  %v1706 = vpow.pop %v1705
  %v1707 = vmul.f32 %v1704, 1.442695
  %v1708 = vpow.pop %v1707
  %v1709 = vsel %vm1696, %v1706, 0.0
  %1710 = vadd.xlane.f32.xlu0 %v1709
  %v1711 = vpop.xlane.xlu0 %1710
  %v1712 = vsel %vm1696, %v1708, 0.0
  %1713 = vadd.xlane.f32.xlu0 %v1712
  %v1714 = vpop.xlane.xlu0 %1713
  %v1715 = vrcp.pop %v1711
  %v1716 = vrcp.pop %v1714
  %v1717 = vmul.f32 %v1706, %v1715
  %v1718 = vmul.f32 %v1708, %v1716
  %1720 = vset.pattern.permute.xlu0 0
  %1721 = vperm.xlu0 %1720, %v1717
  %v1722 = vpop.permute.xlu0 %1721
  %1725 = vset.pattern.permute.xlu0 0
  %1726 = vperm.xlu0 %1725, %v1718
  %v1727 = vpop.permute.xlu0 %1726
  %v1729 = vmul.f32 %v1722, %v1463
  %v1730 = vmul.f32 %v1722, %v1465
  %v1731 = vmul.f32 %v1722, %v1546
  %v1732 = vmul.f32 %v1722, %v1548
  %v1733 = vmul.f32 %v1727, %v1467
  %v1734 = vmul.f32 %v1727, %v1469
  %v1735 = vmul.f32 %v1727, %v1550
  %v1736 = vmul.f32 %v1727, %v1552
  %1737 = vset.pattern.permute.xlu0 1
  %1738 = vperm.xlu0 %1737, %v1717
  %v1739 = vpop.permute.xlu0 %1738
  %1741 = vset.pattern.permute.xlu0 1
  %1742 = vperm.xlu0 %1741, %v1718
  %v1743 = vpop.permute.xlu0 %1742
  %v1745 = vmul.f32 %v1739, %v1473
  %v1746 = vmul.f32 %v1739, %v1475
  %v1747 = vmul.f32 %v1739, %v1556
  %v1748 = vmul.f32 %v1739, %v1558
  %v1749 = vmul.f32 %v1743, %v1477
  %v1750 = vmul.f32 %v1743, %v1479
  %v1751 = vmul.f32 %v1743, %v1560
  %v1752 = vmul.f32 %v1743, %v1562
  %v1753 = vadd.f32 %v1729, %v1745
  %v1754 = vadd.f32 %v1730, %v1746
  %v1755 = vadd.f32 %v1731, %v1747
  %v1756 = vadd.f32 %v1732, %v1748
  %v1757 = vadd.f32 %v1733, %v1749
  %v1758 = vadd.f32 %v1734, %v1750
  %v1759 = vadd.f32 %v1735, %v1751
  %v1760 = vadd.f32 %v1736, %v1752
  %1761 = vset.pattern.permute.xlu0 2
  %1762 = vperm.xlu0 %1761, %v1717
  %v1763 = vpop.permute.xlu0 %1762
  %1765 = vset.pattern.permute.xlu0 2
  %1766 = vperm.xlu0 %1765, %v1718
  %v1767 = vpop.permute.xlu0 %1766
  %v1769 = vmul.f32 %v1763, %v1483
  %v1770 = vmul.f32 %v1763, %v1485
  %v1771 = vmul.f32 %v1763, %v1566
  %v1772 = vmul.f32 %v1763, %v1568
  %v1773 = vmul.f32 %v1767, %v1487
  %v1774 = vmul.f32 %v1767, %v1489
  %v1775 = vmul.f32 %v1767, %v1570
  %v1776 = vmul.f32 %v1767, %v1572
  %v1777 = vadd.f32 %v1753, %v1769
  %v1778 = vadd.f32 %v1754, %v1770
  %v1779 = vadd.f32 %v1755, %v1771
  %v1780 = vadd.f32 %v1756, %v1772
  %v1781 = vadd.f32 %v1757, %v1773
  %v1782 = vadd.f32 %v1758, %v1774
  %v1783 = vadd.f32 %v1759, %v1775
  %v1784 = vadd.f32 %v1760, %v1776
  %1785 = vset.pattern.permute.xlu0 3
  %1786 = vperm.xlu0 %1785, %v1717
  %v1787 = vpop.permute.xlu0 %1786
  %1789 = vset.pattern.permute.xlu0 3
  %1790 = vperm.xlu0 %1789, %v1718
  %v1791 = vpop.permute.xlu0 %1790
  %v1793 = vmul.f32 %v1787, %v1493
  %v1794 = vmul.f32 %v1787, %v1495
  %v1795 = vmul.f32 %v1787, %v1576
  %v1796 = vmul.f32 %v1787, %v1578
  %v1797 = vmul.f32 %v1791, %v1497
  %v1798 = vmul.f32 %v1791, %v1499
  %v1799 = vmul.f32 %v1791, %v1580
  %v1800 = vmul.f32 %v1791, %v1582
  %v1801 = vadd.f32 %v1777, %v1793
  %v1802 = vadd.f32 %v1778, %v1794
  %v1803 = vadd.f32 %v1779, %v1795
  %v1804 = vadd.f32 %v1780, %v1796
  %v1805 = vadd.f32 %v1781, %v1797
  %v1806 = vadd.f32 %v1782, %v1798
  %v1807 = vadd.f32 %v1783, %v1799
  %v1808 = vadd.f32 %v1784, %v1800
  %1809 = vset.pattern.permute.xlu0 4
  %1810 = vperm.xlu0 %1809, %v1717
  %v1811 = vpop.permute.xlu0 %1810
  %1813 = vset.pattern.permute.xlu0 4
  %1814 = vperm.xlu0 %1813, %v1718
  %v1815 = vpop.permute.xlu0 %1814
  %v1817 = vmul.f32 %v1811, %v1503
  %v1818 = vmul.f32 %v1811, %v1505
  %v1819 = vmul.f32 %v1811, %v1586
  %v1820 = vmul.f32 %v1811, %v1588
  %v1821 = vmul.f32 %v1815, %v1507
  %v1822 = vmul.f32 %v1815, %v1509
  %v1823 = vmul.f32 %v1815, %v1590
  %v1824 = vmul.f32 %v1815, %v1592
  %v1825 = vadd.f32 %v1801, %v1817
  %v1826 = vadd.f32 %v1802, %v1818
  %v1827 = vadd.f32 %v1803, %v1819
  %v1828 = vadd.f32 %v1804, %v1820
  %v1829 = vadd.f32 %v1805, %v1821
  %v1830 = vadd.f32 %v1806, %v1822
  %v1831 = vadd.f32 %v1807, %v1823
  %v1832 = vadd.f32 %v1808, %v1824
  %v1833 = vpack.c.bf16 %v1829, %v1825
  %v1834 = vpack.c.bf16 %v1830, %v1826
  %v1835 = vpack.c.bf16 %v1831, %v1827
  %v1836 = vpack.c.bf16 %v1832, %v1828
  %v1837 = vld [vmem:[%s5] sm:$0xff]
  %v1838 = vld [vmem:[%s5 + $0x8] sm:$0xff]
  %v1839 = vld [vmem:[%s5 + $0x10] sm:$0xff]
  %v1840 = vld [vmem:[%s5 + $0x18] sm:$0xff]
  %v1841 = vld [vmem:[%s5 + $0x20] sm:$0xff]
  %v1842 = vld [vmem:[%s5 + $0x28] sm:$0xff]
  %v1843 = vld [vmem:[%s5 + $0x30] sm:$0xff]
  %v1844 = vld [vmem:[%s5 + $0x38] sm:$0xff]
  %v1845 = vld [vmem:[%s5 + $0x40] sm:$0xff]
  %v1846 = vld [vmem:[%s5 + $0x48] sm:$0xff]
  %v1847 = vld [vmem:[%s5 + $0x50] sm:$0xff]
  %v1848 = vld [vmem:[%s5 + $0x58] sm:$0xff]
  %v1849 = vld [vmem:[%s5 + $0x60] sm:$0xff]
  %v1850 = vld [vmem:[%s5 + $0x68] sm:$0xff]
  %v1851 = vld [vmem:[%s5 + $0x70] sm:$0xff]
  %v1852 = vld [vmem:[%s5 + $0x78] sm:$0xff]
  %v1853 = vld [vmem:[%s5 + $0x80] sm:$0xff]
  %v1854 = vld [vmem:[%s5 + $0x88] sm:$0xff]
  %v1855 = vld [vmem:[%s5 + $0x90] sm:$0xff]
  %v1856 = vld [vmem:[%s5 + $0x98] sm:$0xff]
  %v1857 = vld [vmem:[%s5 + $0xa0] sm:$0xff]
  %v1858 = vld [vmem:[%s5 + $0xa8] sm:$0xff]
  %v1859 = vld [vmem:[%s5 + $0xb0] sm:$0xff]
  %v1860 = vld [vmem:[%s5 + $0xb8] sm:$0xff]
  %v1861 = vld [vmem:[%s5 + $0xc0] sm:$0xff]
  %v1862 = vld [vmem:[%s5 + $0xc8] sm:$0xff]
  %v1863 = vld [vmem:[%s5 + $0xd0] sm:$0xff]
  %v1864 = vld [vmem:[%s5 + $0xd8] sm:$0xff]
  %v1865 = vld [vmem:[%s5 + $0xe0] sm:$0xff]
  %v1866 = vld [vmem:[%s5 + $0xe8] sm:$0xff]
  %v1867 = vld [vmem:[%s5 + $0xf0] sm:$0xff]
  %v1868 = vld [vmem:[%s5 + $0xf8] sm:$0xff]
  %v1869 = vld [vmem:[%s5 + $0x100] sm:$0xff]
  %v1870 = vld [vmem:[%s5 + $0x108] sm:$0xff]
  %v1871 = vld [vmem:[%s5 + $0x110] sm:$0xff]
  %v1872 = vld [vmem:[%s5 + $0x118] sm:$0xff]
  %v1873 = vld [vmem:[%s5 + $0x120] sm:$0xff]
  %v1874 = vld [vmem:[%s5 + $0x128] sm:$0xff]
  %v1875 = vld [vmem:[%s5 + $0x130] sm:$0xff]
  %v1876 = vld [vmem:[%s5 + $0x138] sm:$0xff]
  %v1877 = vld [vmem:[%s5 + $0x140] sm:$0xff]
  %v1878 = vld [vmem:[%s5 + $0x148] sm:$0xff]
  %v1879 = vld [vmem:[%s5 + $0x150] sm:$0xff]
  %v1880 = vld [vmem:[%s5 + $0x158] sm:$0xff]
  %v1881 = vld [vmem:[%s5 + $0x160] sm:$0xff]
  %v1882 = vld [vmem:[%s5 + $0x168] sm:$0xff]
  %v1883 = vld [vmem:[%s5 + $0x170] sm:$0xff]
  %v1884 = vld [vmem:[%s5 + $0x178] sm:$0xff]
  %v1885 = vld [vmem:[%s5 + $0x180] sm:$0xff]
  %v1886 = vld [vmem:[%s5 + $0x188] sm:$0xff]
  %v1887 = vld [vmem:[%s5 + $0x190] sm:$0xff]
  %v1888 = vld [vmem:[%s5 + $0x198] sm:$0xff]
  %v1889 = vld [vmem:[%s5 + $0x1a0] sm:$0xff]
  %v1890 = vld [vmem:[%s5 + $0x1a8] sm:$0xff]
  %v1891 = vld [vmem:[%s5 + $0x1b0] sm:$0xff]
  %v1892 = vld [vmem:[%s5 + $0x1b8] sm:$0xff]
  %v1893 = vld [vmem:[%s5 + $0x1c0] sm:$0xff]
  %v1894 = vld [vmem:[%s5 + $0x1c8] sm:$0xff]
  %v1895 = vld [vmem:[%s5 + $0x1d0] sm:$0xff]
  %v1896 = vld [vmem:[%s5 + $0x1d8] sm:$0xff]
  %v1897 = vld [vmem:[%s5 + $0x1e0] sm:$0xff]
  %v1898 = vld [vmem:[%s5 + $0x1e8] sm:$0xff]
  %v1899 = vld [vmem:[%s5 + $0x1f0] sm:$0xff]
  %v1900 = vld [vmem:[%s5 + $0x1f8] sm:$0xff]
  %v1901 = vld [vmem:[%s5 + $0x200] sm:$0xff]
  %v1902 = vld [vmem:[%s5 + $0x208] sm:$0xff]
  %v1903 = vld [vmem:[%s5 + $0x210] sm:$0xff]
  %v1904 = vld [vmem:[%s5 + $0x218] sm:$0xff]
  %v1905 = vld [vmem:[%s5 + $0x220] sm:$0xff]
  %v1906 = vld [vmem:[%s5 + $0x228] sm:$0xff]
  %v1907 = vld [vmem:[%s5 + $0x230] sm:$0xff]
  %v1908 = vld [vmem:[%s5 + $0x238] sm:$0xff]
  %v1909 = vld [vmem:[%s5 + $0x240] sm:$0xff]
  %v1910 = vld [vmem:[%s5 + $0x248] sm:$0xff]
  %v1911 = vld [vmem:[%s5 + $0x250] sm:$0xff]
  %v1912 = vld [vmem:[%s5 + $0x258] sm:$0xff]
  %v1913 = vld [vmem:[%s5 + $0x260] sm:$0xff]
  %v1914 = vld [vmem:[%s5 + $0x268] sm:$0xff]
  %v1915 = vld [vmem:[%s5 + $0x270] sm:$0xff]
  %v1916 = vld [vmem:[%s5 + $0x278] sm:$0xff]
  %v1917 = vld [vmem:[%s5 + $0x280] sm:$0xff]
  %v1918 = vld [vmem:[%s5 + $0x288] sm:$0xff]
  %v1919 = vld [vmem:[%s5 + $0x290] sm:$0xff]
  %v1920 = vld [vmem:[%s5 + $0x298] sm:$0xff]
  %v1921 = vld [vmem:[%s5 + $0x2a0] sm:$0xff]
  %v1922 = vld [vmem:[%s5 + $0x2a8] sm:$0xff]
  %v1923 = vld [vmem:[%s5 + $0x2b0] sm:$0xff]
  %v1924 = vld [vmem:[%s5 + $0x2b8] sm:$0xff]
  %v1925 = vld [vmem:[%s5 + $0x2c0] sm:$0xff]
  %v1926 = vld [vmem:[%s5 + $0x2c8] sm:$0xff]
  %v1927 = vld [vmem:[%s5 + $0x2d0] sm:$0xff]
  %v1928 = vld [vmem:[%s5 + $0x2d8] sm:$0xff]
  %v1929 = vld [vmem:[%s5 + $0x2e0] sm:$0xff]
  %v1930 = vld [vmem:[%s5 + $0x2e8] sm:$0xff]
  %v1931 = vld [vmem:[%s5 + $0x2f0] sm:$0xff]
  %v1932 = vld [vmem:[%s5 + $0x2f8] sm:$0xff]
  %v1933 = vld [vmem:[%s5 + $0x300] sm:$0xff]
  %v1934 = vld [vmem:[%s5 + $0x308] sm:$0xff]
  %v1935 = vld [vmem:[%s5 + $0x310] sm:$0xff]
  %v1936 = vld [vmem:[%s5 + $0x318] sm:$0xff]
  %v1937 = vld [vmem:[%s5 + $0x320] sm:$0xff]
  %v1938 = vld [vmem:[%s5 + $0x328] sm:$0xff]
  %v1939 = vld [vmem:[%s5 + $0x330] sm:$0xff]
  %v1940 = vld [vmem:[%s5 + $0x338] sm:$0xff]
  %v1941 = vld [vmem:[%s5 + $0x340] sm:$0xff]
  %v1942 = vld [vmem:[%s5 + $0x348] sm:$0xff]
  %v1943 = vld [vmem:[%s5 + $0x350] sm:$0xff]
  %v1944 = vld [vmem:[%s5 + $0x358] sm:$0xff]
  %v1945 = vld [vmem:[%s5 + $0x360] sm:$0xff]
  %v1946 = vld [vmem:[%s5 + $0x368] sm:$0xff]
  %v1947 = vld [vmem:[%s5 + $0x370] sm:$0xff]
  %v1948 = vld [vmem:[%s5 + $0x378] sm:$0xff]
  %v1949 = vld [vmem:[%s5 + $0x380] sm:$0xff]
  %v1950 = vld [vmem:[%s5 + $0x388] sm:$0xff]
  %v1951 = vld [vmem:[%s5 + $0x390] sm:$0xff]
  %v1952 = vld [vmem:[%s5 + $0x398] sm:$0xff]
  %v1953 = vld [vmem:[%s5 + $0x3a0] sm:$0xff]
  %v1954 = vld [vmem:[%s5 + $0x3a8] sm:$0xff]
  %v1955 = vld [vmem:[%s5 + $0x3b0] sm:$0xff]
  %v1956 = vld [vmem:[%s5 + $0x3b8] sm:$0xff]
  %v1957 = vld [vmem:[%s5 + $0x3c0] sm:$0xff]
  %v1958 = vld [vmem:[%s5 + $0x3c8] sm:$0xff]
  %v1959 = vld [vmem:[%s5 + $0x3d0] sm:$0xff]
  %v1960 = vld [vmem:[%s5 + $0x3d8] sm:$0xff]
  %v1961 = vld [vmem:[%s5 + $0x3e0] sm:$0xff]
  %v1962 = vld [vmem:[%s5 + $0x3e8] sm:$0xff]
  %v1963 = vld [vmem:[%s5 + $0x3f0] sm:$0xff]
  %v1964 = vld [vmem:[%s5 + $0x3f8] sm:$0xff]
  %v2093 = vunpack.c.l.b16 %v1837
  %v2094 = vunpack.c.h.b16 %v1837
  %v2095 = vunpack.c.l.b16 %v1838
  %v2096 = vunpack.c.h.b16 %v1838
  %v2097 = vunpack.c.l.b16 %v1839
  %v2098 = vunpack.c.h.b16 %v1839
  %v2099 = vunpack.c.l.b16 %v1840
  %v2100 = vunpack.c.h.b16 %v1840
  %v2101 = vunpack.c.l.b16 %v1841
  %v2102 = vunpack.c.h.b16 %v1841
  %v2103 = vunpack.c.l.b16 %v1842
  %v2104 = vunpack.c.h.b16 %v1842
  %v2105 = vunpack.c.l.b16 %v1843
  %v2106 = vunpack.c.h.b16 %v1843
  %v2107 = vunpack.c.l.b16 %v1844
  %v2108 = vunpack.c.h.b16 %v1844
  %v2109 = vunpack.c.l.b16 %v1845
  %v2110 = vunpack.c.h.b16 %v1845
  %v2111 = vunpack.c.l.b16 %v1846
  %v2112 = vunpack.c.h.b16 %v1846
  %v2113 = vunpack.c.l.b16 %v1847
  %v2114 = vunpack.c.h.b16 %v1847
  %v2115 = vunpack.c.l.b16 %v1848
  %v2116 = vunpack.c.h.b16 %v1848
  %v2117 = vunpack.c.l.b16 %v1849
  %v2118 = vunpack.c.h.b16 %v1849
  %v2119 = vunpack.c.l.b16 %v1850
  %v2120 = vunpack.c.h.b16 %v1850
  %v2121 = vunpack.c.l.b16 %v1851
  %v2122 = vunpack.c.h.b16 %v1851
  %v2123 = vunpack.c.l.b16 %v1852
  %v2124 = vunpack.c.h.b16 %v1852
  %v2125 = vunpack.c.l.b16 %v1853
  %v2126 = vunpack.c.h.b16 %v1853
  %v2127 = vunpack.c.l.b16 %v1854
  %v2128 = vunpack.c.h.b16 %v1854
  %v2129 = vunpack.c.l.b16 %v1855
  %v2130 = vunpack.c.h.b16 %v1855
  %v2131 = vunpack.c.l.b16 %v1856
  %v2132 = vunpack.c.h.b16 %v1856
  %v2133 = vunpack.c.l.b16 %v1857
  %v2134 = vunpack.c.h.b16 %v1857
  %v2135 = vunpack.c.l.b16 %v1858
  %v2136 = vunpack.c.h.b16 %v1858
  %v2137 = vunpack.c.l.b16 %v1859
  %v2138 = vunpack.c.h.b16 %v1859
  %v2139 = vunpack.c.l.b16 %v1860
  %v2140 = vunpack.c.h.b16 %v1860
  %v2141 = vunpack.c.l.b16 %v1861
  %v2142 = vunpack.c.h.b16 %v1861
  %v2143 = vunpack.c.l.b16 %v1862
  %v2144 = vunpack.c.h.b16 %v1862
  %v2145 = vunpack.c.l.b16 %v1863
  %v2146 = vunpack.c.h.b16 %v1863
  %v2147 = vunpack.c.l.b16 %v1864
  %v2148 = vunpack.c.h.b16 %v1864
  %v2149 = vunpack.c.l.b16 %v1865
  %v2150 = vunpack.c.h.b16 %v1865
  %v2151 = vunpack.c.l.b16 %v1866
  %v2152 = vunpack.c.h.b16 %v1866
  %v2153 = vunpack.c.l.b16 %v1867
  %v2154 = vunpack.c.h.b16 %v1867
  %v2155 = vunpack.c.l.b16 %v1868
  %v2156 = vunpack.c.h.b16 %v1868
  %v2157 = vunpack.c.l.b16 %v1869
  %v2158 = vunpack.c.h.b16 %v1869
  %v2159 = vunpack.c.l.b16 %v1870
  %v2160 = vunpack.c.h.b16 %v1870
  %v2161 = vunpack.c.l.b16 %v1871
  %v2162 = vunpack.c.h.b16 %v1871
  %v2163 = vunpack.c.l.b16 %v1872
  %v2164 = vunpack.c.h.b16 %v1872
  %v2165 = vunpack.c.l.b16 %v1873
  %v2166 = vunpack.c.h.b16 %v1873
  %v2167 = vunpack.c.l.b16 %v1874
  %v2168 = vunpack.c.h.b16 %v1874
  %v2169 = vunpack.c.l.b16 %v1875
  %v2170 = vunpack.c.h.b16 %v1875
  %v2171 = vunpack.c.l.b16 %v1876
  %v2172 = vunpack.c.h.b16 %v1876
  %v2173 = vunpack.c.l.b16 %v1877
  %v2174 = vunpack.c.h.b16 %v1877
  %v2175 = vunpack.c.l.b16 %v1878
  %v2176 = vunpack.c.h.b16 %v1878
  %v2177 = vunpack.c.l.b16 %v1879
  %v2178 = vunpack.c.h.b16 %v1879
  %v2179 = vunpack.c.l.b16 %v1880
  %v2180 = vunpack.c.h.b16 %v1880
  %v2181 = vunpack.c.l.b16 %v1881
  %v2182 = vunpack.c.h.b16 %v1881
  %v2183 = vunpack.c.l.b16 %v1882
  %v2184 = vunpack.c.h.b16 %v1882
  %v2185 = vunpack.c.l.b16 %v1883
  %v2186 = vunpack.c.h.b16 %v1883
  %v2187 = vunpack.c.l.b16 %v1884
  %v2188 = vunpack.c.h.b16 %v1884
  %v2189 = vunpack.c.l.b16 %v1885
  %v2190 = vunpack.c.h.b16 %v1885
  %v2191 = vunpack.c.l.b16 %v1886
  %v2192 = vunpack.c.h.b16 %v1886
  %v2193 = vunpack.c.l.b16 %v1887
  %v2194 = vunpack.c.h.b16 %v1887
  %v2195 = vunpack.c.l.b16 %v1888
  %v2196 = vunpack.c.h.b16 %v1888
  %v2197 = vunpack.c.l.b16 %v1889
  %v2198 = vunpack.c.h.b16 %v1889
  %v2199 = vunpack.c.l.b16 %v1890
  %v2200 = vunpack.c.h.b16 %v1890
  %v2201 = vunpack.c.l.b16 %v1891
  %v2202 = vunpack.c.h.b16 %v1891
  %v2203 = vunpack.c.l.b16 %v1892
  %v2204 = vunpack.c.h.b16 %v1892
  %v2205 = vunpack.c.l.b16 %v1893
  %v2206 = vunpack.c.h.b16 %v1893
  %v2207 = vunpack.c.l.b16 %v1894
  %v2208 = vunpack.c.h.b16 %v1894
  %v2209 = vunpack.c.l.b16 %v1895
  %v2210 = vunpack.c.h.b16 %v1895
  %v2211 = vunpack.c.l.b16 %v1896
  %v2212 = vunpack.c.h.b16 %v1896
  %v2213 = vunpack.c.l.b16 %v1897
  %v2214 = vunpack.c.h.b16 %v1897
  %v2215 = vunpack.c.l.b16 %v1898
  %v2216 = vunpack.c.h.b16 %v1898
  %v2217 = vunpack.c.l.b16 %v1899
  %v2218 = vunpack.c.h.b16 %v1899
  %v2219 = vunpack.c.l.b16 %v1900
  %v2220 = vunpack.c.h.b16 %v1900
  %v2221 = vunpack.c.l.b16 %v1901
  %v2222 = vunpack.c.h.b16 %v1901
  %v2223 = vunpack.c.l.b16 %v1902
  %v2224 = vunpack.c.h.b16 %v1902
  %v2225 = vunpack.c.l.b16 %v1903
  %v2226 = vunpack.c.h.b16 %v1903
  %v2227 = vunpack.c.l.b16 %v1904
  %v2228 = vunpack.c.h.b16 %v1904
  %v2229 = vunpack.c.l.b16 %v1905
  %v2230 = vunpack.c.h.b16 %v1905
  %v2231 = vunpack.c.l.b16 %v1906
  %v2232 = vunpack.c.h.b16 %v1906
  %v2233 = vunpack.c.l.b16 %v1907
  %v2234 = vunpack.c.h.b16 %v1907
  %v2235 = vunpack.c.l.b16 %v1908
  %v2236 = vunpack.c.h.b16 %v1908
  %v2237 = vunpack.c.l.b16 %v1909
  %v2238 = vunpack.c.h.b16 %v1909
  %v2239 = vunpack.c.l.b16 %v1910
  %v2240 = vunpack.c.h.b16 %v1910
  %v2241 = vunpack.c.l.b16 %v1911
  %v2242 = vunpack.c.h.b16 %v1911
  %v2243 = vunpack.c.l.b16 %v1912
  %v2244 = vunpack.c.h.b16 %v1912
  %v2245 = vunpack.c.l.b16 %v1913
  %v2246 = vunpack.c.h.b16 %v1913
  %v2247 = vunpack.c.l.b16 %v1914
  %v2248 = vunpack.c.h.b16 %v1914
  %v2249 = vunpack.c.l.b16 %v1915
  %v2250 = vunpack.c.h.b16 %v1915
  %v2251 = vunpack.c.l.b16 %v1916
  %v2252 = vunpack.c.h.b16 %v1916
  %v2253 = vunpack.c.l.b16 %v1917
  %v2254 = vunpack.c.h.b16 %v1917
  %v2255 = vunpack.c.l.b16 %v1918
  %v2256 = vunpack.c.h.b16 %v1918
  %v2257 = vunpack.c.l.b16 %v1919
  %v2258 = vunpack.c.h.b16 %v1919
  %v2259 = vunpack.c.l.b16 %v1920
  %v2260 = vunpack.c.h.b16 %v1920
  %v2261 = vunpack.c.l.b16 %v1921
  %v2262 = vunpack.c.h.b16 %v1921
  %v2263 = vunpack.c.l.b16 %v1922
  %v2264 = vunpack.c.h.b16 %v1922
  %v2265 = vunpack.c.l.b16 %v1923
  %v2266 = vunpack.c.h.b16 %v1923
  %v2267 = vunpack.c.l.b16 %v1924
  %v2268 = vunpack.c.h.b16 %v1924
  %v2269 = vunpack.c.l.b16 %v1925
  %v2270 = vunpack.c.h.b16 %v1925
  %v2271 = vunpack.c.l.b16 %v1926
  %v2272 = vunpack.c.h.b16 %v1926
  %v2273 = vunpack.c.l.b16 %v1927
  %v2274 = vunpack.c.h.b16 %v1927
  %v2275 = vunpack.c.l.b16 %v1928
  %v2276 = vunpack.c.h.b16 %v1928
  %v2277 = vunpack.c.l.b16 %v1929
  %v2278 = vunpack.c.h.b16 %v1929
  %v2279 = vunpack.c.l.b16 %v1930
  %v2280 = vunpack.c.h.b16 %v1930
  %v2281 = vunpack.c.l.b16 %v1931
  %v2282 = vunpack.c.h.b16 %v1931
  %v2283 = vunpack.c.l.b16 %v1932
  %v2284 = vunpack.c.h.b16 %v1932
  %v2285 = vunpack.c.l.b16 %v1933
  %v2286 = vunpack.c.h.b16 %v1933
  %v2287 = vunpack.c.l.b16 %v1934
  %v2288 = vunpack.c.h.b16 %v1934
  %v2289 = vunpack.c.l.b16 %v1935
  %v2290 = vunpack.c.h.b16 %v1935
  %v2291 = vunpack.c.l.b16 %v1936
  %v2292 = vunpack.c.h.b16 %v1936
  %v2293 = vunpack.c.l.b16 %v1937
  %v2294 = vunpack.c.h.b16 %v1937
  %v2295 = vunpack.c.l.b16 %v1938
  %v2296 = vunpack.c.h.b16 %v1938
  %v2297 = vunpack.c.l.b16 %v1939
  %v2298 = vunpack.c.h.b16 %v1939
  %v2299 = vunpack.c.l.b16 %v1940
  %v2300 = vunpack.c.h.b16 %v1940
  %v2301 = vunpack.c.l.b16 %v1941
  %v2302 = vunpack.c.h.b16 %v1941
  %v2303 = vunpack.c.l.b16 %v1942
  %v2304 = vunpack.c.h.b16 %v1942
  %v2305 = vunpack.c.l.b16 %v1943
  %v2306 = vunpack.c.h.b16 %v1943
  %v2307 = vunpack.c.l.b16 %v1944
  %v2308 = vunpack.c.h.b16 %v1944
  %v2309 = vunpack.c.l.b16 %v1945
  %v2310 = vunpack.c.h.b16 %v1945
  %v2311 = vunpack.c.l.b16 %v1946
  %v2312 = vunpack.c.h.b16 %v1946
  %v2313 = vunpack.c.l.b16 %v1947
  %v2314 = vunpack.c.h.b16 %v1947
  %v2315 = vunpack.c.l.b16 %v1948
  %v2316 = vunpack.c.h.b16 %v1948
  %v2317 = vunpack.c.l.b16 %v1949
  %v2318 = vunpack.c.h.b16 %v1949
  %v2319 = vunpack.c.l.b16 %v1950
  %v2320 = vunpack.c.h.b16 %v1950
  %v2321 = vunpack.c.l.b16 %v1951
  %v2322 = vunpack.c.h.b16 %v1951
  %v2323 = vunpack.c.l.b16 %v1952
  %v2324 = vunpack.c.h.b16 %v1952
  %v2325 = vunpack.c.l.b16 %v1953
  %v2326 = vunpack.c.h.b16 %v1953
  %v2327 = vunpack.c.l.b16 %v1954
  %v2328 = vunpack.c.h.b16 %v1954
  %v2329 = vunpack.c.l.b16 %v1955
  %v2330 = vunpack.c.h.b16 %v1955
  %v2331 = vunpack.c.l.b16 %v1956
  %v2332 = vunpack.c.h.b16 %v1956
  %v2333 = vunpack.c.l.b16 %v1957
  %v2334 = vunpack.c.h.b16 %v1957
  %v2335 = vunpack.c.l.b16 %v1958
  %v2336 = vunpack.c.h.b16 %v1958
  %v2337 = vunpack.c.l.b16 %v1959
  %v2338 = vunpack.c.h.b16 %v1959
  %v2339 = vunpack.c.l.b16 %v1960
  %v2340 = vunpack.c.h.b16 %v1960
  %v2341 = vunpack.c.l.b16 %v1961
  %v2342 = vunpack.c.h.b16 %v1961
  %v2343 = vunpack.c.l.b16 %v1962
  %v2344 = vunpack.c.h.b16 %v1962
  %v2345 = vunpack.c.l.b16 %v1963
  %v2346 = vunpack.c.h.b16 %v1963
  %v2347 = vunpack.c.l.b16 %v1964
  %v2348 = vunpack.c.h.b16 %v1964
  %v2349 = vpack.c.b16 %v2097, %v2093
  %v2350 = vpack.c.b16 %v2098, %v2094
  %v2351 = vpack.c.b16 %v2099, %v2095
  %v2352 = vpack.c.b16 %v2100, %v2096
  %v2353 = vpack.c.b16 %v2105, %v2101
  %v2354 = vpack.c.b16 %v2106, %v2102
  %v2355 = vpack.c.b16 %v2107, %v2103
  %v2356 = vpack.c.b16 %v2108, %v2104
  %v2357 = vpack.c.b16 %v2113, %v2109
  %v2358 = vpack.c.b16 %v2114, %v2110
  %v2359 = vpack.c.b16 %v2115, %v2111
  %v2360 = vpack.c.b16 %v2116, %v2112
  %v2361 = vpack.c.b16 %v2121, %v2117
  %v2362 = vpack.c.b16 %v2122, %v2118
  %v2363 = vpack.c.b16 %v2123, %v2119
  %v2364 = vpack.c.b16 %v2124, %v2120
  %v2365 = vpack.c.b16 %v2129, %v2125
  %v2366 = vpack.c.b16 %v2130, %v2126
  %v2367 = vpack.c.b16 %v2131, %v2127
  %v2368 = vpack.c.b16 %v2132, %v2128
  %v2369 = vpack.c.b16 %v2137, %v2133
  %v2370 = vpack.c.b16 %v2138, %v2134
  %v2371 = vpack.c.b16 %v2139, %v2135
  %v2372 = vpack.c.b16 %v2140, %v2136
  %v2373 = vpack.c.b16 %v2145, %v2141
  %v2374 = vpack.c.b16 %v2146, %v2142
  %v2375 = vpack.c.b16 %v2147, %v2143
  %v2376 = vpack.c.b16 %v2148, %v2144
  %v2377 = vpack.c.b16 %v2153, %v2149
  %v2378 = vpack.c.b16 %v2154, %v2150
  %v2379 = vpack.c.b16 %v2155, %v2151
  %v2380 = vpack.c.b16 %v2156, %v2152
  %v2381 = vpack.c.b16 %v2161, %v2157
  %v2382 = vpack.c.b16 %v2162, %v2158
  %v2383 = vpack.c.b16 %v2163, %v2159
  %v2384 = vpack.c.b16 %v2164, %v2160
  %v2385 = vpack.c.b16 %v2169, %v2165
  %v2386 = vpack.c.b16 %v2170, %v2166
  %v2387 = vpack.c.b16 %v2171, %v2167
  %v2388 = vpack.c.b16 %v2172, %v2168
  %v2389 = vpack.c.b16 %v2177, %v2173
  %v2390 = vpack.c.b16 %v2178, %v2174
  %v2391 = vpack.c.b16 %v2179, %v2175
  %v2392 = vpack.c.b16 %v2180, %v2176
  %v2393 = vpack.c.b16 %v2185, %v2181
  %v2394 = vpack.c.b16 %v2186, %v2182
  %v2395 = vpack.c.b16 %v2187, %v2183
  %v2396 = vpack.c.b16 %v2188, %v2184
  %v2397 = vpack.c.b16 %v2193, %v2189
  %v2398 = vpack.c.b16 %v2194, %v2190
  %v2399 = vpack.c.b16 %v2195, %v2191
  %v2400 = vpack.c.b16 %v2196, %v2192
  %v2401 = vpack.c.b16 %v2201, %v2197
  %v2402 = vpack.c.b16 %v2202, %v2198
  %v2403 = vpack.c.b16 %v2203, %v2199
  %v2404 = vpack.c.b16 %v2204, %v2200
  %v2405 = vpack.c.b16 %v2209, %v2205
  %v2406 = vpack.c.b16 %v2210, %v2206
  %v2407 = vpack.c.b16 %v2211, %v2207
  %v2408 = vpack.c.b16 %v2212, %v2208
  %v2409 = vpack.c.b16 %v2217, %v2213
  %v2410 = vpack.c.b16 %v2218, %v2214
  %v2411 = vpack.c.b16 %v2219, %v2215
  %v2412 = vpack.c.b16 %v2220, %v2216
  %v2413 = vpack.c.b16 %v2225, %v2221
  %v2414 = vpack.c.b16 %v2226, %v2222
  %v2415 = vpack.c.b16 %v2227, %v2223
  %v2416 = vpack.c.b16 %v2228, %v2224
  %v2417 = vpack.c.b16 %v2233, %v2229
  %v2418 = vpack.c.b16 %v2234, %v2230
  %v2419 = vpack.c.b16 %v2235, %v2231
  %v2420 = vpack.c.b16 %v2236, %v2232
  %v2421 = vpack.c.b16 %v2241, %v2237
  %v2422 = vpack.c.b16 %v2242, %v2238
  %v2423 = vpack.c.b16 %v2243, %v2239
  %v2424 = vpack.c.b16 %v2244, %v2240
  %v2425 = vpack.c.b16 %v2249, %v2245
  %v2426 = vpack.c.b16 %v2250, %v2246
  %v2427 = vpack.c.b16 %v2251, %v2247
  %v2428 = vpack.c.b16 %v2252, %v2248
  %v2429 = vpack.c.b16 %v2257, %v2253
  %v2430 = vpack.c.b16 %v2258, %v2254
  %v2431 = vpack.c.b16 %v2259, %v2255
  %v2432 = vpack.c.b16 %v2260, %v2256
  %v2433 = vpack.c.b16 %v2265, %v2261
  %v2434 = vpack.c.b16 %v2266, %v2262
  %v2435 = vpack.c.b16 %v2267, %v2263
  %v2436 = vpack.c.b16 %v2268, %v2264
  %v2437 = vpack.c.b16 %v2273, %v2269
  %v2438 = vpack.c.b16 %v2274, %v2270
  %v2439 = vpack.c.b16 %v2275, %v2271
  %v2440 = vpack.c.b16 %v2276, %v2272
  %v2441 = vpack.c.b16 %v2281, %v2277
  %v2442 = vpack.c.b16 %v2282, %v2278
  %v2443 = vpack.c.b16 %v2283, %v2279
  %v2444 = vpack.c.b16 %v2284, %v2280
  %v2445 = vpack.c.b16 %v2289, %v2285
  %v2446 = vpack.c.b16 %v2290, %v2286
  %v2447 = vpack.c.b16 %v2291, %v2287
  %v2448 = vpack.c.b16 %v2292, %v2288
  %v2449 = vpack.c.b16 %v2297, %v2293
  %v2450 = vpack.c.b16 %v2298, %v2294
  %v2451 = vpack.c.b16 %v2299, %v2295
  %v2452 = vpack.c.b16 %v2300, %v2296
  %v2453 = vpack.c.b16 %v2305, %v2301
  %v2454 = vpack.c.b16 %v2306, %v2302
  %v2455 = vpack.c.b16 %v2307, %v2303
  %v2456 = vpack.c.b16 %v2308, %v2304
  %v2457 = vpack.c.b16 %v2313, %v2309
  %v2458 = vpack.c.b16 %v2314, %v2310
  %v2459 = vpack.c.b16 %v2315, %v2311
  %v2460 = vpack.c.b16 %v2316, %v2312
  %v2461 = vpack.c.b16 %v2321, %v2317
  %v2462 = vpack.c.b16 %v2322, %v2318
  %v2463 = vpack.c.b16 %v2323, %v2319
  %v2464 = vpack.c.b16 %v2324, %v2320
  %v2465 = vpack.c.b16 %v2329, %v2325
  %v2466 = vpack.c.b16 %v2330, %v2326
  %v2467 = vpack.c.b16 %v2331, %v2327
  %v2468 = vpack.c.b16 %v2332, %v2328
  %v2469 = vpack.c.b16 %v2337, %v2333
  %v2470 = vpack.c.b16 %v2338, %v2334
  %v2471 = vpack.c.b16 %v2339, %v2335
  %v2472 = vpack.c.b16 %v2340, %v2336
  %v2473 = vpack.c.b16 %v2345, %v2341
  %v2474 = vpack.c.b16 %v2346, %v2342
  %v2475 = vpack.c.b16 %v2347, %v2343
  %v2476 = vpack.c.b16 %v2348, %v2344
  %2605 = vmatprep.subr.bf16.mxu0 %v2378
  %2606 = vmatpush1.bf16.msra.mxu0 %v2377
  %2607 = vmatprep.subr.bf16.mxu0 %v2374
  %2608 = vmatpush1.bf16.msra.mxu0 %v2373
  %2609 = vmatprep.subr.bf16.mxu0 %v2370
  %2610 = vmatpush1.bf16.msra.mxu0 %v2369
  %2611 = vmatprep.subr.bf16.mxu0 %v2366
  %2612 = vmatpush1.bf16.msra.mxu0 %v2365
  %2613 = vmatprep.subr.bf16.mxu0 %v2362
  %2614 = vmatpush1.bf16.msra.mxu0 %v2361
  %2615 = vmatprep.subr.bf16.mxu0 %v2358
  %2616 = vmatpush1.bf16.msra.mxu0 %v2357
  %2617 = vmatprep.subr.bf16.mxu0 %v2354
  %2618 = vmatpush1.bf16.msra.mxu0 %v2353
  %2619 = vmatprep.subr.bf16.mxu0 %v2350
  %2620 = vmatpush1.bf16.msra.mxu0 %v2349
  %2621 = vmatprep.subr.bf16.mxu0 %v2410
  %2622 = vmatpush2.bf16.msra.mxu0 %v2409
  %2623 = vmatprep.subr.bf16.mxu0 %v2406
  %2624 = vmatpush2.bf16.msra.mxu0 %v2405
  %2625 = vmatprep.subr.bf16.mxu0 %v2402
  %2626 = vmatpush2.bf16.msra.mxu0 %v2401
  %2627 = vmatprep.subr.bf16.mxu0 %v2398
  %2628 = vmatpush2.bf16.msra.mxu0 %v2397
  %2629 = vmatprep.subr.bf16.mxu0 %v2394
  %2630 = vmatpush2.bf16.msra.mxu0 %v2393
  %2631 = vmatprep.subr.bf16.mxu0 %v2390
  %2632 = vmatpush2.bf16.msra.mxu0 %v2389
  %2633 = vmatprep.subr.bf16.mxu0 %v2386
  %2634 = vmatpush2.bf16.msra.mxu0 %v2385
  %2635 = vmatprep.subr.bf16.mxu0 %v2382
  %2636 = vmatpush2.bf16.msra.mxu0 %v2381
  %2637 = vmatprep.mubr.bf16.mxu0 %v1834
  %2638 = vmatmul.mubr.bf16.gmra.mxu0 %v1833
  %v2639 = vpop.f32.mrf.mxu0
  %v2640 = vadd.f32 0.0, %v2639
  %v2641 = vpop.f32.mrf.mxu0
  %v2642 = vadd.f32 0.0, %v2641
  %v2643 = vpop.f32.mrf.mxu0
  %v2644 = vadd.f32 0.0, %v2643
  %v2645 = vpop.f32.mrf.mxu0
  %v2646 = vadd.f32 0.0, %v2645
  %2647 = vdwg.mxu0
  %2648 = vmatprep.subr.bf16.mxu0 %v2442
  %2649 = vmatpush1.bf16.msra.mxu0 %v2441
  %2650 = vmatprep.subr.bf16.mxu0 %v2438
  %2651 = vmatpush1.bf16.msra.mxu0 %v2437
  %2652 = vmatprep.subr.bf16.mxu0 %v2434
  %2653 = vmatpush1.bf16.msra.mxu0 %v2433
  %2654 = vmatprep.subr.bf16.mxu0 %v2430
  %2655 = vmatpush1.bf16.msra.mxu0 %v2429
  %2656 = vmatprep.subr.bf16.mxu0 %v2426
  %2657 = vmatpush1.bf16.msra.mxu0 %v2425
  %2658 = vmatprep.subr.bf16.mxu0 %v2422
  %2659 = vmatpush1.bf16.msra.mxu0 %v2421
  %2660 = vmatprep.subr.bf16.mxu0 %v2418
  %2661 = vmatpush1.bf16.msra.mxu0 %v2417
  %2662 = vmatprep.subr.bf16.mxu0 %v2414
  %2663 = vmatpush1.bf16.msra.mxu0 %v2413
  %2664 = vmatprep.subr.bf16.mxu0 %v2474
  %2665 = vmatpush2.bf16.msra.mxu0 %v2473
  %2666 = vmatprep.subr.bf16.mxu0 %v2470
  %2667 = vmatpush2.bf16.msra.mxu0 %v2469
  %2668 = vmatprep.subr.bf16.mxu0 %v2466
  %2669 = vmatpush2.bf16.msra.mxu0 %v2465
  %2670 = vmatprep.subr.bf16.mxu0 %v2462
  %2671 = vmatpush2.bf16.msra.mxu0 %v2461
  %2672 = vmatprep.subr.bf16.mxu0 %v2458
  %2673 = vmatpush2.bf16.msra.mxu0 %v2457
  %2674 = vmatprep.subr.bf16.mxu0 %v2454
  %2675 = vmatpush2.bf16.msra.mxu0 %v2453
  %2676 = vmatprep.subr.bf16.mxu0 %v2450
  %2677 = vmatpush2.bf16.msra.mxu0 %v2449
  %2678 = vmatprep.subr.bf16.mxu0 %v2446
  %2679 = vmatpush2.bf16.msra.mxu0 %v2445
  %2680 = vmatprep.mubr.bf16.mxu0 %v1836
  %2681 = vmatmul.mubr.bf16.gmra.mxu0 %v1835
  %v2682 = vpop.f32.mrf.mxu0
  %v2683 = vadd.f32 %v2640, %v2682
  %v2684 = vpop.f32.mrf.mxu0
  %v2685 = vadd.f32 %v2642, %v2684
  %v2686 = vpop.f32.mrf.mxu0
  %v2687 = vadd.f32 %v2644, %v2686
  %v2688 = vpop.f32.mrf.mxu0
  %v2689 = vadd.f32 %v2646, %v2688
  %2690 = vdwg.mxu0
  %2691 = vmatprep.subr.bf16.mxu0 %v2380
  %2692 = vmatpush1.bf16.msra.mxu0 %v2379
  %2693 = vmatprep.subr.bf16.mxu0 %v2376
  %2694 = vmatpush1.bf16.msra.mxu0 %v2375
  %2695 = vmatprep.subr.bf16.mxu0 %v2372
  %2696 = vmatpush1.bf16.msra.mxu0 %v2371
  %2697 = vmatprep.subr.bf16.mxu0 %v2368
  %2698 = vmatpush1.bf16.msra.mxu0 %v2367
  %2699 = vmatprep.subr.bf16.mxu0 %v2364
  %2700 = vmatpush1.bf16.msra.mxu0 %v2363
  %2701 = vmatprep.subr.bf16.mxu0 %v2360
  %2702 = vmatpush1.bf16.msra.mxu0 %v2359
  %2703 = vmatprep.subr.bf16.mxu0 %v2356
  %2704 = vmatpush1.bf16.msra.mxu0 %v2355
  %2705 = vmatprep.subr.bf16.mxu0 %v2352
  %2706 = vmatpush1.bf16.msra.mxu0 %v2351
  %2707 = vmatprep.subr.bf16.mxu0 %v2412
  %2708 = vmatpush2.bf16.msra.mxu0 %v2411
  %2709 = vmatprep.subr.bf16.mxu0 %v2408
  %2710 = vmatpush2.bf16.msra.mxu0 %v2407
  %2711 = vmatprep.subr.bf16.mxu0 %v2404
  %2712 = vmatpush2.bf16.msra.mxu0 %v2403
  %2713 = vmatprep.subr.bf16.mxu0 %v2400
  %2714 = vmatpush2.bf16.msra.mxu0 %v2399
  %2715 = vmatprep.subr.bf16.mxu0 %v2396
  %2716 = vmatpush2.bf16.msra.mxu0 %v2395
  %2717 = vmatprep.subr.bf16.mxu0 %v2392
  %2718 = vmatpush2.bf16.msra.mxu0 %v2391
  %2719 = vmatprep.subr.bf16.mxu0 %v2388
  %2720 = vmatpush2.bf16.msra.mxu0 %v2387
  %2721 = vmatprep.subr.bf16.mxu0 %v2384
  %2722 = vmatpush2.bf16.msra.mxu0 %v2383
  %2723 = vmatprep.mubr.bf16.mxu0 %v1834
  %2724 = vmatmul.mubr.bf16.gmra.mxu0 %v1833
  %v2725 = vpop.f32.mrf.mxu0
  %v2726 = vadd.f32 0.0, %v2725
  %v2727 = vpop.f32.mrf.mxu0
  %v2728 = vadd.f32 0.0, %v2727
  %v2729 = vpop.f32.mrf.mxu0
  %v2730 = vadd.f32 0.0, %v2729
  %v2731 = vpop.f32.mrf.mxu0
  %v2732 = vadd.f32 0.0, %v2731
  %2733 = vdwg.mxu0
  %2734 = vmatprep.subr.bf16.mxu0 %v2444
  %2735 = vmatpush1.bf16.msra.mxu0 %v2443
  %2736 = vmatprep.subr.bf16.mxu0 %v2440
  %2737 = vmatpush1.bf16.msra.mxu0 %v2439
  %2738 = vmatprep.subr.bf16.mxu0 %v2436
  %2739 = vmatpush1.bf16.msra.mxu0 %v2435
  %2740 = vmatprep.subr.bf16.mxu0 %v2432
  %2741 = vmatpush1.bf16.msra.mxu0 %v2431
  %2742 = vmatprep.subr.bf16.mxu0 %v2428
  %2743 = vmatpush1.bf16.msra.mxu0 %v2427
  %2744 = vmatprep.subr.bf16.mxu0 %v2424
  %2745 = vmatpush1.bf16.msra.mxu0 %v2423
  %2746 = vmatprep.subr.bf16.mxu0 %v2420
  %2747 = vmatpush1.bf16.msra.mxu0 %v2419
  %2748 = vmatprep.subr.bf16.mxu0 %v2416
  %2749 = vmatpush1.bf16.msra.mxu0 %v2415
  %2750 = vmatprep.subr.bf16.mxu0 %v2476
  %2751 = vmatpush2.bf16.msra.mxu0 %v2475
  %2752 = vmatprep.subr.bf16.mxu0 %v2472
  %2753 = vmatpush2.bf16.msra.mxu0 %v2471
  %2754 = vmatprep.subr.bf16.mxu0 %v2468
  %2755 = vmatpush2.bf16.msra.mxu0 %v2467
  %2756 = vmatprep.subr.bf16.mxu0 %v2464
  %2757 = vmatpush2.bf16.msra.mxu0 %v2463
  %2758 = vmatprep.subr.bf16.mxu0 %v2460
  %2759 = vmatpush2.bf16.msra.mxu0 %v2459
  %2760 = vmatprep.subr.bf16.mxu0 %v2456
  %2761 = vmatpush2.bf16.msra.mxu0 %v2455
  %2762 = vmatprep.subr.bf16.mxu0 %v2452
  %2763 = vmatpush2.bf16.msra.mxu0 %v2451
  %2764 = vmatprep.subr.bf16.mxu0 %v2448
  %2765 = vmatpush2.bf16.msra.mxu0 %v2447
  %2766 = vmatprep.mubr.bf16.mxu0 %v1836
  %2767 = vmatmul.mubr.bf16.gmra.mxu0 %v1835
  %v2768 = vpop.f32.mrf.mxu0
  %v2769 = vadd.f32 %v2726, %v2768
  %v2770 = vpop.f32.mrf.mxu0
  %v2771 = vadd.f32 %v2728, %v2770
  %v2772 = vpop.f32.mrf.mxu0
  %v2773 = vadd.f32 %v2730, %v2772
  %v2774 = vpop.f32.mrf.mxu0
  %v2775 = vadd.f32 %v2732, %v2774
  %2776 = vdwg.mxu0
  %v2777 = vadd.f32 %v325, %v2683
  %v2778 = vadd.f32 %v327, %v2685
  %v2779 = vadd.f32 %v408, %v2769
  %v2780 = vadd.f32 %v410, %v2771
  %v2781 = vadd.f32 %v329, %v2687
  %v2782 = vadd.f32 %v331, %v2689
  %v2783 = vadd.f32 %v412, %v2773
  %v2784 = vadd.f32 %v414, %v2775
  %v2785 = vadd.f32 %v2777, %v2778
  %v2786 = vadd.f32 %v2785, %v2779
  %v2787 = vadd.f32 %v2786, %v2780
  %2788 = vadd.xlane.f32.xlu0 %v2787
  %v2789 = vpop.xlane.xlu0 %2788
  %v2790 = vadd.f32 %v2781, %v2782
  %v2791 = vadd.f32 %v2790, %v2783
  %v2792 = vadd.f32 %v2791, %v2784
  %2793 = vadd.xlane.f32.xlu0 %v2792
  %v2794 = vpop.xlane.xlu0 %2793
  %v2795 = vrcp.pop 512.0
  %v2796 = vmul.f32 %v2789, %v2795
  %v2797 = vmul.f32 %v2794, %v2795
  %v2798 = vsub.f32 %v2777, %v2796
  %v2799 = vsub.f32 %v2778, %v2796
  %v2800 = vsub.f32 %v2779, %v2796
  %v2801 = vsub.f32 %v2780, %v2796
  %v2802 = vsub.f32 %v2781, %v2797
  %v2803 = vsub.f32 %v2782, %v2797
  %v2804 = vsub.f32 %v2783, %v2797
  %v2805 = vsub.f32 %v2784, %v2797
  %v2806 = vmul.f32 %v2798, %v2798
  %v2807 = vmul.f32 %v2799, %v2799
  %v2808 = vmul.f32 %v2800, %v2800
  %v2809 = vmul.f32 %v2801, %v2801
  %v2810 = vmul.f32 %v2802, %v2802
  %v2811 = vmul.f32 %v2803, %v2803
  %v2812 = vmul.f32 %v2804, %v2804
  %v2813 = vmul.f32 %v2805, %v2805
  %v2814 = vadd.f32 %v2806, %v2807
  %v2815 = vadd.f32 %v2814, %v2808
  %v2816 = vadd.f32 %v2815, %v2809
  %2817 = vadd.xlane.f32.xlu0 %v2816
  %v2818 = vpop.xlane.xlu0 %2817
  %v2819 = vadd.f32 %v2810, %v2811
  %v2820 = vadd.f32 %v2819, %v2812
  %v2821 = vadd.f32 %v2820, %v2813
  %2822 = vadd.xlane.f32.xlu0 %v2821
  %v2823 = vpop.xlane.xlu0 %2822
  %v2824 = vmul.f32 %v2818, %v2795
  %v2825 = vmul.f32 %v2823, %v2795
  %v2826 = vadd.f32 %v2824, 1e-05
  %v2827 = vadd.f32 %v2825, 1e-05
  %v2828 = vrsqrt.pop %v2826
  %v2829 = vrsqrt.pop %v2827
  %v2830 = vmul.f32 %v2798, %v2828
  %v2831 = vmul.f32 %v2799, %v2828
  %v2832 = vmul.f32 %v2800, %v2828
  %v2833 = vmul.f32 %v2801, %v2828
  %v2834 = vmul.f32 %v2802, %v2829
  %v2835 = vmul.f32 %v2803, %v2829
  %v2836 = vmul.f32 %v2804, %v2829
  %v2837 = vmul.f32 %v2805, %v2829
  %v2838 = vmul.f32 %v1141, %v1297
  %v2839 = vmul.f32 %v1143, %v1299
  %v2840 = vmul.f32 %v1224, %v1380
  %v2841 = vmul.f32 %v1226, %v1382
  %v2842 = vmul.f32 %v1145, %v1301
  %v2843 = vmul.f32 %v1147, %v1303
  %v2844 = vmul.f32 %v1228, %v1384
  %v2845 = vmul.f32 %v1230, %v1386
  %v2846 = vadd.f32 %v2838, %v2839
  %v2847 = vadd.f32 %v2846, %v2840
  %v2848 = vadd.f32 %v2847, %v2841
  %2849 = vadd.xlane.f32.xlu0 %v2848
  %v2850 = vpop.xlane.xlu0 %2849
  %v2851 = vadd.f32 %v2842, %v2843
  %v2852 = vadd.f32 %v2851, %v2844
  %v2853 = vadd.f32 %v2852, %v2845
  %2854 = vadd.xlane.f32.xlu0 %v2853
  %v2855 = vpop.xlane.xlu0 %2854
  %v2856 = vmul.f32 %v1141, %v1307
  %v2857 = vmul.f32 %v1143, %v1309
  %v2858 = vmul.f32 %v1224, %v1390
  %v2859 = vmul.f32 %v1226, %v1392
  %v2860 = vmul.f32 %v1145, %v1311
  %v2861 = vmul.f32 %v1147, %v1313
  %v2862 = vmul.f32 %v1228, %v1394
  %v2863 = vmul.f32 %v1230, %v1396
  %v2864 = vadd.f32 %v2856, %v2857
  %v2865 = vadd.f32 %v2864, %v2858
  %v2866 = vadd.f32 %v2865, %v2859
  %2867 = vadd.xlane.f32.xlu0 %v2866
  %v2868 = vpop.xlane.xlu0 %2867
  %v2869 = vadd.f32 %v2860, %v2861
  %v2870 = vadd.f32 %v2869, %v2862
  %v2871 = vadd.f32 %v2870, %v2863
  %2872 = vadd.xlane.f32.xlu0 %v2871
  %v2873 = vpop.xlane.xlu0 %2872
  %v2874 = vmul.f32 %v1141, %v1317
  %v2875 = vmul.f32 %v1143, %v1319
  %v2876 = vmul.f32 %v1224, %v1400
  %v2877 = vmul.f32 %v1226, %v1402
  %v2878 = vmul.f32 %v1145, %v1321
  %v2879 = vmul.f32 %v1147, %v1323
  %v2880 = vmul.f32 %v1228, %v1404
  %v2881 = vmul.f32 %v1230, %v1406
  %v2882 = vadd.f32 %v2874, %v2875
  %v2883 = vadd.f32 %v2882, %v2876
  %v2884 = vadd.f32 %v2883, %v2877
  %2885 = vadd.xlane.f32.xlu0 %v2884
  %v2886 = vpop.xlane.xlu0 %2885
  %v2887 = vadd.f32 %v2878, %v2879
  %v2888 = vadd.f32 %v2887, %v2880
  %v2889 = vadd.f32 %v2888, %v2881
  %2890 = vadd.xlane.f32.xlu0 %v2889
  %v2891 = vpop.xlane.xlu0 %2890
  %v2892 = vmul.f32 %v1141, %v1327
  %v2893 = vmul.f32 %v1143, %v1329
  %v2894 = vmul.f32 %v1224, %v1410
  %v2895 = vmul.f32 %v1226, %v1412
  %v2896 = vmul.f32 %v1145, %v1331
  %v2897 = vmul.f32 %v1147, %v1333
  %v2898 = vmul.f32 %v1228, %v1414
  %v2899 = vmul.f32 %v1230, %v1416
  %v2900 = vadd.f32 %v2892, %v2893
  %v2901 = vadd.f32 %v2900, %v2894
  %v2902 = vadd.f32 %v2901, %v2895
  %2903 = vadd.xlane.f32.xlu0 %v2902
  %v2904 = vpop.xlane.xlu0 %2903
  %v2905 = vadd.f32 %v2896, %v2897
  %v2906 = vadd.f32 %v2905, %v2898
  %v2907 = vadd.f32 %v2906, %v2899
  %2908 = vadd.xlane.f32.xlu0 %v2907
  %v2909 = vpop.xlane.xlu0 %2908
  %v2910 = vmul.f32 %v1141, %v1337
  %v2911 = vmul.f32 %v1143, %v1339
  %v2912 = vmul.f32 %v1224, %v1420
  %v2913 = vmul.f32 %v1226, %v1422
  %v2914 = vmul.f32 %v1145, %v1341
  %v2915 = vmul.f32 %v1147, %v1343
  %v2916 = vmul.f32 %v1228, %v1424
  %v2917 = vmul.f32 %v1230, %v1426
  %v2918 = vadd.f32 %v2910, %v2911
  %v2919 = vadd.f32 %v2918, %v2912
  %v2920 = vadd.f32 %v2919, %v2913
  %2921 = vadd.xlane.f32.xlu0 %v2920
  %v2922 = vpop.xlane.xlu0 %2921
  %v2923 = vadd.f32 %v2914, %v2915
  %v2924 = vadd.f32 %v2923, %v2916
  %v2925 = vadd.f32 %v2924, %v2917
  %2926 = vadd.xlane.f32.xlu0 %v2925
  %v2927 = vpop.xlane.xlu0 %2926
  %v2928 = vsel %vm1684, %v2850, %v2868
  %v2929 = vsel %vm1684, %v2855, %v2873
  %v2930 = vsel %vm1687, %v2928, %v2886
  %v2931 = vsel %vm1687, %v2929, %v2891
  %v2932 = vsel %vm1690, %v2930, %v2904
  %v2933 = vsel %vm1690, %v2931, %v2909
  %v2934 = vsel %vm1693, %v2932, %v2922
  %v2935 = vsel %vm1693, %v2933, %v2927
  %v2936 = vsel %vm1696, %v2934, -inf
  %2937 = vmax.xlane.f32.xlu0 %v2936
  %v2938 = vpop.xlane.xlu0 %2937
  %v2939 = vsel %vm1696, %v2935, -inf
  %2940 = vmax.xlane.f32.xlu0 %v2939
  %v2941 = vpop.xlane.xlu0 %2940
  %v2942 = vsub.f32 %v2934, %v2938
  %v2943 = vsub.f32 %v2935, %v2941
  %v2944 = vmul.f32 %v2942, 1.442695
  %v2945 = vpow.pop %v2944
  %v2946 = vmul.f32 %v2943, 1.442695
  %v2947 = vpow.pop %v2946
  %v2948 = vsel %vm1696, %v2945, 0.0
  %2949 = vadd.xlane.f32.xlu0 %v2948
  %v2950 = vpop.xlane.xlu0 %2949
  %v2951 = vsel %vm1696, %v2947, 0.0
  %2952 = vadd.xlane.f32.xlu0 %v2951
  %v2953 = vpop.xlane.xlu0 %2952
  %v2954 = vrcp.pop %v2950
  %v2955 = vrcp.pop %v2953
  %v2956 = vmul.f32 %v2945, %v2954
  %v2957 = vmul.f32 %v2947, %v2955
  %2959 = vset.pattern.permute.xlu0 0
  %2960 = vperm.xlu0 %2959, %v2956
  %v2961 = vpop.permute.xlu0 %2960
  %2964 = vset.pattern.permute.xlu0 0
  %2965 = vperm.xlu0 %2964, %v2957
  %v2966 = vpop.permute.xlu0 %2965
  %v2968 = vmul.f32 %v2961, %v1463
  %v2969 = vmul.f32 %v2961, %v1465
  %v2970 = vmul.f32 %v2961, %v1546
  %v2971 = vmul.f32 %v2961, %v1548
  %v2972 = vmul.f32 %v2966, %v1467
  %v2973 = vmul.f32 %v2966, %v1469
  %v2974 = vmul.f32 %v2966, %v1550
  %v2975 = vmul.f32 %v2966, %v1552
  %2976 = vset.pattern.permute.xlu0 1
  %2977 = vperm.xlu0 %2976, %v2956
  %v2978 = vpop.permute.xlu0 %2977
  %2980 = vset.pattern.permute.xlu0 1
  %2981 = vperm.xlu0 %2980, %v2957
  %v2982 = vpop.permute.xlu0 %2981
  %v2984 = vmul.f32 %v2978, %v1473
  %v2985 = vmul.f32 %v2978, %v1475
  %v2986 = vmul.f32 %v2978, %v1556
  %v2987 = vmul.f32 %v2978, %v1558
  %v2988 = vmul.f32 %v2982, %v1477
  %v2989 = vmul.f32 %v2982, %v1479
  %v2990 = vmul.f32 %v2982, %v1560
  %v2991 = vmul.f32 %v2982, %v1562
  %v2992 = vadd.f32 %v2968, %v2984
  %v2993 = vadd.f32 %v2969, %v2985
  %v2994 = vadd.f32 %v2970, %v2986
  %v2995 = vadd.f32 %v2971, %v2987
  %v2996 = vadd.f32 %v2972, %v2988
  %v2997 = vadd.f32 %v2973, %v2989
  %v2998 = vadd.f32 %v2974, %v2990
  %v2999 = vadd.f32 %v2975, %v2991
  %3000 = vset.pattern.permute.xlu0 2
  %3001 = vperm.xlu0 %3000, %v2956
  %v3002 = vpop.permute.xlu0 %3001
  %3004 = vset.pattern.permute.xlu0 2
  %3005 = vperm.xlu0 %3004, %v2957
  %v3006 = vpop.permute.xlu0 %3005
  %v3008 = vmul.f32 %v3002, %v1483
  %v3009 = vmul.f32 %v3002, %v1485
  %v3010 = vmul.f32 %v3002, %v1566
  %v3011 = vmul.f32 %v3002, %v1568
  %v3012 = vmul.f32 %v3006, %v1487
  %v3013 = vmul.f32 %v3006, %v1489
  %v3014 = vmul.f32 %v3006, %v1570
  %v3015 = vmul.f32 %v3006, %v1572
  %v3016 = vadd.f32 %v2992, %v3008
  %v3017 = vadd.f32 %v2993, %v3009
  %v3018 = vadd.f32 %v2994, %v3010
  %v3019 = vadd.f32 %v2995, %v3011
  %v3020 = vadd.f32 %v2996, %v3012
  %v3021 = vadd.f32 %v2997, %v3013
  %v3022 = vadd.f32 %v2998, %v3014
  %v3023 = vadd.f32 %v2999, %v3015
  %3024 = vset.pattern.permute.xlu0 3
  %3025 = vperm.xlu0 %3024, %v2956
  %v3026 = vpop.permute.xlu0 %3025
  %3028 = vset.pattern.permute.xlu0 3
  %3029 = vperm.xlu0 %3028, %v2957
  %v3030 = vpop.permute.xlu0 %3029
  %v3032 = vmul.f32 %v3026, %v1493
  %v3033 = vmul.f32 %v3026, %v1495
  %v3034 = vmul.f32 %v3026, %v1576
  %v3035 = vmul.f32 %v3026, %v1578
  %v3036 = vmul.f32 %v3030, %v1497
  %v3037 = vmul.f32 %v3030, %v1499
  %v3038 = vmul.f32 %v3030, %v1580
  %v3039 = vmul.f32 %v3030, %v1582
  %v3040 = vadd.f32 %v3016, %v3032
  %v3041 = vadd.f32 %v3017, %v3033
  %v3042 = vadd.f32 %v3018, %v3034
  %v3043 = vadd.f32 %v3019, %v3035
  %v3044 = vadd.f32 %v3020, %v3036
  %v3045 = vadd.f32 %v3021, %v3037
  %v3046 = vadd.f32 %v3022, %v3038
  %v3047 = vadd.f32 %v3023, %v3039
  %3048 = vset.pattern.permute.xlu0 4
  %3049 = vperm.xlu0 %3048, %v2956
  %v3050 = vpop.permute.xlu0 %3049
  %3052 = vset.pattern.permute.xlu0 4
  %3053 = vperm.xlu0 %3052, %v2957
  %v3054 = vpop.permute.xlu0 %3053
  %v3056 = vmul.f32 %v3050, %v1503
  %v3057 = vmul.f32 %v3050, %v1505
  %v3058 = vmul.f32 %v3050, %v1586
  %v3059 = vmul.f32 %v3050, %v1588
  %v3060 = vmul.f32 %v3054, %v1507
  %v3061 = vmul.f32 %v3054, %v1509
  %v3062 = vmul.f32 %v3054, %v1590
  %v3063 = vmul.f32 %v3054, %v1592
  %v3064 = vadd.f32 %v3040, %v3056
  %v3065 = vadd.f32 %v3041, %v3057
  %v3066 = vadd.f32 %v3042, %v3058
  %v3067 = vadd.f32 %v3043, %v3059
  %v3068 = vadd.f32 %v3044, %v3060
  %v3069 = vadd.f32 %v3045, %v3061
  %v3070 = vadd.f32 %v3046, %v3062
  %v3071 = vadd.f32 %v3047, %v3063
  %v3072 = vpack.c.bf16 %v3068, %v3064
  %v3073 = vpack.c.bf16 %v3069, %v3065
  %v3074 = vpack.c.bf16 %v3070, %v3066
  %v3075 = vpack.c.bf16 %v3071, %v3067
  %3076 = vmatprep.subr.bf16.mxu0 %v2378
  %3077 = vmatpush1.bf16.msra.mxu0 %v2377
  %3078 = vmatprep.subr.bf16.mxu0 %v2374
  %3079 = vmatpush1.bf16.msra.mxu0 %v2373
  %3080 = vmatprep.subr.bf16.mxu0 %v2370
  %3081 = vmatpush1.bf16.msra.mxu0 %v2369
  %3082 = vmatprep.subr.bf16.mxu0 %v2366
  %3083 = vmatpush1.bf16.msra.mxu0 %v2365
  %3084 = vmatprep.subr.bf16.mxu0 %v2362
  %3085 = vmatpush1.bf16.msra.mxu0 %v2361
  %3086 = vmatprep.subr.bf16.mxu0 %v2358
  %3087 = vmatpush1.bf16.msra.mxu0 %v2357
  %3088 = vmatprep.subr.bf16.mxu0 %v2354
  %3089 = vmatpush1.bf16.msra.mxu0 %v2353
  %3090 = vmatprep.subr.bf16.mxu0 %v2350
  %3091 = vmatpush1.bf16.msra.mxu0 %v2349
  %3092 = vmatprep.subr.bf16.mxu0 %v2410
  %3093 = vmatpush2.bf16.msra.mxu0 %v2409
  %3094 = vmatprep.subr.bf16.mxu0 %v2406
  %3095 = vmatpush2.bf16.msra.mxu0 %v2405
  %3096 = vmatprep.subr.bf16.mxu0 %v2402
  %3097 = vmatpush2.bf16.msra.mxu0 %v2401
  %3098 = vmatprep.subr.bf16.mxu0 %v2398
  %3099 = vmatpush2.bf16.msra.mxu0 %v2397
  %3100 = vmatprep.subr.bf16.mxu0 %v2394
  %3101 = vmatpush2.bf16.msra.mxu0 %v2393
  %3102 = vmatprep.subr.bf16.mxu0 %v2390
  %3103 = vmatpush2.bf16.msra.mxu0 %v2389
  %3104 = vmatprep.subr.bf16.mxu0 %v2386
  %3105 = vmatpush2.bf16.msra.mxu0 %v2385
  %3106 = vmatprep.subr.bf16.mxu0 %v2382
  %3107 = vmatpush2.bf16.msra.mxu0 %v2381
  %3108 = vmatprep.mubr.bf16.mxu0 %v3073
  %3109 = vmatmul.mubr.bf16.gmra.mxu0 %v3072
  %v3110 = vpop.f32.mrf.mxu0
  %v3111 = vadd.f32 0.0, %v3110
  %v3112 = vpop.f32.mrf.mxu0
  %v3113 = vadd.f32 0.0, %v3112
  %v3114 = vpop.f32.mrf.mxu0
  %v3115 = vadd.f32 0.0, %v3114
  %v3116 = vpop.f32.mrf.mxu0
  %v3117 = vadd.f32 0.0, %v3116
  %3118 = vdwg.mxu0
  %3119 = vmatprep.subr.bf16.mxu0 %v2442
  %3120 = vmatpush1.bf16.msra.mxu0 %v2441
  %3121 = vmatprep.subr.bf16.mxu0 %v2438
  %3122 = vmatpush1.bf16.msra.mxu0 %v2437
  %3123 = vmatprep.subr.bf16.mxu0 %v2434
  %3124 = vmatpush1.bf16.msra.mxu0 %v2433
  %3125 = vmatprep.subr.bf16.mxu0 %v2430
  %3126 = vmatpush1.bf16.msra.mxu0 %v2429
  %3127 = vmatprep.subr.bf16.mxu0 %v2426
  %3128 = vmatpush1.bf16.msra.mxu0 %v2425
  %3129 = vmatprep.subr.bf16.mxu0 %v2422
  %3130 = vmatpush1.bf16.msra.mxu0 %v2421
  %3131 = vmatprep.subr.bf16.mxu0 %v2418
  %3132 = vmatpush1.bf16.msra.mxu0 %v2417
  %3133 = vmatprep.subr.bf16.mxu0 %v2414
  %3134 = vmatpush1.bf16.msra.mxu0 %v2413
  %3135 = vmatprep.subr.bf16.mxu0 %v2474
  %3136 = vmatpush2.bf16.msra.mxu0 %v2473
  %3137 = vmatprep.subr.bf16.mxu0 %v2470
  %3138 = vmatpush2.bf16.msra.mxu0 %v2469
  %3139 = vmatprep.subr.bf16.mxu0 %v2466
  %3140 = vmatpush2.bf16.msra.mxu0 %v2465
  %3141 = vmatprep.subr.bf16.mxu0 %v2462
  %3142 = vmatpush2.bf16.msra.mxu0 %v2461
  %3143 = vmatprep.subr.bf16.mxu0 %v2458
  %3144 = vmatpush2.bf16.msra.mxu0 %v2457
  %3145 = vmatprep.subr.bf16.mxu0 %v2454
  %3146 = vmatpush2.bf16.msra.mxu0 %v2453
  %3147 = vmatprep.subr.bf16.mxu0 %v2450
  %3148 = vmatpush2.bf16.msra.mxu0 %v2449
  %3149 = vmatprep.subr.bf16.mxu0 %v2446
  %3150 = vmatpush2.bf16.msra.mxu0 %v2445
  %3151 = vmatprep.mubr.bf16.mxu0 %v3075
  %3152 = vmatmul.mubr.bf16.gmra.mxu0 %v3074
  %v3153 = vpop.f32.mrf.mxu0
  %v3154 = vadd.f32 %v3111, %v3153
  %v3155 = vpop.f32.mrf.mxu0
  %v3156 = vadd.f32 %v3113, %v3155
  %v3157 = vpop.f32.mrf.mxu0
  %v3158 = vadd.f32 %v3115, %v3157
  %v3159 = vpop.f32.mrf.mxu0
  %v3160 = vadd.f32 %v3117, %v3159
  %3161 = vdwg.mxu0
  %3162 = vmatprep.subr.bf16.mxu0 %v2380
  %3163 = vmatpush1.bf16.msra.mxu0 %v2379
  %3164 = vmatprep.subr.bf16.mxu0 %v2376
  %3165 = vmatpush1.bf16.msra.mxu0 %v2375
  %3166 = vmatprep.subr.bf16.mxu0 %v2372
  %3167 = vmatpush1.bf16.msra.mxu0 %v2371
  %3168 = vmatprep.subr.bf16.mxu0 %v2368
  %3169 = vmatpush1.bf16.msra.mxu0 %v2367
  %3170 = vmatprep.subr.bf16.mxu0 %v2364
  %3171 = vmatpush1.bf16.msra.mxu0 %v2363
  %3172 = vmatprep.subr.bf16.mxu0 %v2360
  %3173 = vmatpush1.bf16.msra.mxu0 %v2359
  %3174 = vmatprep.subr.bf16.mxu0 %v2356
  %3175 = vmatpush1.bf16.msra.mxu0 %v2355
  %3176 = vmatprep.subr.bf16.mxu0 %v2352
  %3177 = vmatpush1.bf16.msra.mxu0 %v2351
  %3178 = vmatprep.subr.bf16.mxu0 %v2412
  %3179 = vmatpush2.bf16.msra.mxu0 %v2411
  %3180 = vmatprep.subr.bf16.mxu0 %v2408
  %3181 = vmatpush2.bf16.msra.mxu0 %v2407
  %3182 = vmatprep.subr.bf16.mxu0 %v2404
  %3183 = vmatpush2.bf16.msra.mxu0 %v2403
  %3184 = vmatprep.subr.bf16.mxu0 %v2400
  %3185 = vmatpush2.bf16.msra.mxu0 %v2399
  %3186 = vmatprep.subr.bf16.mxu0 %v2396
  %3187 = vmatpush2.bf16.msra.mxu0 %v2395
  %3188 = vmatprep.subr.bf16.mxu0 %v2392
  %3189 = vmatpush2.bf16.msra.mxu0 %v2391
  %3190 = vmatprep.subr.bf16.mxu0 %v2388
  %3191 = vmatpush2.bf16.msra.mxu0 %v2387
  %3192 = vmatprep.subr.bf16.mxu0 %v2384
  %3193 = vmatpush2.bf16.msra.mxu0 %v2383
  %3194 = vmatprep.mubr.bf16.mxu0 %v3073
  %3195 = vmatmul.mubr.bf16.gmra.mxu0 %v3072
  %v3196 = vpop.f32.mrf.mxu0
  %v3197 = vadd.f32 0.0, %v3196
  %v3198 = vpop.f32.mrf.mxu0
  %v3199 = vadd.f32 0.0, %v3198
  %v3200 = vpop.f32.mrf.mxu0
  %v3201 = vadd.f32 0.0, %v3200
  %v3202 = vpop.f32.mrf.mxu0
  %v3203 = vadd.f32 0.0, %v3202
  %3204 = vdwg.mxu0
  %3205 = vmatprep.subr.bf16.mxu0 %v2444
  %3206 = vmatpush1.bf16.msra.mxu0 %v2443
  %3207 = vmatprep.subr.bf16.mxu0 %v2440
  %3208 = vmatpush1.bf16.msra.mxu0 %v2439
  %3209 = vmatprep.subr.bf16.mxu0 %v2436
  %3210 = vmatpush1.bf16.msra.mxu0 %v2435
  %3211 = vmatprep.subr.bf16.mxu0 %v2432
  %3212 = vmatpush1.bf16.msra.mxu0 %v2431
  %3213 = vmatprep.subr.bf16.mxu0 %v2428
  %3214 = vmatpush1.bf16.msra.mxu0 %v2427
  %3215 = vmatprep.subr.bf16.mxu0 %v2424
  %3216 = vmatpush1.bf16.msra.mxu0 %v2423
  %3217 = vmatprep.subr.bf16.mxu0 %v2420
  %3218 = vmatpush1.bf16.msra.mxu0 %v2419
  %3219 = vmatprep.subr.bf16.mxu0 %v2416
  %3220 = vmatpush1.bf16.msra.mxu0 %v2415
  %3221 = vmatprep.subr.bf16.mxu0 %v2476
  %3222 = vmatpush2.bf16.msra.mxu0 %v2475
  %3223 = vmatprep.subr.bf16.mxu0 %v2472
  %3224 = vmatpush2.bf16.msra.mxu0 %v2471
  %3225 = vmatprep.subr.bf16.mxu0 %v2468
  %3226 = vmatpush2.bf16.msra.mxu0 %v2467
  %3227 = vmatprep.subr.bf16.mxu0 %v2464
  %3228 = vmatpush2.bf16.msra.mxu0 %v2463
  %3229 = vmatprep.subr.bf16.mxu0 %v2460
  %3230 = vmatpush2.bf16.msra.mxu0 %v2459
  %3231 = vmatprep.subr.bf16.mxu0 %v2456
  %3232 = vmatpush2.bf16.msra.mxu0 %v2455
  %3233 = vmatprep.subr.bf16.mxu0 %v2452
  %3234 = vmatpush2.bf16.msra.mxu0 %v2451
  %3235 = vmatprep.subr.bf16.mxu0 %v2448
  %3236 = vmatpush2.bf16.msra.mxu0 %v2447
  %3237 = vmatprep.mubr.bf16.mxu0 %v3075
  %3238 = vmatmul.mubr.bf16.gmra.mxu0 %v3074
  %v3239 = vpop.f32.mrf.mxu0
  %v3240 = vadd.f32 %v3197, %v3239
  %v3241 = vpop.f32.mrf.mxu0
  %v3242 = vadd.f32 %v3199, %v3241
  %v3243 = vpop.f32.mrf.mxu0
  %v3244 = vadd.f32 %v3201, %v3243
  %v3245 = vpop.f32.mrf.mxu0
  %v3246 = vadd.f32 %v3203, %v3245
  %3247 = vdwg.mxu0
  %v3248 = vadd.f32 %v335, %v3154
  %v3249 = vadd.f32 %v337, %v3156
  %v3250 = vadd.f32 %v418, %v3240
  %v3251 = vadd.f32 %v420, %v3242
  %v3252 = vadd.f32 %v339, %v3158
  %v3253 = vadd.f32 %v341, %v3160
  %v3254 = vadd.f32 %v422, %v3244
  %v3255 = vadd.f32 %v424, %v3246
  %v3256 = vadd.f32 %v3248, %v3249
  %v3257 = vadd.f32 %v3256, %v3250
  %v3258 = vadd.f32 %v3257, %v3251
  %3259 = vadd.xlane.f32.xlu0 %v3258
  %v3260 = vpop.xlane.xlu0 %3259
  %v3261 = vadd.f32 %v3252, %v3253
  %v3262 = vadd.f32 %v3261, %v3254
  %v3263 = vadd.f32 %v3262, %v3255
  %3264 = vadd.xlane.f32.xlu0 %v3263
  %v3265 = vpop.xlane.xlu0 %3264
  %v3266 = vmul.f32 %v3260, %v2795
  %v3267 = vmul.f32 %v3265, %v2795
  %v3268 = vsub.f32 %v3248, %v3266
  %v3269 = vsub.f32 %v3249, %v3266
  %v3270 = vsub.f32 %v3250, %v3266
  %v3271 = vsub.f32 %v3251, %v3266
  %v3272 = vsub.f32 %v3252, %v3267
  %v3273 = vsub.f32 %v3253, %v3267
  %v3274 = vsub.f32 %v3254, %v3267
  %v3275 = vsub.f32 %v3255, %v3267
  %v3276 = vmul.f32 %v3268, %v3268
  %v3277 = vmul.f32 %v3269, %v3269
  %v3278 = vmul.f32 %v3270, %v3270
  %v3279 = vmul.f32 %v3271, %v3271
  %v3280 = vmul.f32 %v3272, %v3272
  %v3281 = vmul.f32 %v3273, %v3273
  %v3282 = vmul.f32 %v3274, %v3274
  %v3283 = vmul.f32 %v3275, %v3275
  %v3284 = vadd.f32 %v3276, %v3277
  %v3285 = vadd.f32 %v3284, %v3278
  %v3286 = vadd.f32 %v3285, %v3279
  %3287 = vadd.xlane.f32.xlu0 %v3286
  %v3288 = vpop.xlane.xlu0 %3287
  %v3289 = vadd.f32 %v3280, %v3281
  %v3290 = vadd.f32 %v3289, %v3282
  %v3291 = vadd.f32 %v3290, %v3283
  %3292 = vadd.xlane.f32.xlu0 %v3291
  %v3293 = vpop.xlane.xlu0 %3292
  %v3294 = vmul.f32 %v3288, %v2795
  %v3295 = vmul.f32 %v3293, %v2795
  %v3296 = vadd.f32 %v3294, 1e-05
  %v3297 = vadd.f32 %v3295, 1e-05
  %v3298 = vrsqrt.pop %v3296
  %v3299 = vrsqrt.pop %v3297
  %v3300 = vmul.f32 %v3268, %v3298
  %v3301 = vmul.f32 %v3269, %v3298
  %v3302 = vmul.f32 %v3270, %v3298
  %v3303 = vmul.f32 %v3271, %v3298
  %v3304 = vmul.f32 %v3272, %v3299
  %v3305 = vmul.f32 %v3273, %v3299
  %v3306 = vmul.f32 %v3274, %v3299
  %v3307 = vmul.f32 %v3275, %v3299
  %v3308 = vadd.f32 %v2830, %v3300
  %v3309 = vadd.f32 %v2831, %v3301
  %v3310 = vadd.f32 %v2832, %v3302
  %v3311 = vadd.f32 %v2833, %v3303
  %v3312 = vadd.f32 %v2834, %v3304
  %v3313 = vadd.f32 %v2835, %v3305
  %v3314 = vadd.f32 %v2836, %v3306
  %v3315 = vadd.f32 %v2837, %v3307
  %v3316 = vmul.f32 %v1151, %v1297
  %v3317 = vmul.f32 %v1153, %v1299
  %v3318 = vmul.f32 %v1234, %v1380
  %v3319 = vmul.f32 %v1236, %v1382
  %v3320 = vmul.f32 %v1155, %v1301
  %v3321 = vmul.f32 %v1157, %v1303
  %v3322 = vmul.f32 %v1238, %v1384
  %v3323 = vmul.f32 %v1240, %v1386
  %v3324 = vadd.f32 %v3316, %v3317
  %v3325 = vadd.f32 %v3324, %v3318
  %v3326 = vadd.f32 %v3325, %v3319
  %3327 = vadd.xlane.f32.xlu0 %v3326
  %v3328 = vpop.xlane.xlu0 %3327
  %v3329 = vadd.f32 %v3320, %v3321
  %v3330 = vadd.f32 %v3329, %v3322
  %v3331 = vadd.f32 %v3330, %v3323
  %3332 = vadd.xlane.f32.xlu0 %v3331
  %v3333 = vpop.xlane.xlu0 %3332
  %v3334 = vmul.f32 %v1151, %v1307
  %v3335 = vmul.f32 %v1153, %v1309
  %v3336 = vmul.f32 %v1234, %v1390
  %v3337 = vmul.f32 %v1236, %v1392
  %v3338 = vmul.f32 %v1155, %v1311
  %v3339 = vmul.f32 %v1157, %v1313
  %v3340 = vmul.f32 %v1238, %v1394
  %v3341 = vmul.f32 %v1240, %v1396
  %v3342 = vadd.f32 %v3334, %v3335
  %v3343 = vadd.f32 %v3342, %v3336
  %v3344 = vadd.f32 %v3343, %v3337
  %3345 = vadd.xlane.f32.xlu0 %v3344
  %v3346 = vpop.xlane.xlu0 %3345
  %v3347 = vadd.f32 %v3338, %v3339
  %v3348 = vadd.f32 %v3347, %v3340
  %v3349 = vadd.f32 %v3348, %v3341
  %3350 = vadd.xlane.f32.xlu0 %v3349
  %v3351 = vpop.xlane.xlu0 %3350
  %v3352 = vmul.f32 %v1151, %v1317
  %v3353 = vmul.f32 %v1153, %v1319
  %v3354 = vmul.f32 %v1234, %v1400
  %v3355 = vmul.f32 %v1236, %v1402
  %v3356 = vmul.f32 %v1155, %v1321
  %v3357 = vmul.f32 %v1157, %v1323
  %v3358 = vmul.f32 %v1238, %v1404
  %v3359 = vmul.f32 %v1240, %v1406
  %v3360 = vadd.f32 %v3352, %v3353
  %v3361 = vadd.f32 %v3360, %v3354
  %v3362 = vadd.f32 %v3361, %v3355
  %3363 = vadd.xlane.f32.xlu0 %v3362
  %v3364 = vpop.xlane.xlu0 %3363
  %v3365 = vadd.f32 %v3356, %v3357
  %v3366 = vadd.f32 %v3365, %v3358
  %v3367 = vadd.f32 %v3366, %v3359
  %3368 = vadd.xlane.f32.xlu0 %v3367
  %v3369 = vpop.xlane.xlu0 %3368
  %v3370 = vmul.f32 %v1151, %v1327
  %v3371 = vmul.f32 %v1153, %v1329
  %v3372 = vmul.f32 %v1234, %v1410
  %v3373 = vmul.f32 %v1236, %v1412
  %v3374 = vmul.f32 %v1155, %v1331
  %v3375 = vmul.f32 %v1157, %v1333
  %v3376 = vmul.f32 %v1238, %v1414
  %v3377 = vmul.f32 %v1240, %v1416
  %v3378 = vadd.f32 %v3370, %v3371
  %v3379 = vadd.f32 %v3378, %v3372
  %v3380 = vadd.f32 %v3379, %v3373
  %3381 = vadd.xlane.f32.xlu0 %v3380
  %v3382 = vpop.xlane.xlu0 %3381
  %v3383 = vadd.f32 %v3374, %v3375
  %v3384 = vadd.f32 %v3383, %v3376
  %v3385 = vadd.f32 %v3384, %v3377
  %3386 = vadd.xlane.f32.xlu0 %v3385
  %v3387 = vpop.xlane.xlu0 %3386
  %v3388 = vmul.f32 %v1151, %v1337
  %v3389 = vmul.f32 %v1153, %v1339
  %v3390 = vmul.f32 %v1234, %v1420
  %v3391 = vmul.f32 %v1236, %v1422
  %v3392 = vmul.f32 %v1155, %v1341
  %v3393 = vmul.f32 %v1157, %v1343
  %v3394 = vmul.f32 %v1238, %v1424
  %v3395 = vmul.f32 %v1240, %v1426
  %v3396 = vadd.f32 %v3388, %v3389
  %v3397 = vadd.f32 %v3396, %v3390
  %v3398 = vadd.f32 %v3397, %v3391
  %3399 = vadd.xlane.f32.xlu0 %v3398
  %v3400 = vpop.xlane.xlu0 %3399
  %v3401 = vadd.f32 %v3392, %v3393
  %v3402 = vadd.f32 %v3401, %v3394
  %v3403 = vadd.f32 %v3402, %v3395
  %3404 = vadd.xlane.f32.xlu0 %v3403
  %v3405 = vpop.xlane.xlu0 %3404
  %v3406 = vsel %vm1684, %v3328, %v3346
  %v3407 = vsel %vm1684, %v3333, %v3351
  %v3408 = vsel %vm1687, %v3406, %v3364
  %v3409 = vsel %vm1687, %v3407, %v3369
  %v3410 = vsel %vm1690, %v3408, %v3382
  %v3411 = vsel %vm1690, %v3409, %v3387
  %v3412 = vsel %vm1693, %v3410, %v3400
  %v3413 = vsel %vm1693, %v3411, %v3405
  %v3414 = vsel %vm1696, %v3412, -inf
  %3415 = vmax.xlane.f32.xlu0 %v3414
  %v3416 = vpop.xlane.xlu0 %3415
  %v3417 = vsel %vm1696, %v3413, -inf
  %3418 = vmax.xlane.f32.xlu0 %v3417
  %v3419 = vpop.xlane.xlu0 %3418
  %v3420 = vsub.f32 %v3412, %v3416
  %v3421 = vsub.f32 %v3413, %v3419
  %v3422 = vmul.f32 %v3420, 1.442695
  %v3423 = vpow.pop %v3422
  %v3424 = vmul.f32 %v3421, 1.442695
  %v3425 = vpow.pop %v3424
  %v3426 = vsel %vm1696, %v3423, 0.0
  %3427 = vadd.xlane.f32.xlu0 %v3426
  %v3428 = vpop.xlane.xlu0 %3427
  %v3429 = vsel %vm1696, %v3425, 0.0
  %3430 = vadd.xlane.f32.xlu0 %v3429
  %v3431 = vpop.xlane.xlu0 %3430
  %v3432 = vrcp.pop %v3428
  %v3433 = vrcp.pop %v3431
  %v3434 = vmul.f32 %v3423, %v3432
  %v3435 = vmul.f32 %v3425, %v3433
  %3437 = vset.pattern.permute.xlu0 0
  %3438 = vperm.xlu0 %3437, %v3434
  %v3439 = vpop.permute.xlu0 %3438
  %3442 = vset.pattern.permute.xlu0 0
  %3443 = vperm.xlu0 %3442, %v3435
  %v3444 = vpop.permute.xlu0 %3443
  %v3446 = vmul.f32 %v3439, %v1463
  %v3447 = vmul.f32 %v3439, %v1465
  %v3448 = vmul.f32 %v3439, %v1546
  %v3449 = vmul.f32 %v3439, %v1548
  %v3450 = vmul.f32 %v3444, %v1467
  %v3451 = vmul.f32 %v3444, %v1469
  %v3452 = vmul.f32 %v3444, %v1550
  %v3453 = vmul.f32 %v3444, %v1552
  %3454 = vset.pattern.permute.xlu0 1
  %3455 = vperm.xlu0 %3454, %v3434
  %v3456 = vpop.permute.xlu0 %3455
  %3458 = vset.pattern.permute.xlu0 1
  %3459 = vperm.xlu0 %3458, %v3435
  %v3460 = vpop.permute.xlu0 %3459
  %v3462 = vmul.f32 %v3456, %v1473
  %v3463 = vmul.f32 %v3456, %v1475
  %v3464 = vmul.f32 %v3456, %v1556
  %v3465 = vmul.f32 %v3456, %v1558
  %v3466 = vmul.f32 %v3460, %v1477
  %v3467 = vmul.f32 %v3460, %v1479
  %v3468 = vmul.f32 %v3460, %v1560
  %v3469 = vmul.f32 %v3460, %v1562
  %v3470 = vadd.f32 %v3446, %v3462
  %v3471 = vadd.f32 %v3447, %v3463
  %v3472 = vadd.f32 %v3448, %v3464
  %v3473 = vadd.f32 %v3449, %v3465
  %v3474 = vadd.f32 %v3450, %v3466
  %v3475 = vadd.f32 %v3451, %v3467
  %v3476 = vadd.f32 %v3452, %v3468
  %v3477 = vadd.f32 %v3453, %v3469
  %3478 = vset.pattern.permute.xlu0 2
  %3479 = vperm.xlu0 %3478, %v3434
  %v3480 = vpop.permute.xlu0 %3479
  %3482 = vset.pattern.permute.xlu0 2
  %3483 = vperm.xlu0 %3482, %v3435
  %v3484 = vpop.permute.xlu0 %3483
  %v3486 = vmul.f32 %v3480, %v1483
  %v3487 = vmul.f32 %v3480, %v1485
  %v3488 = vmul.f32 %v3480, %v1566
  %v3489 = vmul.f32 %v3480, %v1568
  %v3490 = vmul.f32 %v3484, %v1487
  %v3491 = vmul.f32 %v3484, %v1489
  %v3492 = vmul.f32 %v3484, %v1570
  %v3493 = vmul.f32 %v3484, %v1572
  %v3494 = vadd.f32 %v3470, %v3486
  %v3495 = vadd.f32 %v3471, %v3487
  %v3496 = vadd.f32 %v3472, %v3488
  %v3497 = vadd.f32 %v3473, %v3489
  %v3498 = vadd.f32 %v3474, %v3490
  %v3499 = vadd.f32 %v3475, %v3491
  %v3500 = vadd.f32 %v3476, %v3492
  %v3501 = vadd.f32 %v3477, %v3493
  %3502 = vset.pattern.permute.xlu0 3
  %3503 = vperm.xlu0 %3502, %v3434
  %v3504 = vpop.permute.xlu0 %3503
  %3506 = vset.pattern.permute.xlu0 3
  %3507 = vperm.xlu0 %3506, %v3435
  %v3508 = vpop.permute.xlu0 %3507
  %v3510 = vmul.f32 %v3504, %v1493
  %v3511 = vmul.f32 %v3504, %v1495
  %v3512 = vmul.f32 %v3504, %v1576
  %v3513 = vmul.f32 %v3504, %v1578
  %v3514 = vmul.f32 %v3508, %v1497
  %v3515 = vmul.f32 %v3508, %v1499
  %v3516 = vmul.f32 %v3508, %v1580
  %v3517 = vmul.f32 %v3508, %v1582
  %v3518 = vadd.f32 %v3494, %v3510
  %v3519 = vadd.f32 %v3495, %v3511
  %v3520 = vadd.f32 %v3496, %v3512
  %v3521 = vadd.f32 %v3497, %v3513
  %v3522 = vadd.f32 %v3498, %v3514
  %v3523 = vadd.f32 %v3499, %v3515
  %v3524 = vadd.f32 %v3500, %v3516
  %v3525 = vadd.f32 %v3501, %v3517
  %3526 = vset.pattern.permute.xlu0 4
  %3527 = vperm.xlu0 %3526, %v3434
  %v3528 = vpop.permute.xlu0 %3527
  %3530 = vset.pattern.permute.xlu0 4
  %3531 = vperm.xlu0 %3530, %v3435
  %v3532 = vpop.permute.xlu0 %3531
  %v3534 = vmul.f32 %v3528, %v1503
  %v3535 = vmul.f32 %v3528, %v1505
  %v3536 = vmul.f32 %v3528, %v1586
  %v3537 = vmul.f32 %v3528, %v1588
  %v3538 = vmul.f32 %v3532, %v1507
  %v3539 = vmul.f32 %v3532, %v1509
  %v3540 = vmul.f32 %v3532, %v1590
  %v3541 = vmul.f32 %v3532, %v1592
  %v3542 = vadd.f32 %v3518, %v3534
  %v3543 = vadd.f32 %v3519, %v3535
  %v3544 = vadd.f32 %v3520, %v3536
  %v3545 = vadd.f32 %v3521, %v3537
  %v3546 = vadd.f32 %v3522, %v3538
  %v3547 = vadd.f32 %v3523, %v3539
  %v3548 = vadd.f32 %v3524, %v3540
  %v3549 = vadd.f32 %v3525, %v3541
  %v3550 = vpack.c.bf16 %v3546, %v3542
  %v3551 = vpack.c.bf16 %v3547, %v3543
  %v3552 = vpack.c.bf16 %v3548, %v3544
  %v3553 = vpack.c.bf16 %v3549, %v3545
  %3554 = vmatprep.subr.bf16.mxu0 %v2378
  %3555 = vmatpush1.bf16.msra.mxu0 %v2377
  %3556 = vmatprep.subr.bf16.mxu0 %v2374
  %3557 = vmatpush1.bf16.msra.mxu0 %v2373
  %3558 = vmatprep.subr.bf16.mxu0 %v2370
  %3559 = vmatpush1.bf16.msra.mxu0 %v2369
  %3560 = vmatprep.subr.bf16.mxu0 %v2366
  %3561 = vmatpush1.bf16.msra.mxu0 %v2365
  %3562 = vmatprep.subr.bf16.mxu0 %v2362
  %3563 = vmatpush1.bf16.msra.mxu0 %v2361
  %3564 = vmatprep.subr.bf16.mxu0 %v2358
  %3565 = vmatpush1.bf16.msra.mxu0 %v2357
  %3566 = vmatprep.subr.bf16.mxu0 %v2354
  %3567 = vmatpush1.bf16.msra.mxu0 %v2353
  %3568 = vmatprep.subr.bf16.mxu0 %v2350
  %3569 = vmatpush1.bf16.msra.mxu0 %v2349
  %3570 = vmatprep.subr.bf16.mxu0 %v2410
  %3571 = vmatpush2.bf16.msra.mxu0 %v2409
  %3572 = vmatprep.subr.bf16.mxu0 %v2406
  %3573 = vmatpush2.bf16.msra.mxu0 %v2405
  %3574 = vmatprep.subr.bf16.mxu0 %v2402
  %3575 = vmatpush2.bf16.msra.mxu0 %v2401
  %3576 = vmatprep.subr.bf16.mxu0 %v2398
  %3577 = vmatpush2.bf16.msra.mxu0 %v2397
  %3578 = vmatprep.subr.bf16.mxu0 %v2394
  %3579 = vmatpush2.bf16.msra.mxu0 %v2393
  %3580 = vmatprep.subr.bf16.mxu0 %v2390
  %3581 = vmatpush2.bf16.msra.mxu0 %v2389
  %3582 = vmatprep.subr.bf16.mxu0 %v2386
  %3583 = vmatpush2.bf16.msra.mxu0 %v2385
  %3584 = vmatprep.subr.bf16.mxu0 %v2382
  %3585 = vmatpush2.bf16.msra.mxu0 %v2381
  %3586 = vmatprep.mubr.bf16.mxu0 %v3551
  %3587 = vmatmul.mubr.bf16.gmra.mxu0 %v3550
  %v3588 = vpop.f32.mrf.mxu0
  %v3589 = vadd.f32 0.0, %v3588
  %v3590 = vpop.f32.mrf.mxu0
  %v3591 = vadd.f32 0.0, %v3590
  %v3592 = vpop.f32.mrf.mxu0
  %v3593 = vadd.f32 0.0, %v3592
  %v3594 = vpop.f32.mrf.mxu0
  %v3595 = vadd.f32 0.0, %v3594
  %3596 = vdwg.mxu0
  %3597 = vmatprep.subr.bf16.mxu0 %v2442
  %3598 = vmatpush1.bf16.msra.mxu0 %v2441
  %3599 = vmatprep.subr.bf16.mxu0 %v2438
  %3600 = vmatpush1.bf16.msra.mxu0 %v2437
  %3601 = vmatprep.subr.bf16.mxu0 %v2434
  %3602 = vmatpush1.bf16.msra.mxu0 %v2433
  %3603 = vmatprep.subr.bf16.mxu0 %v2430
  %3604 = vmatpush1.bf16.msra.mxu0 %v2429
  %3605 = vmatprep.subr.bf16.mxu0 %v2426
  %3606 = vmatpush1.bf16.msra.mxu0 %v2425
  %3607 = vmatprep.subr.bf16.mxu0 %v2422
  %3608 = vmatpush1.bf16.msra.mxu0 %v2421
  %3609 = vmatprep.subr.bf16.mxu0 %v2418
  %3610 = vmatpush1.bf16.msra.mxu0 %v2417
  %3611 = vmatprep.subr.bf16.mxu0 %v2414
  %3612 = vmatpush1.bf16.msra.mxu0 %v2413
  %3613 = vmatprep.subr.bf16.mxu0 %v2474
  %3614 = vmatpush2.bf16.msra.mxu0 %v2473
  %3615 = vmatprep.subr.bf16.mxu0 %v2470
  %3616 = vmatpush2.bf16.msra.mxu0 %v2469
  %3617 = vmatprep.subr.bf16.mxu0 %v2466
  %3618 = vmatpush2.bf16.msra.mxu0 %v2465
  %3619 = vmatprep.subr.bf16.mxu0 %v2462
  %3620 = vmatpush2.bf16.msra.mxu0 %v2461
  %3621 = vmatprep.subr.bf16.mxu0 %v2458
  %3622 = vmatpush2.bf16.msra.mxu0 %v2457
  %3623 = vmatprep.subr.bf16.mxu0 %v2454
  %3624 = vmatpush2.bf16.msra.mxu0 %v2453
  %3625 = vmatprep.subr.bf16.mxu0 %v2450
  %3626 = vmatpush2.bf16.msra.mxu0 %v2449
  %3627 = vmatprep.subr.bf16.mxu0 %v2446
  %3628 = vmatpush2.bf16.msra.mxu0 %v2445
  %3629 = vmatprep.mubr.bf16.mxu0 %v3553
  %3630 = vmatmul.mubr.bf16.gmra.mxu0 %v3552
  %v3631 = vpop.f32.mrf.mxu0
  %v3632 = vadd.f32 %v3589, %v3631
  %v3633 = vpop.f32.mrf.mxu0
  %v3634 = vadd.f32 %v3591, %v3633
  %v3635 = vpop.f32.mrf.mxu0
  %v3636 = vadd.f32 %v3593, %v3635
  %v3637 = vpop.f32.mrf.mxu0
  %v3638 = vadd.f32 %v3595, %v3637
  %3639 = vdwg.mxu0
  %3640 = vmatprep.subr.bf16.mxu0 %v2380
  %3641 = vmatpush1.bf16.msra.mxu0 %v2379
  %3642 = vmatprep.subr.bf16.mxu0 %v2376
  %3643 = vmatpush1.bf16.msra.mxu0 %v2375
  %3644 = vmatprep.subr.bf16.mxu0 %v2372
  %3645 = vmatpush1.bf16.msra.mxu0 %v2371
  %3646 = vmatprep.subr.bf16.mxu0 %v2368
  %3647 = vmatpush1.bf16.msra.mxu0 %v2367
  %3648 = vmatprep.subr.bf16.mxu0 %v2364
  %3649 = vmatpush1.bf16.msra.mxu0 %v2363
  %3650 = vmatprep.subr.bf16.mxu0 %v2360
  %3651 = vmatpush1.bf16.msra.mxu0 %v2359
  %3652 = vmatprep.subr.bf16.mxu0 %v2356
  %3653 = vmatpush1.bf16.msra.mxu0 %v2355
  %3654 = vmatprep.subr.bf16.mxu0 %v2352
  %3655 = vmatpush1.bf16.msra.mxu0 %v2351
  %3656 = vmatprep.subr.bf16.mxu0 %v2412
  %3657 = vmatpush2.bf16.msra.mxu0 %v2411
  %3658 = vmatprep.subr.bf16.mxu0 %v2408
  %3659 = vmatpush2.bf16.msra.mxu0 %v2407
  %3660 = vmatprep.subr.bf16.mxu0 %v2404
  %3661 = vmatpush2.bf16.msra.mxu0 %v2403
  %3662 = vmatprep.subr.bf16.mxu0 %v2400
  %3663 = vmatpush2.bf16.msra.mxu0 %v2399
  %3664 = vmatprep.subr.bf16.mxu0 %v2396
  %3665 = vmatpush2.bf16.msra.mxu0 %v2395
  %3666 = vmatprep.subr.bf16.mxu0 %v2392
  %3667 = vmatpush2.bf16.msra.mxu0 %v2391
  %3668 = vmatprep.subr.bf16.mxu0 %v2388
  %3669 = vmatpush2.bf16.msra.mxu0 %v2387
  %3670 = vmatprep.subr.bf16.mxu0 %v2384
  %3671 = vmatpush2.bf16.msra.mxu0 %v2383
  %3672 = vmatprep.mubr.bf16.mxu0 %v3551
  %3673 = vmatmul.mubr.bf16.gmra.mxu0 %v3550
  %v3674 = vpop.f32.mrf.mxu0
  %v3675 = vadd.f32 0.0, %v3674
  %v3676 = vpop.f32.mrf.mxu0
  %v3677 = vadd.f32 0.0, %v3676
  %v3678 = vpop.f32.mrf.mxu0
  %v3679 = vadd.f32 0.0, %v3678
  %v3680 = vpop.f32.mrf.mxu0
  %v3681 = vadd.f32 0.0, %v3680
  %3682 = vdwg.mxu0
  %3683 = vmatprep.subr.bf16.mxu0 %v2444
  %3684 = vmatpush1.bf16.msra.mxu0 %v2443
  %3685 = vmatprep.subr.bf16.mxu0 %v2440
  %3686 = vmatpush1.bf16.msra.mxu0 %v2439
  %3687 = vmatprep.subr.bf16.mxu0 %v2436
  %3688 = vmatpush1.bf16.msra.mxu0 %v2435
  %3689 = vmatprep.subr.bf16.mxu0 %v2432
  %3690 = vmatpush1.bf16.msra.mxu0 %v2431
  %3691 = vmatprep.subr.bf16.mxu0 %v2428
  %3692 = vmatpush1.bf16.msra.mxu0 %v2427
  %3693 = vmatprep.subr.bf16.mxu0 %v2424
  %3694 = vmatpush1.bf16.msra.mxu0 %v2423
  %3695 = vmatprep.subr.bf16.mxu0 %v2420
  %3696 = vmatpush1.bf16.msra.mxu0 %v2419
  %3697 = vmatprep.subr.bf16.mxu0 %v2416
  %3698 = vmatpush1.bf16.msra.mxu0 %v2415
  %3699 = vmatprep.subr.bf16.mxu0 %v2476
  %3700 = vmatpush2.bf16.msra.mxu0 %v2475
  %3701 = vmatprep.subr.bf16.mxu0 %v2472
  %3702 = vmatpush2.bf16.msra.mxu0 %v2471
  %3703 = vmatprep.subr.bf16.mxu0 %v2468
  %3704 = vmatpush2.bf16.msra.mxu0 %v2467
  %3705 = vmatprep.subr.bf16.mxu0 %v2464
  %3706 = vmatpush2.bf16.msra.mxu0 %v2463
  %3707 = vmatprep.subr.bf16.mxu0 %v2460
  %3708 = vmatpush2.bf16.msra.mxu0 %v2459
  %3709 = vmatprep.subr.bf16.mxu0 %v2456
  %3710 = vmatpush2.bf16.msra.mxu0 %v2455
  %3711 = vmatprep.subr.bf16.mxu0 %v2452
  %3712 = vmatpush2.bf16.msra.mxu0 %v2451
  %3713 = vmatprep.subr.bf16.mxu0 %v2448
  %3714 = vmatpush2.bf16.msra.mxu0 %v2447
  %3715 = vmatprep.mubr.bf16.mxu0 %v3553
  %3716 = vmatmul.mubr.bf16.gmra.mxu0 %v3552
  %v3717 = vpop.f32.mrf.mxu0
  %v3718 = vadd.f32 %v3675, %v3717
  %v3719 = vpop.f32.mrf.mxu0
  %v3720 = vadd.f32 %v3677, %v3719
  %v3721 = vpop.f32.mrf.mxu0
  %v3722 = vadd.f32 %v3679, %v3721
  %v3723 = vpop.f32.mrf.mxu0
  %v3724 = vadd.f32 %v3681, %v3723
  %3725 = vdwg.mxu0
  %v3726 = vadd.f32 %v345, %v3632
  %v3727 = vadd.f32 %v347, %v3634
  %v3728 = vadd.f32 %v428, %v3718
  %v3729 = vadd.f32 %v430, %v3720
  %v3730 = vadd.f32 %v349, %v3636
  %v3731 = vadd.f32 %v351, %v3638
  %v3732 = vadd.f32 %v432, %v3722
  %v3733 = vadd.f32 %v434, %v3724
  %v3734 = vadd.f32 %v3726, %v3727
  %v3735 = vadd.f32 %v3734, %v3728
  %v3736 = vadd.f32 %v3735, %v3729
  %3737 = vadd.xlane.f32.xlu0 %v3736
  %v3738 = vpop.xlane.xlu0 %3737
  %v3739 = vadd.f32 %v3730, %v3731
  %v3740 = vadd.f32 %v3739, %v3732
  %v3741 = vadd.f32 %v3740, %v3733
  %3742 = vadd.xlane.f32.xlu0 %v3741
  %v3743 = vpop.xlane.xlu0 %3742
  %v3744 = vmul.f32 %v3738, %v2795
  %v3745 = vmul.f32 %v3743, %v2795
  %v3746 = vsub.f32 %v3726, %v3744
  %v3747 = vsub.f32 %v3727, %v3744
  %v3748 = vsub.f32 %v3728, %v3744
  %v3749 = vsub.f32 %v3729, %v3744
  %v3750 = vsub.f32 %v3730, %v3745
  %v3751 = vsub.f32 %v3731, %v3745
  %v3752 = vsub.f32 %v3732, %v3745
  %v3753 = vsub.f32 %v3733, %v3745
  %v3754 = vmul.f32 %v3746, %v3746
  %v3755 = vmul.f32 %v3747, %v3747
  %v3756 = vmul.f32 %v3748, %v3748
  %v3757 = vmul.f32 %v3749, %v3749
  %v3758 = vmul.f32 %v3750, %v3750
  %v3759 = vmul.f32 %v3751, %v3751
  %v3760 = vmul.f32 %v3752, %v3752
  %v3761 = vmul.f32 %v3753, %v3753
  %v3762 = vadd.f32 %v3754, %v3755
  %v3763 = vadd.f32 %v3762, %v3756
  %v3764 = vadd.f32 %v3763, %v3757
  %3765 = vadd.xlane.f32.xlu0 %v3764
  %v3766 = vpop.xlane.xlu0 %3765
  %v3767 = vadd.f32 %v3758, %v3759
  %v3768 = vadd.f32 %v3767, %v3760
  %v3769 = vadd.f32 %v3768, %v3761
  %3770 = vadd.xlane.f32.xlu0 %v3769
  %v3771 = vpop.xlane.xlu0 %3770
  %v3772 = vmul.f32 %v3766, %v2795
  %v3773 = vmul.f32 %v3771, %v2795
  %v3774 = vadd.f32 %v3772, 1e-05
  %v3775 = vadd.f32 %v3773, 1e-05
  %v3776 = vrsqrt.pop %v3774
  %v3777 = vrsqrt.pop %v3775
  %v3778 = vmul.f32 %v3746, %v3776
  %v3779 = vmul.f32 %v3747, %v3776
  %v3780 = vmul.f32 %v3748, %v3776
  %v3781 = vmul.f32 %v3749, %v3776
  %v3782 = vmul.f32 %v3750, %v3777
  %v3783 = vmul.f32 %v3751, %v3777
  %v3784 = vmul.f32 %v3752, %v3777
  %v3785 = vmul.f32 %v3753, %v3777
  %v3786 = vadd.f32 %v3308, %v3778
  %v3787 = vadd.f32 %v3309, %v3779
  %v3788 = vadd.f32 %v3310, %v3780
  %v3789 = vadd.f32 %v3311, %v3781
  %v3790 = vadd.f32 %v3312, %v3782
  %v3791 = vadd.f32 %v3313, %v3783
  %v3792 = vadd.f32 %v3314, %v3784
  %v3793 = vadd.f32 %v3315, %v3785
  %v3794 = vmul.f32 %v1161, %v1297
  %v3795 = vmul.f32 %v1163, %v1299
  %v3796 = vmul.f32 %v1244, %v1380
  %v3797 = vmul.f32 %v1246, %v1382
  %v3798 = vmul.f32 %v1165, %v1301
  %v3799 = vmul.f32 %v1167, %v1303
  %v3800 = vmul.f32 %v1248, %v1384
  %v3801 = vmul.f32 %v1250, %v1386
  %v3802 = vadd.f32 %v3794, %v3795
  %v3803 = vadd.f32 %v3802, %v3796
  %v3804 = vadd.f32 %v3803, %v3797
  %3805 = vadd.xlane.f32.xlu0 %v3804
  %v3806 = vpop.xlane.xlu0 %3805
  %v3807 = vadd.f32 %v3798, %v3799
  %v3808 = vadd.f32 %v3807, %v3800
  %v3809 = vadd.f32 %v3808, %v3801
  %3810 = vadd.xlane.f32.xlu0 %v3809
  %v3811 = vpop.xlane.xlu0 %3810
  %v3812 = vmul.f32 %v1161, %v1307
  %v3813 = vmul.f32 %v1163, %v1309
  %v3814 = vmul.f32 %v1244, %v1390
  %v3815 = vmul.f32 %v1246, %v1392
  %v3816 = vmul.f32 %v1165, %v1311
  %v3817 = vmul.f32 %v1167, %v1313
  %v3818 = vmul.f32 %v1248, %v1394
  %v3819 = vmul.f32 %v1250, %v1396
  %v3820 = vadd.f32 %v3812, %v3813
  %v3821 = vadd.f32 %v3820, %v3814
  %v3822 = vadd.f32 %v3821, %v3815
  %3823 = vadd.xlane.f32.xlu0 %v3822
  %v3824 = vpop.xlane.xlu0 %3823
  %v3825 = vadd.f32 %v3816, %v3817
  %v3826 = vadd.f32 %v3825, %v3818
  %v3827 = vadd.f32 %v3826, %v3819
  %3828 = vadd.xlane.f32.xlu0 %v3827
  %v3829 = vpop.xlane.xlu0 %3828
  %v3830 = vmul.f32 %v1161, %v1317
  %v3831 = vmul.f32 %v1163, %v1319
  %v3832 = vmul.f32 %v1244, %v1400
  %v3833 = vmul.f32 %v1246, %v1402
  %v3834 = vmul.f32 %v1165, %v1321
  %v3835 = vmul.f32 %v1167, %v1323
  %v3836 = vmul.f32 %v1248, %v1404
  %v3837 = vmul.f32 %v1250, %v1406
  %v3838 = vadd.f32 %v3830, %v3831
  %v3839 = vadd.f32 %v3838, %v3832
  %v3840 = vadd.f32 %v3839, %v3833
  %3841 = vadd.xlane.f32.xlu0 %v3840
  %v3842 = vpop.xlane.xlu0 %3841
  %v3843 = vadd.f32 %v3834, %v3835
  %v3844 = vadd.f32 %v3843, %v3836
  %v3845 = vadd.f32 %v3844, %v3837
  %3846 = vadd.xlane.f32.xlu0 %v3845
  %v3847 = vpop.xlane.xlu0 %3846
  %v3848 = vmul.f32 %v1161, %v1327
  %v3849 = vmul.f32 %v1163, %v1329
  %v3850 = vmul.f32 %v1244, %v1410
  %v3851 = vmul.f32 %v1246, %v1412
  %v3852 = vmul.f32 %v1165, %v1331
  %v3853 = vmul.f32 %v1167, %v1333
  %v3854 = vmul.f32 %v1248, %v1414
  %v3855 = vmul.f32 %v1250, %v1416
  %v3856 = vadd.f32 %v3848, %v3849
  %v3857 = vadd.f32 %v3856, %v3850
  %v3858 = vadd.f32 %v3857, %v3851
  %3859 = vadd.xlane.f32.xlu0 %v3858
  %v3860 = vpop.xlane.xlu0 %3859
  %v3861 = vadd.f32 %v3852, %v3853
  %v3862 = vadd.f32 %v3861, %v3854
  %v3863 = vadd.f32 %v3862, %v3855
  %3864 = vadd.xlane.f32.xlu0 %v3863
  %v3865 = vpop.xlane.xlu0 %3864
  %v3866 = vmul.f32 %v1161, %v1337
  %v3867 = vmul.f32 %v1163, %v1339
  %v3868 = vmul.f32 %v1244, %v1420
  %v3869 = vmul.f32 %v1246, %v1422
  %v3870 = vmul.f32 %v1165, %v1341
  %v3871 = vmul.f32 %v1167, %v1343
  %v3872 = vmul.f32 %v1248, %v1424
  %v3873 = vmul.f32 %v1250, %v1426
  %v3874 = vadd.f32 %v3866, %v3867
  %v3875 = vadd.f32 %v3874, %v3868
  %v3876 = vadd.f32 %v3875, %v3869
  %3877 = vadd.xlane.f32.xlu0 %v3876
  %v3878 = vpop.xlane.xlu0 %3877
  %v3879 = vadd.f32 %v3870, %v3871
  %v3880 = vadd.f32 %v3879, %v3872
  %v3881 = vadd.f32 %v3880, %v3873
  %3882 = vadd.xlane.f32.xlu0 %v3881
  %v3883 = vpop.xlane.xlu0 %3882
  %v3884 = vsel %vm1684, %v3806, %v3824
  %v3885 = vsel %vm1684, %v3811, %v3829
  %v3886 = vsel %vm1687, %v3884, %v3842
  %v3887 = vsel %vm1687, %v3885, %v3847
  %v3888 = vsel %vm1690, %v3886, %v3860
  %v3889 = vsel %vm1690, %v3887, %v3865
  %v3890 = vsel %vm1693, %v3888, %v3878
  %v3891 = vsel %vm1693, %v3889, %v3883
  %v3892 = vsel %vm1696, %v3890, -inf
  %3893 = vmax.xlane.f32.xlu0 %v3892
  %v3894 = vpop.xlane.xlu0 %3893
  %v3895 = vsel %vm1696, %v3891, -inf
  %3896 = vmax.xlane.f32.xlu0 %v3895
  %v3897 = vpop.xlane.xlu0 %3896
  %v3898 = vsub.f32 %v3890, %v3894
  %v3899 = vsub.f32 %v3891, %v3897
  %v3900 = vmul.f32 %v3898, 1.442695
  %v3901 = vpow.pop %v3900
  %v3902 = vmul.f32 %v3899, 1.442695
  %v3903 = vpow.pop %v3902
  %v3904 = vsel %vm1696, %v3901, 0.0
  %3905 = vadd.xlane.f32.xlu0 %v3904
  %v3906 = vpop.xlane.xlu0 %3905
  %v3907 = vsel %vm1696, %v3903, 0.0
  %3908 = vadd.xlane.f32.xlu0 %v3907
  %v3909 = vpop.xlane.xlu0 %3908
  %v3910 = vrcp.pop %v3906
  %v3911 = vrcp.pop %v3909
  %v3912 = vmul.f32 %v3901, %v3910
  %v3913 = vmul.f32 %v3903, %v3911
  %3915 = vset.pattern.permute.xlu0 0
  %3916 = vperm.xlu0 %3915, %v3912
  %v3917 = vpop.permute.xlu0 %3916
  %3920 = vset.pattern.permute.xlu0 0
  %3921 = vperm.xlu0 %3920, %v3913
  %v3922 = vpop.permute.xlu0 %3921
  %v3924 = vmul.f32 %v3917, %v1463
  %v3925 = vmul.f32 %v3917, %v1465
  %v3926 = vmul.f32 %v3917, %v1546
  %v3927 = vmul.f32 %v3917, %v1548
  %v3928 = vmul.f32 %v3922, %v1467
  %v3929 = vmul.f32 %v3922, %v1469
  %v3930 = vmul.f32 %v3922, %v1550
  %v3931 = vmul.f32 %v3922, %v1552
  %3932 = vset.pattern.permute.xlu0 1
  %3933 = vperm.xlu0 %3932, %v3912
  %v3934 = vpop.permute.xlu0 %3933
  %3936 = vset.pattern.permute.xlu0 1
  %3937 = vperm.xlu0 %3936, %v3913
  %v3938 = vpop.permute.xlu0 %3937
  %v3940 = vmul.f32 %v3934, %v1473
  %v3941 = vmul.f32 %v3934, %v1475
  %v3942 = vmul.f32 %v3934, %v1556
  %v3943 = vmul.f32 %v3934, %v1558
  %v3944 = vmul.f32 %v3938, %v1477
  %v3945 = vmul.f32 %v3938, %v1479
  %v3946 = vmul.f32 %v3938, %v1560
  %v3947 = vmul.f32 %v3938, %v1562
  %v3948 = vadd.f32 %v3924, %v3940
  %v3949 = vadd.f32 %v3925, %v3941
  %v3950 = vadd.f32 %v3926, %v3942
  %v3951 = vadd.f32 %v3927, %v3943
  %v3952 = vadd.f32 %v3928, %v3944
  %v3953 = vadd.f32 %v3929, %v3945
  %v3954 = vadd.f32 %v3930, %v3946
  %v3955 = vadd.f32 %v3931, %v3947
  %3956 = vset.pattern.permute.xlu0 2
  %3957 = vperm.xlu0 %3956, %v3912
  %v3958 = vpop.permute.xlu0 %3957
  %3960 = vset.pattern.permute.xlu0 2
  %3961 = vperm.xlu0 %3960, %v3913
  %v3962 = vpop.permute.xlu0 %3961
  %v3964 = vmul.f32 %v3958, %v1483
  %v3965 = vmul.f32 %v3958, %v1485
  %v3966 = vmul.f32 %v3958, %v1566
  %v3967 = vmul.f32 %v3958, %v1568
  %v3968 = vmul.f32 %v3962, %v1487
  %v3969 = vmul.f32 %v3962, %v1489
  %v3970 = vmul.f32 %v3962, %v1570
  %v3971 = vmul.f32 %v3962, %v1572
  %v3972 = vadd.f32 %v3948, %v3964
  %v3973 = vadd.f32 %v3949, %v3965
  %v3974 = vadd.f32 %v3950, %v3966
  %v3975 = vadd.f32 %v3951, %v3967
  %v3976 = vadd.f32 %v3952, %v3968
  %v3977 = vadd.f32 %v3953, %v3969
  %v3978 = vadd.f32 %v3954, %v3970
  %v3979 = vadd.f32 %v3955, %v3971
  %3980 = vset.pattern.permute.xlu0 3
  %3981 = vperm.xlu0 %3980, %v3912
  %v3982 = vpop.permute.xlu0 %3981
  %3984 = vset.pattern.permute.xlu0 3
  %3985 = vperm.xlu0 %3984, %v3913
  %v3986 = vpop.permute.xlu0 %3985
  %v3988 = vmul.f32 %v3982, %v1493
  %v3989 = vmul.f32 %v3982, %v1495
  %v3990 = vmul.f32 %v3982, %v1576
  %v3991 = vmul.f32 %v3982, %v1578
  %v3992 = vmul.f32 %v3986, %v1497
  %v3993 = vmul.f32 %v3986, %v1499
  %v3994 = vmul.f32 %v3986, %v1580
  %v3995 = vmul.f32 %v3986, %v1582
  %v3996 = vadd.f32 %v3972, %v3988
  %v3997 = vadd.f32 %v3973, %v3989
  %v3998 = vadd.f32 %v3974, %v3990
  %v3999 = vadd.f32 %v3975, %v3991
  %v4000 = vadd.f32 %v3976, %v3992
  %v4001 = vadd.f32 %v3977, %v3993
  %v4002 = vadd.f32 %v3978, %v3994
  %v4003 = vadd.f32 %v3979, %v3995
  %4004 = vset.pattern.permute.xlu0 4
  %4005 = vperm.xlu0 %4004, %v3912
  %v4006 = vpop.permute.xlu0 %4005
  %4008 = vset.pattern.permute.xlu0 4
  %4009 = vperm.xlu0 %4008, %v3913
  %v4010 = vpop.permute.xlu0 %4009
  %v4012 = vmul.f32 %v4006, %v1503
  %v4013 = vmul.f32 %v4006, %v1505
  %v4014 = vmul.f32 %v4006, %v1586
  %v4015 = vmul.f32 %v4006, %v1588
  %v4016 = vmul.f32 %v4010, %v1507
  %v4017 = vmul.f32 %v4010, %v1509
  %v4018 = vmul.f32 %v4010, %v1590
  %v4019 = vmul.f32 %v4010, %v1592
  %v4020 = vadd.f32 %v3996, %v4012
  %v4021 = vadd.f32 %v3997, %v4013
  %v4022 = vadd.f32 %v3998, %v4014
  %v4023 = vadd.f32 %v3999, %v4015
  %v4024 = vadd.f32 %v4000, %v4016
  %v4025 = vadd.f32 %v4001, %v4017
  %v4026 = vadd.f32 %v4002, %v4018
  %v4027 = vadd.f32 %v4003, %v4019
  %v4028 = vpack.c.bf16 %v4024, %v4020
  %v4029 = vpack.c.bf16 %v4025, %v4021
  %v4030 = vpack.c.bf16 %v4026, %v4022
  %v4031 = vpack.c.bf16 %v4027, %v4023
  %4032 = vmatprep.subr.bf16.mxu0 %v2378
  %4033 = vmatpush1.bf16.msra.mxu0 %v2377
  %4034 = vmatprep.subr.bf16.mxu0 %v2374
  %4035 = vmatpush1.bf16.msra.mxu0 %v2373
  %4036 = vmatprep.subr.bf16.mxu0 %v2370
  %4037 = vmatpush1.bf16.msra.mxu0 %v2369
  %4038 = vmatprep.subr.bf16.mxu0 %v2366
  %4039 = vmatpush1.bf16.msra.mxu0 %v2365
  %4040 = vmatprep.subr.bf16.mxu0 %v2362
  %4041 = vmatpush1.bf16.msra.mxu0 %v2361
  %4042 = vmatprep.subr.bf16.mxu0 %v2358
  %4043 = vmatpush1.bf16.msra.mxu0 %v2357
  %4044 = vmatprep.subr.bf16.mxu0 %v2354
  %4045 = vmatpush1.bf16.msra.mxu0 %v2353
  %4046 = vmatprep.subr.bf16.mxu0 %v2350
  %4047 = vmatpush1.bf16.msra.mxu0 %v2349
  %4048 = vmatprep.subr.bf16.mxu0 %v2410
  %4049 = vmatpush2.bf16.msra.mxu0 %v2409
  %4050 = vmatprep.subr.bf16.mxu0 %v2406
  %4051 = vmatpush2.bf16.msra.mxu0 %v2405
  %4052 = vmatprep.subr.bf16.mxu0 %v2402
  %4053 = vmatpush2.bf16.msra.mxu0 %v2401
  %4054 = vmatprep.subr.bf16.mxu0 %v2398
  %4055 = vmatpush2.bf16.msra.mxu0 %v2397
  %4056 = vmatprep.subr.bf16.mxu0 %v2394
  %4057 = vmatpush2.bf16.msra.mxu0 %v2393
  %4058 = vmatprep.subr.bf16.mxu0 %v2390
  %4059 = vmatpush2.bf16.msra.mxu0 %v2389
  %4060 = vmatprep.subr.bf16.mxu0 %v2386
  %4061 = vmatpush2.bf16.msra.mxu0 %v2385
  %4062 = vmatprep.subr.bf16.mxu0 %v2382
  %4063 = vmatpush2.bf16.msra.mxu0 %v2381
  %4064 = vmatprep.mubr.bf16.mxu0 %v4029
  %4065 = vmatmul.mubr.bf16.gmra.mxu0 %v4028
  %v4066 = vpop.f32.mrf.mxu0
  %v4067 = vadd.f32 0.0, %v4066
  %v4068 = vpop.f32.mrf.mxu0
  %v4069 = vadd.f32 0.0, %v4068
  %v4070 = vpop.f32.mrf.mxu0
  %v4071 = vadd.f32 0.0, %v4070
  %v4072 = vpop.f32.mrf.mxu0
  %v4073 = vadd.f32 0.0, %v4072
  %4074 = vdwg.mxu0
  %4075 = vmatprep.subr.bf16.mxu0 %v2442
  %4076 = vmatpush1.bf16.msra.mxu0 %v2441
  %4077 = vmatprep.subr.bf16.mxu0 %v2438
  %4078 = vmatpush1.bf16.msra.mxu0 %v2437
  %4079 = vmatprep.subr.bf16.mxu0 %v2434
  %4080 = vmatpush1.bf16.msra.mxu0 %v2433
  %4081 = vmatprep.subr.bf16.mxu0 %v2430
  %4082 = vmatpush1.bf16.msra.mxu0 %v2429
  %4083 = vmatprep.subr.bf16.mxu0 %v2426
  %4084 = vmatpush1.bf16.msra.mxu0 %v2425
  %4085 = vmatprep.subr.bf16.mxu0 %v2422
  %4086 = vmatpush1.bf16.msra.mxu0 %v2421
  %4087 = vmatprep.subr.bf16.mxu0 %v2418
  %4088 = vmatpush1.bf16.msra.mxu0 %v2417
  %4089 = vmatprep.subr.bf16.mxu0 %v2414
  %4090 = vmatpush1.bf16.msra.mxu0 %v2413
  %4091 = vmatprep.subr.bf16.mxu0 %v2474
  %4092 = vmatpush2.bf16.msra.mxu0 %v2473
  %4093 = vmatprep.subr.bf16.mxu0 %v2470
  %4094 = vmatpush2.bf16.msra.mxu0 %v2469
  %4095 = vmatprep.subr.bf16.mxu0 %v2466
  %4096 = vmatpush2.bf16.msra.mxu0 %v2465
  %4097 = vmatprep.subr.bf16.mxu0 %v2462
  %4098 = vmatpush2.bf16.msra.mxu0 %v2461
  %4099 = vmatprep.subr.bf16.mxu0 %v2458
  %4100 = vmatpush2.bf16.msra.mxu0 %v2457
  %4101 = vmatprep.subr.bf16.mxu0 %v2454
  %4102 = vmatpush2.bf16.msra.mxu0 %v2453
  %4103 = vmatprep.subr.bf16.mxu0 %v2450
  %4104 = vmatpush2.bf16.msra.mxu0 %v2449
  %4105 = vmatprep.subr.bf16.mxu0 %v2446
  %4106 = vmatpush2.bf16.msra.mxu0 %v2445
  %4107 = vmatprep.mubr.bf16.mxu0 %v4031
  %4108 = vmatmul.mubr.bf16.gmra.mxu0 %v4030
  %v4109 = vpop.f32.mrf.mxu0
  %v4110 = vadd.f32 %v4067, %v4109
  %v4111 = vpop.f32.mrf.mxu0
  %v4112 = vadd.f32 %v4069, %v4111
  %v4113 = vpop.f32.mrf.mxu0
  %v4114 = vadd.f32 %v4071, %v4113
  %v4115 = vpop.f32.mrf.mxu0
  %v4116 = vadd.f32 %v4073, %v4115
  %4117 = vdwg.mxu0
  %4118 = vmatprep.subr.bf16.mxu0 %v2380
  %4119 = vmatpush1.bf16.msra.mxu0 %v2379
  %4120 = vmatprep.subr.bf16.mxu0 %v2376
  %4121 = vmatpush1.bf16.msra.mxu0 %v2375
  %4122 = vmatprep.subr.bf16.mxu0 %v2372
  %4123 = vmatpush1.bf16.msra.mxu0 %v2371
  %4124 = vmatprep.subr.bf16.mxu0 %v2368
  %4125 = vmatpush1.bf16.msra.mxu0 %v2367
  %4126 = vmatprep.subr.bf16.mxu0 %v2364
  %4127 = vmatpush1.bf16.msra.mxu0 %v2363
  %4128 = vmatprep.subr.bf16.mxu0 %v2360
  %4129 = vmatpush1.bf16.msra.mxu0 %v2359
  %4130 = vmatprep.subr.bf16.mxu0 %v2356
  %4131 = vmatpush1.bf16.msra.mxu0 %v2355
  %4132 = vmatprep.subr.bf16.mxu0 %v2352
  %4133 = vmatpush1.bf16.msra.mxu0 %v2351
  %4134 = vmatprep.subr.bf16.mxu0 %v2412
  %4135 = vmatpush2.bf16.msra.mxu0 %v2411
  %4136 = vmatprep.subr.bf16.mxu0 %v2408
  %4137 = vmatpush2.bf16.msra.mxu0 %v2407
  %4138 = vmatprep.subr.bf16.mxu0 %v2404
  %4139 = vmatpush2.bf16.msra.mxu0 %v2403
  %4140 = vmatprep.subr.bf16.mxu0 %v2400
  %4141 = vmatpush2.bf16.msra.mxu0 %v2399
  %4142 = vmatprep.subr.bf16.mxu0 %v2396
  %4143 = vmatpush2.bf16.msra.mxu0 %v2395
  %4144 = vmatprep.subr.bf16.mxu0 %v2392
  %4145 = vmatpush2.bf16.msra.mxu0 %v2391
  %4146 = vmatprep.subr.bf16.mxu0 %v2388
  %4147 = vmatpush2.bf16.msra.mxu0 %v2387
  %4148 = vmatprep.subr.bf16.mxu0 %v2384
  %4149 = vmatpush2.bf16.msra.mxu0 %v2383
  %4150 = vmatprep.mubr.bf16.mxu0 %v4029
  %4151 = vmatmul.mubr.bf16.gmra.mxu0 %v4028
  %v4152 = vpop.f32.mrf.mxu0
  %v4153 = vadd.f32 0.0, %v4152
  %v4154 = vpop.f32.mrf.mxu0
  %v4155 = vadd.f32 0.0, %v4154
  %v4156 = vpop.f32.mrf.mxu0
  %v4157 = vadd.f32 0.0, %v4156
  %v4158 = vpop.f32.mrf.mxu0
  %v4159 = vadd.f32 0.0, %v4158
  %4160 = vdwg.mxu0
  %4161 = vmatprep.subr.bf16.mxu0 %v2444
  %4162 = vmatpush1.bf16.msra.mxu0 %v2443
  %4163 = vmatprep.subr.bf16.mxu0 %v2440
  %4164 = vmatpush1.bf16.msra.mxu0 %v2439
  %4165 = vmatprep.subr.bf16.mxu0 %v2436
  %4166 = vmatpush1.bf16.msra.mxu0 %v2435
  %4167 = vmatprep.subr.bf16.mxu0 %v2432
  %4168 = vmatpush1.bf16.msra.mxu0 %v2431
  %4169 = vmatprep.subr.bf16.mxu0 %v2428
  %4170 = vmatpush1.bf16.msra.mxu0 %v2427
  %4171 = vmatprep.subr.bf16.mxu0 %v2424
  %4172 = vmatpush1.bf16.msra.mxu0 %v2423
  %4173 = vmatprep.subr.bf16.mxu0 %v2420
  %4174 = vmatpush1.bf16.msra.mxu0 %v2419
  %4175 = vmatprep.subr.bf16.mxu0 %v2416
  %4176 = vmatpush1.bf16.msra.mxu0 %v2415
  %4177 = vmatprep.subr.bf16.mxu0 %v2476
  %4178 = vmatpush2.bf16.msra.mxu0 %v2475
  %4179 = vmatprep.subr.bf16.mxu0 %v2472
  %4180 = vmatpush2.bf16.msra.mxu0 %v2471
  %4181 = vmatprep.subr.bf16.mxu0 %v2468
  %4182 = vmatpush2.bf16.msra.mxu0 %v2467
  %4183 = vmatprep.subr.bf16.mxu0 %v2464
  %4184 = vmatpush2.bf16.msra.mxu0 %v2463
  %4185 = vmatprep.subr.bf16.mxu0 %v2460
  %4186 = vmatpush2.bf16.msra.mxu0 %v2459
  %4187 = vmatprep.subr.bf16.mxu0 %v2456
  %4188 = vmatpush2.bf16.msra.mxu0 %v2455
  %4189 = vmatprep.subr.bf16.mxu0 %v2452
  %4190 = vmatpush2.bf16.msra.mxu0 %v2451
  %4191 = vmatprep.subr.bf16.mxu0 %v2448
  %4192 = vmatpush2.bf16.msra.mxu0 %v2447
  %4193 = vmatprep.mubr.bf16.mxu0 %v4031
  %4194 = vmatmul.mubr.bf16.gmra.mxu0 %v4030
  %v4195 = vpop.f32.mrf.mxu0
  %v4196 = vadd.f32 %v4153, %v4195
  %v4197 = vpop.f32.mrf.mxu0
  %v4198 = vadd.f32 %v4155, %v4197
  %v4199 = vpop.f32.mrf.mxu0
  %v4200 = vadd.f32 %v4157, %v4199
  %v4201 = vpop.f32.mrf.mxu0
  %v4202 = vadd.f32 %v4159, %v4201
  %4203 = vdwg.mxu0
  %v4204 = vadd.f32 %v355, %v4110
  %v4205 = vadd.f32 %v357, %v4112
  %v4206 = vadd.f32 %v438, %v4196
  %v4207 = vadd.f32 %v440, %v4198
  %v4208 = vadd.f32 %v359, %v4114
  %v4209 = vadd.f32 %v361, %v4116
  %v4210 = vadd.f32 %v442, %v4200
  %v4211 = vadd.f32 %v444, %v4202
  %v4212 = vadd.f32 %v4204, %v4205
  %v4213 = vadd.f32 %v4212, %v4206
  %v4214 = vadd.f32 %v4213, %v4207
  %4215 = vadd.xlane.f32.xlu0 %v4214
  %v4216 = vpop.xlane.xlu0 %4215
  %v4217 = vadd.f32 %v4208, %v4209
  %v4218 = vadd.f32 %v4217, %v4210
  %v4219 = vadd.f32 %v4218, %v4211
  %4220 = vadd.xlane.f32.xlu0 %v4219
  %v4221 = vpop.xlane.xlu0 %4220
  %v4222 = vmul.f32 %v4216, %v2795
  %v4223 = vmul.f32 %v4221, %v2795
  %v4224 = vsub.f32 %v4204, %v4222
  %v4225 = vsub.f32 %v4205, %v4222
  %v4226 = vsub.f32 %v4206, %v4222
  %v4227 = vsub.f32 %v4207, %v4222
  %v4228 = vsub.f32 %v4208, %v4223
  %v4229 = vsub.f32 %v4209, %v4223
  %v4230 = vsub.f32 %v4210, %v4223
  %v4231 = vsub.f32 %v4211, %v4223
  %v4232 = vmul.f32 %v4224, %v4224
  %v4233 = vmul.f32 %v4225, %v4225
  %v4234 = vmul.f32 %v4226, %v4226
  %v4235 = vmul.f32 %v4227, %v4227
  %v4236 = vmul.f32 %v4228, %v4228
  %v4237 = vmul.f32 %v4229, %v4229
  %v4238 = vmul.f32 %v4230, %v4230
  %v4239 = vmul.f32 %v4231, %v4231
  %v4240 = vadd.f32 %v4232, %v4233
  %v4241 = vadd.f32 %v4240, %v4234
  %v4242 = vadd.f32 %v4241, %v4235
  %4243 = vadd.xlane.f32.xlu0 %v4242
  %v4244 = vpop.xlane.xlu0 %4243
  %v4245 = vadd.f32 %v4236, %v4237
  %v4246 = vadd.f32 %v4245, %v4238
  %v4247 = vadd.f32 %v4246, %v4239
  %4248 = vadd.xlane.f32.xlu0 %v4247
  %v4249 = vpop.xlane.xlu0 %4248
  %v4250 = vmul.f32 %v4244, %v2795
  %v4251 = vmul.f32 %v4249, %v2795
  %v4252 = vadd.f32 %v4250, 1e-05
  %v4253 = vadd.f32 %v4251, 1e-05
  %v4254 = vrsqrt.pop %v4252
  %v4255 = vrsqrt.pop %v4253
  %v4256 = vmul.f32 %v4224, %v4254
  %v4257 = vmul.f32 %v4225, %v4254
  %v4258 = vmul.f32 %v4226, %v4254
  %v4259 = vmul.f32 %v4227, %v4254
  %v4260 = vmul.f32 %v4228, %v4255
  %v4261 = vmul.f32 %v4229, %v4255
  %v4262 = vmul.f32 %v4230, %v4255
  %v4263 = vmul.f32 %v4231, %v4255
  %v4264 = vadd.f32 %v3786, %v4256
  %v4265 = vadd.f32 %v3787, %v4257
  %v4266 = vadd.f32 %v3788, %v4258
  %v4267 = vadd.f32 %v3789, %v4259
  %v4268 = vadd.f32 %v3790, %v4260
  %v4269 = vadd.f32 %v3791, %v4261
  %v4270 = vadd.f32 %v3792, %v4262
  %v4271 = vadd.f32 %v3793, %v4263
  %v4272 = vmul.f32 %v1171, %v1297
  %v4273 = vmul.f32 %v1173, %v1299
  %v4274 = vmul.f32 %v1254, %v1380
  %v4275 = vmul.f32 %v1256, %v1382
  %v4276 = vmul.f32 %v1175, %v1301
  %v4277 = vmul.f32 %v1177, %v1303
  %v4278 = vmul.f32 %v1258, %v1384
  %v4279 = vmul.f32 %v1260, %v1386
  %v4280 = vadd.f32 %v4272, %v4273
  %v4281 = vadd.f32 %v4280, %v4274
  %v4282 = vadd.f32 %v4281, %v4275
  %4283 = vadd.xlane.f32.xlu0 %v4282
  %v4284 = vpop.xlane.xlu0 %4283
  %v4285 = vadd.f32 %v4276, %v4277
  %v4286 = vadd.f32 %v4285, %v4278
  %v4287 = vadd.f32 %v4286, %v4279
  %4288 = vadd.xlane.f32.xlu0 %v4287
  %v4289 = vpop.xlane.xlu0 %4288
  %v4290 = vmul.f32 %v1171, %v1307
  %v4291 = vmul.f32 %v1173, %v1309
  %v4292 = vmul.f32 %v1254, %v1390
  %v4293 = vmul.f32 %v1256, %v1392
  %v4294 = vmul.f32 %v1175, %v1311
  %v4295 = vmul.f32 %v1177, %v1313
  %v4296 = vmul.f32 %v1258, %v1394
  %v4297 = vmul.f32 %v1260, %v1396
  %v4298 = vadd.f32 %v4290, %v4291
  %v4299 = vadd.f32 %v4298, %v4292
  %v4300 = vadd.f32 %v4299, %v4293
  %4301 = vadd.xlane.f32.xlu0 %v4300
  %v4302 = vpop.xlane.xlu0 %4301
  %v4303 = vadd.f32 %v4294, %v4295
  %v4304 = vadd.f32 %v4303, %v4296
  %v4305 = vadd.f32 %v4304, %v4297
  %4306 = vadd.xlane.f32.xlu0 %v4305
  %v4307 = vpop.xlane.xlu0 %4306
  %v4308 = vmul.f32 %v1171, %v1317
  %v4309 = vmul.f32 %v1173, %v1319
  %v4310 = vmul.f32 %v1254, %v1400
  %v4311 = vmul.f32 %v1256, %v1402
  %v4312 = vmul.f32 %v1175, %v1321
  %v4313 = vmul.f32 %v1177, %v1323
  %v4314 = vmul.f32 %v1258, %v1404
  %v4315 = vmul.f32 %v1260, %v1406
  %v4316 = vadd.f32 %v4308, %v4309
  %v4317 = vadd.f32 %v4316, %v4310
  %v4318 = vadd.f32 %v4317, %v4311
  %4319 = vadd.xlane.f32.xlu0 %v4318
  %v4320 = vpop.xlane.xlu0 %4319
  %v4321 = vadd.f32 %v4312, %v4313
  %v4322 = vadd.f32 %v4321, %v4314
  %v4323 = vadd.f32 %v4322, %v4315
  %4324 = vadd.xlane.f32.xlu0 %v4323
  %v4325 = vpop.xlane.xlu0 %4324
  %v4326 = vmul.f32 %v1171, %v1327
  %v4327 = vmul.f32 %v1173, %v1329
  %v4328 = vmul.f32 %v1254, %v1410
  %v4329 = vmul.f32 %v1256, %v1412
  %v4330 = vmul.f32 %v1175, %v1331
  %v4331 = vmul.f32 %v1177, %v1333
  %v4332 = vmul.f32 %v1258, %v1414
  %v4333 = vmul.f32 %v1260, %v1416
  %v4334 = vadd.f32 %v4326, %v4327
  %v4335 = vadd.f32 %v4334, %v4328
  %v4336 = vadd.f32 %v4335, %v4329
  %4337 = vadd.xlane.f32.xlu0 %v4336
  %v4338 = vpop.xlane.xlu0 %4337
  %v4339 = vadd.f32 %v4330, %v4331
  %v4340 = vadd.f32 %v4339, %v4332
  %v4341 = vadd.f32 %v4340, %v4333
  %4342 = vadd.xlane.f32.xlu0 %v4341
  %v4343 = vpop.xlane.xlu0 %4342
  %v4344 = vmul.f32 %v1171, %v1337
  %v4345 = vmul.f32 %v1173, %v1339
  %v4346 = vmul.f32 %v1254, %v1420
  %v4347 = vmul.f32 %v1256, %v1422
  %v4348 = vmul.f32 %v1175, %v1341
  %v4349 = vmul.f32 %v1177, %v1343
  %v4350 = vmul.f32 %v1258, %v1424
  %v4351 = vmul.f32 %v1260, %v1426
  %v4352 = vadd.f32 %v4344, %v4345
  %v4353 = vadd.f32 %v4352, %v4346
  %v4354 = vadd.f32 %v4353, %v4347
  %4355 = vadd.xlane.f32.xlu0 %v4354
  %v4356 = vpop.xlane.xlu0 %4355
  %v4357 = vadd.f32 %v4348, %v4349
  %v4358 = vadd.f32 %v4357, %v4350
  %v4359 = vadd.f32 %v4358, %v4351
  %4360 = vadd.xlane.f32.xlu0 %v4359
  %v4361 = vpop.xlane.xlu0 %4360
  %v4362 = vsel %vm1684, %v4284, %v4302
  %v4363 = vsel %vm1684, %v4289, %v4307
  %v4364 = vsel %vm1687, %v4362, %v4320
  %v4365 = vsel %vm1687, %v4363, %v4325
  %v4366 = vsel %vm1690, %v4364, %v4338
  %v4367 = vsel %vm1690, %v4365, %v4343
  %v4368 = vsel %vm1693, %v4366, %v4356
  %v4369 = vsel %vm1693, %v4367, %v4361
  %v4370 = vsel %vm1696, %v4368, -inf
  %4371 = vmax.xlane.f32.xlu0 %v4370
  %v4372 = vpop.xlane.xlu0 %4371
  %v4373 = vsel %vm1696, %v4369, -inf
  %4374 = vmax.xlane.f32.xlu0 %v4373
  %v4375 = vpop.xlane.xlu0 %4374
  %v4376 = vsub.f32 %v4368, %v4372
  %v4377 = vsub.f32 %v4369, %v4375
  %v4378 = vmul.f32 %v4376, 1.442695
  %v4379 = vpow.pop %v4378
  %v4380 = vmul.f32 %v4377, 1.442695
  %v4381 = vpow.pop %v4380
  %v4382 = vsel %vm1696, %v4379, 0.0
  %4383 = vadd.xlane.f32.xlu0 %v4382
  %v4384 = vpop.xlane.xlu0 %4383
  %v4385 = vsel %vm1696, %v4381, 0.0
  %4386 = vadd.xlane.f32.xlu0 %v4385
  %v4387 = vpop.xlane.xlu0 %4386
  %v4388 = vrcp.pop %v4384
  %v4389 = vrcp.pop %v4387
  %v4390 = vmul.f32 %v4379, %v4388
  %v4391 = vmul.f32 %v4381, %v4389
  %4393 = vset.pattern.permute.xlu0 0
  %4394 = vperm.xlu0 %4393, %v4390
  %v4395 = vpop.permute.xlu0 %4394
  %4398 = vset.pattern.permute.xlu0 0
  %4399 = vperm.xlu0 %4398, %v4391
  %v4400 = vpop.permute.xlu0 %4399
  %v4402 = vmul.f32 %v4395, %v1463
  %v4403 = vmul.f32 %v4395, %v1465
  %v4404 = vmul.f32 %v4395, %v1546
  %v4405 = vmul.f32 %v4395, %v1548
  %v4406 = vmul.f32 %v4400, %v1467
  %v4407 = vmul.f32 %v4400, %v1469
  %v4408 = vmul.f32 %v4400, %v1550
  %v4409 = vmul.f32 %v4400, %v1552
  %4410 = vset.pattern.permute.xlu0 1
  %4411 = vperm.xlu0 %4410, %v4390
  %v4412 = vpop.permute.xlu0 %4411
  %4414 = vset.pattern.permute.xlu0 1
  %4415 = vperm.xlu0 %4414, %v4391
  %v4416 = vpop.permute.xlu0 %4415
  %v4418 = vmul.f32 %v4412, %v1473
  %v4419 = vmul.f32 %v4412, %v1475
  %v4420 = vmul.f32 %v4412, %v1556
  %v4421 = vmul.f32 %v4412, %v1558
  %v4422 = vmul.f32 %v4416, %v1477
  %v4423 = vmul.f32 %v4416, %v1479
  %v4424 = vmul.f32 %v4416, %v1560
  %v4425 = vmul.f32 %v4416, %v1562
  %v4426 = vadd.f32 %v4402, %v4418
  %v4427 = vadd.f32 %v4403, %v4419
  %v4428 = vadd.f32 %v4404, %v4420
  %v4429 = vadd.f32 %v4405, %v4421
  %v4430 = vadd.f32 %v4406, %v4422
  %v4431 = vadd.f32 %v4407, %v4423
  %v4432 = vadd.f32 %v4408, %v4424
  %v4433 = vadd.f32 %v4409, %v4425
  %4434 = vset.pattern.permute.xlu0 2
  %4435 = vperm.xlu0 %4434, %v4390
  %v4436 = vpop.permute.xlu0 %4435
  %4438 = vset.pattern.permute.xlu0 2
  %4439 = vperm.xlu0 %4438, %v4391
  %v4440 = vpop.permute.xlu0 %4439
  %v4442 = vmul.f32 %v4436, %v1483
  %v4443 = vmul.f32 %v4436, %v1485
  %v4444 = vmul.f32 %v4436, %v1566
  %v4445 = vmul.f32 %v4436, %v1568
  %v4446 = vmul.f32 %v4440, %v1487
  %v4447 = vmul.f32 %v4440, %v1489
  %v4448 = vmul.f32 %v4440, %v1570
  %v4449 = vmul.f32 %v4440, %v1572
  %v4450 = vadd.f32 %v4426, %v4442
  %v4451 = vadd.f32 %v4427, %v4443
  %v4452 = vadd.f32 %v4428, %v4444
  %v4453 = vadd.f32 %v4429, %v4445
  %v4454 = vadd.f32 %v4430, %v4446
  %v4455 = vadd.f32 %v4431, %v4447
  %v4456 = vadd.f32 %v4432, %v4448
  %v4457 = vadd.f32 %v4433, %v4449
  %4458 = vset.pattern.permute.xlu0 3
  %4459 = vperm.xlu0 %4458, %v4390
  %v4460 = vpop.permute.xlu0 %4459
  %4462 = vset.pattern.permute.xlu0 3
  %4463 = vperm.xlu0 %4462, %v4391
  %v4464 = vpop.permute.xlu0 %4463
  %v4466 = vmul.f32 %v4460, %v1493
  %v4467 = vmul.f32 %v4460, %v1495
  %v4468 = vmul.f32 %v4460, %v1576
  %v4469 = vmul.f32 %v4460, %v1578
  %v4470 = vmul.f32 %v4464, %v1497
  %v4471 = vmul.f32 %v4464, %v1499
  %v4472 = vmul.f32 %v4464, %v1580
  %v4473 = vmul.f32 %v4464, %v1582
  %v4474 = vadd.f32 %v4450, %v4466
  %v4475 = vadd.f32 %v4451, %v4467
  %v4476 = vadd.f32 %v4452, %v4468
  %v4477 = vadd.f32 %v4453, %v4469
  %v4478 = vadd.f32 %v4454, %v4470
  %v4479 = vadd.f32 %v4455, %v4471
  %v4480 = vadd.f32 %v4456, %v4472
  %v4481 = vadd.f32 %v4457, %v4473
  %4482 = vset.pattern.permute.xlu0 4
  %4483 = vperm.xlu0 %4482, %v4390
  %v4484 = vpop.permute.xlu0 %4483
  %4486 = vset.pattern.permute.xlu0 4
  %4487 = vperm.xlu0 %4486, %v4391
  %v4488 = vpop.permute.xlu0 %4487
  %v4490 = vmul.f32 %v4484, %v1503
  %v4491 = vmul.f32 %v4484, %v1505
  %v4492 = vmul.f32 %v4484, %v1586
  %v4493 = vmul.f32 %v4484, %v1588
  %v4494 = vmul.f32 %v4488, %v1507
  %v4495 = vmul.f32 %v4488, %v1509
  %v4496 = vmul.f32 %v4488, %v1590
  %v4497 = vmul.f32 %v4488, %v1592
  %v4498 = vadd.f32 %v4474, %v4490
  %v4499 = vadd.f32 %v4475, %v4491
  %v4500 = vadd.f32 %v4476, %v4492
  %v4501 = vadd.f32 %v4477, %v4493
  %v4502 = vadd.f32 %v4478, %v4494
  %v4503 = vadd.f32 %v4479, %v4495
  %v4504 = vadd.f32 %v4480, %v4496
  %v4505 = vadd.f32 %v4481, %v4497
  %v4506 = vpack.c.bf16 %v4502, %v4498
  %v4507 = vpack.c.bf16 %v4503, %v4499
  %v4508 = vpack.c.bf16 %v4504, %v4500
  %v4509 = vpack.c.bf16 %v4505, %v4501
  %4510 = vmatprep.subr.bf16.mxu0 %v2378
  %4511 = vmatpush1.bf16.msra.mxu0 %v2377
  %4512 = vmatprep.subr.bf16.mxu0 %v2374
  %4513 = vmatpush1.bf16.msra.mxu0 %v2373
  %4514 = vmatprep.subr.bf16.mxu0 %v2370
  %4515 = vmatpush1.bf16.msra.mxu0 %v2369
  %4516 = vmatprep.subr.bf16.mxu0 %v2366
  %4517 = vmatpush1.bf16.msra.mxu0 %v2365
  %4518 = vmatprep.subr.bf16.mxu0 %v2362
  %4519 = vmatpush1.bf16.msra.mxu0 %v2361
  %4520 = vmatprep.subr.bf16.mxu0 %v2358
  %4521 = vmatpush1.bf16.msra.mxu0 %v2357
  %4522 = vmatprep.subr.bf16.mxu0 %v2354
  %4523 = vmatpush1.bf16.msra.mxu0 %v2353
  %4524 = vmatprep.subr.bf16.mxu0 %v2350
  %4525 = vmatpush1.bf16.msra.mxu0 %v2349
  %4526 = vmatprep.subr.bf16.mxu0 %v2410
  %4527 = vmatpush2.bf16.msra.mxu0 %v2409
  %4528 = vmatprep.subr.bf16.mxu0 %v2406
  %4529 = vmatpush2.bf16.msra.mxu0 %v2405
  %4530 = vmatprep.subr.bf16.mxu0 %v2402
  %4531 = vmatpush2.bf16.msra.mxu0 %v2401
  %4532 = vmatprep.subr.bf16.mxu0 %v2398
  %4533 = vmatpush2.bf16.msra.mxu0 %v2397
  %4534 = vmatprep.subr.bf16.mxu0 %v2394
  %4535 = vmatpush2.bf16.msra.mxu0 %v2393
  %4536 = vmatprep.subr.bf16.mxu0 %v2390
  %4537 = vmatpush2.bf16.msra.mxu0 %v2389
  %4538 = vmatprep.subr.bf16.mxu0 %v2386
  %4539 = vmatpush2.bf16.msra.mxu0 %v2385
  %4540 = vmatprep.subr.bf16.mxu0 %v2382
  %4541 = vmatpush2.bf16.msra.mxu0 %v2381
  %4542 = vmatprep.mubr.bf16.mxu0 %v4507
  %4543 = vmatmul.mubr.bf16.gmra.mxu0 %v4506
  %v4544 = vpop.f32.mrf.mxu0
  %v4545 = vadd.f32 0.0, %v4544
  %v4546 = vpop.f32.mrf.mxu0
  %v4547 = vadd.f32 0.0, %v4546
  %v4548 = vpop.f32.mrf.mxu0
  %v4549 = vadd.f32 0.0, %v4548
  %v4550 = vpop.f32.mrf.mxu0
  %v4551 = vadd.f32 0.0, %v4550
  %4552 = vdwg.mxu0
  %4553 = vmatprep.subr.bf16.mxu0 %v2442
  %4554 = vmatpush1.bf16.msra.mxu0 %v2441
  %4555 = vmatprep.subr.bf16.mxu0 %v2438
  %4556 = vmatpush1.bf16.msra.mxu0 %v2437
  %4557 = vmatprep.subr.bf16.mxu0 %v2434
  %4558 = vmatpush1.bf16.msra.mxu0 %v2433
  %4559 = vmatprep.subr.bf16.mxu0 %v2430
  %4560 = vmatpush1.bf16.msra.mxu0 %v2429
  %4561 = vmatprep.subr.bf16.mxu0 %v2426
  %4562 = vmatpush1.bf16.msra.mxu0 %v2425
  %4563 = vmatprep.subr.bf16.mxu0 %v2422
  %4564 = vmatpush1.bf16.msra.mxu0 %v2421
  %4565 = vmatprep.subr.bf16.mxu0 %v2418
  %4566 = vmatpush1.bf16.msra.mxu0 %v2417
  %4567 = vmatprep.subr.bf16.mxu0 %v2414
  %4568 = vmatpush1.bf16.msra.mxu0 %v2413
  %4569 = vmatprep.subr.bf16.mxu0 %v2474
  %4570 = vmatpush2.bf16.msra.mxu0 %v2473
  %4571 = vmatprep.subr.bf16.mxu0 %v2470
  %4572 = vmatpush2.bf16.msra.mxu0 %v2469
  %4573 = vmatprep.subr.bf16.mxu0 %v2466
  %4574 = vmatpush2.bf16.msra.mxu0 %v2465
  %4575 = vmatprep.subr.bf16.mxu0 %v2462
  %4576 = vmatpush2.bf16.msra.mxu0 %v2461
  %4577 = vmatprep.subr.bf16.mxu0 %v2458
  %4578 = vmatpush2.bf16.msra.mxu0 %v2457
  %4579 = vmatprep.subr.bf16.mxu0 %v2454
  %4580 = vmatpush2.bf16.msra.mxu0 %v2453
  %4581 = vmatprep.subr.bf16.mxu0 %v2450
  %4582 = vmatpush2.bf16.msra.mxu0 %v2449
  %4583 = vmatprep.subr.bf16.mxu0 %v2446
  %4584 = vmatpush2.bf16.msra.mxu0 %v2445
  %4585 = vmatprep.mubr.bf16.mxu0 %v4509
  %4586 = vmatmul.mubr.bf16.gmra.mxu0 %v4508
  %v4587 = vpop.f32.mrf.mxu0
  %v4588 = vadd.f32 %v4545, %v4587
  %v4589 = vpop.f32.mrf.mxu0
  %v4590 = vadd.f32 %v4547, %v4589
  %v4591 = vpop.f32.mrf.mxu0
  %v4592 = vadd.f32 %v4549, %v4591
  %v4593 = vpop.f32.mrf.mxu0
  %v4594 = vadd.f32 %v4551, %v4593
  %4595 = vdwg.mxu0
  %4596 = vmatprep.subr.bf16.mxu0 %v2380
  %4597 = vmatpush1.bf16.msra.mxu0 %v2379
  %4598 = vmatprep.subr.bf16.mxu0 %v2376
  %4599 = vmatpush1.bf16.msra.mxu0 %v2375
  %4600 = vmatprep.subr.bf16.mxu0 %v2372
  %4601 = vmatpush1.bf16.msra.mxu0 %v2371
  %4602 = vmatprep.subr.bf16.mxu0 %v2368
  %4603 = vmatpush1.bf16.msra.mxu0 %v2367
  %4604 = vmatprep.subr.bf16.mxu0 %v2364
  %4605 = vmatpush1.bf16.msra.mxu0 %v2363
  %4606 = vmatprep.subr.bf16.mxu0 %v2360
  %4607 = vmatpush1.bf16.msra.mxu0 %v2359
  %4608 = vmatprep.subr.bf16.mxu0 %v2356
  %4609 = vmatpush1.bf16.msra.mxu0 %v2355
  %4610 = vmatprep.subr.bf16.mxu0 %v2352
  %4611 = vmatpush1.bf16.msra.mxu0 %v2351
  %4612 = vmatprep.subr.bf16.mxu0 %v2412
  %4613 = vmatpush2.bf16.msra.mxu0 %v2411
  %4614 = vmatprep.subr.bf16.mxu0 %v2408
  %4615 = vmatpush2.bf16.msra.mxu0 %v2407
  %4616 = vmatprep.subr.bf16.mxu0 %v2404
  %4617 = vmatpush2.bf16.msra.mxu0 %v2403
  %4618 = vmatprep.subr.bf16.mxu0 %v2400
  %4619 = vmatpush2.bf16.msra.mxu0 %v2399
  %4620 = vmatprep.subr.bf16.mxu0 %v2396
  %4621 = vmatpush2.bf16.msra.mxu0 %v2395
  %4622 = vmatprep.subr.bf16.mxu0 %v2392
  %4623 = vmatpush2.bf16.msra.mxu0 %v2391
  %4624 = vmatprep.subr.bf16.mxu0 %v2388
  %4625 = vmatpush2.bf16.msra.mxu0 %v2387
  %4626 = vmatprep.subr.bf16.mxu0 %v2384
  %4627 = vmatpush2.bf16.msra.mxu0 %v2383
  %4628 = vmatprep.mubr.bf16.mxu0 %v4507
  %4629 = vmatmul.mubr.bf16.gmra.mxu0 %v4506
  %v4630 = vpop.f32.mrf.mxu0
  %v4631 = vadd.f32 0.0, %v4630
  %v4632 = vpop.f32.mrf.mxu0
  %v4633 = vadd.f32 0.0, %v4632
  %v4634 = vpop.f32.mrf.mxu0
  %v4635 = vadd.f32 0.0, %v4634
  %v4636 = vpop.f32.mrf.mxu0
  %v4637 = vadd.f32 0.0, %v4636
  %4638 = vdwg.mxu0
  %4639 = vmatprep.subr.bf16.mxu0 %v2444
  %4640 = vmatpush1.bf16.msra.mxu0 %v2443
  %4641 = vmatprep.subr.bf16.mxu0 %v2440
  %4642 = vmatpush1.bf16.msra.mxu0 %v2439
  %4643 = vmatprep.subr.bf16.mxu0 %v2436
  %4644 = vmatpush1.bf16.msra.mxu0 %v2435
  %4645 = vmatprep.subr.bf16.mxu0 %v2432
  %4646 = vmatpush1.bf16.msra.mxu0 %v2431
  %4647 = vmatprep.subr.bf16.mxu0 %v2428
  %4648 = vmatpush1.bf16.msra.mxu0 %v2427
  %4649 = vmatprep.subr.bf16.mxu0 %v2424
  %4650 = vmatpush1.bf16.msra.mxu0 %v2423
  %4651 = vmatprep.subr.bf16.mxu0 %v2420
  %4652 = vmatpush1.bf16.msra.mxu0 %v2419
  %4653 = vmatprep.subr.bf16.mxu0 %v2416
  %4654 = vmatpush1.bf16.msra.mxu0 %v2415
  %4655 = vmatprep.subr.bf16.mxu0 %v2476
  %4656 = vmatpush2.bf16.msra.mxu0 %v2475
  %4657 = vmatprep.subr.bf16.mxu0 %v2472
  %4658 = vmatpush2.bf16.msra.mxu0 %v2471
  %4659 = vmatprep.subr.bf16.mxu0 %v2468
  %4660 = vmatpush2.bf16.msra.mxu0 %v2467
  %4661 = vmatprep.subr.bf16.mxu0 %v2464
  %4662 = vmatpush2.bf16.msra.mxu0 %v2463
  %4663 = vmatprep.subr.bf16.mxu0 %v2460
  %4664 = vmatpush2.bf16.msra.mxu0 %v2459
  %4665 = vmatprep.subr.bf16.mxu0 %v2456
  %4666 = vmatpush2.bf16.msra.mxu0 %v2455
  %4667 = vmatprep.subr.bf16.mxu0 %v2452
  %4668 = vmatpush2.bf16.msra.mxu0 %v2451
  %4669 = vmatprep.subr.bf16.mxu0 %v2448
  %4670 = vmatpush2.bf16.msra.mxu0 %v2447
  %4671 = vmatprep.mubr.bf16.mxu0 %v4509
  %4672 = vmatmul.mubr.bf16.gmra.mxu0 %v4508
  %v4673 = vpop.f32.mrf.mxu0
  %v4674 = vadd.f32 %v4631, %v4673
  %v4675 = vpop.f32.mrf.mxu0
  %v4676 = vadd.f32 %v4633, %v4675
  %v4677 = vpop.f32.mrf.mxu0
  %v4678 = vadd.f32 %v4635, %v4677
  %v4679 = vpop.f32.mrf.mxu0
  %v4680 = vadd.f32 %v4637, %v4679
  %4681 = vdwg.mxu0
  %v4682 = vadd.f32 %v365, %v4588
  %v4683 = vadd.f32 %v367, %v4590
  %v4684 = vadd.f32 %v448, %v4674
  %v4685 = vadd.f32 %v450, %v4676
  %v4686 = vadd.f32 %v369, %v4592
  %v4687 = vadd.f32 %v371, %v4594
  %v4688 = vadd.f32 %v452, %v4678
  %v4689 = vadd.f32 %v454, %v4680
  %v4690 = vadd.f32 %v4682, %v4683
  %v4691 = vadd.f32 %v4690, %v4684
  %v4692 = vadd.f32 %v4691, %v4685
  %4693 = vadd.xlane.f32.xlu0 %v4692
  %v4694 = vpop.xlane.xlu0 %4693
  %v4695 = vadd.f32 %v4686, %v4687
  %v4696 = vadd.f32 %v4695, %v4688
  %v4697 = vadd.f32 %v4696, %v4689
  %4698 = vadd.xlane.f32.xlu0 %v4697
  %v4699 = vpop.xlane.xlu0 %4698
  %v4700 = vmul.f32 %v4694, %v2795
  %v4701 = vmul.f32 %v4699, %v2795
  %v4702 = vsub.f32 %v4682, %v4700
  %v4703 = vsub.f32 %v4683, %v4700
  %v4704 = vsub.f32 %v4684, %v4700
  %v4705 = vsub.f32 %v4685, %v4700
  %v4706 = vsub.f32 %v4686, %v4701
  %v4707 = vsub.f32 %v4687, %v4701
  %v4708 = vsub.f32 %v4688, %v4701
  %v4709 = vsub.f32 %v4689, %v4701
  %v4710 = vmul.f32 %v4702, %v4702
  %v4711 = vmul.f32 %v4703, %v4703
  %v4712 = vmul.f32 %v4704, %v4704
  %v4713 = vmul.f32 %v4705, %v4705
  %v4714 = vmul.f32 %v4706, %v4706
  %v4715 = vmul.f32 %v4707, %v4707
  %v4716 = vmul.f32 %v4708, %v4708
  %v4717 = vmul.f32 %v4709, %v4709
  %v4718 = vadd.f32 %v4710, %v4711
  %v4719 = vadd.f32 %v4718, %v4712
  %v4720 = vadd.f32 %v4719, %v4713
  %4721 = vadd.xlane.f32.xlu0 %v4720
  %v4722 = vpop.xlane.xlu0 %4721
  %v4723 = vadd.f32 %v4714, %v4715
  %v4724 = vadd.f32 %v4723, %v4716
  %v4725 = vadd.f32 %v4724, %v4717
  %4726 = vadd.xlane.f32.xlu0 %v4725
  %v4727 = vpop.xlane.xlu0 %4726
  %v4728 = vmul.f32 %v4722, %v2795
  %v4729 = vmul.f32 %v4727, %v2795
  %v4730 = vadd.f32 %v4728, 1e-05
  %v4731 = vadd.f32 %v4729, 1e-05
  %v4732 = vrsqrt.pop %v4730
  %v4733 = vrsqrt.pop %v4731
  %v4734 = vmul.f32 %v4702, %v4732
  %v4735 = vmul.f32 %v4703, %v4732
  %v4736 = vmul.f32 %v4704, %v4732
  %v4737 = vmul.f32 %v4705, %v4732
  %v4738 = vmul.f32 %v4706, %v4733
  %v4739 = vmul.f32 %v4707, %v4733
  %v4740 = vmul.f32 %v4708, %v4733
  %v4741 = vmul.f32 %v4709, %v4733
  %v4742 = vadd.f32 %v4264, %v4734
  %v4743 = vadd.f32 %v4265, %v4735
  %v4744 = vadd.f32 %v4266, %v4736
  %v4745 = vadd.f32 %v4267, %v4737
  %v4746 = vadd.f32 %v4268, %v4738
  %v4747 = vadd.f32 %v4269, %v4739
  %v4748 = vadd.f32 %v4270, %v4740
  %v4749 = vadd.f32 %v4271, %v4741
  %v4750 = vpack.c.bf16 %v4746, %v4742
  %v4751 = vpack.c.bf16 %v4747, %v4743
  %v4752 = vpack.c.bf16 %v4748, %v4744
  %v4753 = vpack.c.bf16 %v4749, %v4745
  %v4754 = vld [vmem:[%s6] sm:$0xff]
  %v4755 = vld [vmem:[%s6 + $0x8] sm:$0xff]
  %v4756 = vld [vmem:[%s6 + $0x10] sm:$0xff]
  %v4757 = vld [vmem:[%s6 + $0x18] sm:$0xff]
  %v4758 = vld [vmem:[%s6 + $0x20] sm:$0xff]
  %v4759 = vld [vmem:[%s6 + $0x28] sm:$0xff]
  %v4760 = vld [vmem:[%s6 + $0x30] sm:$0xff]
  %v4761 = vld [vmem:[%s6 + $0x38] sm:$0xff]
  %v4762 = vld [vmem:[%s6 + $0x40] sm:$0xff]
  %v4763 = vld [vmem:[%s6 + $0x48] sm:$0xff]
  %v4764 = vld [vmem:[%s6 + $0x50] sm:$0xff]
  %v4765 = vld [vmem:[%s6 + $0x58] sm:$0xff]
  %v4766 = vld [vmem:[%s6 + $0x60] sm:$0xff]
  %v4767 = vld [vmem:[%s6 + $0x68] sm:$0xff]
  %v4768 = vld [vmem:[%s6 + $0x70] sm:$0xff]
  %v4769 = vld [vmem:[%s6 + $0x78] sm:$0xff]
  %v4770 = vld [vmem:[%s6 + $0x80] sm:$0xff]
  %v4771 = vld [vmem:[%s6 + $0x88] sm:$0xff]
  %v4772 = vld [vmem:[%s6 + $0x90] sm:$0xff]
  %v4773 = vld [vmem:[%s6 + $0x98] sm:$0xff]
  %v4774 = vld [vmem:[%s6 + $0xa0] sm:$0xff]
  %v4775 = vld [vmem:[%s6 + $0xa8] sm:$0xff]
  %v4776 = vld [vmem:[%s6 + $0xb0] sm:$0xff]
  %v4777 = vld [vmem:[%s6 + $0xb8] sm:$0xff]
  %v4778 = vld [vmem:[%s6 + $0xc0] sm:$0xff]
  %v4779 = vld [vmem:[%s6 + $0xc8] sm:$0xff]
  %v4780 = vld [vmem:[%s6 + $0xd0] sm:$0xff]
  %v4781 = vld [vmem:[%s6 + $0xd8] sm:$0xff]
  %v4782 = vld [vmem:[%s6 + $0xe0] sm:$0xff]
  %v4783 = vld [vmem:[%s6 + $0xe8] sm:$0xff]
  %v4784 = vld [vmem:[%s6 + $0xf0] sm:$0xff]
  %v4785 = vld [vmem:[%s6 + $0xf8] sm:$0xff]
  %v4786 = vld [vmem:[%s6 + $0x100] sm:$0xff]
  %v4787 = vld [vmem:[%s6 + $0x108] sm:$0xff]
  %v4788 = vld [vmem:[%s6 + $0x110] sm:$0xff]
  %v4789 = vld [vmem:[%s6 + $0x118] sm:$0xff]
  %v4790 = vld [vmem:[%s6 + $0x120] sm:$0xff]
  %v4791 = vld [vmem:[%s6 + $0x128] sm:$0xff]
  %v4792 = vld [vmem:[%s6 + $0x130] sm:$0xff]
  %v4793 = vld [vmem:[%s6 + $0x138] sm:$0xff]
  %v4794 = vld [vmem:[%s6 + $0x140] sm:$0xff]
  %v4795 = vld [vmem:[%s6 + $0x148] sm:$0xff]
  %v4796 = vld [vmem:[%s6 + $0x150] sm:$0xff]
  %v4797 = vld [vmem:[%s6 + $0x158] sm:$0xff]
  %v4798 = vld [vmem:[%s6 + $0x160] sm:$0xff]
  %v4799 = vld [vmem:[%s6 + $0x168] sm:$0xff]
  %v4800 = vld [vmem:[%s6 + $0x170] sm:$0xff]
  %v4801 = vld [vmem:[%s6 + $0x178] sm:$0xff]
  %v4802 = vld [vmem:[%s6 + $0x180] sm:$0xff]
  %v4803 = vld [vmem:[%s6 + $0x188] sm:$0xff]
  %v4804 = vld [vmem:[%s6 + $0x190] sm:$0xff]
  %v4805 = vld [vmem:[%s6 + $0x198] sm:$0xff]
  %v4806 = vld [vmem:[%s6 + $0x1a0] sm:$0xff]
  %v4807 = vld [vmem:[%s6 + $0x1a8] sm:$0xff]
  %v4808 = vld [vmem:[%s6 + $0x1b0] sm:$0xff]
  %v4809 = vld [vmem:[%s6 + $0x1b8] sm:$0xff]
  %v4810 = vld [vmem:[%s6 + $0x1c0] sm:$0xff]
  %v4811 = vld [vmem:[%s6 + $0x1c8] sm:$0xff]
  %v4812 = vld [vmem:[%s6 + $0x1d0] sm:$0xff]
  %v4813 = vld [vmem:[%s6 + $0x1d8] sm:$0xff]
  %v4814 = vld [vmem:[%s6 + $0x1e0] sm:$0xff]
  %v4815 = vld [vmem:[%s6 + $0x1e8] sm:$0xff]
  %v4816 = vld [vmem:[%s6 + $0x1f0] sm:$0xff]
  %v4817 = vld [vmem:[%s6 + $0x1f8] sm:$0xff]
  %v4818 = vld [vmem:[%s6 + $0x200] sm:$0xff]
  %v4819 = vld [vmem:[%s6 + $0x208] sm:$0xff]
  %v4820 = vld [vmem:[%s6 + $0x210] sm:$0xff]
  %v4821 = vld [vmem:[%s6 + $0x218] sm:$0xff]
  %v4822 = vld [vmem:[%s6 + $0x220] sm:$0xff]
  %v4823 = vld [vmem:[%s6 + $0x228] sm:$0xff]
  %v4824 = vld [vmem:[%s6 + $0x230] sm:$0xff]
  %v4825 = vld [vmem:[%s6 + $0x238] sm:$0xff]
  %v4826 = vld [vmem:[%s6 + $0x240] sm:$0xff]
  %v4827 = vld [vmem:[%s6 + $0x248] sm:$0xff]
  %v4828 = vld [vmem:[%s6 + $0x250] sm:$0xff]
  %v4829 = vld [vmem:[%s6 + $0x258] sm:$0xff]
  %v4830 = vld [vmem:[%s6 + $0x260] sm:$0xff]
  %v4831 = vld [vmem:[%s6 + $0x268] sm:$0xff]
  %v4832 = vld [vmem:[%s6 + $0x270] sm:$0xff]
  %v4833 = vld [vmem:[%s6 + $0x278] sm:$0xff]
  %v4834 = vld [vmem:[%s6 + $0x280] sm:$0xff]
  %v4835 = vld [vmem:[%s6 + $0x288] sm:$0xff]
  %v4836 = vld [vmem:[%s6 + $0x290] sm:$0xff]
  %v4837 = vld [vmem:[%s6 + $0x298] sm:$0xff]
  %v4838 = vld [vmem:[%s6 + $0x2a0] sm:$0xff]
  %v4839 = vld [vmem:[%s6 + $0x2a8] sm:$0xff]
  %v4840 = vld [vmem:[%s6 + $0x2b0] sm:$0xff]
  %v4841 = vld [vmem:[%s6 + $0x2b8] sm:$0xff]
  %v4842 = vld [vmem:[%s6 + $0x2c0] sm:$0xff]
  %v4843 = vld [vmem:[%s6 + $0x2c8] sm:$0xff]
  %v4844 = vld [vmem:[%s6 + $0x2d0] sm:$0xff]
  %v4845 = vld [vmem:[%s6 + $0x2d8] sm:$0xff]
  %v4846 = vld [vmem:[%s6 + $0x2e0] sm:$0xff]
  %v4847 = vld [vmem:[%s6 + $0x2e8] sm:$0xff]
  %v4848 = vld [vmem:[%s6 + $0x2f0] sm:$0xff]
  %v4849 = vld [vmem:[%s6 + $0x2f8] sm:$0xff]
  %v4850 = vld [vmem:[%s6 + $0x300] sm:$0xff]
  %v4851 = vld [vmem:[%s6 + $0x308] sm:$0xff]
  %v4852 = vld [vmem:[%s6 + $0x310] sm:$0xff]
  %v4853 = vld [vmem:[%s6 + $0x318] sm:$0xff]
  %v4854 = vld [vmem:[%s6 + $0x320] sm:$0xff]
  %v4855 = vld [vmem:[%s6 + $0x328] sm:$0xff]
  %v4856 = vld [vmem:[%s6 + $0x330] sm:$0xff]
  %v4857 = vld [vmem:[%s6 + $0x338] sm:$0xff]
  %v4858 = vld [vmem:[%s6 + $0x340] sm:$0xff]
  %v4859 = vld [vmem:[%s6 + $0x348] sm:$0xff]
  %v4860 = vld [vmem:[%s6 + $0x350] sm:$0xff]
  %v4861 = vld [vmem:[%s6 + $0x358] sm:$0xff]
  %v4862 = vld [vmem:[%s6 + $0x360] sm:$0xff]
  %v4863 = vld [vmem:[%s6 + $0x368] sm:$0xff]
  %v4864 = vld [vmem:[%s6 + $0x370] sm:$0xff]
  %v4865 = vld [vmem:[%s6 + $0x378] sm:$0xff]
  %v4866 = vld [vmem:[%s6 + $0x380] sm:$0xff]
  %v4867 = vld [vmem:[%s6 + $0x388] sm:$0xff]
  %v4868 = vld [vmem:[%s6 + $0x390] sm:$0xff]
  %v4869 = vld [vmem:[%s6 + $0x398] sm:$0xff]
  %v4870 = vld [vmem:[%s6 + $0x3a0] sm:$0xff]
  %v4871 = vld [vmem:[%s6 + $0x3a8] sm:$0xff]
  %v4872 = vld [vmem:[%s6 + $0x3b0] sm:$0xff]
  %v4873 = vld [vmem:[%s6 + $0x3b8] sm:$0xff]
  %v4874 = vld [vmem:[%s6 + $0x3c0] sm:$0xff]
  %v4875 = vld [vmem:[%s6 + $0x3c8] sm:$0xff]
  %v4876 = vld [vmem:[%s6 + $0x3d0] sm:$0xff]
  %v4877 = vld [vmem:[%s6 + $0x3d8] sm:$0xff]
  %v4878 = vld [vmem:[%s6 + $0x3e0] sm:$0xff]
  %v4879 = vld [vmem:[%s6 + $0x3e8] sm:$0xff]
  %v4880 = vld [vmem:[%s6 + $0x3f0] sm:$0xff]
  %v4881 = vld [vmem:[%s6 + $0x3f8] sm:$0xff]
  %v4882 = vld [vmem:[%s7] sm:$0xf]
  %v4884 = vlaneseq
  %v4885 = vshrl.u32 %v4884, 7
  %v4886 = vsub.s32 0, %v4885
  %v4887 = vrot.slane %v4882, %v4886
  %v4888 = vlaneseq
  %v4889 = vshrl.u32 %v4888, 7
  %v4890 = vsub.s32 1, %v4889
  %v4891 = vrot.slane %v4882, %v4890
  %v4892 = vlaneseq
  %v4893 = vshrl.u32 %v4892, 7
  %v4894 = vsub.s32 2, %v4893
  %v4895 = vrot.slane %v4882, %v4894
  %v4896 = vlaneseq
  %v4897 = vshrl.u32 %v4896, 7
  %v4898 = vsub.s32 3, %v4897
  %v4899 = vrot.slane %v4882, %v4898
  %v5032 = vunpack.c.l.b16 %v4754
  %v5033 = vunpack.c.h.b16 %v4754
  %v5034 = vunpack.c.l.b16 %v4755
  %v5035 = vunpack.c.h.b16 %v4755
  %v5036 = vunpack.c.l.b16 %v4756
  %v5037 = vunpack.c.h.b16 %v4756
  %v5038 = vunpack.c.l.b16 %v4757
  %v5039 = vunpack.c.h.b16 %v4757
  %v5040 = vunpack.c.l.b16 %v4758
  %v5041 = vunpack.c.h.b16 %v4758
  %v5042 = vunpack.c.l.b16 %v4759
  %v5043 = vunpack.c.h.b16 %v4759
  %v5044 = vunpack.c.l.b16 %v4760
  %v5045 = vunpack.c.h.b16 %v4760
  %v5046 = vunpack.c.l.b16 %v4761
  %v5047 = vunpack.c.h.b16 %v4761
  %v5048 = vunpack.c.l.b16 %v4762
  %v5049 = vunpack.c.h.b16 %v4762
  %v5050 = vunpack.c.l.b16 %v4763
  %v5051 = vunpack.c.h.b16 %v4763
  %v5052 = vunpack.c.l.b16 %v4764
  %v5053 = vunpack.c.h.b16 %v4764
  %v5054 = vunpack.c.l.b16 %v4765
  %v5055 = vunpack.c.h.b16 %v4765
  %v5056 = vunpack.c.l.b16 %v4766
  %v5057 = vunpack.c.h.b16 %v4766
  %v5058 = vunpack.c.l.b16 %v4767
  %v5059 = vunpack.c.h.b16 %v4767
  %v5060 = vunpack.c.l.b16 %v4768
  %v5061 = vunpack.c.h.b16 %v4768
  %v5062 = vunpack.c.l.b16 %v4769
  %v5063 = vunpack.c.h.b16 %v4769
  %v5064 = vunpack.c.l.b16 %v4770
  %v5065 = vunpack.c.h.b16 %v4770
  %v5066 = vunpack.c.l.b16 %v4771
  %v5067 = vunpack.c.h.b16 %v4771
  %v5068 = vunpack.c.l.b16 %v4772
  %v5069 = vunpack.c.h.b16 %v4772
  %v5070 = vunpack.c.l.b16 %v4773
  %v5071 = vunpack.c.h.b16 %v4773
  %v5072 = vunpack.c.l.b16 %v4774
  %v5073 = vunpack.c.h.b16 %v4774
  %v5074 = vunpack.c.l.b16 %v4775
  %v5075 = vunpack.c.h.b16 %v4775
  %v5076 = vunpack.c.l.b16 %v4776
  %v5077 = vunpack.c.h.b16 %v4776
  %v5078 = vunpack.c.l.b16 %v4777
  %v5079 = vunpack.c.h.b16 %v4777
  %v5080 = vunpack.c.l.b16 %v4778
  %v5081 = vunpack.c.h.b16 %v4778
  %v5082 = vunpack.c.l.b16 %v4779
  %v5083 = vunpack.c.h.b16 %v4779
  %v5084 = vunpack.c.l.b16 %v4780
  %v5085 = vunpack.c.h.b16 %v4780
  %v5086 = vunpack.c.l.b16 %v4781
  %v5087 = vunpack.c.h.b16 %v4781
  %v5088 = vunpack.c.l.b16 %v4782
  %v5089 = vunpack.c.h.b16 %v4782
  %v5090 = vunpack.c.l.b16 %v4783
  %v5091 = vunpack.c.h.b16 %v4783
  %v5092 = vunpack.c.l.b16 %v4784
  %v5093 = vunpack.c.h.b16 %v4784
  %v5094 = vunpack.c.l.b16 %v4785
  %v5095 = vunpack.c.h.b16 %v4785
  %v5096 = vunpack.c.l.b16 %v4786
  %v5097 = vunpack.c.h.b16 %v4786
  %v5098 = vunpack.c.l.b16 %v4787
  %v5099 = vunpack.c.h.b16 %v4787
  %v5100 = vunpack.c.l.b16 %v4788
  %v5101 = vunpack.c.h.b16 %v4788
  %v5102 = vunpack.c.l.b16 %v4789
  %v5103 = vunpack.c.h.b16 %v4789
  %v5104 = vunpack.c.l.b16 %v4790
  %v5105 = vunpack.c.h.b16 %v4790
  %v5106 = vunpack.c.l.b16 %v4791
  %v5107 = vunpack.c.h.b16 %v4791
  %v5108 = vunpack.c.l.b16 %v4792
  %v5109 = vunpack.c.h.b16 %v4792
  %v5110 = vunpack.c.l.b16 %v4793
  %v5111 = vunpack.c.h.b16 %v4793
  %v5112 = vunpack.c.l.b16 %v4794
  %v5113 = vunpack.c.h.b16 %v4794
  %v5114 = vunpack.c.l.b16 %v4795
  %v5115 = vunpack.c.h.b16 %v4795
  %v5116 = vunpack.c.l.b16 %v4796
  %v5117 = vunpack.c.h.b16 %v4796
  %v5118 = vunpack.c.l.b16 %v4797
  %v5119 = vunpack.c.h.b16 %v4797
  %v5120 = vunpack.c.l.b16 %v4798
  %v5121 = vunpack.c.h.b16 %v4798
  %v5122 = vunpack.c.l.b16 %v4799
  %v5123 = vunpack.c.h.b16 %v4799
  %v5124 = vunpack.c.l.b16 %v4800
  %v5125 = vunpack.c.h.b16 %v4800
  %v5126 = vunpack.c.l.b16 %v4801
  %v5127 = vunpack.c.h.b16 %v4801
  %v5128 = vunpack.c.l.b16 %v4802
  %v5129 = vunpack.c.h.b16 %v4802
  %v5130 = vunpack.c.l.b16 %v4803
  %v5131 = vunpack.c.h.b16 %v4803
  %v5132 = vunpack.c.l.b16 %v4804
  %v5133 = vunpack.c.h.b16 %v4804
  %v5134 = vunpack.c.l.b16 %v4805
  %v5135 = vunpack.c.h.b16 %v4805
  %v5136 = vunpack.c.l.b16 %v4806
  %v5137 = vunpack.c.h.b16 %v4806
  %v5138 = vunpack.c.l.b16 %v4807
  %v5139 = vunpack.c.h.b16 %v4807
  %v5140 = vunpack.c.l.b16 %v4808
  %v5141 = vunpack.c.h.b16 %v4808
  %v5142 = vunpack.c.l.b16 %v4809
  %v5143 = vunpack.c.h.b16 %v4809
  %v5144 = vunpack.c.l.b16 %v4810
  %v5145 = vunpack.c.h.b16 %v4810
  %v5146 = vunpack.c.l.b16 %v4811
  %v5147 = vunpack.c.h.b16 %v4811
  %v5148 = vunpack.c.l.b16 %v4812
  %v5149 = vunpack.c.h.b16 %v4812
  %v5150 = vunpack.c.l.b16 %v4813
  %v5151 = vunpack.c.h.b16 %v4813
  %v5152 = vunpack.c.l.b16 %v4814
  %v5153 = vunpack.c.h.b16 %v4814
  %v5154 = vunpack.c.l.b16 %v4815
  %v5155 = vunpack.c.h.b16 %v4815
  %v5156 = vunpack.c.l.b16 %v4816
  %v5157 = vunpack.c.h.b16 %v4816
  %v5158 = vunpack.c.l.b16 %v4817
  %v5159 = vunpack.c.h.b16 %v4817
  %v5160 = vunpack.c.l.b16 %v4818
  %v5161 = vunpack.c.h.b16 %v4818
  %v5162 = vunpack.c.l.b16 %v4819
  %v5163 = vunpack.c.h.b16 %v4819
  %v5164 = vunpack.c.l.b16 %v4820
  %v5165 = vunpack.c.h.b16 %v4820
  %v5166 = vunpack.c.l.b16 %v4821
  %v5167 = vunpack.c.h.b16 %v4821
  %v5168 = vunpack.c.l.b16 %v4822
  %v5169 = vunpack.c.h.b16 %v4822
  %v5170 = vunpack.c.l.b16 %v4823
  %v5171 = vunpack.c.h.b16 %v4823
  %v5172 = vunpack.c.l.b16 %v4824
  %v5173 = vunpack.c.h.b16 %v4824
  %v5174 = vunpack.c.l.b16 %v4825
  %v5175 = vunpack.c.h.b16 %v4825
  %v5176 = vunpack.c.l.b16 %v4826
  %v5177 = vunpack.c.h.b16 %v4826
  %v5178 = vunpack.c.l.b16 %v4827
  %v5179 = vunpack.c.h.b16 %v4827
  %v5180 = vunpack.c.l.b16 %v4828
  %v5181 = vunpack.c.h.b16 %v4828
  %v5182 = vunpack.c.l.b16 %v4829
  %v5183 = vunpack.c.h.b16 %v4829
  %v5184 = vunpack.c.l.b16 %v4830
  %v5185 = vunpack.c.h.b16 %v4830
  %v5186 = vunpack.c.l.b16 %v4831
  %v5187 = vunpack.c.h.b16 %v4831
  %v5188 = vunpack.c.l.b16 %v4832
  %v5189 = vunpack.c.h.b16 %v4832
  %v5190 = vunpack.c.l.b16 %v4833
  %v5191 = vunpack.c.h.b16 %v4833
  %v5192 = vunpack.c.l.b16 %v4834
  %v5193 = vunpack.c.h.b16 %v4834
  %v5194 = vunpack.c.l.b16 %v4835
  %v5195 = vunpack.c.h.b16 %v4835
  %v5196 = vunpack.c.l.b16 %v4836
  %v5197 = vunpack.c.h.b16 %v4836
  %v5198 = vunpack.c.l.b16 %v4837
  %v5199 = vunpack.c.h.b16 %v4837
  %v5200 = vunpack.c.l.b16 %v4838
  %v5201 = vunpack.c.h.b16 %v4838
  %v5202 = vunpack.c.l.b16 %v4839
  %v5203 = vunpack.c.h.b16 %v4839
  %v5204 = vunpack.c.l.b16 %v4840
  %v5205 = vunpack.c.h.b16 %v4840
  %v5206 = vunpack.c.l.b16 %v4841
  %v5207 = vunpack.c.h.b16 %v4841
  %v5208 = vunpack.c.l.b16 %v4842
  %v5209 = vunpack.c.h.b16 %v4842
  %v5210 = vunpack.c.l.b16 %v4843
  %v5211 = vunpack.c.h.b16 %v4843
  %v5212 = vunpack.c.l.b16 %v4844
  %v5213 = vunpack.c.h.b16 %v4844
  %v5214 = vunpack.c.l.b16 %v4845
  %v5215 = vunpack.c.h.b16 %v4845
  %v5216 = vunpack.c.l.b16 %v4846
  %v5217 = vunpack.c.h.b16 %v4846
  %v5218 = vunpack.c.l.b16 %v4847
  %v5219 = vunpack.c.h.b16 %v4847
  %v5220 = vunpack.c.l.b16 %v4848
  %v5221 = vunpack.c.h.b16 %v4848
  %v5222 = vunpack.c.l.b16 %v4849
  %v5223 = vunpack.c.h.b16 %v4849
  %v5224 = vunpack.c.l.b16 %v4850
  %v5225 = vunpack.c.h.b16 %v4850
  %v5226 = vunpack.c.l.b16 %v4851
  %v5227 = vunpack.c.h.b16 %v4851
  %v5228 = vunpack.c.l.b16 %v4852
  %v5229 = vunpack.c.h.b16 %v4852
  %v5230 = vunpack.c.l.b16 %v4853
  %v5231 = vunpack.c.h.b16 %v4853
  %v5232 = vunpack.c.l.b16 %v4854
  %v5233 = vunpack.c.h.b16 %v4854
  %v5234 = vunpack.c.l.b16 %v4855
  %v5235 = vunpack.c.h.b16 %v4855
  %v5236 = vunpack.c.l.b16 %v4856
  %v5237 = vunpack.c.h.b16 %v4856
  %v5238 = vunpack.c.l.b16 %v4857
  %v5239 = vunpack.c.h.b16 %v4857
  %v5240 = vunpack.c.l.b16 %v4858
  %v5241 = vunpack.c.h.b16 %v4858
  %v5242 = vunpack.c.l.b16 %v4859
  %v5243 = vunpack.c.h.b16 %v4859
  %v5244 = vunpack.c.l.b16 %v4860
  %v5245 = vunpack.c.h.b16 %v4860
  %v5246 = vunpack.c.l.b16 %v4861
  %v5247 = vunpack.c.h.b16 %v4861
  %v5248 = vunpack.c.l.b16 %v4862
  %v5249 = vunpack.c.h.b16 %v4862
  %v5250 = vunpack.c.l.b16 %v4863
  %v5251 = vunpack.c.h.b16 %v4863
  %v5252 = vunpack.c.l.b16 %v4864
  %v5253 = vunpack.c.h.b16 %v4864
  %v5254 = vunpack.c.l.b16 %v4865
  %v5255 = vunpack.c.h.b16 %v4865
  %v5256 = vunpack.c.l.b16 %v4866
  %v5257 = vunpack.c.h.b16 %v4866
  %v5258 = vunpack.c.l.b16 %v4867
  %v5259 = vunpack.c.h.b16 %v4867
  %v5260 = vunpack.c.l.b16 %v4868
  %v5261 = vunpack.c.h.b16 %v4868
  %v5262 = vunpack.c.l.b16 %v4869
  %v5263 = vunpack.c.h.b16 %v4869
  %v5264 = vunpack.c.l.b16 %v4870
  %v5265 = vunpack.c.h.b16 %v4870
  %v5266 = vunpack.c.l.b16 %v4871
  %v5267 = vunpack.c.h.b16 %v4871
  %v5268 = vunpack.c.l.b16 %v4872
  %v5269 = vunpack.c.h.b16 %v4872
  %v5270 = vunpack.c.l.b16 %v4873
  %v5271 = vunpack.c.h.b16 %v4873
  %v5272 = vunpack.c.l.b16 %v4874
  %v5273 = vunpack.c.h.b16 %v4874
  %v5274 = vunpack.c.l.b16 %v4875
  %v5275 = vunpack.c.h.b16 %v4875
  %v5276 = vunpack.c.l.b16 %v4876
  %v5277 = vunpack.c.h.b16 %v4876
  %v5278 = vunpack.c.l.b16 %v4877
  %v5279 = vunpack.c.h.b16 %v4877
  %v5280 = vunpack.c.l.b16 %v4878
  %v5281 = vunpack.c.h.b16 %v4878
  %v5282 = vunpack.c.l.b16 %v4879
  %v5283 = vunpack.c.h.b16 %v4879
  %v5284 = vunpack.c.l.b16 %v4880
  %v5285 = vunpack.c.h.b16 %v4880
  %v5286 = vunpack.c.l.b16 %v4881
  %v5287 = vunpack.c.h.b16 %v4881
  %v5288 = vpack.c.b16 %v5036, %v5032
  %v5289 = vpack.c.b16 %v5037, %v5033
  %v5290 = vpack.c.b16 %v5038, %v5034
  %v5291 = vpack.c.b16 %v5039, %v5035
  %v5292 = vpack.c.b16 %v5044, %v5040
  %v5293 = vpack.c.b16 %v5045, %v5041
  %v5294 = vpack.c.b16 %v5046, %v5042
  %v5295 = vpack.c.b16 %v5047, %v5043
  %v5296 = vpack.c.b16 %v5052, %v5048
  %v5297 = vpack.c.b16 %v5053, %v5049
  %v5298 = vpack.c.b16 %v5054, %v5050
  %v5299 = vpack.c.b16 %v5055, %v5051
  %v5300 = vpack.c.b16 %v5060, %v5056
  %v5301 = vpack.c.b16 %v5061, %v5057
  %v5302 = vpack.c.b16 %v5062, %v5058
  %v5303 = vpack.c.b16 %v5063, %v5059
  %v5304 = vpack.c.b16 %v5068, %v5064
  %v5305 = vpack.c.b16 %v5069, %v5065
  %v5306 = vpack.c.b16 %v5070, %v5066
  %v5307 = vpack.c.b16 %v5071, %v5067
  %v5308 = vpack.c.b16 %v5076, %v5072
  %v5309 = vpack.c.b16 %v5077, %v5073
  %v5310 = vpack.c.b16 %v5078, %v5074
  %v5311 = vpack.c.b16 %v5079, %v5075
  %v5312 = vpack.c.b16 %v5084, %v5080
  %v5313 = vpack.c.b16 %v5085, %v5081
  %v5314 = vpack.c.b16 %v5086, %v5082
  %v5315 = vpack.c.b16 %v5087, %v5083
  %v5316 = vpack.c.b16 %v5092, %v5088
  %v5317 = vpack.c.b16 %v5093, %v5089
  %v5318 = vpack.c.b16 %v5094, %v5090
  %v5319 = vpack.c.b16 %v5095, %v5091
  %v5320 = vpack.c.b16 %v5100, %v5096
  %v5321 = vpack.c.b16 %v5101, %v5097
  %v5322 = vpack.c.b16 %v5102, %v5098
  %v5323 = vpack.c.b16 %v5103, %v5099
  %v5324 = vpack.c.b16 %v5108, %v5104
  %v5325 = vpack.c.b16 %v5109, %v5105
  %v5326 = vpack.c.b16 %v5110, %v5106
  %v5327 = vpack.c.b16 %v5111, %v5107
  %v5328 = vpack.c.b16 %v5116, %v5112
  %v5329 = vpack.c.b16 %v5117, %v5113
  %v5330 = vpack.c.b16 %v5118, %v5114
  %v5331 = vpack.c.b16 %v5119, %v5115
  %v5332 = vpack.c.b16 %v5124, %v5120
  %v5333 = vpack.c.b16 %v5125, %v5121
  %v5334 = vpack.c.b16 %v5126, %v5122
  %v5335 = vpack.c.b16 %v5127, %v5123
  %v5336 = vpack.c.b16 %v5132, %v5128
  %v5337 = vpack.c.b16 %v5133, %v5129
  %v5338 = vpack.c.b16 %v5134, %v5130
  %v5339 = vpack.c.b16 %v5135, %v5131
  %v5340 = vpack.c.b16 %v5140, %v5136
  %v5341 = vpack.c.b16 %v5141, %v5137
  %v5342 = vpack.c.b16 %v5142, %v5138
  %v5343 = vpack.c.b16 %v5143, %v5139
  %v5344 = vpack.c.b16 %v5148, %v5144
  %v5345 = vpack.c.b16 %v5149, %v5145
  %v5346 = vpack.c.b16 %v5150, %v5146
  %v5347 = vpack.c.b16 %v5151, %v5147
  %v5348 = vpack.c.b16 %v5156, %v5152
  %v5349 = vpack.c.b16 %v5157, %v5153
  %v5350 = vpack.c.b16 %v5158, %v5154
  %v5351 = vpack.c.b16 %v5159, %v5155
  %v5352 = vpack.c.b16 %v5164, %v5160
  %v5353 = vpack.c.b16 %v5165, %v5161
  %v5354 = vpack.c.b16 %v5166, %v5162
  %v5355 = vpack.c.b16 %v5167, %v5163
  %v5356 = vpack.c.b16 %v5172, %v5168
  %v5357 = vpack.c.b16 %v5173, %v5169
  %v5358 = vpack.c.b16 %v5174, %v5170
  %v5359 = vpack.c.b16 %v5175, %v5171
  %v5360 = vpack.c.b16 %v5180, %v5176
  %v5361 = vpack.c.b16 %v5181, %v5177
  %v5362 = vpack.c.b16 %v5182, %v5178
  %v5363 = vpack.c.b16 %v5183, %v5179
  %v5364 = vpack.c.b16 %v5188, %v5184
  %v5365 = vpack.c.b16 %v5189, %v5185
  %v5366 = vpack.c.b16 %v5190, %v5186
  %v5367 = vpack.c.b16 %v5191, %v5187
  %v5368 = vpack.c.b16 %v5196, %v5192
  %v5369 = vpack.c.b16 %v5197, %v5193
  %v5370 = vpack.c.b16 %v5198, %v5194
  %v5371 = vpack.c.b16 %v5199, %v5195
  %v5372 = vpack.c.b16 %v5204, %v5200
  %v5373 = vpack.c.b16 %v5205, %v5201
  %v5374 = vpack.c.b16 %v5206, %v5202
  %v5375 = vpack.c.b16 %v5207, %v5203
  %v5376 = vpack.c.b16 %v5212, %v5208
  %v5377 = vpack.c.b16 %v5213, %v5209
  %v5378 = vpack.c.b16 %v5214, %v5210
  %v5379 = vpack.c.b16 %v5215, %v5211
  %v5380 = vpack.c.b16 %v5220, %v5216
  %v5381 = vpack.c.b16 %v5221, %v5217
  %v5382 = vpack.c.b16 %v5222, %v5218
  %v5383 = vpack.c.b16 %v5223, %v5219
  %v5384 = vpack.c.b16 %v5228, %v5224
  %v5385 = vpack.c.b16 %v5229, %v5225
  %v5386 = vpack.c.b16 %v5230, %v5226
  %v5387 = vpack.c.b16 %v5231, %v5227
  %v5388 = vpack.c.b16 %v5236, %v5232
  %v5389 = vpack.c.b16 %v5237, %v5233
  %v5390 = vpack.c.b16 %v5238, %v5234
  %v5391 = vpack.c.b16 %v5239, %v5235
  %v5392 = vpack.c.b16 %v5244, %v5240
  %v5393 = vpack.c.b16 %v5245, %v5241
  %v5394 = vpack.c.b16 %v5246, %v5242
  %v5395 = vpack.c.b16 %v5247, %v5243
  %v5396 = vpack.c.b16 %v5252, %v5248
  %v5397 = vpack.c.b16 %v5253, %v5249
  %v5398 = vpack.c.b16 %v5254, %v5250
  %v5399 = vpack.c.b16 %v5255, %v5251
  %v5400 = vpack.c.b16 %v5260, %v5256
  %v5401 = vpack.c.b16 %v5261, %v5257
  %v5402 = vpack.c.b16 %v5262, %v5258
  %v5403 = vpack.c.b16 %v5263, %v5259
  %v5404 = vpack.c.b16 %v5268, %v5264
  %v5405 = vpack.c.b16 %v5269, %v5265
  %v5406 = vpack.c.b16 %v5270, %v5266
  %v5407 = vpack.c.b16 %v5271, %v5267
  %v5408 = vpack.c.b16 %v5276, %v5272
  %v5409 = vpack.c.b16 %v5277, %v5273
  %v5410 = vpack.c.b16 %v5278, %v5274
  %v5411 = vpack.c.b16 %v5279, %v5275
  %v5412 = vpack.c.b16 %v5284, %v5280
  %v5413 = vpack.c.b16 %v5285, %v5281
  %v5414 = vpack.c.b16 %v5286, %v5282
  %v5415 = vpack.c.b16 %v5287, %v5283
  %5544 = vmatprep.subr.bf16.mxu0 %v5317
  %5545 = vmatpush1.bf16.msra.mxu0 %v5316
  %5546 = vmatprep.subr.bf16.mxu0 %v5313
  %5547 = vmatpush1.bf16.msra.mxu0 %v5312
  %5548 = vmatprep.subr.bf16.mxu0 %v5309
  %5549 = vmatpush1.bf16.msra.mxu0 %v5308
  %5550 = vmatprep.subr.bf16.mxu0 %v5305
  %5551 = vmatpush1.bf16.msra.mxu0 %v5304
  %5552 = vmatprep.subr.bf16.mxu0 %v5301
  %5553 = vmatpush1.bf16.msra.mxu0 %v5300
  %5554 = vmatprep.subr.bf16.mxu0 %v5297
  %5555 = vmatpush1.bf16.msra.mxu0 %v5296
  %5556 = vmatprep.subr.bf16.mxu0 %v5293
  %5557 = vmatpush1.bf16.msra.mxu0 %v5292
  %5558 = vmatprep.subr.bf16.mxu0 %v5289
  %5559 = vmatpush1.bf16.msra.mxu0 %v5288
  %5560 = vmatprep.subr.bf16.mxu0 %v5349
  %5561 = vmatpush2.bf16.msra.mxu0 %v5348
  %5562 = vmatprep.subr.bf16.mxu0 %v5345
  %5563 = vmatpush2.bf16.msra.mxu0 %v5344
  %5564 = vmatprep.subr.bf16.mxu0 %v5341
  %5565 = vmatpush2.bf16.msra.mxu0 %v5340
  %5566 = vmatprep.subr.bf16.mxu0 %v5337
  %5567 = vmatpush2.bf16.msra.mxu0 %v5336
  %5568 = vmatprep.subr.bf16.mxu0 %v5333
  %5569 = vmatpush2.bf16.msra.mxu0 %v5332
  %5570 = vmatprep.subr.bf16.mxu0 %v5329
  %5571 = vmatpush2.bf16.msra.mxu0 %v5328
  %5572 = vmatprep.subr.bf16.mxu0 %v5325
  %5573 = vmatpush2.bf16.msra.mxu0 %v5324
  %5574 = vmatprep.subr.bf16.mxu0 %v5321
  %5575 = vmatpush2.bf16.msra.mxu0 %v5320
  %5576 = vmatprep.mubr.bf16.mxu0 %v4751
  %5577 = vmatmul.mubr.bf16.gmra.mxu0 %v4750
  %v5578 = vpop.f32.mrf.mxu0
  %v5579 = vadd.f32 %v4887, %v5578
  %v5580 = vpop.f32.mrf.mxu0
  %v5581 = vadd.f32 %v4891, %v5580
  %v5582 = vpop.f32.mrf.mxu0
  %v5583 = vadd.f32 %v4887, %v5582
  %v5584 = vpop.f32.mrf.mxu0
  %v5585 = vadd.f32 %v4891, %v5584
  %5586 = vdwg.mxu0
  %5587 = vmatprep.subr.bf16.mxu0 %v5381
  %5588 = vmatpush1.bf16.msra.mxu0 %v5380
  %5589 = vmatprep.subr.bf16.mxu0 %v5377
  %5590 = vmatpush1.bf16.msra.mxu0 %v5376
  %5591 = vmatprep.subr.bf16.mxu0 %v5373
  %5592 = vmatpush1.bf16.msra.mxu0 %v5372
  %5593 = vmatprep.subr.bf16.mxu0 %v5369
  %5594 = vmatpush1.bf16.msra.mxu0 %v5368
  %5595 = vmatprep.subr.bf16.mxu0 %v5365
  %5596 = vmatpush1.bf16.msra.mxu0 %v5364
  %5597 = vmatprep.subr.bf16.mxu0 %v5361
  %5598 = vmatpush1.bf16.msra.mxu0 %v5360
  %5599 = vmatprep.subr.bf16.mxu0 %v5357
  %5600 = vmatpush1.bf16.msra.mxu0 %v5356
  %5601 = vmatprep.subr.bf16.mxu0 %v5353
  %5602 = vmatpush1.bf16.msra.mxu0 %v5352
  %5603 = vmatprep.subr.bf16.mxu0 %v5413
  %5604 = vmatpush2.bf16.msra.mxu0 %v5412
  %5605 = vmatprep.subr.bf16.mxu0 %v5409
  %5606 = vmatpush2.bf16.msra.mxu0 %v5408
  %5607 = vmatprep.subr.bf16.mxu0 %v5405
  %5608 = vmatpush2.bf16.msra.mxu0 %v5404
  %5609 = vmatprep.subr.bf16.mxu0 %v5401
  %5610 = vmatpush2.bf16.msra.mxu0 %v5400
  %5611 = vmatprep.subr.bf16.mxu0 %v5397
  %5612 = vmatpush2.bf16.msra.mxu0 %v5396
  %5613 = vmatprep.subr.bf16.mxu0 %v5393
  %5614 = vmatpush2.bf16.msra.mxu0 %v5392
  %5615 = vmatprep.subr.bf16.mxu0 %v5389
  %5616 = vmatpush2.bf16.msra.mxu0 %v5388
  %5617 = vmatprep.subr.bf16.mxu0 %v5385
  %5618 = vmatpush2.bf16.msra.mxu0 %v5384
  %5619 = vmatprep.mubr.bf16.mxu0 %v4753
  %5620 = vmatmul.mubr.bf16.gmra.mxu0 %v4752
  %v5621 = vpop.f32.mrf.mxu0
  %v5622 = vadd.f32 %v5579, %v5621
  %v5623 = vpop.f32.mrf.mxu0
  %v5624 = vadd.f32 %v5581, %v5623
  %v5625 = vpop.f32.mrf.mxu0
  %v5626 = vadd.f32 %v5583, %v5625
  %v5627 = vpop.f32.mrf.mxu0
  %v5628 = vadd.f32 %v5585, %v5627
  %5629 = vdwg.mxu0
  %5630 = vmatprep.subr.bf16.mxu0 %v5319
  %5631 = vmatpush1.bf16.msra.mxu0 %v5318
  %5632 = vmatprep.subr.bf16.mxu0 %v5315
  %5633 = vmatpush1.bf16.msra.mxu0 %v5314
  %5634 = vmatprep.subr.bf16.mxu0 %v5311
  %5635 = vmatpush1.bf16.msra.mxu0 %v5310
  %5636 = vmatprep.subr.bf16.mxu0 %v5307
  %5637 = vmatpush1.bf16.msra.mxu0 %v5306
  %5638 = vmatprep.subr.bf16.mxu0 %v5303
  %5639 = vmatpush1.bf16.msra.mxu0 %v5302
  %5640 = vmatprep.subr.bf16.mxu0 %v5299
  %5641 = vmatpush1.bf16.msra.mxu0 %v5298
  %5642 = vmatprep.subr.bf16.mxu0 %v5295
  %5643 = vmatpush1.bf16.msra.mxu0 %v5294
  %5644 = vmatprep.subr.bf16.mxu0 %v5291
  %5645 = vmatpush1.bf16.msra.mxu0 %v5290
  %5646 = vmatprep.subr.bf16.mxu0 %v5351
  %5647 = vmatpush2.bf16.msra.mxu0 %v5350
  %5648 = vmatprep.subr.bf16.mxu0 %v5347
  %5649 = vmatpush2.bf16.msra.mxu0 %v5346
  %5650 = vmatprep.subr.bf16.mxu0 %v5343
  %5651 = vmatpush2.bf16.msra.mxu0 %v5342
  %5652 = vmatprep.subr.bf16.mxu0 %v5339
  %5653 = vmatpush2.bf16.msra.mxu0 %v5338
  %5654 = vmatprep.subr.bf16.mxu0 %v5335
  %5655 = vmatpush2.bf16.msra.mxu0 %v5334
  %5656 = vmatprep.subr.bf16.mxu0 %v5331
  %5657 = vmatpush2.bf16.msra.mxu0 %v5330
  %5658 = vmatprep.subr.bf16.mxu0 %v5327
  %5659 = vmatpush2.bf16.msra.mxu0 %v5326
  %5660 = vmatprep.subr.bf16.mxu0 %v5323
  %5661 = vmatpush2.bf16.msra.mxu0 %v5322
  %5662 = vmatprep.mubr.bf16.mxu0 %v4751
  %5663 = vmatmul.mubr.bf16.gmra.mxu0 %v4750
  %v5664 = vpop.f32.mrf.mxu0
  %v5665 = vadd.f32 %v4895, %v5664
  %v5666 = vpop.f32.mrf.mxu0
  %v5667 = vadd.f32 %v4899, %v5666
  %v5668 = vpop.f32.mrf.mxu0
  %v5669 = vadd.f32 %v4895, %v5668
  %v5670 = vpop.f32.mrf.mxu0
  %v5671 = vadd.f32 %v4899, %v5670
  %5672 = vdwg.mxu0
  %5673 = vmatprep.subr.bf16.mxu0 %v5383
  %5674 = vmatpush1.bf16.msra.mxu0 %v5382
  %5675 = vmatprep.subr.bf16.mxu0 %v5379
  %5676 = vmatpush1.bf16.msra.mxu0 %v5378
  %5677 = vmatprep.subr.bf16.mxu0 %v5375
  %5678 = vmatpush1.bf16.msra.mxu0 %v5374
  %5679 = vmatprep.subr.bf16.mxu0 %v5371
  %5680 = vmatpush1.bf16.msra.mxu0 %v5370
  %5681 = vmatprep.subr.bf16.mxu0 %v5367
  %5682 = vmatpush1.bf16.msra.mxu0 %v5366
  %5683 = vmatprep.subr.bf16.mxu0 %v5363
  %5684 = vmatpush1.bf16.msra.mxu0 %v5362
  %5685 = vmatprep.subr.bf16.mxu0 %v5359
  %5686 = vmatpush1.bf16.msra.mxu0 %v5358
  %5687 = vmatprep.subr.bf16.mxu0 %v5355
  %5688 = vmatpush1.bf16.msra.mxu0 %v5354
  %5689 = vmatprep.subr.bf16.mxu0 %v5415
  %5690 = vmatpush2.bf16.msra.mxu0 %v5414
  %5691 = vmatprep.subr.bf16.mxu0 %v5411
  %5692 = vmatpush2.bf16.msra.mxu0 %v5410
  %5693 = vmatprep.subr.bf16.mxu0 %v5407
  %5694 = vmatpush2.bf16.msra.mxu0 %v5406
  %5695 = vmatprep.subr.bf16.mxu0 %v5403
  %5696 = vmatpush2.bf16.msra.mxu0 %v5402
  %5697 = vmatprep.subr.bf16.mxu0 %v5399
  %5698 = vmatpush2.bf16.msra.mxu0 %v5398
  %5699 = vmatprep.subr.bf16.mxu0 %v5395
  %5700 = vmatpush2.bf16.msra.mxu0 %v5394
  %5701 = vmatprep.subr.bf16.mxu0 %v5391
  %5702 = vmatpush2.bf16.msra.mxu0 %v5390
  %5703 = vmatprep.subr.bf16.mxu0 %v5387
  %5704 = vmatpush2.bf16.msra.mxu0 %v5386
  %5705 = vmatprep.mubr.bf16.mxu0 %v4753
  %5706 = vmatmul.mubr.bf16.gmra.mxu0 %v4752
  %v5707 = vpop.f32.mrf.mxu0
  %v5708 = vadd.f32 %v5665, %v5707
  %v5709 = vpop.f32.mrf.mxu0
  %v5710 = vadd.f32 %v5667, %v5709
  %v5711 = vpop.f32.mrf.mxu0
  %v5712 = vadd.f32 %v5669, %v5711
  %v5713 = vpop.f32.mrf.mxu0
  %v5714 = vadd.f32 %v5671, %v5713
  %5715 = vdwg.mxu0
  %v5716 = vmul.f32 %v5622, %v5622
  %v5717 = vmul.f32 %v5624, %v5624
  %v5718 = vmul.f32 %v5708, %v5708
  %v5719 = vmul.f32 %v5710, %v5710
  %v5720 = vmul.f32 %v5626, %v5626
  %v5721 = vmul.f32 %v5628, %v5628
  %v5722 = vmul.f32 %v5712, %v5712
  %v5723 = vmul.f32 %v5714, %v5714
  %v5724 = vmul.f32 %v5622, %v5716
  %v5725 = vmul.f32 %v5624, %v5717
  %v5726 = vmul.f32 %v5708, %v5718
  %v5727 = vmul.f32 %v5710, %v5719
  %v5728 = vmul.f32 %v5626, %v5720
  %v5729 = vmul.f32 %v5628, %v5721
  %v5730 = vmul.f32 %v5712, %v5722
  %v5731 = vmul.f32 %v5714, %v5723
  %v5732 = vmul.f32 %v5724, 0.044715
  %v5733 = vmul.f32 %v5725, 0.044715
  %v5734 = vmul.f32 %v5726, 0.044715
  %v5735 = vmul.f32 %v5727, 0.044715
  %v5736 = vmul.f32 %v5728, 0.044715
  %v5737 = vmul.f32 %v5729, 0.044715
  %v5738 = vmul.f32 %v5730, 0.044715
  %v5739 = vmul.f32 %v5731, 0.044715
  %v5740 = vadd.f32 %v5622, %v5732
  %v5741 = vadd.f32 %v5624, %v5733
  %v5742 = vadd.f32 %v5708, %v5734
  %v5743 = vadd.f32 %v5710, %v5735
  %v5744 = vadd.f32 %v5626, %v5736
  %v5745 = vadd.f32 %v5628, %v5737
  %v5746 = vadd.f32 %v5712, %v5738
  %v5747 = vadd.f32 %v5714, %v5739
  %v5748 = vmul.f32 %v5740, 0.7978846
  %v5749 = vmul.f32 %v5741, 0.7978846
  %v5750 = vmul.f32 %v5742, 0.7978846
  %v5751 = vmul.f32 %v5743, 0.7978846
  %v5752 = vmul.f32 %v5744, 0.7978846
  %v5753 = vmul.f32 %v5745, 0.7978846
  %v5754 = vmul.f32 %v5746, 0.7978846
  %v5755 = vmul.f32 %v5747, 0.7978846
  %v5756 = vtanh.pop %v5748
  %v5757 = vtanh.pop %v5749
  %v5758 = vtanh.pop %v5750
  %v5759 = vtanh.pop %v5751
  %v5760 = vtanh.pop %v5752
  %v5761 = vtanh.pop %v5753
  %v5762 = vtanh.pop %v5754
  %v5763 = vtanh.pop %v5755
  %v5764 = vadd.f32 %v5756, 1.0
  %v5765 = vadd.f32 %v5757, 1.0
  %v5766 = vadd.f32 %v5758, 1.0
  %v5767 = vadd.f32 %v5759, 1.0
  %v5768 = vadd.f32 %v5760, 1.0
  %v5769 = vadd.f32 %v5761, 1.0
  %v5770 = vadd.f32 %v5762, 1.0
  %v5771 = vadd.f32 %v5763, 1.0
  %v5772 = vmul.f32 %v5764, 0.5
  %v5773 = vmul.f32 %v5765, 0.5
  %v5774 = vmul.f32 %v5766, 0.5
  %v5775 = vmul.f32 %v5767, 0.5
  %v5776 = vmul.f32 %v5768, 0.5
  %v5777 = vmul.f32 %v5769, 0.5
  %v5778 = vmul.f32 %v5770, 0.5
  %v5779 = vmul.f32 %v5771, 0.5
  %v5780 = vmul.f32 %v5622, %v5772
  %v5781 = vmul.f32 %v5624, %v5773
  %v5782 = vmul.f32 %v5708, %v5774
  %v5783 = vmul.f32 %v5710, %v5775
  %v5784 = vmul.f32 %v5626, %v5776
  %v5785 = vmul.f32 %v5628, %v5777
  %v5786 = vmul.f32 %v5712, %v5778
  %v5787 = vmul.f32 %v5714, %v5779
  %v5788 = vpack.c.bf16 %v5784, %v5780
  %v5789 = vpack.c.bf16 %v5785, %v5781
  %v5790 = vpack.c.bf16 %v5786, %v5782
  %v5791 = vpack.c.bf16 %v5787, %v5783
  %v5792 = vld [vmem:[%s8] sm:$0xff]
  %v5793 = vld [vmem:[%s8 + $0x8] sm:$0xf]
  %v5794 = vld [vmem:[%s8 + $0xc] sm:$0xff]
  %v5795 = vld [vmem:[%s8 + $0x14] sm:$0xf]
  %v5796 = vld [vmem:[%s8 + $0x18] sm:$0xff]
  %v5797 = vld [vmem:[%s8 + $0x20] sm:$0xf]
  %v5798 = vld [vmem:[%s8 + $0x24] sm:$0xff]
  %v5799 = vld [vmem:[%s8 + $0x2c] sm:$0xf]
  %v5800 = vld [vmem:[%s8 + $0x30] sm:$0xff]
  %v5801 = vld [vmem:[%s8 + $0x38] sm:$0xf]
  %v5802 = vld [vmem:[%s8 + $0x3c] sm:$0xff]
  %v5803 = vld [vmem:[%s8 + $0x44] sm:$0xf]
  %v5804 = vld [vmem:[%s8 + $0x48] sm:$0xff]
  %v5805 = vld [vmem:[%s8 + $0x50] sm:$0xf]
  %v5806 = vld [vmem:[%s8 + $0x54] sm:$0xff]
  %v5807 = vld [vmem:[%s8 + $0x5c] sm:$0xf]
  %v5808 = vld [vmem:[%s8 + $0x60] sm:$0xff]
  %v5809 = vld [vmem:[%s8 + $0x68] sm:$0xf]
  %v5810 = vld [vmem:[%s8 + $0x6c] sm:$0xff]
  %v5811 = vld [vmem:[%s8 + $0x74] sm:$0xf]
  %v5812 = vld [vmem:[%s8 + $0x78] sm:$0xff]
  %v5813 = vld [vmem:[%s8 + $0x80] sm:$0xf]
  %v5814 = vld [vmem:[%s8 + $0x84] sm:$0xff]
  %v5815 = vld [vmem:[%s8 + $0x8c] sm:$0xf]
  %v5816 = vld [vmem:[%s8 + $0x90] sm:$0xff]
  %v5817 = vld [vmem:[%s8 + $0x98] sm:$0xf]
  %v5818 = vld [vmem:[%s8 + $0x9c] sm:$0xff]
  %v5819 = vld [vmem:[%s8 + $0xa4] sm:$0xf]
  %v5820 = vld [vmem:[%s8 + $0xa8] sm:$0xff]
  %v5821 = vld [vmem:[%s8 + $0xb0] sm:$0xf]
  %v5822 = vld [vmem:[%s8 + $0xb4] sm:$0xff]
  %v5823 = vld [vmem:[%s8 + $0xbc] sm:$0xf]
  %v5824 = vld [vmem:[%s8 + $0xc0] sm:$0xff]
  %v5825 = vld [vmem:[%s8 + $0xc8] sm:$0xf]
  %v5826 = vld [vmem:[%s8 + $0xcc] sm:$0xff]
  %v5827 = vld [vmem:[%s8 + $0xd4] sm:$0xf]
  %v5828 = vld [vmem:[%s8 + $0xd8] sm:$0xff]
  %v5829 = vld [vmem:[%s8 + $0xe0] sm:$0xf]
  %v5830 = vld [vmem:[%s8 + $0xe4] sm:$0xff]
  %v5831 = vld [vmem:[%s8 + $0xec] sm:$0xf]
  %v5832 = vld [vmem:[%s8 + $0xf0] sm:$0xff]
  %v5833 = vld [vmem:[%s8 + $0xf8] sm:$0xf]
  %v5834 = vld [vmem:[%s8 + $0xfc] sm:$0xff]
  %v5835 = vld [vmem:[%s8 + $0x104] sm:$0xf]
  %v5836 = vld [vmem:[%s8 + $0x108] sm:$0xff]
  %v5837 = vld [vmem:[%s8 + $0x110] sm:$0xf]
  %v5838 = vld [vmem:[%s8 + $0x114] sm:$0xff]
  %v5839 = vld [vmem:[%s8 + $0x11c] sm:$0xf]
  %v5840 = vld [vmem:[%s8 + $0x120] sm:$0xff]
  %v5841 = vld [vmem:[%s8 + $0x128] sm:$0xf]
  %v5842 = vld [vmem:[%s8 + $0x12c] sm:$0xff]
  %v5843 = vld [vmem:[%s8 + $0x134] sm:$0xf]
  %v5844 = vld [vmem:[%s8 + $0x138] sm:$0xff]
  %v5845 = vld [vmem:[%s8 + $0x140] sm:$0xf]
  %v5846 = vld [vmem:[%s8 + $0x144] sm:$0xff]
  %v5847 = vld [vmem:[%s8 + $0x14c] sm:$0xf]
  %v5848 = vld [vmem:[%s8 + $0x150] sm:$0xff]
  %v5849 = vld [vmem:[%s8 + $0x158] sm:$0xf]
  %v5850 = vld [vmem:[%s8 + $0x15c] sm:$0xff]
  %v5851 = vld [vmem:[%s8 + $0x164] sm:$0xf]
  %v5852 = vld [vmem:[%s8 + $0x168] sm:$0xff]
  %v5853 = vld [vmem:[%s8 + $0x170] sm:$0xf]
  %v5854 = vld [vmem:[%s8 + $0x174] sm:$0xff]
  %v5855 = vld [vmem:[%s8 + $0x17c] sm:$0xf]
  %v5856 = vld [vmem:[%s8 + $0x180] sm:$0xff]
  %v5857 = vld [vmem:[%s8 + $0x188] sm:$0xf]
  %v5858 = vld [vmem:[%s8 + $0x18c] sm:$0xff]
  %v5859 = vld [vmem:[%s8 + $0x194] sm:$0xf]
  %v5860 = vld [vmem:[%s8 + $0x198] sm:$0xff]
  %v5861 = vld [vmem:[%s8 + $0x1a0] sm:$0xf]
  %v5862 = vld [vmem:[%s8 + $0x1a4] sm:$0xff]
  %v5863 = vld [vmem:[%s8 + $0x1ac] sm:$0xf]
  %v5864 = vld [vmem:[%s8 + $0x1b0] sm:$0xff]
  %v5865 = vld [vmem:[%s8 + $0x1b8] sm:$0xf]
  %v5866 = vld [vmem:[%s8 + $0x1bc] sm:$0xff]
  %v5867 = vld [vmem:[%s8 + $0x1c4] sm:$0xf]
  %v5868 = vld [vmem:[%s8 + $0x1c8] sm:$0xff]
  %v5869 = vld [vmem:[%s8 + $0x1d0] sm:$0xf]
  %v5870 = vld [vmem:[%s8 + $0x1d4] sm:$0xff]
  %v5871 = vld [vmem:[%s8 + $0x1dc] sm:$0xf]
  %v5872 = vld [vmem:[%s8 + $0x1e0] sm:$0xff]
  %v5873 = vld [vmem:[%s8 + $0x1e8] sm:$0xf]
  %v5874 = vld [vmem:[%s8 + $0x1ec] sm:$0xff]
  %v5875 = vld [vmem:[%s8 + $0x1f4] sm:$0xf]
  %v5876 = vld [vmem:[%s8 + $0x1f8] sm:$0xff]
  %v5877 = vld [vmem:[%s8 + $0x200] sm:$0xf]
  %v5878 = vld [vmem:[%s8 + $0x204] sm:$0xff]
  %v5879 = vld [vmem:[%s8 + $0x20c] sm:$0xf]
  %v5880 = vld [vmem:[%s8 + $0x210] sm:$0xff]
  %v5881 = vld [vmem:[%s8 + $0x218] sm:$0xf]
  %v5882 = vld [vmem:[%s8 + $0x21c] sm:$0xff]
  %v5883 = vld [vmem:[%s8 + $0x224] sm:$0xf]
  %v5884 = vld [vmem:[%s8 + $0x228] sm:$0xff]
  %v5885 = vld [vmem:[%s8 + $0x230] sm:$0xf]
  %v5886 = vld [vmem:[%s8 + $0x234] sm:$0xff]
  %v5887 = vld [vmem:[%s8 + $0x23c] sm:$0xf]
  %v5888 = vld [vmem:[%s8 + $0x240] sm:$0xff]
  %v5889 = vld [vmem:[%s8 + $0x248] sm:$0xf]
  %v5890 = vld [vmem:[%s8 + $0x24c] sm:$0xff]
  %v5891 = vld [vmem:[%s8 + $0x254] sm:$0xf]
  %v5892 = vld [vmem:[%s8 + $0x258] sm:$0xff]
  %v5893 = vld [vmem:[%s8 + $0x260] sm:$0xf]
  %v5894 = vld [vmem:[%s8 + $0x264] sm:$0xff]
  %v5895 = vld [vmem:[%s8 + $0x26c] sm:$0xf]
  %v5896 = vld [vmem:[%s8 + $0x270] sm:$0xff]
  %v5897 = vld [vmem:[%s8 + $0x278] sm:$0xf]
  %v5898 = vld [vmem:[%s8 + $0x27c] sm:$0xff]
  %v5899 = vld [vmem:[%s8 + $0x284] sm:$0xf]
  %v5900 = vld [vmem:[%s8 + $0x288] sm:$0xff]
  %v5901 = vld [vmem:[%s8 + $0x290] sm:$0xf]
  %v5902 = vld [vmem:[%s8 + $0x294] sm:$0xff]
  %v5903 = vld [vmem:[%s8 + $0x29c] sm:$0xf]
  %v5904 = vld [vmem:[%s8 + $0x2a0] sm:$0xff]
  %v5905 = vld [vmem:[%s8 + $0x2a8] sm:$0xf]
  %v5906 = vld [vmem:[%s8 + $0x2ac] sm:$0xff]
  %v5907 = vld [vmem:[%s8 + $0x2b4] sm:$0xf]
  %v5908 = vld [vmem:[%s8 + $0x2b8] sm:$0xff]
  %v5909 = vld [vmem:[%s8 + $0x2c0] sm:$0xf]
  %v5910 = vld [vmem:[%s8 + $0x2c4] sm:$0xff]
  %v5911 = vld [vmem:[%s8 + $0x2cc] sm:$0xf]
  %v5912 = vld [vmem:[%s8 + $0x2d0] sm:$0xff]
  %v5913 = vld [vmem:[%s8 + $0x2d8] sm:$0xf]
  %v5914 = vld [vmem:[%s8 + $0x2dc] sm:$0xff]
  %v5915 = vld [vmem:[%s8 + $0x2e4] sm:$0xf]
  %v5916 = vld [vmem:[%s8 + $0x2e8] sm:$0xff]
  %v5917 = vld [vmem:[%s8 + $0x2f0] sm:$0xf]
  %v5918 = vld [vmem:[%s8 + $0x2f4] sm:$0xff]
  %v5919 = vld [vmem:[%s8 + $0x2fc] sm:$0xf]
  %v5920 = vld [vmem:[%s9] sm:$0x7]
  %v5922 = vlaneseq
  %v5923 = vshrl.u32 %v5922, 7
  %v5924 = vsub.s32 0, %v5923
  %v5925 = vrot.slane %v5920, %v5924
  %v5926 = vlaneseq
  %v5927 = vshrl.u32 %v5926, 7
  %v5928 = vsub.s32 1, %v5927
  %v5929 = vrot.slane %v5920, %v5928
  %v5930 = vlaneseq
  %v5931 = vshrl.u32 %v5930, 7
  %v5932 = vsub.s32 2, %v5931
  %v5933 = vrot.slane %v5920, %v5932
  %v6065 = vunpack.c.l.b16 %v5792
  %v6066 = vunpack.c.h.b16 %v5792
  %v6067 = vunpack.c.l.b16 %v5793
  %v6068 = vunpack.c.l.b16 %v5794
  %v6069 = vunpack.c.h.b16 %v5794
  %v6070 = vunpack.c.l.b16 %v5795
  %v6071 = vunpack.c.l.b16 %v5796
  %v6072 = vunpack.c.h.b16 %v5796
  %v6073 = vunpack.c.l.b16 %v5797
  %v6074 = vunpack.c.l.b16 %v5798
  %v6075 = vunpack.c.h.b16 %v5798
  %v6076 = vunpack.c.l.b16 %v5799
  %v6077 = vunpack.c.l.b16 %v5800
  %v6078 = vunpack.c.h.b16 %v5800
  %v6079 = vunpack.c.l.b16 %v5801
  %v6080 = vunpack.c.l.b16 %v5802
  %v6081 = vunpack.c.h.b16 %v5802
  %v6082 = vunpack.c.l.b16 %v5803
  %v6083 = vunpack.c.l.b16 %v5804
  %v6084 = vunpack.c.h.b16 %v5804
  %v6085 = vunpack.c.l.b16 %v5805
  %v6086 = vunpack.c.l.b16 %v5806
  %v6087 = vunpack.c.h.b16 %v5806
  %v6088 = vunpack.c.l.b16 %v5807
  %v6089 = vunpack.c.l.b16 %v5808
  %v6090 = vunpack.c.h.b16 %v5808
  %v6091 = vunpack.c.l.b16 %v5809
  %v6092 = vunpack.c.l.b16 %v5810
  %v6093 = vunpack.c.h.b16 %v5810
  %v6094 = vunpack.c.l.b16 %v5811
  %v6095 = vunpack.c.l.b16 %v5812
  %v6096 = vunpack.c.h.b16 %v5812
  %v6097 = vunpack.c.l.b16 %v5813
  %v6098 = vunpack.c.l.b16 %v5814
  %v6099 = vunpack.c.h.b16 %v5814
  %v6100 = vunpack.c.l.b16 %v5815
  %v6101 = vunpack.c.l.b16 %v5816
  %v6102 = vunpack.c.h.b16 %v5816
  %v6103 = vunpack.c.l.b16 %v5817
  %v6104 = vunpack.c.l.b16 %v5818
  %v6105 = vunpack.c.h.b16 %v5818
  %v6106 = vunpack.c.l.b16 %v5819
  %v6107 = vunpack.c.l.b16 %v5820
  %v6108 = vunpack.c.h.b16 %v5820
  %v6109 = vunpack.c.l.b16 %v5821
  %v6110 = vunpack.c.l.b16 %v5822
  %v6111 = vunpack.c.h.b16 %v5822
  %v6112 = vunpack.c.l.b16 %v5823
  %v6113 = vunpack.c.l.b16 %v5824
  %v6114 = vunpack.c.h.b16 %v5824
  %v6115 = vunpack.c.l.b16 %v5825
  %v6116 = vunpack.c.l.b16 %v5826
  %v6117 = vunpack.c.h.b16 %v5826
  %v6118 = vunpack.c.l.b16 %v5827
  %v6119 = vunpack.c.l.b16 %v5828
  %v6120 = vunpack.c.h.b16 %v5828
  %v6121 = vunpack.c.l.b16 %v5829
  %v6122 = vunpack.c.l.b16 %v5830
  %v6123 = vunpack.c.h.b16 %v5830
  %v6124 = vunpack.c.l.b16 %v5831
  %v6125 = vunpack.c.l.b16 %v5832
  %v6126 = vunpack.c.h.b16 %v5832
  %v6127 = vunpack.c.l.b16 %v5833
  %v6128 = vunpack.c.l.b16 %v5834
  %v6129 = vunpack.c.h.b16 %v5834
  %v6130 = vunpack.c.l.b16 %v5835
  %v6131 = vunpack.c.l.b16 %v5836
  %v6132 = vunpack.c.h.b16 %v5836
  %v6133 = vunpack.c.l.b16 %v5837
  %v6134 = vunpack.c.l.b16 %v5838
  %v6135 = vunpack.c.h.b16 %v5838
  %v6136 = vunpack.c.l.b16 %v5839
  %v6137 = vunpack.c.l.b16 %v5840
  %v6138 = vunpack.c.h.b16 %v5840
  %v6139 = vunpack.c.l.b16 %v5841
  %v6140 = vunpack.c.l.b16 %v5842
  %v6141 = vunpack.c.h.b16 %v5842
  %v6142 = vunpack.c.l.b16 %v5843
  %v6143 = vunpack.c.l.b16 %v5844
  %v6144 = vunpack.c.h.b16 %v5844
  %v6145 = vunpack.c.l.b16 %v5845
  %v6146 = vunpack.c.l.b16 %v5846
  %v6147 = vunpack.c.h.b16 %v5846
  %v6148 = vunpack.c.l.b16 %v5847
  %v6149 = vunpack.c.l.b16 %v5848
  %v6150 = vunpack.c.h.b16 %v5848
  %v6151 = vunpack.c.l.b16 %v5849
  %v6152 = vunpack.c.l.b16 %v5850
  %v6153 = vunpack.c.h.b16 %v5850
  %v6154 = vunpack.c.l.b16 %v5851
  %v6155 = vunpack.c.l.b16 %v5852
  %v6156 = vunpack.c.h.b16 %v5852
  %v6157 = vunpack.c.l.b16 %v5853
  %v6158 = vunpack.c.l.b16 %v5854
  %v6159 = vunpack.c.h.b16 %v5854
  %v6160 = vunpack.c.l.b16 %v5855
  %v6161 = vunpack.c.l.b16 %v5856
  %v6162 = vunpack.c.h.b16 %v5856
  %v6163 = vunpack.c.l.b16 %v5857
  %v6164 = vunpack.c.l.b16 %v5858
  %v6165 = vunpack.c.h.b16 %v5858
  %v6166 = vunpack.c.l.b16 %v5859
  %v6167 = vunpack.c.l.b16 %v5860
  %v6168 = vunpack.c.h.b16 %v5860
  %v6169 = vunpack.c.l.b16 %v5861
  %v6170 = vunpack.c.l.b16 %v5862
  %v6171 = vunpack.c.h.b16 %v5862
  %v6172 = vunpack.c.l.b16 %v5863
  %v6173 = vunpack.c.l.b16 %v5864
  %v6174 = vunpack.c.h.b16 %v5864
  %v6175 = vunpack.c.l.b16 %v5865
  %v6176 = vunpack.c.l.b16 %v5866
  %v6177 = vunpack.c.h.b16 %v5866
  %v6178 = vunpack.c.l.b16 %v5867
  %v6179 = vunpack.c.l.b16 %v5868
  %v6180 = vunpack.c.h.b16 %v5868
  %v6181 = vunpack.c.l.b16 %v5869
  %v6182 = vunpack.c.l.b16 %v5870
  %v6183 = vunpack.c.h.b16 %v5870
  %v6184 = vunpack.c.l.b16 %v5871
  %v6185 = vunpack.c.l.b16 %v5872
  %v6186 = vunpack.c.h.b16 %v5872
  %v6187 = vunpack.c.l.b16 %v5873
  %v6188 = vunpack.c.l.b16 %v5874
  %v6189 = vunpack.c.h.b16 %v5874
  %v6190 = vunpack.c.l.b16 %v5875
  %v6191 = vunpack.c.l.b16 %v5876
  %v6192 = vunpack.c.h.b16 %v5876
  %v6193 = vunpack.c.l.b16 %v5877
  %v6194 = vunpack.c.l.b16 %v5878
  %v6195 = vunpack.c.h.b16 %v5878
  %v6196 = vunpack.c.l.b16 %v5879
  %v6197 = vunpack.c.l.b16 %v5880
  %v6198 = vunpack.c.h.b16 %v5880
  %v6199 = vunpack.c.l.b16 %v5881
  %v6200 = vunpack.c.l.b16 %v5882
  %v6201 = vunpack.c.h.b16 %v5882
  %v6202 = vunpack.c.l.b16 %v5883
  %v6203 = vunpack.c.l.b16 %v5884
  %v6204 = vunpack.c.h.b16 %v5884
  %v6205 = vunpack.c.l.b16 %v5885
  %v6206 = vunpack.c.l.b16 %v5886
  %v6207 = vunpack.c.h.b16 %v5886
  %v6208 = vunpack.c.l.b16 %v5887
  %v6209 = vunpack.c.l.b16 %v5888
  %v6210 = vunpack.c.h.b16 %v5888
  %v6211 = vunpack.c.l.b16 %v5889
  %v6212 = vunpack.c.l.b16 %v5890
  %v6213 = vunpack.c.h.b16 %v5890
  %v6214 = vunpack.c.l.b16 %v5891
  %v6215 = vunpack.c.l.b16 %v5892
  %v6216 = vunpack.c.h.b16 %v5892
  %v6217 = vunpack.c.l.b16 %v5893
  %v6218 = vunpack.c.l.b16 %v5894
  %v6219 = vunpack.c.h.b16 %v5894
  %v6220 = vunpack.c.l.b16 %v5895
  %v6221 = vunpack.c.l.b16 %v5896
  %v6222 = vunpack.c.h.b16 %v5896
  %v6223 = vunpack.c.l.b16 %v5897
  %v6224 = vunpack.c.l.b16 %v5898
  %v6225 = vunpack.c.h.b16 %v5898
  %v6226 = vunpack.c.l.b16 %v5899
  %v6227 = vunpack.c.l.b16 %v5900
  %v6228 = vunpack.c.h.b16 %v5900
  %v6229 = vunpack.c.l.b16 %v5901
  %v6230 = vunpack.c.l.b16 %v5902
  %v6231 = vunpack.c.h.b16 %v5902
  %v6232 = vunpack.c.l.b16 %v5903
  %v6233 = vunpack.c.l.b16 %v5904
  %v6234 = vunpack.c.h.b16 %v5904
  %v6235 = vunpack.c.l.b16 %v5905
  %v6236 = vunpack.c.l.b16 %v5906
  %v6237 = vunpack.c.h.b16 %v5906
  %v6238 = vunpack.c.l.b16 %v5907
  %v6239 = vunpack.c.l.b16 %v5908
  %v6240 = vunpack.c.h.b16 %v5908
  %v6241 = vunpack.c.l.b16 %v5909
  %v6242 = vunpack.c.l.b16 %v5910
  %v6243 = vunpack.c.h.b16 %v5910
  %v6244 = vunpack.c.l.b16 %v5911
  %v6245 = vunpack.c.l.b16 %v5912
  %v6246 = vunpack.c.h.b16 %v5912
  %v6247 = vunpack.c.l.b16 %v5913
  %v6248 = vunpack.c.l.b16 %v5914
  %v6249 = vunpack.c.h.b16 %v5914
  %v6250 = vunpack.c.l.b16 %v5915
  %v6251 = vunpack.c.l.b16 %v5916
  %v6252 = vunpack.c.h.b16 %v5916
  %v6253 = vunpack.c.l.b16 %v5917
  %v6254 = vunpack.c.l.b16 %v5918
  %v6255 = vunpack.c.h.b16 %v5918
  %v6256 = vunpack.c.l.b16 %v5919
  %v6257 = vpack.c.b16 %v6068, %v6065
  %v6258 = vpack.c.b16 %v6069, %v6066
  %v6259 = vpack.c.b16 %v6070, %v6067
  %v6260 = vpack.c.b16 %v6074, %v6071
  %v6261 = vpack.c.b16 %v6075, %v6072
  %v6262 = vpack.c.b16 %v6076, %v6073
  %v6263 = vpack.c.b16 %v6080, %v6077
  %v6264 = vpack.c.b16 %v6081, %v6078
  %v6265 = vpack.c.b16 %v6082, %v6079
  %v6266 = vpack.c.b16 %v6086, %v6083
  %v6267 = vpack.c.b16 %v6087, %v6084
  %v6268 = vpack.c.b16 %v6088, %v6085
  %v6269 = vpack.c.b16 %v6092, %v6089
  %v6270 = vpack.c.b16 %v6093, %v6090
  %v6271 = vpack.c.b16 %v6094, %v6091
  %v6272 = vpack.c.b16 %v6098, %v6095
  %v6273 = vpack.c.b16 %v6099, %v6096
  %v6274 = vpack.c.b16 %v6100, %v6097
  %v6275 = vpack.c.b16 %v6104, %v6101
  %v6276 = vpack.c.b16 %v6105, %v6102
  %v6277 = vpack.c.b16 %v6106, %v6103
  %v6278 = vpack.c.b16 %v6110, %v6107
  %v6279 = vpack.c.b16 %v6111, %v6108
  %v6280 = vpack.c.b16 %v6112, %v6109
  %v6281 = vpack.c.b16 %v6116, %v6113
  %v6282 = vpack.c.b16 %v6117, %v6114
  %v6283 = vpack.c.b16 %v6118, %v6115
  %v6284 = vpack.c.b16 %v6122, %v6119
  %v6285 = vpack.c.b16 %v6123, %v6120
  %v6286 = vpack.c.b16 %v6124, %v6121
  %v6287 = vpack.c.b16 %v6128, %v6125
  %v6288 = vpack.c.b16 %v6129, %v6126
  %v6289 = vpack.c.b16 %v6130, %v6127
  %v6290 = vpack.c.b16 %v6134, %v6131
  %v6291 = vpack.c.b16 %v6135, %v6132
  %v6292 = vpack.c.b16 %v6136, %v6133
  %v6293 = vpack.c.b16 %v6140, %v6137
  %v6294 = vpack.c.b16 %v6141, %v6138
  %v6295 = vpack.c.b16 %v6142, %v6139
  %v6296 = vpack.c.b16 %v6146, %v6143
  %v6297 = vpack.c.b16 %v6147, %v6144
  %v6298 = vpack.c.b16 %v6148, %v6145
  %v6299 = vpack.c.b16 %v6152, %v6149
  %v6300 = vpack.c.b16 %v6153, %v6150
  %v6301 = vpack.c.b16 %v6154, %v6151
  %v6302 = vpack.c.b16 %v6158, %v6155
  %v6303 = vpack.c.b16 %v6159, %v6156
  %v6304 = vpack.c.b16 %v6160, %v6157
  %v6305 = vpack.c.b16 %v6164, %v6161
  %v6306 = vpack.c.b16 %v6165, %v6162
  %v6307 = vpack.c.b16 %v6166, %v6163
  %v6308 = vpack.c.b16 %v6170, %v6167
  %v6309 = vpack.c.b16 %v6171, %v6168
  %v6310 = vpack.c.b16 %v6172, %v6169
  %v6311 = vpack.c.b16 %v6176, %v6173
  %v6312 = vpack.c.b16 %v6177, %v6174
  %v6313 = vpack.c.b16 %v6178, %v6175
  %v6314 = vpack.c.b16 %v6182, %v6179
  %v6315 = vpack.c.b16 %v6183, %v6180
  %v6316 = vpack.c.b16 %v6184, %v6181
  %v6317 = vpack.c.b16 %v6188, %v6185
  %v6318 = vpack.c.b16 %v6189, %v6186
  %v6319 = vpack.c.b16 %v6190, %v6187
  %v6320 = vpack.c.b16 %v6194, %v6191
  %v6321 = vpack.c.b16 %v6195, %v6192
  %v6322 = vpack.c.b16 %v6196, %v6193
  %v6323 = vpack.c.b16 %v6200, %v6197
  %v6324 = vpack.c.b16 %v6201, %v6198
  %v6325 = vpack.c.b16 %v6202, %v6199
  %v6326 = vpack.c.b16 %v6206, %v6203
  %v6327 = vpack.c.b16 %v6207, %v6204
  %v6328 = vpack.c.b16 %v6208, %v6205
  %v6329 = vpack.c.b16 %v6212, %v6209
  %v6330 = vpack.c.b16 %v6213, %v6210
  %v6331 = vpack.c.b16 %v6214, %v6211
  %v6332 = vpack.c.b16 %v6218, %v6215
  %v6333 = vpack.c.b16 %v6219, %v6216
  %v6334 = vpack.c.b16 %v6220, %v6217
  %v6335 = vpack.c.b16 %v6224, %v6221
  %v6336 = vpack.c.b16 %v6225, %v6222
  %v6337 = vpack.c.b16 %v6226, %v6223
  %v6338 = vpack.c.b16 %v6230, %v6227
  %v6339 = vpack.c.b16 %v6231, %v6228
  %v6340 = vpack.c.b16 %v6232, %v6229
  %v6341 = vpack.c.b16 %v6236, %v6233
  %v6342 = vpack.c.b16 %v6237, %v6234
  %v6343 = vpack.c.b16 %v6238, %v6235
  %v6344 = vpack.c.b16 %v6242, %v6239
  %v6345 = vpack.c.b16 %v6243, %v6240
  %v6346 = vpack.c.b16 %v6244, %v6241
  %v6347 = vpack.c.b16 %v6248, %v6245
  %v6348 = vpack.c.b16 %v6249, %v6246
  %v6349 = vpack.c.b16 %v6250, %v6247
  %v6350 = vpack.c.b16 %v6254, %v6251
  %v6351 = vpack.c.b16 %v6255, %v6252
  %v6352 = vpack.c.b16 %v6256, %v6253
  %6449 = vmatprep.subr.bf16.mxu0 %v6279
  %6450 = vmatpush1.bf16.msra.mxu0 %v6278
  %6451 = vmatprep.subr.bf16.mxu0 %v6276
  %6452 = vmatpush1.bf16.msra.mxu0 %v6275
  %6453 = vmatprep.subr.bf16.mxu0 %v6273
  %6454 = vmatpush1.bf16.msra.mxu0 %v6272
  %6455 = vmatprep.subr.bf16.mxu0 %v6270
  %6456 = vmatpush1.bf16.msra.mxu0 %v6269
  %6457 = vmatprep.subr.bf16.mxu0 %v6267
  %6458 = vmatpush1.bf16.msra.mxu0 %v6266
  %6459 = vmatprep.subr.bf16.mxu0 %v6264
  %6460 = vmatpush1.bf16.msra.mxu0 %v6263
  %6461 = vmatprep.subr.bf16.mxu0 %v6261
  %6462 = vmatpush1.bf16.msra.mxu0 %v6260
  %6463 = vmatprep.subr.bf16.mxu0 %v6258
  %6464 = vmatpush1.bf16.msra.mxu0 %v6257
  %6465 = vmatprep.subr.bf16.mxu0 %v6303
  %6466 = vmatpush2.bf16.msra.mxu0 %v6302
  %6467 = vmatprep.subr.bf16.mxu0 %v6300
  %6468 = vmatpush2.bf16.msra.mxu0 %v6299
  %6469 = vmatprep.subr.bf16.mxu0 %v6297
  %6470 = vmatpush2.bf16.msra.mxu0 %v6296
  %6471 = vmatprep.subr.bf16.mxu0 %v6294
  %6472 = vmatpush2.bf16.msra.mxu0 %v6293
  %6473 = vmatprep.subr.bf16.mxu0 %v6291
  %6474 = vmatpush2.bf16.msra.mxu0 %v6290
  %6475 = vmatprep.subr.bf16.mxu0 %v6288
  %6476 = vmatpush2.bf16.msra.mxu0 %v6287
  %6477 = vmatprep.subr.bf16.mxu0 %v6285
  %6478 = vmatpush2.bf16.msra.mxu0 %v6284
  %6479 = vmatprep.subr.bf16.mxu0 %v6282
  %6480 = vmatpush2.bf16.msra.mxu0 %v6281
  %6481 = vmatprep.mubr.bf16.mxu0 %v5789
  %6482 = vmatmul.mubr.bf16.gmra.mxu0 %v5788
  %v6483 = vpop.f32.mrf.mxu0
  %v6484 = vadd.f32 %v5925, %v6483
  %v6485 = vpop.f32.mrf.mxu0
  %v6486 = vadd.f32 %v5929, %v6485
  %v6487 = vpop.f32.mrf.mxu0
  %v6488 = vadd.f32 %v5925, %v6487
  %v6489 = vpop.f32.mrf.mxu0
  %v6490 = vadd.f32 %v5929, %v6489
  %6491 = vdwg.mxu0
  %6492 = vmatprep.subr.bf16.mxu0 %v6327
  %6493 = vmatpush1.bf16.msra.mxu0 %v6326
  %6494 = vmatprep.subr.bf16.mxu0 %v6324
  %6495 = vmatpush1.bf16.msra.mxu0 %v6323
  %6496 = vmatprep.subr.bf16.mxu0 %v6321
  %6497 = vmatpush1.bf16.msra.mxu0 %v6320
  %6498 = vmatprep.subr.bf16.mxu0 %v6318
  %6499 = vmatpush1.bf16.msra.mxu0 %v6317
  %6500 = vmatprep.subr.bf16.mxu0 %v6315
  %6501 = vmatpush1.bf16.msra.mxu0 %v6314
  %6502 = vmatprep.subr.bf16.mxu0 %v6312
  %6503 = vmatpush1.bf16.msra.mxu0 %v6311
  %6504 = vmatprep.subr.bf16.mxu0 %v6309
  %6505 = vmatpush1.bf16.msra.mxu0 %v6308
  %6506 = vmatprep.subr.bf16.mxu0 %v6306
  %6507 = vmatpush1.bf16.msra.mxu0 %v6305
  %6508 = vmatprep.subr.bf16.mxu0 %v6351
  %6509 = vmatpush2.bf16.msra.mxu0 %v6350
  %6510 = vmatprep.subr.bf16.mxu0 %v6348
  %6511 = vmatpush2.bf16.msra.mxu0 %v6347
  %6512 = vmatprep.subr.bf16.mxu0 %v6345
  %6513 = vmatpush2.bf16.msra.mxu0 %v6344
  %6514 = vmatprep.subr.bf16.mxu0 %v6342
  %6515 = vmatpush2.bf16.msra.mxu0 %v6341
  %6516 = vmatprep.subr.bf16.mxu0 %v6339
  %6517 = vmatpush2.bf16.msra.mxu0 %v6338
  %6518 = vmatprep.subr.bf16.mxu0 %v6336
  %6519 = vmatpush2.bf16.msra.mxu0 %v6335
  %6520 = vmatprep.subr.bf16.mxu0 %v6333
  %6521 = vmatpush2.bf16.msra.mxu0 %v6332
  %6522 = vmatprep.subr.bf16.mxu0 %v6330
  %6523 = vmatpush2.bf16.msra.mxu0 %v6329
  %6524 = vmatprep.mubr.bf16.mxu0 %v5791
  %6525 = vmatmul.mubr.bf16.gmra.mxu0 %v5790
  %v6526 = vpop.f32.mrf.mxu0
  %v6527 = vadd.f32 %v6484, %v6526
  %v6528 = vpop.f32.mrf.mxu0
  %v6529 = vadd.f32 %v6486, %v6528
  %v6530 = vpop.f32.mrf.mxu0
  %v6531 = vadd.f32 %v6488, %v6530
  %v6532 = vpop.f32.mrf.mxu0
  %v6533 = vadd.f32 %v6490, %v6532
  %6534 = vdwg.mxu0
  %6535 = vmatprep.subr.bf16.mxu0 0
  %6536 = vmatpush1.bf16.msra.mxu0 %v6280
  %6537 = vmatprep.subr.bf16.mxu0 0
  %6538 = vmatpush1.bf16.msra.mxu0 %v6277
  %6539 = vmatprep.subr.bf16.mxu0 0
  %6540 = vmatpush1.bf16.msra.mxu0 %v6274
  %6541 = vmatprep.subr.bf16.mxu0 0
  %6542 = vmatpush1.bf16.msra.mxu0 %v6271
  %6543 = vmatprep.subr.bf16.mxu0 0
  %6544 = vmatpush1.bf16.msra.mxu0 %v6268
  %6545 = vmatprep.subr.bf16.mxu0 0
  %6546 = vmatpush1.bf16.msra.mxu0 %v6265
  %6547 = vmatprep.subr.bf16.mxu0 0
  %6548 = vmatpush1.bf16.msra.mxu0 %v6262
  %6549 = vmatprep.subr.bf16.mxu0 0
  %6550 = vmatpush1.bf16.msra.mxu0 %v6259
  %6551 = vmatprep.subr.bf16.mxu0 0
  %6552 = vmatpush2.bf16.msra.mxu0 %v6304
  %6553 = vmatprep.subr.bf16.mxu0 0
  %6554 = vmatpush2.bf16.msra.mxu0 %v6301
  %6555 = vmatprep.subr.bf16.mxu0 0
  %6556 = vmatpush2.bf16.msra.mxu0 %v6298
  %6557 = vmatprep.subr.bf16.mxu0 0
  %6558 = vmatpush2.bf16.msra.mxu0 %v6295
  %6559 = vmatprep.subr.bf16.mxu0 0
  %6560 = vmatpush2.bf16.msra.mxu0 %v6292
  %6561 = vmatprep.subr.bf16.mxu0 0
  %6562 = vmatpush2.bf16.msra.mxu0 %v6289
  %6563 = vmatprep.subr.bf16.mxu0 0
  %6564 = vmatpush2.bf16.msra.mxu0 %v6286
  %6565 = vmatprep.subr.bf16.mxu0 0
  %6566 = vmatpush2.bf16.msra.mxu0 %v6283
  %6567 = vmatprep.mubr.bf16.mxu0 %v5789
  %6568 = vmatmul.mubr.bf16.gmra.mxu0 %v5788
  %v6569 = vpop.f32.mrf.mxu0
  %v6570 = vadd.f32 %v5933, %v6569
  %v6571 = vpop.f32.mrf.mxu0
  %v6572 = vpop.f32.mrf.mxu0
  %v6573 = vadd.f32 %v5933, %v6572
  %v6574 = vpop.f32.mrf.mxu0
  %6575 = vdwg.mxu0
  %6576 = vmatprep.subr.bf16.mxu0 0
  %6577 = vmatpush1.bf16.msra.mxu0 %v6328
  %6578 = vmatprep.subr.bf16.mxu0 0
  %6579 = vmatpush1.bf16.msra.mxu0 %v6325
  %6580 = vmatprep.subr.bf16.mxu0 0
  %6581 = vmatpush1.bf16.msra.mxu0 %v6322
  %6582 = vmatprep.subr.bf16.mxu0 0
  %6583 = vmatpush1.bf16.msra.mxu0 %v6319
  %6584 = vmatprep.subr.bf16.mxu0 0
  %6585 = vmatpush1.bf16.msra.mxu0 %v6316
  %6586 = vmatprep.subr.bf16.mxu0 0
  %6587 = vmatpush1.bf16.msra.mxu0 %v6313
  %6588 = vmatprep.subr.bf16.mxu0 0
  %6589 = vmatpush1.bf16.msra.mxu0 %v6310
  %6590 = vmatprep.subr.bf16.mxu0 0
  %6591 = vmatpush1.bf16.msra.mxu0 %v6307
  %6592 = vmatprep.subr.bf16.mxu0 0
  %6593 = vmatpush2.bf16.msra.mxu0 %v6352
  %6594 = vmatprep.subr.bf16.mxu0 0
  %6595 = vmatpush2.bf16.msra.mxu0 %v6349
  %6596 = vmatprep.subr.bf16.mxu0 0
  %6597 = vmatpush2.bf16.msra.mxu0 %v6346
  %6598 = vmatprep.subr.bf16.mxu0 0
  %6599 = vmatpush2.bf16.msra.mxu0 %v6343
  %6600 = vmatprep.subr.bf16.mxu0 0
  %6601 = vmatpush2.bf16.msra.mxu0 %v6340
  %6602 = vmatprep.subr.bf16.mxu0 0
  %6603 = vmatpush2.bf16.msra.mxu0 %v6337
  %6604 = vmatprep.subr.bf16.mxu0 0
  %6605 = vmatpush2.bf16.msra.mxu0 %v6334
  %6606 = vmatprep.subr.bf16.mxu0 0
  %6607 = vmatpush2.bf16.msra.mxu0 %v6331
  %6608 = vmatprep.mubr.bf16.mxu0 %v5791
  %6609 = vmatmul.mubr.bf16.gmra.mxu0 %v5790
  %v6610 = vpop.f32.mrf.mxu0
  %v6611 = vadd.f32 %v6570, %v6610
  %v6612 = vpop.f32.mrf.mxu0
  %v6613 = vpop.f32.mrf.mxu0
  %v6614 = vadd.f32 %v6573, %v6613
  %v6615 = vpop.f32.mrf.mxu0
  %6616 = vdwg.mxu0
  %6617 = vst [vmem:[%s10] sm:$0xff] %v6527
  %6618 = vst [vmem:[%s10 + $0x8] sm:$0xff] %v6529
  %6619 = vst [vmem:[%s10 + $0x10] sm:$0xff] %v6611
  %6620 = vst [vmem:[%s10 + $0x18] sm:$0xff] %v6531
  %6621 = vst [vmem:[%s10 + $0x20] sm:$0xff] %v6533
  %6622 = vst [vmem:[%s10 + $0x28] sm:$0xff] %v6614
  // Predicated region
  $region42: #{emg_to_eeg_forward.1} parent=0 // pred_check
    _
  $region43: #{emg_to_eeg_forward.1} parent=0 // pred_check_branch
    %6624 = sbr.rel (0) target = $region45
  $region44: #{emg_to_eeg_forward.1} parent=0 // pred_region
    _
  $region45: #{emg_to_eeg_forward.1} parent=0 // pred_fallthru
    _
  // Predicated region
  $region46: #{emg_to_eeg_forward.1} parent=0 // pred_check
    _
  $region47: #{emg_to_eeg_forward.1} parent=0 // pred_check_branch
    %6626 = sbr.rel (0) target = $region49
  $region48: #{emg_to_eeg_forward.1} parent=0 // pred_region
    _
  $region49: #{emg_to_eeg_forward.1} parent=0 // pred_fallthru
    _

</llo_original>
